<compile_context>
chip_gen: v5e
topology: v5e:2x2
jax: 0.10.0
libtpu: 0.0.40
codegen_flags: <defaults>
</compile_context>

<pallas_src>
import jax
import jax.numpy as jnp
from jax import lax
from jax.experimental import pallas as pl
from jax.experimental.pallas import tpu as pltpu


# ------------------------------ helpers -------------------------------------

def _round_up(v, m):
    return ((v + m - 1) // m) * m


def _pad_gate_mat(w, hp, cols=None):
    """Pad a PyTorch-layout LSTM weight (4H, C) to (4*hp, cols), per gate."""
    four_h, c = w.shape
    h = four_h // 4
    cols = c if cols is None else cols
    w = w.reshape(4, h, c)
    w = jnp.pad(w, ((0, 0), (0, hp - h), (0, cols - c)))
    return w.reshape(4 * hp, cols)


def _pad_gate_vec(b, hp):
    h = b.shape[0] // 4
    return jnp.pad(b.reshape(4, h), ((0, 0), (0, hp - h))).reshape(4 * hp)


# --------------- fused 2-layer LSTM + regression-head kernel -----------------

def _fused_lstm_head_kernel(x_ref, wih1_hbm, whh1_hbm, wih2_hbm, whh2_hbm,
                            b1_ref, b2_ref, regw_ref, regb_ref, out_ref,
                            wih1_v, whh1_v, wih2_v, whh2_v, dma_sem,
                            h1_scr, c1_scr, h2_scr, c2_scr, h2_blk):
    """One grid step = t_block time steps of both LSTM layers + linear head.

    x_ref   : (TB, Bp, In) bf16   streamed input block
    w*_hbm  : raw HBM refs (pre-transposed (K, 4Hp) bf16), DMA'd once
    b1/b2   : (1, 4Hp) f32        combined per-layer biases
    regw    : (1, Hp) f32 for O==1, else (Hp, O) f32 (pre-transposed)
    out_ref : (1, TB, Bp) f32 for O==1, else (TB, Bp, O) f32
    scratch : resident weights, DMA sems, h/c carries, layer-2 hidden block
    """
    tb, bp, _ = x_ref.shape
    hp, g = whh1_v.shape

    @pl.when(pl.program_id(0) == 0)
    def _():
        # One-shot DMA of the grid-invariant weights into single-buffered VMEM
        # scratch (no 2x pipeline buffering of invariant inputs).
        copies = [
            pltpu.make_async_copy(src, dst, dma_sem.at[k])
            for k, (src, dst) in enumerate((
                (wih1_hbm, wih1_v), (whh1_hbm, whh1_v),
                (wih2_hbm, wih2_v), (whh2_hbm, whh2_v)))
        ]
        for cp in copies:
            cp.start()
        for cp in copies:
            cp.wait()
        h1_scr[...] = jnp.zeros_like(h1_scr)
        c1_scr[...] = jnp.zeros_like(c1_scr)
        h2_scr[...] = jnp.zeros_like(h2_scr)
        c2_scr[...] = jnp.zeros_like(c2_scr)

    # Hoist the bias broadcasts out of the unrolled time loop (JAX does not
    # CSE broadcast_in_dim).
    b1 = jnp.broadcast_to(b1_ref[...], (bp, g))
    b2 = jnp.broadcast_to(b2_ref[...], (bp, g))

    def cell(gates, c_prev):
        # PyTorch gate order: i, f, g, o.  Gate math stays f32.
        # TODO(synk): on v6e/v7x the sigmoid/tanh + c/h update could run in
        # bf16 for EUP/VPU headroom (not on v5e: no bf16 VPU/EUP paths).
        i_g = jax.nn.sigmoid(gates[:, 0 * hp:1 * hp])
        f_g = jax.nn.sigmoid(gates[:, 1 * hp:2 * hp])
        g_g = jnp.tanh(gates[:, 2 * hp:3 * hp])
        o_g = jax.nn.sigmoid(gates[:, 3 * hp:4 * hp])
        c_new = f_g * c_prev + i_g * g_g
        return o_g * jnp.tanh(c_new), c_new

    def step(i, carry):
        h1, c1, h2, c2 = carry
        # Layer 1: input projection folded into the recurrence (x never
        # round-trips HBM as gate pre-activations).  bf16 MXU inputs, f32 acc.
        g1 = (jnp.dot(x_ref[i], wih1_v[...], preferred_element_type=jnp.float32)
              + jnp.dot(h1.astype(jnp.bfloat16), whh1_v[...],
                        preferred_element_type=jnp.float32)
              + b1)
        h1n, c1n = cell(g1, c1)
        # Layer 2: input is layer-1 hidden state, which never leaves VMEM.
        g2 = (jnp.dot(h1n.astype(jnp.bfloat16), wih2_v[...],
                      preferred_element_type=jnp.float32)
              + jnp.dot(h2.astype(jnp.bfloat16), whh2_v[...],
                        preferred_element_type=jnp.float32)
              + b2)
        h2n, c2n = cell(g2, c2)
        h2_blk[i] = h2n
        return h1n, c1n, h2n, c2n

    carry = (h1_scr[...], c1_scr[...], h2_scr[...], c2_scr[...])
    # Bounded unroll: amortize loop overhead without blowing up vreg pressure.
    h1, c1, h2, c2 = lax.fori_loop(0, tb, step, carry, unroll=min(tb, 8))
    h1_scr[...] = h1
    c1_scr[...] = c1
    h2_scr[...] = h2
    c2_scr[...] = c2

    # Regression head applied once per time block.
    h2_all = h2_blk[...]                               # (TB, Bp, Hp) f32
    w = regw_ref[...]
    if w.shape[0] == 1:
        # O == 1: VPU multiply + lane reduction (an MXU matmul would use 1 of
        # 128/256 result columns).  Output slab is (TB, Bp): no last-dim-1
        # masked vst per element.
        y = jnp.sum(h2_all * w.reshape(1, 1, hp), axis=-1)        # (TB, Bp)
        out_ref[0] = (y + regb_ref[...]).astype(out_ref.dtype)
    else:
        # O > 1: reg_w arrives pre-transposed as (Hp, O); no in-kernel .T.
        y = jnp.dot(h2_all.reshape(tb * bp, hp), w,
                    preferred_element_type=jnp.float32).reshape(tb, bp, -1)
        out_ref[...] = (y + regb_ref[...].reshape(1, 1, -1)).astype(out_ref.dtype)


# ------------------------------ full module ----------------------------------

def lstm_reg_forward(x, params, t_block=32):
    """x: (seq, batch, input_size) -> (seq, batch, output_size)."""
    assert len(params["lstm"]) == 2, "fused kernel is specialized to num_layers=2"
    (w_ih1, w_hh1, b_ih1, b_hh1), (w_ih2, w_hh2, b_ih2, b_hh2) = params["lstm"]
    reg_w, reg_b = params["reg_w"], params["reg_b"]

    s, b, in_sz = x.shape
    h = w_hh1.shape[1]
    o = reg_w.shape[0]

    hp = _round_up(h, 128)          # lane-dense gates / state
    bp = _round_up(b, 8)            # full f32 sublanes
    tb = max(1, min(t_block, s))    # time-block size
    sp = _round_up(s, tb)           # trailing time padding (outputs sliced off)
    nb = sp // tb
    g = 4 * hp

    # Pre-transposed, per-gate zero-padded parameters.  LSTM weights in bf16
    # (f32 MXU accumulation); padded hidden units provably stay exactly zero.
    wih1_t = _pad_gate_mat(w_ih1, hp).T.astype(jnp.bfloat16)          # (In, 4Hp)
    whh1_t = _pad_gate_mat(w_hh1, hp, hp).T.astype(jnp.bfloat16)      # (Hp, 4Hp)
    b1 = _pad_gate_vec(b_ih1 + b_hh1, hp).reshape(1, g).astype(jnp.float32)
    wih2_t = _pad_gate_mat(w_ih2, hp, hp).T.astype(jnp.bfloat16)      # (Hp, 4Hp)
    whh2_t = _pad_gate_mat(w_hh2, hp, hp).T.astype(jnp.bfloat16)      # (Hp, 4Hp)
    b2 = _pad_gate_vec(b_ih2 + b_hh2, hp).reshape(1, g).astype(jnp.float32)
    if o == 1:
        regw_p = jnp.pad(reg_w.astype(jnp.float32), ((0, 0), (0, hp - h)))   # (1, Hp)
    else:
        regw_p = jnp.pad(reg_w.astype(jnp.float32).T, ((0, hp - h), (0, 0))) # (Hp, O)
    regb_p = reg_b.reshape(1, o).astype(jnp.float32)

    # Pad sequence (trailing, sliced off) and batch (independent rows); x is the
    # only HBM stream of the serial pass, so ship it in bf16.
    xp = jnp.pad(x, ((0, sp - s), (0, bp - b), (0, 0))).astype(jnp.bfloat16)

    if o == 1:
        out_shape = jax.ShapeDtypeStruct((nb, tb, bp), jnp.float32)
        out_spec = pl.BlockSpec((1, tb, bp), lambda t: (t, 0, 0))
        out_blk_elems = tb * bp
    else:
        out_shape = jax.ShapeDtypeStruct((sp, bp, o), jnp.float32)
        out_spec = pl.BlockSpec((tb, bp, o), lambda t: (t, 0, 0))
        out_blk_elems = tb * bp * o

    # Explicit VMEM budget (default scoped limit is only 16 MiB v5e / 32 MiB
    # v6e, v7x); sized from the actual resident + double-buffered tiles.
    vmem_bytes = (
        (in_sz + 3 * hp) * g * 2              # single-buffered resident bf16 weights
        + 2 * tb * bp * in_sz * 2             # double-buffered x stream (bf16)
        + 2 * (2 * g + regw_p.size + o) * 4   # small pipelined bias / head params
        + 2 * out_blk_elems * 4               # double-buffered output block
        + 4 * bp * hp * 4                     # h/c carries (both layers)
        + tb * bp * hp * 4                    # layer-2 hidden block (head input)
    )
    vmem_limit = int(min(max(int(vmem_bytes * 1.5) + (4 << 20), 32 << 20), 120 << 20))
    # TODO(synk): on v7x (64 MiB physical VMEM) clamp t_block so vmem_limit
    # stays below 64 MiB, and split the batch across the two TensorCores
    # (parallel batch-block grid axis) when bp >= 16.

    out = pl.pallas_call(
        _fused_lstm_head_kernel,
        out_shape=out_shape,
        grid_spec=pltpu.PrefetchScalarGridSpec(
            num_scalar_prefetch=0,
            grid=(nb,),
            in_specs=[
                pl.BlockSpec((tb, bp, in_sz), lambda t: (t, 0, 0)),  # x (time-blocked)
                # Weights stay in HBM and are DMA'd once into VMEM scratch.
                pl.BlockSpec(memory_space=pl.ANY),                   # W_ih1^T (bf16)
                pl.BlockSpec(memory_space=pl.ANY),                   # W_hh1^T (bf16)
                pl.BlockSpec(memory_space=pl.ANY),                   # W_ih2^T (bf16)
                pl.BlockSpec(memory_space=pl.ANY),                   # W_hh2^T (bf16)
                pl.BlockSpec((1, g), lambda t: (0, 0)),              # b1
                pl.BlockSpec((1, g), lambda t: (0, 0)),              # b2
                pl.BlockSpec(regw_p.shape, lambda t: (0, 0)),        # reg_w
                pl.BlockSpec((1, o), lambda t: (0, 0)),              # reg_b
            ],
            out_specs=out_spec,
            scratch_shapes=[
                pltpu.VMEM((in_sz, g), jnp.bfloat16),   # W_ih1^T resident
                pltpu.VMEM((hp, g), jnp.bfloat16),      # W_hh1^T resident
                pltpu.VMEM((hp, g), jnp.bfloat16),      # W_ih2^T resident
                pltpu.VMEM((hp, g), jnp.bfloat16),      # W_hh2^T resident
                pltpu.SemaphoreType.DMA((4,)),          # one-shot weight DMAs
                pltpu.VMEM((bp, hp), jnp.float32),      # h1 carry
                pltpu.VMEM((bp, hp), jnp.float32),      # c1 carry
                pltpu.VMEM((bp, hp), jnp.float32),      # h2 carry
                pltpu.VMEM((bp, hp), jnp.float32),      # c2 carry
                pltpu.VMEM((tb, bp, hp), jnp.float32),  # layer-2 h block (head input)
            ],
        ),
        compiler_params=pltpu.CompilerParams(
            # The time recurrence is serial: this axis must stay "arbitrary".
            dimension_semantics=("arbitrary",),
            vmem_limit_bytes=vmem_limit,
        ),
    )(xp, wih1_t, whh1_t, wih2_t, whh2_t, b1, b2, regw_p, regb_p)

    if o == 1:
        return out.reshape(sp, bp)[:s, :b][..., None]
    return out[:s, :b, :]


def init_params(key, input_size, hidden_size, output_size=1, num_layers=2):
    """PyTorch-style uniform(-1/sqrt(H), 1/sqrt(H)) init, deterministic."""
    k = 1.0 / jnp.sqrt(jnp.float32(hidden_size))
    lstm_params = []
    for layer in range(num_layers):
        in_sz = input_size if layer == 0 else hidden_size
        key, k1, k2, k3, k4 = jax.random.split(key, 5)
        w_ih = jax.random.uniform(k1, (4 * hidden_size, in_sz), jnp.float32, -k, k)
        w_hh = jax.random.uniform(k2, (4 * hidden_size, hidden_size), jnp.float32, -k, k)
        b_ih = jax.random.uniform(k3, (4 * hidden_size,), jnp.float32, -k, k)
        b_hh = jax.random.uniform(k4, (4 * hidden_size,), jnp.float32, -k, k)
        lstm_params.append((w_ih, w_hh, b_ih, b_hh))
    key, k5, k6 = jax.random.split(key, 3)
    reg_w = jax.random.uniform(k5, (output_size, hidden_size), jnp.float32, -k, k)
    reg_b = jax.random.uniform(k6, (output_size,), jnp.float32, -k, k)
    return {"lstm": lstm_params, "reg_w": reg_w, "reg_b": reg_b}


# ---------------------------- pure-JAX reference -----------------------------

def lstm_reg_reference(x, params, emulate_bf16=False):
    """f32 reference; emulate_bf16=True mirrors the kernel's mixed precision
    (bf16 matmul inputs, f32 accumulation / gate math)."""
    if emulate_bf16:
        cast = lambda a: a.astype(jnp.bfloat16).astype(jnp.float32)
    else:
        cast = lambda a: a.astype(jnp.float32)

    h_seq = x.astype(jnp.float32)
    for (w_ih, w_hh, b_ih, b_hh) in params["lstm"]:
        S, B, _ = h_seq.shape
        H = w_hh.shape[1]
        wih_t = cast(w_ih).T
        whh_t = cast(w_hh).T
        bias = (b_ih + b_hh).astype(jnp.float32)
        h_t = jnp.zeros((B, H), jnp.float32)
        c_t = jnp.zeros((B, H), jnp.float32)
        outs = []
        for t in range(S):
            gates = jnp.dot(cast(h_seq[t]), wih_t) + jnp.dot(cast(h_t), whh_t) + bias
            i_g = jax.nn.sigmoid(gates[:, 0 * H:1 * H])
            f_g = jax.nn.sigmoid(gates[:, 1 * H:2 * H])
            g_g = jnp.tanh(gates[:, 2 * H:3 * H])
            o_g = jax.nn.sigmoid(gates[:, 3 * H:4 * H])
            c_t = f_g * c_t + i_g * g_g
            h_t = o_g * jnp.tanh(c_t)
            outs.append(h_t)
        h_seq = jnp.stack(outs, axis=0)
    S, B, H = h_seq.shape
    out = jnp.dot(h_seq.reshape(S * B, H), params["reg_w"].T.astype(jnp.float32))
    out = out + params["reg_b"].astype(jnp.float32)
    return out.reshape(S, B, -1)


if __name__ == "__main__":
    seq, batch = 8, 2
    input_size, hidden_size, output_size, num_layers = 8, 32, 1, 2

    key = jax.random.PRNGKey(0)
    key, kx, kp = jax.random.split(key, 3)
    x = jax.random.normal(kx, (seq, batch, input_size), jnp.float32)
    params = init_params(kp, input_size, hidden_size, output_size, num_layers)

    out = jax.block_until_ready(lstm_reg_forward(x, params))
    assert out.shape == (seq, batch, output_size), out.shape

    with jax.default_matmul_precision("float32"):
        ref_faithful = lstm_reg_reference(x, params, emulate_bf16=True)
        ref_f32 = lstm_reg_reference(x, params, emulate_bf16=False)

    # Tight check against a reference that mirrors the kernel's mixed precision.
    err = float(jnp.max(jnp.abs(out - ref_faithful)))
    assert jnp.allclose(out, ref_faithful, atol=5e-3, rtol=5e-3), err
    # Loose sanity check against the pure-f32 module semantics (bf16 drift).
    err32 = float(jnp.max(jnp.abs(out - ref_f32)))
    assert jnp.allclose(out, ref_f32, atol=5e-2, rtol=5e-2), err32

    print("KERNEL_OK")
</pallas_src>

<mosaic_0001>
module attributes {stable_mosaic.version = 11 : i64} {
  func.func @_fused_lstm_head_kernel(%arg0: i32, %arg1: memref<8x8x8xbf16, #tpu.memory_space<vmem>>, %arg2: memref<8x512xbf16, #tpu.memory_space<any>>, %arg3: memref<128x512xbf16, #tpu.memory_space<any>>, %arg4: memref<128x512xbf16, #tpu.memory_space<any>>, %arg5: memref<128x512xbf16, #tpu.memory_space<any>>, %arg6: memref<1x512xf32, #tpu.memory_space<vmem>>, %arg7: memref<1x512xf32, #tpu.memory_space<vmem>>, %arg8: memref<1x128xf32, #tpu.memory_space<vmem>>, %arg9: memref<1x1xf32, #tpu.memory_space<vmem>>, %arg10: memref<1x8x8xf32, #tpu.memory_space<vmem>>, %arg11: memref<8x512xbf16, #tpu.memory_space<vmem>>, %arg12: memref<128x512xbf16, #tpu.memory_space<vmem>>, %arg13: memref<128x512xbf16, #tpu.memory_space<vmem>>, %arg14: memref<128x512xbf16, #tpu.memory_space<vmem>>, %arg15: memref<4x!tpu.dma_semaphore, #tpu.memory_space<semaphore_mem>>, %arg16: memref<8x128xf32, #tpu.memory_space<vmem>>, %arg17: memref<8x128xf32, #tpu.memory_space<vmem>>, %arg18: memref<8x128xf32, #tpu.memory_space<vmem>>, %arg19: memref<8x128xf32, #tpu.memory_space<vmem>>, %arg20: memref<8x8x128xf32, #tpu.memory_space<vmem>>) attributes {dimension_semantics = [#tpu.dimension_semantics<arbitrary>], iteration_bounds = array<i64: 1>, scalar_prefetch = 0 : i64, scratch_operands = 10 : i64, tpu.core_type = #tpu.core_type<tc>, window_params = [{transform_indices = @transform_0, window_bounds = array<i64: 8, 8, 8>}, {}, {}, {}, {}, {pipeline_mode = #tpu.pipeline_mode<synchronous>, transform_indices = @transform_5, window_bounds = array<i64: 1, 512>}, {pipeline_mode = #tpu.pipeline_mode<synchronous>, transform_indices = @transform_6, window_bounds = array<i64: 1, 512>}, {pipeline_mode = #tpu.pipeline_mode<synchronous>, transform_indices = @transform_7, window_bounds = array<i64: 1, 128>}, {pipeline_mode = #tpu.pipeline_mode<synchronous>, transform_indices = @transform_8, window_bounds = array<i64: 1, 1>}, {transform_indices = @transform_9, window_bounds = array<i64: 1, 8, 8>}]} {
    %c0_i32 = arith.constant 0 : i32
    %0 = arith.cmpi eq, %arg0, %c0_i32 : i32
    %1 = arith.extui %0 : i1 to i32
    %c0_i32_0 = arith.constant 0 : i32
    %2 = arith.cmpi ne, %1, %c0_i32_0 : i32
    scf.if %2 {
      %c0_i32_207 = arith.constant 0 : i32
      %605 = tpu.memref_slice %arg15[%c0_i32_207] : memref<4x!tpu.dma_semaphore, #tpu.memory_space<semaphore_mem>> -> memref<1x!tpu.dma_semaphore, #tpu.memory_space<semaphore_mem>>
      %606 = tpu.memref_squeeze %605 : memref<1x!tpu.dma_semaphore, #tpu.memory_space<semaphore_mem>> -> memref<!tpu.dma_semaphore, #tpu.memory_space<semaphore_mem>>
      tpu.enqueue_dma source(%arg2 : memref<8x512xbf16, #tpu.memory_space<any>>) target(%arg11 : memref<8x512xbf16, #tpu.memory_space<vmem>>) target_semaphore(%606 : memref<!tpu.dma_semaphore, #tpu.memory_space<semaphore_mem>>)
      %c1_i32_208 = arith.constant 1 : i32
      %607 = tpu.memref_slice %arg15[%c1_i32_208] : memref<4x!tpu.dma_semaphore, #tpu.memory_space<semaphore_mem>> -> memref<1x!tpu.dma_semaphore, #tpu.memory_space<semaphore_mem>>
      %608 = tpu.memref_squeeze %607 : memref<1x!tpu.dma_semaphore, #tpu.memory_space<semaphore_mem>> -> memref<!tpu.dma_semaphore, #tpu.memory_space<semaphore_mem>>
      tpu.enqueue_dma source(%arg3 : memref<128x512xbf16, #tpu.memory_space<any>>) target(%arg12 : memref<128x512xbf16, #tpu.memory_space<vmem>>) target_semaphore(%608 : memref<!tpu.dma_semaphore, #tpu.memory_space<semaphore_mem>>)
      %c2_i32_209 = arith.constant 2 : i32
      %609 = tpu.memref_slice %arg15[%c2_i32_209] : memref<4x!tpu.dma_semaphore, #tpu.memory_space<semaphore_mem>> -> memref<1x!tpu.dma_semaphore, #tpu.memory_space<semaphore_mem>>
      %610 = tpu.memref_squeeze %609 : memref<1x!tpu.dma_semaphore, #tpu.memory_space<semaphore_mem>> -> memref<!tpu.dma_semaphore, #tpu.memory_space<semaphore_mem>>
      tpu.enqueue_dma source(%arg4 : memref<128x512xbf16, #tpu.memory_space<any>>) target(%arg13 : memref<128x512xbf16, #tpu.memory_space<vmem>>) target_semaphore(%610 : memref<!tpu.dma_semaphore, #tpu.memory_space<semaphore_mem>>)
      %c3_i32_210 = arith.constant 3 : i32
      %611 = tpu.memref_slice %arg15[%c3_i32_210] : memref<4x!tpu.dma_semaphore, #tpu.memory_space<semaphore_mem>> -> memref<1x!tpu.dma_semaphore, #tpu.memory_space<semaphore_mem>>
      %612 = tpu.memref_squeeze %611 : memref<1x!tpu.dma_semaphore, #tpu.memory_space<semaphore_mem>> -> memref<!tpu.dma_semaphore, #tpu.memory_space<semaphore_mem>>
      tpu.enqueue_dma source(%arg5 : memref<128x512xbf16, #tpu.memory_space<any>>) target(%arg14 : memref<128x512xbf16, #tpu.memory_space<vmem>>) target_semaphore(%612 : memref<!tpu.dma_semaphore, #tpu.memory_space<semaphore_mem>>)
      %c0_i32_211 = arith.constant 0 : i32
      %613 = tpu.memref_slice %arg15[%c0_i32_211] : memref<4x!tpu.dma_semaphore, #tpu.memory_space<semaphore_mem>> -> memref<1x!tpu.dma_semaphore, #tpu.memory_space<semaphore_mem>>
      %614 = tpu.memref_squeeze %613 : memref<1x!tpu.dma_semaphore, #tpu.memory_space<semaphore_mem>> -> memref<!tpu.dma_semaphore, #tpu.memory_space<semaphore_mem>>
      tpu.wait_dma2 semaphore(%614 : memref<!tpu.dma_semaphore, #tpu.memory_space<semaphore_mem>>) src(%arg2 : memref<8x512xbf16, #tpu.memory_space<any>>) dst(%arg11 : memref<8x512xbf16, #tpu.memory_space<vmem>>)
      %c1_i32_212 = arith.constant 1 : i32
      %615 = tpu.memref_slice %arg15[%c1_i32_212] : memref<4x!tpu.dma_semaphore, #tpu.memory_space<semaphore_mem>> -> memref<1x!tpu.dma_semaphore, #tpu.memory_space<semaphore_mem>>
      %616 = tpu.memref_squeeze %615 : memref<1x!tpu.dma_semaphore, #tpu.memory_space<semaphore_mem>> -> memref<!tpu.dma_semaphore, #tpu.memory_space<semaphore_mem>>
      tpu.wait_dma2 semaphore(%616 : memref<!tpu.dma_semaphore, #tpu.memory_space<semaphore_mem>>) src(%arg3 : memref<128x512xbf16, #tpu.memory_space<any>>) dst(%arg12 : memref<128x512xbf16, #tpu.memory_space<vmem>>)
      %c2_i32_213 = arith.constant 2 : i32
      %617 = tpu.memref_slice %arg15[%c2_i32_213] : memref<4x!tpu.dma_semaphore, #tpu.memory_space<semaphore_mem>> -> memref<1x!tpu.dma_semaphore, #tpu.memory_space<semaphore_mem>>
      %618 = tpu.memref_squeeze %617 : memref<1x!tpu.dma_semaphore, #tpu.memory_space<semaphore_mem>> -> memref<!tpu.dma_semaphore, #tpu.memory_space<semaphore_mem>>
      tpu.wait_dma2 semaphore(%618 : memref<!tpu.dma_semaphore, #tpu.memory_space<semaphore_mem>>) src(%arg4 : memref<128x512xbf16, #tpu.memory_space<any>>) dst(%arg13 : memref<128x512xbf16, #tpu.memory_space<vmem>>)
      %c3_i32_214 = arith.constant 3 : i32
      %619 = tpu.memref_slice %arg15[%c3_i32_214] : memref<4x!tpu.dma_semaphore, #tpu.memory_space<semaphore_mem>> -> memref<1x!tpu.dma_semaphore, #tpu.memory_space<semaphore_mem>>
      %620 = tpu.memref_squeeze %619 : memref<1x!tpu.dma_semaphore, #tpu.memory_space<semaphore_mem>> -> memref<!tpu.dma_semaphore, #tpu.memory_space<semaphore_mem>>
      tpu.wait_dma2 semaphore(%620 : memref<!tpu.dma_semaphore, #tpu.memory_space<semaphore_mem>>) src(%arg5 : memref<128x512xbf16, #tpu.memory_space<any>>) dst(%arg14 : memref<128x512xbf16, #tpu.memory_space<vmem>>)
      %cst_215 = arith.constant 0.000000e+00 : f32
      %621 = vector.broadcast %cst_215 : f32 to vector<8x128xf32>
      %c0_216 = arith.constant 0 : index
      %c0_217 = arith.constant 0 : index
      %622 = vector.load %arg16[%c0_216, %c0_217] : memref<8x128xf32, #tpu.memory_space<vmem>>, vector<8x128xf32>
      tpu.vector_store %arg16[%c0_216, %c0_217], %621 {strides = array<i32>} : memref<8x128xf32, #tpu.memory_space<vmem>>, vector<8x128xf32>,
      %cst_218 = arith.constant 0.000000e+00 : f32
      %623 = vector.broadcast %cst_218 : f32 to vector<8x128xf32>
      %c0_219 = arith.constant 0 : index
      %c0_220 = arith.constant 0 : index
      %624 = vector.load %arg17[%c0_219, %c0_220] : memref<8x128xf32, #tpu.memory_space<vmem>>, vector<8x128xf32>
      tpu.vector_store %arg17[%c0_219, %c0_220], %623 {strides = array<i32>} : memref<8x128xf32, #tpu.memory_space<vmem>>, vector<8x128xf32>,
      %cst_221 = arith.constant 0.000000e+00 : f32
      %625 = vector.broadcast %cst_221 : f32 to vector<8x128xf32>
      %c0_222 = arith.constant 0 : index
      %c0_223 = arith.constant 0 : index
      %626 = vector.load %arg18[%c0_222, %c0_223] : memref<8x128xf32, #tpu.memory_space<vmem>>, vector<8x128xf32>
      tpu.vector_store %arg18[%c0_222, %c0_223], %625 {strides = array<i32>} : memref<8x128xf32, #tpu.memory_space<vmem>>, vector<8x128xf32>,
      %cst_224 = arith.constant 0.000000e+00 : f32
      %627 = vector.broadcast %cst_224 : f32 to vector<8x128xf32>
      %c0_225 = arith.constant 0 : index
      %c0_226 = arith.constant 0 : index
      %628 = vector.load %arg19[%c0_225, %c0_226] : memref<8x128xf32, #tpu.memory_space<vmem>>, vector<8x128xf32>
      tpu.vector_store %arg19[%c0_225, %c0_226], %627 {strides = array<i32>} : memref<8x128xf32, #tpu.memory_space<vmem>>, vector<8x128xf32>,
    } else {
    }
    %c0 = arith.constant 0 : index
    %c0_1 = arith.constant 0 : index
    %3 = vector.load %arg6[%c0, %c0_1] : memref<1x512xf32, #tpu.memory_space<vmem>>, vector<1x512xf32>
    %4 = vector.shape_cast %3 : vector<1x512xf32> to vector<1x512xf32>
    %5 = vector.broadcast %4 : vector<1x512xf32> to vector<8x512xf32>
    %c0_2 = arith.constant 0 : index
    %c0_3 = arith.constant 0 : index
    %6 = vector.load %arg7[%c0_2, %c0_3] : memref<1x512xf32, #tpu.memory_space<vmem>>, vector<1x512xf32>
    %7 = vector.shape_cast %6 : vector<1x512xf32> to vector<1x512xf32>
    %8 = vector.broadcast %7 : vector<1x512xf32> to vector<8x512xf32>
    %c0_4 = arith.constant 0 : index
    %c0_5 = arith.constant 0 : index
    %9 = vector.load %arg16[%c0_4, %c0_5] : memref<8x128xf32, #tpu.memory_space<vmem>>, vector<8x128xf32>
    %c0_6 = arith.constant 0 : index
    %c0_7 = arith.constant 0 : index
    %10 = vector.load %arg17[%c0_6, %c0_7] : memref<8x128xf32, #tpu.memory_space<vmem>>, vector<8x128xf32>
    %c0_8 = arith.constant 0 : index
    %c0_9 = arith.constant 0 : index
    %11 = vector.load %arg18[%c0_8, %c0_9] : memref<8x128xf32, #tpu.memory_space<vmem>>, vector<8x128xf32>
    %c0_10 = arith.constant 0 : index
    %c0_11 = arith.constant 0 : index
    %12 = vector.load %arg19[%c0_10, %c0_11] : memref<8x128xf32, #tpu.memory_space<vmem>>, vector<8x128xf32>
    %c0_i32_12 = arith.constant 0 : i32
    %13 = arith.index_cast %c0_i32_12 : i32 to index
    %c0_13 = arith.constant 0 : index
    %c0_14 = arith.constant 0 : index
    %14 = vector.load %arg1[%13, %c0_13, %c0_14] : memref<8x8x8xbf16, #tpu.memory_space<vmem>>, vector<1x8x8xbf16>
    %15 = vector.shape_cast %14 : vector<1x8x8xbf16> to vector<8x8xbf16>
    %c0_15 = arith.constant 0 : index
    %c0_16 = arith.constant 0 : index
    %16 = vector.load %arg11[%c0_15, %c0_16] : memref<8x512xbf16, #tpu.memory_space<vmem>>, vector<8x512xbf16>
    %cst = arith.constant dense<0.000000e+00> : vector<8x512xf32>
    %17 = tpu.matmul %15, %16, %cst {dimension_numbers = #tpu.dot_dimension_numbers<[1], [0], [0], [1], [0, 0, 1, 1], [], []>} : vector<8x8xbf16>, vector<8x512xbf16>, vector<8x512xf32> -> vector<8x512xf32>
    %18 = arith.truncf %9 : vector<8x128xf32> to vector<8x128xbf16>
    %c0_17 = arith.constant 0 : index
    %c0_18 = arith.constant 0 : index
    %19 = vector.load %arg12[%c0_17, %c0_18] : memref<128x512xbf16, #tpu.memory_space<vmem>>, vector<128x512xbf16>
    %cst_19 = arith.constant dense<0.000000e+00> : vector<8x512xf32>
    %20 = tpu.matmul %18, %19, %cst_19 {dimension_numbers = #tpu.dot_dimension_numbers<[1], [0], [0], [1], [0, 0, 1, 1], [], []>} : vector<8x128xbf16>, vector<128x512xbf16>, vector<8x512xf32> -> vector<8x512xf32>
    %21 = arith.addf %17, %20 : vector<8x512xf32>
    %22 = arith.addf %21, %5 : vector<8x512xf32>
    %23 = vector.extract_strided_slice %22 {offsets = [0, 0], sizes = [8, 128], strides = [1, 1]} : vector<8x512xf32> to vector<8x128xf32>
    %24 = arith.negf %23 : vector<8x128xf32>
    %25 = math.exp %24 : vector<8x128xf32>
    %cst_20 = arith.constant 1.000000e+00 : f32
    %26 = vector.broadcast %cst_20 : f32 to vector<8x128xf32>
    %27 = arith.addf %26, %25 : vector<8x128xf32>
    %28 = arith.divf %26, %27 : vector<8x128xf32>
    %29 = vector.extract_strided_slice %22 {offsets = [0, 128], sizes = [8, 128], strides = [1, 1]} : vector<8x512xf32> to vector<8x128xf32>
    %30 = arith.negf %29 : vector<8x128xf32>
    %31 = math.exp %30 : vector<8x128xf32>
    %cst_21 = arith.constant 1.000000e+00 : f32
    %32 = vector.broadcast %cst_21 : f32 to vector<8x128xf32>
    %33 = arith.addf %32, %31 : vector<8x128xf32>
    %34 = arith.divf %32, %33 : vector<8x128xf32>
    %35 = vector.extract_strided_slice %22 {offsets = [0, 256], sizes = [8, 128], strides = [1, 1]} : vector<8x512xf32> to vector<8x128xf32>
    %36 = math.tanh %35 : vector<8x128xf32>
    %37 = vector.extract_strided_slice %22 {offsets = [0, 384], sizes = [8, 128], strides = [1, 1]} : vector<8x512xf32> to vector<8x128xf32>
    %38 = arith.negf %37 : vector<8x128xf32>
    %39 = math.exp %38 : vector<8x128xf32>
    %cst_22 = arith.constant 1.000000e+00 : f32
    %40 = vector.broadcast %cst_22 : f32 to vector<8x128xf32>
    %41 = arith.addf %40, %39 : vector<8x128xf32>
    %42 = arith.divf %40, %41 : vector<8x128xf32>
    %43 = arith.mulf %34, %10 : vector<8x128xf32>
    %44 = arith.mulf %28, %36 : vector<8x128xf32>
    %45 = arith.addf %43, %44 : vector<8x128xf32>
    %46 = math.tanh %45 : vector<8x128xf32>
    %47 = arith.mulf %42, %46 : vector<8x128xf32>
    %48 = arith.truncf %47 : vector<8x128xf32> to vector<8x128xbf16>
    %c0_23 = arith.constant 0 : index
    %c0_24 = arith.constant 0 : index
    %49 = vector.load %arg13[%c0_23, %c0_24] : memref<128x512xbf16, #tpu.memory_space<vmem>>, vector<128x512xbf16>
    %cst_25 = arith.constant dense<0.000000e+00> : vector<8x512xf32>
    %50 = tpu.matmul %48, %49, %cst_25 {dimension_numbers = #tpu.dot_dimension_numbers<[1], [0], [0], [1], [0, 0, 1, 1], [], []>} : vector<8x128xbf16>, vector<128x512xbf16>, vector<8x512xf32> -> vector<8x512xf32>
    %51 = arith.truncf %11 : vector<8x128xf32> to vector<8x128xbf16>
    %c0_26 = arith.constant 0 : index
    %c0_27 = arith.constant 0 : index
    %52 = vector.load %arg14[%c0_26, %c0_27] : memref<128x512xbf16, #tpu.memory_space<vmem>>, vector<128x512xbf16>
    %cst_28 = arith.constant dense<0.000000e+00> : vector<8x512xf32>
    %53 = tpu.matmul %51, %52, %cst_28 {dimension_numbers = #tpu.dot_dimension_numbers<[1], [0], [0], [1], [0, 0, 1, 1], [], []>} : vector<8x128xbf16>, vector<128x512xbf16>, vector<8x512xf32> -> vector<8x512xf32>
    %54 = arith.addf %50, %53 : vector<8x512xf32>
    %55 = arith.addf %54, %8 : vector<8x512xf32>
    %56 = vector.extract_strided_slice %55 {offsets = [0, 0], sizes = [8, 128], strides = [1, 1]} : vector<8x512xf32> to vector<8x128xf32>
    %57 = arith.negf %56 : vector<8x128xf32>
    %58 = math.exp %57 : vector<8x128xf32>
    %cst_29 = arith.constant 1.000000e+00 : f32
    %59 = vector.broadcast %cst_29 : f32 to vector<8x128xf32>
    %60 = arith.addf %59, %58 : vector<8x128xf32>
    %61 = arith.divf %59, %60 : vector<8x128xf32>
    %62 = vector.extract_strided_slice %55 {offsets = [0, 128], sizes = [8, 128], strides = [1, 1]} : vector<8x512xf32> to vector<8x128xf32>
    %63 = arith.negf %62 : vector<8x128xf32>
    %64 = math.exp %63 : vector<8x128xf32>
    %cst_30 = arith.constant 1.000000e+00 : f32
    %65 = vector.broadcast %cst_30 : f32 to vector<8x128xf32>
    %66 = arith.addf %65, %64 : vector<8x128xf32>
    %67 = arith.divf %65, %66 : vector<8x128xf32>
    %68 = vector.extract_strided_slice %55 {offsets = [0, 256], sizes = [8, 128], strides = [1, 1]} : vector<8x512xf32> to vector<8x128xf32>
    %69 = math.tanh %68 : vector<8x128xf32>
    %70 = vector.extract_strided_slice %55 {offsets = [0, 384], sizes = [8, 128], strides = [1, 1]} : vector<8x512xf32> to vector<8x128xf32>
    %71 = arith.negf %70 : vector<8x128xf32>
    %72 = math.exp %71 : vector<8x128xf32>
    %cst_31 = arith.constant 1.000000e+00 : f32
    %73 = vector.broadcast %cst_31 : f32 to vector<8x128xf32>
    %74 = arith.addf %73, %72 : vector<8x128xf32>
    %75 = arith.divf %73, %74 : vector<8x128xf32>
    %76 = arith.mulf %67, %12 : vector<8x128xf32>
    %77 = arith.mulf %61, %69 : vector<8x128xf32>
    %78 = arith.addf %76, %77 : vector<8x128xf32>
    %79 = math.tanh %78 : vector<8x128xf32>
    %80 = arith.mulf %75, %79 : vector<8x128xf32>
    %81 = arith.index_cast %c0_i32_12 : i32 to index
    %c0_32 = arith.constant 0 : index
    %c0_33 = arith.constant 0 : index
    %82 = vector.load %arg20[%81, %c0_32, %c0_33] : memref<8x8x128xf32, #tpu.memory_space<vmem>>, vector<1x8x128xf32>
    %83 = vector.shape_cast %82 : vector<1x8x128xf32> to vector<8x128xf32>
    %84 = vector.shape_cast %80 : vector<8x128xf32> to vector<1x8x128xf32>
    tpu.vector_store %arg20[%81, %c0_32, %c0_33], %84 {strides = array<i32>} : memref<8x8x128xf32, #tpu.memory_space<vmem>>, vector<1x8x128xf32>,
    %c1_i32 = arith.constant 1 : i32
    %85 = arith.index_cast %c1_i32 : i32 to index
    %c0_34 = arith.constant 0 : index
    %c0_35 = arith.constant 0 : index
    %86 = vector.load %arg1[%85, %c0_34, %c0_35] : memref<8x8x8xbf16, #tpu.memory_space<vmem>>, vector<1x8x8xbf16>
    %87 = vector.shape_cast %86 : vector<1x8x8xbf16> to vector<8x8xbf16>
    %c0_36 = arith.constant 0 : index
    %c0_37 = arith.constant 0 : index
    %88 = vector.load %arg11[%c0_36, %c0_37] : memref<8x512xbf16, #tpu.memory_space<vmem>>, vector<8x512xbf16>
    %cst_38 = arith.constant dense<0.000000e+00> : vector<8x512xf32>
    %89 = tpu.matmul %87, %88, %cst_38 {dimension_numbers = #tpu.dot_dimension_numbers<[1], [0], [0], [1], [0, 0, 1, 1], [], []>} : vector<8x8xbf16>, vector<8x512xbf16>, vector<8x512xf32> -> vector<8x512xf32>
    %90 = arith.truncf %47 : vector<8x128xf32> to vector<8x128xbf16>
    %c0_39 = arith.constant 0 : index
    %c0_40 = arith.constant 0 : index
    %91 = vector.load %arg12[%c0_39, %c0_40] : memref<128x512xbf16, #tpu.memory_space<vmem>>, vector<128x512xbf16>
    %cst_41 = arith.constant dense<0.000000e+00> : vector<8x512xf32>
    %92 = tpu.matmul %90, %91, %cst_41 {dimension_numbers = #tpu.dot_dimension_numbers<[1], [0], [0], [1], [0, 0, 1, 1], [], []>} : vector<8x128xbf16>, vector<128x512xbf16>, vector<8x512xf32> -> vector<8x512xf32>
    %93 = arith.addf %89, %92 : vector<8x512xf32>
    %94 = arith.addf %93, %5 : vector<8x512xf32>
    %95 = vector.extract_strided_slice %94 {offsets = [0, 0], sizes = [8, 128], strides = [1, 1]} : vector<8x512xf32> to vector<8x128xf32>
    %96 = arith.negf %95 : vector<8x128xf32>
    %97 = math.exp %96 : vector<8x128xf32>
    %cst_42 = arith.constant 1.000000e+00 : f32
    %98 = vector.broadcast %cst_42 : f32 to vector<8x128xf32>
    %99 = arith.addf %98, %97 : vector<8x128xf32>
    %100 = arith.divf %98, %99 : vector<8x128xf32>
    %101 = vector.extract_strided_slice %94 {offsets = [0, 128], sizes = [8, 128], strides = [1, 1]} : vector<8x512xf32> to vector<8x128xf32>
    %102 = arith.negf %101 : vector<8x128xf32>
    %103 = math.exp %102 : vector<8x128xf32>
    %cst_43 = arith.constant 1.000000e+00 : f32
    %104 = vector.broadcast %cst_43 : f32 to vector<8x128xf32>
    %105 = arith.addf %104, %103 : vector<8x128xf32>
    %106 = arith.divf %104, %105 : vector<8x128xf32>
    %107 = vector.extract_strided_slice %94 {offsets = [0, 256], sizes = [8, 128], strides = [1, 1]} : vector<8x512xf32> to vector<8x128xf32>
    %108 = math.tanh %107 : vector<8x128xf32>
    %109 = vector.extract_strided_slice %94 {offsets = [0, 384], sizes = [8, 128], strides = [1, 1]} : vector<8x512xf32> to vector<8x128xf32>
    %110 = arith.negf %109 : vector<8x128xf32>
    %111 = math.exp %110 : vector<8x128xf32>
    %cst_44 = arith.constant 1.000000e+00 : f32
    %112 = vector.broadcast %cst_44 : f32 to vector<8x128xf32>
    %113 = arith.addf %112, %111 : vector<8x128xf32>
    %114 = arith.divf %112, %113 : vector<8x128xf32>
    %115 = arith.mulf %106, %45 : vector<8x128xf32>
    %116 = arith.mulf %100, %108 : vector<8x128xf32>
    %117 = arith.addf %115, %116 : vector<8x128xf32>
    %118 = math.tanh %117 : vector<8x128xf32>
    %119 = arith.mulf %114, %118 : vector<8x128xf32>
    %120 = arith.truncf %119 : vector<8x128xf32> to vector<8x128xbf16>
    %c0_45 = arith.constant 0 : index
    %c0_46 = arith.constant 0 : index
    %121 = vector.load %arg13[%c0_45, %c0_46] : memref<128x512xbf16, #tpu.memory_space<vmem>>, vector<128x512xbf16>
    %cst_47 = arith.constant dense<0.000000e+00> : vector<8x512xf32>
    %122 = tpu.matmul %120, %121, %cst_47 {dimension_numbers = #tpu.dot_dimension_numbers<[1], [0], [0], [1], [0, 0, 1, 1], [], []>} : vector<8x128xbf16>, vector<128x512xbf16>, vector<8x512xf32> -> vector<8x512xf32>
    %123 = arith.truncf %80 : vector<8x128xf32> to vector<8x128xbf16>
    %c0_48 = arith.constant 0 : index
    %c0_49 = arith.constant 0 : index
    %124 = vector.load %arg14[%c0_48, %c0_49] : memref<128x512xbf16, #tpu.memory_space<vmem>>, vector<128x512xbf16>
    %cst_50 = arith.constant dense<0.000000e+00> : vector<8x512xf32>
    %125 = tpu.matmul %123, %124, %cst_50 {dimension_numbers = #tpu.dot_dimension_numbers<[1], [0], [0], [1], [0, 0, 1, 1], [], []>} : vector<8x128xbf16>, vector<128x512xbf16>, vector<8x512xf32> -> vector<8x512xf32>
    %126 = arith.addf %122, %125 : vector<8x512xf32>
    %127 = arith.addf %126, %8 : vector<8x512xf32>
    %128 = vector.extract_strided_slice %127 {offsets = [0, 0], sizes = [8, 128], strides = [1, 1]} : vector<8x512xf32> to vector<8x128xf32>
    %129 = arith.negf %128 : vector<8x128xf32>
    %130 = math.exp %129 : vector<8x128xf32>
    %cst_51 = arith.constant 1.000000e+00 : f32
    %131 = vector.broadcast %cst_51 : f32 to vector<8x128xf32>
    %132 = arith.addf %131, %130 : vector<8x128xf32>
    %133 = arith.divf %131, %132 : vector<8x128xf32>
    %134 = vector.extract_strided_slice %127 {offsets = [0, 128], sizes = [8, 128], strides = [1, 1]} : vector<8x512xf32> to vector<8x128xf32>
    %135 = arith.negf %134 : vector<8x128xf32>
    %136 = math.exp %135 : vector<8x128xf32>
    %cst_52 = arith.constant 1.000000e+00 : f32
    %137 = vector.broadcast %cst_52 : f32 to vector<8x128xf32>
    %138 = arith.addf %137, %136 : vector<8x128xf32>
    %139 = arith.divf %137, %138 : vector<8x128xf32>
    %140 = vector.extract_strided_slice %127 {offsets = [0, 256], sizes = [8, 128], strides = [1, 1]} : vector<8x512xf32> to vector<8x128xf32>
    %141 = math.tanh %140 : vector<8x128xf32>
    %142 = vector.extract_strided_slice %127 {offsets = [0, 384], sizes = [8, 128], strides = [1, 1]} : vector<8x512xf32> to vector<8x128xf32>
    %143 = arith.negf %142 : vector<8x128xf32>
    %144 = math.exp %143 : vector<8x128xf32>
    %cst_53 = arith.constant 1.000000e+00 : f32
    %145 = vector.broadcast %cst_53 : f32 to vector<8x128xf32>
    %146 = arith.addf %145, %144 : vector<8x128xf32>
    %147 = arith.divf %145, %146 : vector<8x128xf32>
    %148 = arith.mulf %139, %78 : vector<8x128xf32>
    %149 = arith.mulf %133, %141 : vector<8x128xf32>
    %150 = arith.addf %148, %149 : vector<8x128xf32>
    %151 = math.tanh %150 : vector<8x128xf32>
    %152 = arith.mulf %147, %151 : vector<8x128xf32>
    %153 = arith.index_cast %c1_i32 : i32 to index
    %c0_54 = arith.constant 0 : index
    %c0_55 = arith.constant 0 : index
    %154 = vector.load %arg20[%153, %c0_54, %c0_55] : memref<8x8x128xf32, #tpu.memory_space<vmem>>, vector<1x8x128xf32>
    %155 = vector.shape_cast %154 : vector<1x8x128xf32> to vector<8x128xf32>
    %156 = vector.shape_cast %152 : vector<8x128xf32> to vector<1x8x128xf32>
    tpu.vector_store %arg20[%153, %c0_54, %c0_55], %156 {strides = array<i32>} : memref<8x8x128xf32, #tpu.memory_space<vmem>>, vector<1x8x128xf32>,
    %c2_i32 = arith.constant 2 : i32
    %157 = arith.index_cast %c2_i32 : i32 to index
    %c0_56 = arith.constant 0 : index
    %c0_57 = arith.constant 0 : index
    %158 = vector.load %arg1[%157, %c0_56, %c0_57] : memref<8x8x8xbf16, #tpu.memory_space<vmem>>, vector<1x8x8xbf16>
    %159 = vector.shape_cast %158 : vector<1x8x8xbf16> to vector<8x8xbf16>
    %c0_58 = arith.constant 0 : index
    %c0_59 = arith.constant 0 : index
    %160 = vector.load %arg11[%c0_58, %c0_59] : memref<8x512xbf16, #tpu.memory_space<vmem>>, vector<8x512xbf16>
    %cst_60 = arith.constant dense<0.000000e+00> : vector<8x512xf32>
    %161 = tpu.matmul %159, %160, %cst_60 {dimension_numbers = #tpu.dot_dimension_numbers<[1], [0], [0], [1], [0, 0, 1, 1], [], []>} : vector<8x8xbf16>, vector<8x512xbf16>, vector<8x512xf32> -> vector<8x512xf32>
    %162 = arith.truncf %119 : vector<8x128xf32> to vector<8x128xbf16>
    %c0_61 = arith.constant 0 : index
    %c0_62 = arith.constant 0 : index
    %163 = vector.load %arg12[%c0_61, %c0_62] : memref<128x512xbf16, #tpu.memory_space<vmem>>, vector<128x512xbf16>
    %cst_63 = arith.constant dense<0.000000e+00> : vector<8x512xf32>
    %164 = tpu.matmul %162, %163, %cst_63 {dimension_numbers = #tpu.dot_dimension_numbers<[1], [0], [0], [1], [0, 0, 1, 1], [], []>} : vector<8x128xbf16>, vector<128x512xbf16>, vector<8x512xf32> -> vector<8x512xf32>
    %165 = arith.addf %161, %164 : vector<8x512xf32>
    %166 = arith.addf %165, %5 : vector<8x512xf32>
    %167 = vector.extract_strided_slice %166 {offsets = [0, 0], sizes = [8, 128], strides = [1, 1]} : vector<8x512xf32> to vector<8x128xf32>
    %168 = arith.negf %167 : vector<8x128xf32>
    %169 = math.exp %168 : vector<8x128xf32>
    %cst_64 = arith.constant 1.000000e+00 : f32
    %170 = vector.broadcast %cst_64 : f32 to vector<8x128xf32>
    %171 = arith.addf %170, %169 : vector<8x128xf32>
    %172 = arith.divf %170, %171 : vector<8x128xf32>
    %173 = vector.extract_strided_slice %166 {offsets = [0, 128], sizes = [8, 128], strides = [1, 1]} : vector<8x512xf32> to vector<8x128xf32>
    %174 = arith.negf %173 : vector<8x128xf32>
    %175 = math.exp %174 : vector<8x128xf32>
    %cst_65 = arith.constant 1.000000e+00 : f32
    %176 = vector.broadcast %cst_65 : f32 to vector<8x128xf32>
    %177 = arith.addf %176, %175 : vector<8x128xf32>
    %178 = arith.divf %176, %177 : vector<8x128xf32>
    %179 = vector.extract_strided_slice %166 {offsets = [0, 256], sizes = [8, 128], strides = [1, 1]} : vector<8x512xf32> to vector<8x128xf32>
    %180 = math.tanh %179 : vector<8x128xf32>
    %181 = vector.extract_strided_slice %166 {offsets = [0, 384], sizes = [8, 128], strides = [1, 1]} : vector<8x512xf32> to vector<8x128xf32>
    %182 = arith.negf %181 : vector<8x128xf32>
    %183 = math.exp %182 : vector<8x128xf32>
    %cst_66 = arith.constant 1.000000e+00 : f32
    %184 = vector.broadcast %cst_66 : f32 to vector<8x128xf32>
    %185 = arith.addf %184, %183 : vector<8x128xf32>
    %186 = arith.divf %184, %185 : vector<8x128xf32>
    %187 = arith.mulf %178, %117 : vector<8x128xf32>
    %188 = arith.mulf %172, %180 : vector<8x128xf32>
    %189 = arith.addf %187, %188 : vector<8x128xf32>
    %190 = math.tanh %189 : vector<8x128xf32>
    %191 = arith.mulf %186, %190 : vector<8x128xf32>
    %192 = arith.truncf %191 : vector<8x128xf32> to vector<8x128xbf16>
    %c0_67 = arith.constant 0 : index
    %c0_68 = arith.constant 0 : index
    %193 = vector.load %arg13[%c0_67, %c0_68] : memref<128x512xbf16, #tpu.memory_space<vmem>>, vector<128x512xbf16>
    %cst_69 = arith.constant dense<0.000000e+00> : vector<8x512xf32>
    %194 = tpu.matmul %192, %193, %cst_69 {dimension_numbers = #tpu.dot_dimension_numbers<[1], [0], [0], [1], [0, 0, 1, 1], [], []>} : vector<8x128xbf16>, vector<128x512xbf16>, vector<8x512xf32> -> vector<8x512xf32>
    %195 = arith.truncf %152 : vector<8x128xf32> to vector<8x128xbf16>
    %c0_70 = arith.constant 0 : index
    %c0_71 = arith.constant 0 : index
    %196 = vector.load %arg14[%c0_70, %c0_71] : memref<128x512xbf16, #tpu.memory_space<vmem>>, vector<128x512xbf16>
    %cst_72 = arith.constant dense<0.000000e+00> : vector<8x512xf32>
    %197 = tpu.matmul %195, %196, %cst_72 {dimension_numbers = #tpu.dot_dimension_numbers<[1], [0], [0], [1], [0, 0, 1, 1], [], []>} : vector<8x128xbf16>, vector<128x512xbf16>, vector<8x512xf32> -> vector<8x512xf32>
    %198 = arith.addf %194, %197 : vector<8x512xf32>
    %199 = arith.addf %198, %8 : vector<8x512xf32>
    %200 = vector.extract_strided_slice %199 {offsets = [0, 0], sizes = [8, 128], strides = [1, 1]} : vector<8x512xf32> to vector<8x128xf32>
    %201 = arith.negf %200 : vector<8x128xf32>
    %202 = math.exp %201 : vector<8x128xf32>
    %cst_73 = arith.constant 1.000000e+00 : f32
    %203 = vector.broadcast %cst_73 : f32 to vector<8x128xf32>
    %204 = arith.addf %203, %202 : vector<8x128xf32>
    %205 = arith.divf %203, %204 : vector<8x128xf32>
    %206 = vector.extract_strided_slice %199 {offsets = [0, 128], sizes = [8, 128], strides = [1, 1]} : vector<8x512xf32> to vector<8x128xf32>
    %207 = arith.negf %206 : vector<8x128xf32>
    %208 = math.exp %207 : vector<8x128xf32>
    %cst_74 = arith.constant 1.000000e+00 : f32
    %209 = vector.broadcast %cst_74 : f32 to vector<8x128xf32>
    %210 = arith.addf %209, %208 : vector<8x128xf32>
    %211 = arith.divf %209, %210 : vector<8x128xf32>
    %212 = vector.extract_strided_slice %199 {offsets = [0, 256], sizes = [8, 128], strides = [1, 1]} : vector<8x512xf32> to vector<8x128xf32>
    %213 = math.tanh %212 : vector<8x128xf32>
    %214 = vector.extract_strided_slice %199 {offsets = [0, 384], sizes = [8, 128], strides = [1, 1]} : vector<8x512xf32> to vector<8x128xf32>
    %215 = arith.negf %214 : vector<8x128xf32>
    %216 = math.exp %215 : vector<8x128xf32>
    %cst_75 = arith.constant 1.000000e+00 : f32
    %217 = vector.broadcast %cst_75 : f32 to vector<8x128xf32>
    %218 = arith.addf %217, %216 : vector<8x128xf32>
    %219 = arith.divf %217, %218 : vector<8x128xf32>
    %220 = arith.mulf %211, %150 : vector<8x128xf32>
    %221 = arith.mulf %205, %213 : vector<8x128xf32>
    %222 = arith.addf %220, %221 : vector<8x128xf32>
    %223 = math.tanh %222 : vector<8x128xf32>
    %224 = arith.mulf %219, %223 : vector<8x128xf32>
    %225 = arith.index_cast %c2_i32 : i32 to index
    %c0_76 = arith.constant 0 : index
    %c0_77 = arith.constant 0 : index
    %226 = vector.load %arg20[%225, %c0_76, %c0_77] : memref<8x8x128xf32, #tpu.memory_space<vmem>>, vector<1x8x128xf32>
    %227 = vector.shape_cast %226 : vector<1x8x128xf32> to vector<8x128xf32>
    %228 = vector.shape_cast %224 : vector<8x128xf32> to vector<1x8x128xf32>
    tpu.vector_store %arg20[%225, %c0_76, %c0_77], %228 {strides = array<i32>} : memref<8x8x128xf32, #tpu.memory_space<vmem>>, vector<1x8x128xf32>,
    %c3_i32 = arith.constant 3 : i32
    %229 = arith.index_cast %c3_i32 : i32 to index
    %c0_78 = arith.constant 0 : index
    %c0_79 = arith.constant 0 : index
    %230 = vector.load %arg1[%229, %c0_78, %c0_79] : memref<8x8x8xbf16, #tpu.memory_space<vmem>>, vector<1x8x8xbf16>
    %231 = vector.shape_cast %230 : vector<1x8x8xbf16> to vector<8x8xbf16>
    %c0_80 = arith.constant 0 : index
    %c0_81 = arith.constant 0 : index
    %232 = vector.load %arg11[%c0_80, %c0_81] : memref<8x512xbf16, #tpu.memory_space<vmem>>, vector<8x512xbf16>
    %cst_82 = arith.constant dense<0.000000e+00> : vector<8x512xf32>
    %233 = tpu.matmul %231, %232, %cst_82 {dimension_numbers = #tpu.dot_dimension_numbers<[1], [0], [0], [1], [0, 0, 1, 1], [], []>} : vector<8x8xbf16>, vector<8x512xbf16>, vector<8x512xf32> -> vector<8x512xf32>
    %234 = arith.truncf %191 : vector<8x128xf32> to vector<8x128xbf16>
    %c0_83 = arith.constant 0 : index
    %c0_84 = arith.constant 0 : index
    %235 = vector.load %arg12[%c0_83, %c0_84] : memref<128x512xbf16, #tpu.memory_space<vmem>>, vector<128x512xbf16>
    %cst_85 = arith.constant dense<0.000000e+00> : vector<8x512xf32>
    %236 = tpu.matmul %234, %235, %cst_85 {dimension_numbers = #tpu.dot_dimension_numbers<[1], [0], [0], [1], [0, 0, 1, 1], [], []>} : vector<8x128xbf16>, vector<128x512xbf16>, vector<8x512xf32> -> vector<8x512xf32>
    %237 = arith.addf %233, %236 : vector<8x512xf32>
    %238 = arith.addf %237, %5 : vector<8x512xf32>
    %239 = vector.extract_strided_slice %238 {offsets = [0, 0], sizes = [8, 128], strides = [1, 1]} : vector<8x512xf32> to vector<8x128xf32>
    %240 = arith.negf %239 : vector<8x128xf32>
    %241 = math.exp %240 : vector<8x128xf32>
    %cst_86 = arith.constant 1.000000e+00 : f32
    %242 = vector.broadcast %cst_86 : f32 to vector<8x128xf32>
    %243 = arith.addf %242, %241 : vector<8x128xf32>
    %244 = arith.divf %242, %243 : vector<8x128xf32>
    %245 = vector.extract_strided_slice %238 {offsets = [0, 128], sizes = [8, 128], strides = [1, 1]} : vector<8x512xf32> to vector<8x128xf32>
    %246 = arith.negf %245 : vector<8x128xf32>
    %247 = math.exp %246 : vector<8x128xf32>
    %cst_87 = arith.constant 1.000000e+00 : f32
    %248 = vector.broadcast %cst_87 : f32 to vector<8x128xf32>
    %249 = arith.addf %248, %247 : vector<8x128xf32>
    %250 = arith.divf %248, %249 : vector<8x128xf32>
    %251 = vector.extract_strided_slice %238 {offsets = [0, 256], sizes = [8, 128], strides = [1, 1]} : vector<8x512xf32> to vector<8x128xf32>
    %252 = math.tanh %251 : vector<8x128xf32>
    %253 = vector.extract_strided_slice %238 {offsets = [0, 384], sizes = [8, 128], strides = [1, 1]} : vector<8x512xf32> to vector<8x128xf32>
    %254 = arith.negf %253 : vector<8x128xf32>
    %255 = math.exp %254 : vector<8x128xf32>
    %cst_88 = arith.constant 1.000000e+00 : f32
    %256 = vector.broadcast %cst_88 : f32 to vector<8x128xf32>
    %257 = arith.addf %256, %255 : vector<8x128xf32>
    %258 = arith.divf %256, %257 : vector<8x128xf32>
    %259 = arith.mulf %250, %189 : vector<8x128xf32>
    %260 = arith.mulf %244, %252 : vector<8x128xf32>
    %261 = arith.addf %259, %260 : vector<8x128xf32>
    %262 = math.tanh %261 : vector<8x128xf32>
    %263 = arith.mulf %258, %262 : vector<8x128xf32>
    %264 = arith.truncf %263 : vector<8x128xf32> to vector<8x128xbf16>
    %c0_89 = arith.constant 0 : index
    %c0_90 = arith.constant 0 : index
    %265 = vector.load %arg13[%c0_89, %c0_90] : memref<128x512xbf16, #tpu.memory_space<vmem>>, vector<128x512xbf16>
    %cst_91 = arith.constant dense<0.000000e+00> : vector<8x512xf32>
    %266 = tpu.matmul %264, %265, %cst_91 {dimension_numbers = #tpu.dot_dimension_numbers<[1], [0], [0], [1], [0, 0, 1, 1], [], []>} : vector<8x128xbf16>, vector<128x512xbf16>, vector<8x512xf32> -> vector<8x512xf32>
    %267 = arith.truncf %224 : vector<8x128xf32> to vector<8x128xbf16>
    %c0_92 = arith.constant 0 : index
    %c0_93 = arith.constant 0 : index
    %268 = vector.load %arg14[%c0_92, %c0_93] : memref<128x512xbf16, #tpu.memory_space<vmem>>, vector<128x512xbf16>
    %cst_94 = arith.constant dense<0.000000e+00> : vector<8x512xf32>
    %269 = tpu.matmul %267, %268, %cst_94 {dimension_numbers = #tpu.dot_dimension_numbers<[1], [0], [0], [1], [0, 0, 1, 1], [], []>} : vector<8x128xbf16>, vector<128x512xbf16>, vector<8x512xf32> -> vector<8x512xf32>
    %270 = arith.addf %266, %269 : vector<8x512xf32>
    %271 = arith.addf %270, %8 : vector<8x512xf32>
    %272 = vector.extract_strided_slice %271 {offsets = [0, 0], sizes = [8, 128], strides = [1, 1]} : vector<8x512xf32> to vector<8x128xf32>
    %273 = arith.negf %272 : vector<8x128xf32>
    %274 = math.exp %273 : vector<8x128xf32>
    %cst_95 = arith.constant 1.000000e+00 : f32
    %275 = vector.broadcast %cst_95 : f32 to vector<8x128xf32>
    %276 = arith.addf %275, %274 : vector<8x128xf32>
    %277 = arith.divf %275, %276 : vector<8x128xf32>
    %278 = vector.extract_strided_slice %271 {offsets = [0, 128], sizes = [8, 128], strides = [1, 1]} : vector<8x512xf32> to vector<8x128xf32>
    %279 = arith.negf %278 : vector<8x128xf32>
    %280 = math.exp %279 : vector<8x128xf32>
    %cst_96 = arith.constant 1.000000e+00 : f32
    %281 = vector.broadcast %cst_96 : f32 to vector<8x128xf32>
    %282 = arith.addf %281, %280 : vector<8x128xf32>
    %283 = arith.divf %281, %282 : vector<8x128xf32>
    %284 = vector.extract_strided_slice %271 {offsets = [0, 256], sizes = [8, 128], strides = [1, 1]} : vector<8x512xf32> to vector<8x128xf32>
    %285 = math.tanh %284 : vector<8x128xf32>
    %286 = vector.extract_strided_slice %271 {offsets = [0, 384], sizes = [8, 128], strides = [1, 1]} : vector<8x512xf32> to vector<8x128xf32>
    %287 = arith.negf %286 : vector<8x128xf32>
    %288 = math.exp %287 : vector<8x128xf32>
    %cst_97 = arith.constant 1.000000e+00 : f32
    %289 = vector.broadcast %cst_97 : f32 to vector<8x128xf32>
    %290 = arith.addf %289, %288 : vector<8x128xf32>
    %291 = arith.divf %289, %290 : vector<8x128xf32>
    %292 = arith.mulf %283, %222 : vector<8x128xf32>
    %293 = arith.mulf %277, %285 : vector<8x128xf32>
    %294 = arith.addf %292, %293 : vector<8x128xf32>
    %295 = math.tanh %294 : vector<8x128xf32>
    %296 = arith.mulf %291, %295 : vector<8x128xf32>
    %297 = arith.index_cast %c3_i32 : i32 to index
    %c0_98 = arith.constant 0 : index
    %c0_99 = arith.constant 0 : index
    %298 = vector.load %arg20[%297, %c0_98, %c0_99] : memref<8x8x128xf32, #tpu.memory_space<vmem>>, vector<1x8x128xf32>
    %299 = vector.shape_cast %298 : vector<1x8x128xf32> to vector<8x128xf32>
    %300 = vector.shape_cast %296 : vector<8x128xf32> to vector<1x8x128xf32>
    tpu.vector_store %arg20[%297, %c0_98, %c0_99], %300 {strides = array<i32>} : memref<8x8x128xf32, #tpu.memory_space<vmem>>, vector<1x8x128xf32>,
    %c4_i32 = arith.constant 4 : i32
    %301 = arith.index_cast %c4_i32 : i32 to index
    %c0_100 = arith.constant 0 : index
    %c0_101 = arith.constant 0 : index
    %302 = vector.load %arg1[%301, %c0_100, %c0_101] : memref<8x8x8xbf16, #tpu.memory_space<vmem>>, vector<1x8x8xbf16>
    %303 = vector.shape_cast %302 : vector<1x8x8xbf16> to vector<8x8xbf16>
    %c0_102 = arith.constant 0 : index
    %c0_103 = arith.constant 0 : index
    %304 = vector.load %arg11[%c0_102, %c0_103] : memref<8x512xbf16, #tpu.memory_space<vmem>>, vector<8x512xbf16>
    %cst_104 = arith.constant dense<0.000000e+00> : vector<8x512xf32>
    %305 = tpu.matmul %303, %304, %cst_104 {dimension_numbers = #tpu.dot_dimension_numbers<[1], [0], [0], [1], [0, 0, 1, 1], [], []>} : vector<8x8xbf16>, vector<8x512xbf16>, vector<8x512xf32> -> vector<8x512xf32>
    %306 = arith.truncf %263 : vector<8x128xf32> to vector<8x128xbf16>
    %c0_105 = arith.constant 0 : index
    %c0_106 = arith.constant 0 : index
    %307 = vector.load %arg12[%c0_105, %c0_106] : memref<128x512xbf16, #tpu.memory_space<vmem>>, vector<128x512xbf16>
    %cst_107 = arith.constant dense<0.000000e+00> : vector<8x512xf32>
    %308 = tpu.matmul %306, %307, %cst_107 {dimension_numbers = #tpu.dot_dimension_numbers<[1], [0], [0], [1], [0, 0, 1, 1], [], []>} : vector<8x128xbf16>, vector<128x512xbf16>, vector<8x512xf32> -> vector<8x512xf32>
    %309 = arith.addf %305, %308 : vector<8x512xf32>
    %310 = arith.addf %309, %5 : vector<8x512xf32>
    %311 = vector.extract_strided_slice %310 {offsets = [0, 0], sizes = [8, 128], strides = [1, 1]} : vector<8x512xf32> to vector<8x128xf32>
    %312 = arith.negf %311 : vector<8x128xf32>
    %313 = math.exp %312 : vector<8x128xf32>
    %cst_108 = arith.constant 1.000000e+00 : f32
    %314 = vector.broadcast %cst_108 : f32 to vector<8x128xf32>
    %315 = arith.addf %314, %313 : vector<8x128xf32>
    %316 = arith.divf %314, %315 : vector<8x128xf32>
    %317 = vector.extract_strided_slice %310 {offsets = [0, 128], sizes = [8, 128], strides = [1, 1]} : vector<8x512xf32> to vector<8x128xf32>
    %318 = arith.negf %317 : vector<8x128xf32>
    %319 = math.exp %318 : vector<8x128xf32>
    %cst_109 = arith.constant 1.000000e+00 : f32
    %320 = vector.broadcast %cst_109 : f32 to vector<8x128xf32>
    %321 = arith.addf %320, %319 : vector<8x128xf32>
    %322 = arith.divf %320, %321 : vector<8x128xf32>
    %323 = vector.extract_strided_slice %310 {offsets = [0, 256], sizes = [8, 128], strides = [1, 1]} : vector<8x512xf32> to vector<8x128xf32>
    %324 = math.tanh %323 : vector<8x128xf32>
    %325 = vector.extract_strided_slice %310 {offsets = [0, 384], sizes = [8, 128], strides = [1, 1]} : vector<8x512xf32> to vector<8x128xf32>
    %326 = arith.negf %325 : vector<8x128xf32>
    %327 = math.exp %326 : vector<8x128xf32>
    %cst_110 = arith.constant 1.000000e+00 : f32
    %328 = vector.broadcast %cst_110 : f32 to vector<8x128xf32>
    %329 = arith.addf %328, %327 : vector<8x128xf32>
    %330 = arith.divf %328, %329 : vector<8x128xf32>
    %331 = arith.mulf %322, %261 : vector<8x128xf32>
    %332 = arith.mulf %316, %324 : vector<8x128xf32>
    %333 = arith.addf %331, %332 : vector<8x128xf32>
    %334 = math.tanh %333 : vector<8x128xf32>
    %335 = arith.mulf %330, %334 : vector<8x128xf32>
    %336 = arith.truncf %335 : vector<8x128xf32> to vector<8x128xbf16>
    %c0_111 = arith.constant 0 : index
    %c0_112 = arith.constant 0 : index
    %337 = vector.load %arg13[%c0_111, %c0_112] : memref<128x512xbf16, #tpu.memory_space<vmem>>, vector<128x512xbf16>
    %cst_113 = arith.constant dense<0.000000e+00> : vector<8x512xf32>
    %338 = tpu.matmul %336, %337, %cst_113 {dimension_numbers = #tpu.dot_dimension_numbers<[1], [0], [0], [1], [0, 0, 1, 1], [], []>} : vector<8x128xbf16>, vector<128x512xbf16>, vector<8x512xf32> -> vector<8x512xf32>
    %339 = arith.truncf %296 : vector<8x128xf32> to vector<8x128xbf16>
    %c0_114 = arith.constant 0 : index
    %c0_115 = arith.constant 0 : index
    %340 = vector.load %arg14[%c0_114, %c0_115] : memref<128x512xbf16, #tpu.memory_space<vmem>>, vector<128x512xbf16>
    %cst_116 = arith.constant dense<0.000000e+00> : vector<8x512xf32>
    %341 = tpu.matmul %339, %340, %cst_116 {dimension_numbers = #tpu.dot_dimension_numbers<[1], [0], [0], [1], [0, 0, 1, 1], [], []>} : vector<8x128xbf16>, vector<128x512xbf16>, vector<8x512xf32> -> vector<8x512xf32>
    %342 = arith.addf %338, %341 : vector<8x512xf32>
    %343 = arith.addf %342, %8 : vector<8x512xf32>
    %344 = vector.extract_strided_slice %343 {offsets = [0, 0], sizes = [8, 128], strides = [1, 1]} : vector<8x512xf32> to vector<8x128xf32>
    %345 = arith.negf %344 : vector<8x128xf32>
    %346 = math.exp %345 : vector<8x128xf32>
    %cst_117 = arith.constant 1.000000e+00 : f32
    %347 = vector.broadcast %cst_117 : f32 to vector<8x128xf32>
    %348 = arith.addf %347, %346 : vector<8x128xf32>
    %349 = arith.divf %347, %348 : vector<8x128xf32>
    %350 = vector.extract_strided_slice %343 {offsets = [0, 128], sizes = [8, 128], strides = [1, 1]} : vector<8x512xf32> to vector<8x128xf32>
    %351 = arith.negf %350 : vector<8x128xf32>
    %352 = math.exp %351 : vector<8x128xf32>
    %cst_118 = arith.constant 1.000000e+00 : f32
    %353 = vector.broadcast %cst_118 : f32 to vector<8x128xf32>
    %354 = arith.addf %353, %352 : vector<8x128xf32>
    %355 = arith.divf %353, %354 : vector<8x128xf32>
    %356 = vector.extract_strided_slice %343 {offsets = [0, 256], sizes = [8, 128], strides = [1, 1]} : vector<8x512xf32> to vector<8x128xf32>
    %357 = math.tanh %356 : vector<8x128xf32>
    %358 = vector.extract_strided_slice %343 {offsets = [0, 384], sizes = [8, 128], strides = [1, 1]} : vector<8x512xf32> to vector<8x128xf32>
    %359 = arith.negf %358 : vector<8x128xf32>
    %360 = math.exp %359 : vector<8x128xf32>
    %cst_119 = arith.constant 1.000000e+00 : f32
    %361 = vector.broadcast %cst_119 : f32 to vector<8x128xf32>
    %362 = arith.addf %361, %360 : vector<8x128xf32>
    %363 = arith.divf %361, %362 : vector<8x128xf32>
    %364 = arith.mulf %355, %294 : vector<8x128xf32>
    %365 = arith.mulf %349, %357 : vector<8x128xf32>
    %366 = arith.addf %364, %365 : vector<8x128xf32>
    %367 = math.tanh %366 : vector<8x128xf32>
    %368 = arith.mulf %363, %367 : vector<8x128xf32>
    %369 = arith.index_cast %c4_i32 : i32 to index
    %c0_120 = arith.constant 0 : index
    %c0_121 = arith.constant 0 : index
    %370 = vector.load %arg20[%369, %c0_120, %c0_121] : memref<8x8x128xf32, #tpu.memory_space<vmem>>, vector<1x8x128xf32>
    %371 = vector.shape_cast %370 : vector<1x8x128xf32> to vector<8x128xf32>
    %372 = vector.shape_cast %368 : vector<8x128xf32> to vector<1x8x128xf32>
    tpu.vector_store %arg20[%369, %c0_120, %c0_121], %372 {strides = array<i32>} : memref<8x8x128xf32, #tpu.memory_space<vmem>>, vector<1x8x128xf32>,
    %c5_i32 = arith.constant 5 : i32
    %373 = arith.index_cast %c5_i32 : i32 to index
    %c0_122 = arith.constant 0 : index
    %c0_123 = arith.constant 0 : index
    %374 = vector.load %arg1[%373, %c0_122, %c0_123] : memref<8x8x8xbf16, #tpu.memory_space<vmem>>, vector<1x8x8xbf16>
    %375 = vector.shape_cast %374 : vector<1x8x8xbf16> to vector<8x8xbf16>
    %c0_124 = arith.constant 0 : index
    %c0_125 = arith.constant 0 : index
    %376 = vector.load %arg11[%c0_124, %c0_125] : memref<8x512xbf16, #tpu.memory_space<vmem>>, vector<8x512xbf16>
    %cst_126 = arith.constant dense<0.000000e+00> : vector<8x512xf32>
    %377 = tpu.matmul %375, %376, %cst_126 {dimension_numbers = #tpu.dot_dimension_numbers<[1], [0], [0], [1], [0, 0, 1, 1], [], []>} : vector<8x8xbf16>, vector<8x512xbf16>, vector<8x512xf32> -> vector<8x512xf32>
    %378 = arith.truncf %335 : vector<8x128xf32> to vector<8x128xbf16>
    %c0_127 = arith.constant 0 : index
    %c0_128 = arith.constant 0 : index
    %379 = vector.load %arg12[%c0_127, %c0_128] : memref<128x512xbf16, #tpu.memory_space<vmem>>, vector<128x512xbf16>
    %cst_129 = arith.constant dense<0.000000e+00> : vector<8x512xf32>
    %380 = tpu.matmul %378, %379, %cst_129 {dimension_numbers = #tpu.dot_dimension_numbers<[1], [0], [0], [1], [0, 0, 1, 1], [], []>} : vector<8x128xbf16>, vector<128x512xbf16>, vector<8x512xf32> -> vector<8x512xf32>
    %381 = arith.addf %377, %380 : vector<8x512xf32>
    %382 = arith.addf %381, %5 : vector<8x512xf32>
    %383 = vector.extract_strided_slice %382 {offsets = [0, 0], sizes = [8, 128], strides = [1, 1]} : vector<8x512xf32> to vector<8x128xf32>
    %384 = arith.negf %383 : vector<8x128xf32>
    %385 = math.exp %384 : vector<8x128xf32>
    %cst_130 = arith.constant 1.000000e+00 : f32
    %386 = vector.broadcast %cst_130 : f32 to vector<8x128xf32>
    %387 = arith.addf %386, %385 : vector<8x128xf32>
    %388 = arith.divf %386, %387 : vector<8x128xf32>
    %389 = vector.extract_strided_slice %382 {offsets = [0, 128], sizes = [8, 128], strides = [1, 1]} : vector<8x512xf32> to vector<8x128xf32>
    %390 = arith.negf %389 : vector<8x128xf32>
    %391 = math.exp %390 : vector<8x128xf32>
    %cst_131 = arith.constant 1.000000e+00 : f32
    %392 = vector.broadcast %cst_131 : f32 to vector<8x128xf32>
    %393 = arith.addf %392, %391 : vector<8x128xf32>
    %394 = arith.divf %392, %393 : vector<8x128xf32>
    %395 = vector.extract_strided_slice %382 {offsets = [0, 256], sizes = [8, 128], strides = [1, 1]} : vector<8x512xf32> to vector<8x128xf32>
    %396 = math.tanh %395 : vector<8x128xf32>
    %397 = vector.extract_strided_slice %382 {offsets = [0, 384], sizes = [8, 128], strides = [1, 1]} : vector<8x512xf32> to vector<8x128xf32>
    %398 = arith.negf %397 : vector<8x128xf32>
    %399 = math.exp %398 : vector<8x128xf32>
    %cst_132 = arith.constant 1.000000e+00 : f32
    %400 = vector.broadcast %cst_132 : f32 to vector<8x128xf32>
    %401 = arith.addf %400, %399 : vector<8x128xf32>
    %402 = arith.divf %400, %401 : vector<8x128xf32>
    %403 = arith.mulf %394, %333 : vector<8x128xf32>
    %404 = arith.mulf %388, %396 : vector<8x128xf32>
    %405 = arith.addf %403, %404 : vector<8x128xf32>
    %406 = math.tanh %405 : vector<8x128xf32>
    %407 = arith.mulf %402, %406 : vector<8x128xf32>
    %408 = arith.truncf %407 : vector<8x128xf32> to vector<8x128xbf16>
    %c0_133 = arith.constant 0 : index
    %c0_134 = arith.constant 0 : index
    %409 = vector.load %arg13[%c0_133, %c0_134] : memref<128x512xbf16, #tpu.memory_space<vmem>>, vector<128x512xbf16>
    %cst_135 = arith.constant dense<0.000000e+00> : vector<8x512xf32>
    %410 = tpu.matmul %408, %409, %cst_135 {dimension_numbers = #tpu.dot_dimension_numbers<[1], [0], [0], [1], [0, 0, 1, 1], [], []>} : vector<8x128xbf16>, vector<128x512xbf16>, vector<8x512xf32> -> vector<8x512xf32>
    %411 = arith.truncf %368 : vector<8x128xf32> to vector<8x128xbf16>
    %c0_136 = arith.constant 0 : index
    %c0_137 = arith.constant 0 : index
    %412 = vector.load %arg14[%c0_136, %c0_137] : memref<128x512xbf16, #tpu.memory_space<vmem>>, vector<128x512xbf16>
    %cst_138 = arith.constant dense<0.000000e+00> : vector<8x512xf32>
    %413 = tpu.matmul %411, %412, %cst_138 {dimension_numbers = #tpu.dot_dimension_numbers<[1], [0], [0], [1], [0, 0, 1, 1], [], []>} : vector<8x128xbf16>, vector<128x512xbf16>, vector<8x512xf32> -> vector<8x512xf32>
    %414 = arith.addf %410, %413 : vector<8x512xf32>
    %415 = arith.addf %414, %8 : vector<8x512xf32>
    %416 = vector.extract_strided_slice %415 {offsets = [0, 0], sizes = [8, 128], strides = [1, 1]} : vector<8x512xf32> to vector<8x128xf32>
    %417 = arith.negf %416 : vector<8x128xf32>
    %418 = math.exp %417 : vector<8x128xf32>
    %cst_139 = arith.constant 1.000000e+00 : f32
    %419 = vector.broadcast %cst_139 : f32 to vector<8x128xf32>
    %420 = arith.addf %419, %418 : vector<8x128xf32>
    %421 = arith.divf %419, %420 : vector<8x128xf32>
    %422 = vector.extract_strided_slice %415 {offsets = [0, 128], sizes = [8, 128], strides = [1, 1]} : vector<8x512xf32> to vector<8x128xf32>
    %423 = arith.negf %422 : vector<8x128xf32>
    %424 = math.exp %423 : vector<8x128xf32>
    %cst_140 = arith.constant 1.000000e+00 : f32
    %425 = vector.broadcast %cst_140 : f32 to vector<8x128xf32>
    %426 = arith.addf %425, %424 : vector<8x128xf32>
    %427 = arith.divf %425, %426 : vector<8x128xf32>
    %428 = vector.extract_strided_slice %415 {offsets = [0, 256], sizes = [8, 128], strides = [1, 1]} : vector<8x512xf32> to vector<8x128xf32>
    %429 = math.tanh %428 : vector<8x128xf32>
    %430 = vector.extract_strided_slice %415 {offsets = [0, 384], sizes = [8, 128], strides = [1, 1]} : vector<8x512xf32> to vector<8x128xf32>
    %431 = arith.negf %430 : vector<8x128xf32>
    %432 = math.exp %431 : vector<8x128xf32>
    %cst_141 = arith.constant 1.000000e+00 : f32
    %433 = vector.broadcast %cst_141 : f32 to vector<8x128xf32>
    %434 = arith.addf %433, %432 : vector<8x128xf32>
    %435 = arith.divf %433, %434 : vector<8x128xf32>
    %436 = arith.mulf %427, %366 : vector<8x128xf32>
    %437 = arith.mulf %421, %429 : vector<8x128xf32>
    %438 = arith.addf %436, %437 : vector<8x128xf32>
    %439 = math.tanh %438 : vector<8x128xf32>
    %440 = arith.mulf %435, %439 : vector<8x128xf32>
    %441 = arith.index_cast %c5_i32 : i32 to index
    %c0_142 = arith.constant 0 : index
    %c0_143 = arith.constant 0 : index
    %442 = vector.load %arg20[%441, %c0_142, %c0_143] : memref<8x8x128xf32, #tpu.memory_space<vmem>>, vector<1x8x128xf32>
    %443 = vector.shape_cast %442 : vector<1x8x128xf32> to vector<8x128xf32>
    %444 = vector.shape_cast %440 : vector<8x128xf32> to vector<1x8x128xf32>
    tpu.vector_store %arg20[%441, %c0_142, %c0_143], %444 {strides = array<i32>} : memref<8x8x128xf32, #tpu.memory_space<vmem>>, vector<1x8x128xf32>,
    %c6_i32 = arith.constant 6 : i32
    %445 = arith.index_cast %c6_i32 : i32 to index
    %c0_144 = arith.constant 0 : index
    %c0_145 = arith.constant 0 : index
    %446 = vector.load %arg1[%445, %c0_144, %c0_145] : memref<8x8x8xbf16, #tpu.memory_space<vmem>>, vector<1x8x8xbf16>
    %447 = vector.shape_cast %446 : vector<1x8x8xbf16> to vector<8x8xbf16>
    %c0_146 = arith.constant 0 : index
    %c0_147 = arith.constant 0 : index
    %448 = vector.load %arg11[%c0_146, %c0_147] : memref<8x512xbf16, #tpu.memory_space<vmem>>, vector<8x512xbf16>
    %cst_148 = arith.constant dense<0.000000e+00> : vector<8x512xf32>
    %449 = tpu.matmul %447, %448, %cst_148 {dimension_numbers = #tpu.dot_dimension_numbers<[1], [0], [0], [1], [0, 0, 1, 1], [], []>} : vector<8x8xbf16>, vector<8x512xbf16>, vector<8x512xf32> -> vector<8x512xf32>
    %450 = arith.truncf %407 : vector<8x128xf32> to vector<8x128xbf16>
    %c0_149 = arith.constant 0 : index
    %c0_150 = arith.constant 0 : index
    %451 = vector.load %arg12[%c0_149, %c0_150] : memref<128x512xbf16, #tpu.memory_space<vmem>>, vector<128x512xbf16>
    %cst_151 = arith.constant dense<0.000000e+00> : vector<8x512xf32>
    %452 = tpu.matmul %450, %451, %cst_151 {dimension_numbers = #tpu.dot_dimension_numbers<[1], [0], [0], [1], [0, 0, 1, 1], [], []>} : vector<8x128xbf16>, vector<128x512xbf16>, vector<8x512xf32> -> vector<8x512xf32>
    %453 = arith.addf %449, %452 : vector<8x512xf32>
    %454 = arith.addf %453, %5 : vector<8x512xf32>
    %455 = vector.extract_strided_slice %454 {offsets = [0, 0], sizes = [8, 128], strides = [1, 1]} : vector<8x512xf32> to vector<8x128xf32>
    %456 = arith.negf %455 : vector<8x128xf32>
    %457 = math.exp %456 : vector<8x128xf32>
    %cst_152 = arith.constant 1.000000e+00 : f32
    %458 = vector.broadcast %cst_152 : f32 to vector<8x128xf32>
    %459 = arith.addf %458, %457 : vector<8x128xf32>
    %460 = arith.divf %458, %459 : vector<8x128xf32>
    %461 = vector.extract_strided_slice %454 {offsets = [0, 128], sizes = [8, 128], strides = [1, 1]} : vector<8x512xf32> to vector<8x128xf32>
    %462 = arith.negf %461 : vector<8x128xf32>
    %463 = math.exp %462 : vector<8x128xf32>
    %cst_153 = arith.constant 1.000000e+00 : f32
    %464 = vector.broadcast %cst_153 : f32 to vector<8x128xf32>
    %465 = arith.addf %464, %463 : vector<8x128xf32>
    %466 = arith.divf %464, %465 : vector<8x128xf32>
    %467 = vector.extract_strided_slice %454 {offsets = [0, 256], sizes = [8, 128], strides = [1, 1]} : vector<8x512xf32> to vector<8x128xf32>
    %468 = math.tanh %467 : vector<8x128xf32>
    %469 = vector.extract_strided_slice %454 {offsets = [0, 384], sizes = [8, 128], strides = [1, 1]} : vector<8x512xf32> to vector<8x128xf32>
    %470 = arith.negf %469 : vector<8x128xf32>
    %471 = math.exp %470 : vector<8x128xf32>
    %cst_154 = arith.constant 1.000000e+00 : f32
    %472 = vector.broadcast %cst_154 : f32 to vector<8x128xf32>
    %473 = arith.addf %472, %471 : vector<8x128xf32>
    %474 = arith.divf %472, %473 : vector<8x128xf32>
    %475 = arith.mulf %466, %405 : vector<8x128xf32>
    %476 = arith.mulf %460, %468 : vector<8x128xf32>
    %477 = arith.addf %475, %476 : vector<8x128xf32>
    %478 = math.tanh %477 : vector<8x128xf32>
    %479 = arith.mulf %474, %478 : vector<8x128xf32>
    %480 = arith.truncf %479 : vector<8x128xf32> to vector<8x128xbf16>
    %c0_155 = arith.constant 0 : index
    %c0_156 = arith.constant 0 : index
    %481 = vector.load %arg13[%c0_155, %c0_156] : memref<128x512xbf16, #tpu.memory_space<vmem>>, vector<128x512xbf16>
    %cst_157 = arith.constant dense<0.000000e+00> : vector<8x512xf32>
    %482 = tpu.matmul %480, %481, %cst_157 {dimension_numbers = #tpu.dot_dimension_numbers<[1], [0], [0], [1], [0, 0, 1, 1], [], []>} : vector<8x128xbf16>, vector<128x512xbf16>, vector<8x512xf32> -> vector<8x512xf32>
    %483 = arith.truncf %440 : vector<8x128xf32> to vector<8x128xbf16>
    %c0_158 = arith.constant 0 : index
    %c0_159 = arith.constant 0 : index
    %484 = vector.load %arg14[%c0_158, %c0_159] : memref<128x512xbf16, #tpu.memory_space<vmem>>, vector<128x512xbf16>
    %cst_160 = arith.constant dense<0.000000e+00> : vector<8x512xf32>
    %485 = tpu.matmul %483, %484, %cst_160 {dimension_numbers = #tpu.dot_dimension_numbers<[1], [0], [0], [1], [0, 0, 1, 1], [], []>} : vector<8x128xbf16>, vector<128x512xbf16>, vector<8x512xf32> -> vector<8x512xf32>
    %486 = arith.addf %482, %485 : vector<8x512xf32>
    %487 = arith.addf %486, %8 : vector<8x512xf32>
    %488 = vector.extract_strided_slice %487 {offsets = [0, 0], sizes = [8, 128], strides = [1, 1]} : vector<8x512xf32> to vector<8x128xf32>
    %489 = arith.negf %488 : vector<8x128xf32>
    %490 = math.exp %489 : vector<8x128xf32>
    %cst_161 = arith.constant 1.000000e+00 : f32
    %491 = vector.broadcast %cst_161 : f32 to vector<8x128xf32>
    %492 = arith.addf %491, %490 : vector<8x128xf32>
    %493 = arith.divf %491, %492 : vector<8x128xf32>
    %494 = vector.extract_strided_slice %487 {offsets = [0, 128], sizes = [8, 128], strides = [1, 1]} : vector<8x512xf32> to vector<8x128xf32>
    %495 = arith.negf %494 : vector<8x128xf32>
    %496 = math.exp %495 : vector<8x128xf32>
    %cst_162 = arith.constant 1.000000e+00 : f32
    %497 = vector.broadcast %cst_162 : f32 to vector<8x128xf32>
    %498 = arith.addf %497, %496 : vector<8x128xf32>
    %499 = arith.divf %497, %498 : vector<8x128xf32>
    %500 = vector.extract_strided_slice %487 {offsets = [0, 256], sizes = [8, 128], strides = [1, 1]} : vector<8x512xf32> to vector<8x128xf32>
    %501 = math.tanh %500 : vector<8x128xf32>
    %502 = vector.extract_strided_slice %487 {offsets = [0, 384], sizes = [8, 128], strides = [1, 1]} : vector<8x512xf32> to vector<8x128xf32>
    %503 = arith.negf %502 : vector<8x128xf32>
    %504 = math.exp %503 : vector<8x128xf32>
    %cst_163 = arith.constant 1.000000e+00 : f32
    %505 = vector.broadcast %cst_163 : f32 to vector<8x128xf32>
    %506 = arith.addf %505, %504 : vector<8x128xf32>
    %507 = arith.divf %505, %506 : vector<8x128xf32>
    %508 = arith.mulf %499, %438 : vector<8x128xf32>
    %509 = arith.mulf %493, %501 : vector<8x128xf32>
    %510 = arith.addf %508, %509 : vector<8x128xf32>
    %511 = math.tanh %510 : vector<8x128xf32>
    %512 = arith.mulf %507, %511 : vector<8x128xf32>
    %513 = arith.index_cast %c6_i32 : i32 to index
    %c0_164 = arith.constant 0 : index
    %c0_165 = arith.constant 0 : index
    %514 = vector.load %arg20[%513, %c0_164, %c0_165] : memref<8x8x128xf32, #tpu.memory_space<vmem>>, vector<1x8x128xf32>
    %515 = vector.shape_cast %514 : vector<1x8x128xf32> to vector<8x128xf32>
    %516 = vector.shape_cast %512 : vector<8x128xf32> to vector<1x8x128xf32>
    tpu.vector_store %arg20[%513, %c0_164, %c0_165], %516 {strides = array<i32>} : memref<8x8x128xf32, #tpu.memory_space<vmem>>, vector<1x8x128xf32>,
    %c7_i32 = arith.constant 7 : i32
    %517 = arith.index_cast %c7_i32 : i32 to index
    %c0_166 = arith.constant 0 : index
    %c0_167 = arith.constant 0 : index
    %518 = vector.load %arg1[%517, %c0_166, %c0_167] : memref<8x8x8xbf16, #tpu.memory_space<vmem>>, vector<1x8x8xbf16>
    %519 = vector.shape_cast %518 : vector<1x8x8xbf16> to vector<8x8xbf16>
    %c0_168 = arith.constant 0 : index
    %c0_169 = arith.constant 0 : index
    %520 = vector.load %arg11[%c0_168, %c0_169] : memref<8x512xbf16, #tpu.memory_space<vmem>>, vector<8x512xbf16>
    %cst_170 = arith.constant dense<0.000000e+00> : vector<8x512xf32>
    %521 = tpu.matmul %519, %520, %cst_170 {dimension_numbers = #tpu.dot_dimension_numbers<[1], [0], [0], [1], [0, 0, 1, 1], [], []>} : vector<8x8xbf16>, vector<8x512xbf16>, vector<8x512xf32> -> vector<8x512xf32>
    %522 = arith.truncf %479 : vector<8x128xf32> to vector<8x128xbf16>
    %c0_171 = arith.constant 0 : index
    %c0_172 = arith.constant 0 : index
    %523 = vector.load %arg12[%c0_171, %c0_172] : memref<128x512xbf16, #tpu.memory_space<vmem>>, vector<128x512xbf16>
    %cst_173 = arith.constant dense<0.000000e+00> : vector<8x512xf32>
    %524 = tpu.matmul %522, %523, %cst_173 {dimension_numbers = #tpu.dot_dimension_numbers<[1], [0], [0], [1], [0, 0, 1, 1], [], []>} : vector<8x128xbf16>, vector<128x512xbf16>, vector<8x512xf32> -> vector<8x512xf32>
    %525 = arith.addf %521, %524 : vector<8x512xf32>
    %526 = arith.addf %525, %5 : vector<8x512xf32>
    %527 = vector.extract_strided_slice %526 {offsets = [0, 0], sizes = [8, 128], strides = [1, 1]} : vector<8x512xf32> to vector<8x128xf32>
    %528 = arith.negf %527 : vector<8x128xf32>
    %529 = math.exp %528 : vector<8x128xf32>
    %cst_174 = arith.constant 1.000000e+00 : f32
    %530 = vector.broadcast %cst_174 : f32 to vector<8x128xf32>
    %531 = arith.addf %530, %529 : vector<8x128xf32>
    %532 = arith.divf %530, %531 : vector<8x128xf32>
    %533 = vector.extract_strided_slice %526 {offsets = [0, 128], sizes = [8, 128], strides = [1, 1]} : vector<8x512xf32> to vector<8x128xf32>
    %534 = arith.negf %533 : vector<8x128xf32>
    %535 = math.exp %534 : vector<8x128xf32>
    %cst_175 = arith.constant 1.000000e+00 : f32
    %536 = vector.broadcast %cst_175 : f32 to vector<8x128xf32>
    %537 = arith.addf %536, %535 : vector<8x128xf32>
    %538 = arith.divf %536, %537 : vector<8x128xf32>
    %539 = vector.extract_strided_slice %526 {offsets = [0, 256], sizes = [8, 128], strides = [1, 1]} : vector<8x512xf32> to vector<8x128xf32>
    %540 = math.tanh %539 : vector<8x128xf32>
    %541 = vector.extract_strided_slice %526 {offsets = [0, 384], sizes = [8, 128], strides = [1, 1]} : vector<8x512xf32> to vector<8x128xf32>
    %542 = arith.negf %541 : vector<8x128xf32>
    %543 = math.exp %542 : vector<8x128xf32>
    %cst_176 = arith.constant 1.000000e+00 : f32
    %544 = vector.broadcast %cst_176 : f32 to vector<8x128xf32>
    %545 = arith.addf %544, %543 : vector<8x128xf32>
    %546 = arith.divf %544, %545 : vector<8x128xf32>
    %547 = arith.mulf %538, %477 : vector<8x128xf32>
    %548 = arith.mulf %532, %540 : vector<8x128xf32>
    %549 = arith.addf %547, %548 : vector<8x128xf32>
    %550 = math.tanh %549 : vector<8x128xf32>
    %551 = arith.mulf %546, %550 : vector<8x128xf32>
    %552 = arith.truncf %551 : vector<8x128xf32> to vector<8x128xbf16>
    %c0_177 = arith.constant 0 : index
    %c0_178 = arith.constant 0 : index
    %553 = vector.load %arg13[%c0_177, %c0_178] : memref<128x512xbf16, #tpu.memory_space<vmem>>, vector<128x512xbf16>
    %cst_179 = arith.constant dense<0.000000e+00> : vector<8x512xf32>
    %554 = tpu.matmul %552, %553, %cst_179 {dimension_numbers = #tpu.dot_dimension_numbers<[1], [0], [0], [1], [0, 0, 1, 1], [], []>} : vector<8x128xbf16>, vector<128x512xbf16>, vector<8x512xf32> -> vector<8x512xf32>
    %555 = arith.truncf %512 : vector<8x128xf32> to vector<8x128xbf16>
    %c0_180 = arith.constant 0 : index
    %c0_181 = arith.constant 0 : index
    %556 = vector.load %arg14[%c0_180, %c0_181] : memref<128x512xbf16, #tpu.memory_space<vmem>>, vector<128x512xbf16>
    %cst_182 = arith.constant dense<0.000000e+00> : vector<8x512xf32>
    %557 = tpu.matmul %555, %556, %cst_182 {dimension_numbers = #tpu.dot_dimension_numbers<[1], [0], [0], [1], [0, 0, 1, 1], [], []>} : vector<8x128xbf16>, vector<128x512xbf16>, vector<8x512xf32> -> vector<8x512xf32>
    %558 = arith.addf %554, %557 : vector<8x512xf32>
    %559 = arith.addf %558, %8 : vector<8x512xf32>
    %560 = vector.extract_strided_slice %559 {offsets = [0, 0], sizes = [8, 128], strides = [1, 1]} : vector<8x512xf32> to vector<8x128xf32>
    %561 = arith.negf %560 : vector<8x128xf32>
    %562 = math.exp %561 : vector<8x128xf32>
    %cst_183 = arith.constant 1.000000e+00 : f32
    %563 = vector.broadcast %cst_183 : f32 to vector<8x128xf32>
    %564 = arith.addf %563, %562 : vector<8x128xf32>
    %565 = arith.divf %563, %564 : vector<8x128xf32>
    %566 = vector.extract_strided_slice %559 {offsets = [0, 128], sizes = [8, 128], strides = [1, 1]} : vector<8x512xf32> to vector<8x128xf32>
    %567 = arith.negf %566 : vector<8x128xf32>
    %568 = math.exp %567 : vector<8x128xf32>
    %cst_184 = arith.constant 1.000000e+00 : f32
    %569 = vector.broadcast %cst_184 : f32 to vector<8x128xf32>
    %570 = arith.addf %569, %568 : vector<8x128xf32>
    %571 = arith.divf %569, %570 : vector<8x128xf32>
    %572 = vector.extract_strided_slice %559 {offsets = [0, 256], sizes = [8, 128], strides = [1, 1]} : vector<8x512xf32> to vector<8x128xf32>
    %573 = math.tanh %572 : vector<8x128xf32>
    %574 = vector.extract_strided_slice %559 {offsets = [0, 384], sizes = [8, 128], strides = [1, 1]} : vector<8x512xf32> to vector<8x128xf32>
    %575 = arith.negf %574 : vector<8x128xf32>
    %576 = math.exp %575 : vector<8x128xf32>
    %cst_185 = arith.constant 1.000000e+00 : f32
    %577 = vector.broadcast %cst_185 : f32 to vector<8x128xf32>
    %578 = arith.addf %577, %576 : vector<8x128xf32>
    %579 = arith.divf %577, %578 : vector<8x128xf32>
    %580 = arith.mulf %571, %510 : vector<8x128xf32>
    %581 = arith.mulf %565, %573 : vector<8x128xf32>
    %582 = arith.addf %580, %581 : vector<8x128xf32>
    %583 = math.tanh %582 : vector<8x128xf32>
    %584 = arith.mulf %579, %583 : vector<8x128xf32>
    %585 = arith.index_cast %c7_i32 : i32 to index
    %c0_186 = arith.constant 0 : index
    %c0_187 = arith.constant 0 : index
    %586 = vector.load %arg20[%585, %c0_186, %c0_187] : memref<8x8x128xf32, #tpu.memory_space<vmem>>, vector<1x8x128xf32>
    %587 = vector.shape_cast %586 : vector<1x8x128xf32> to vector<8x128xf32>
    %588 = vector.shape_cast %584 : vector<8x128xf32> to vector<1x8x128xf32>
    tpu.vector_store %arg20[%585, %c0_186, %c0_187], %588 {strides = array<i32>} : memref<8x8x128xf32, #tpu.memory_space<vmem>>, vector<1x8x128xf32>,
    %c8_i32 = arith.constant 8 : i32
    %c0_188 = arith.constant 0 : index
    %c0_189 = arith.constant 0 : index
    %589 = vector.load %arg16[%c0_188, %c0_189] : memref<8x128xf32, #tpu.memory_space<vmem>>, vector<8x128xf32>
    tpu.vector_store %arg16[%c0_188, %c0_189], %551 {strides = array<i32>} : memref<8x128xf32, #tpu.memory_space<vmem>>, vector<8x128xf32>,
    %c0_190 = arith.constant 0 : index
    %c0_191 = arith.constant 0 : index
    %590 = vector.load %arg17[%c0_190, %c0_191] : memref<8x128xf32, #tpu.memory_space<vmem>>, vector<8x128xf32>
    tpu.vector_store %arg17[%c0_190, %c0_191], %549 {strides = array<i32>} : memref<8x128xf32, #tpu.memory_space<vmem>>, vector<8x128xf32>,
    %c0_192 = arith.constant 0 : index
    %c0_193 = arith.constant 0 : index
    %591 = vector.load %arg18[%c0_192, %c0_193] : memref<8x128xf32, #tpu.memory_space<vmem>>, vector<8x128xf32>
    tpu.vector_store %arg18[%c0_192, %c0_193], %584 {strides = array<i32>} : memref<8x128xf32, #tpu.memory_space<vmem>>, vector<8x128xf32>,
    %c0_194 = arith.constant 0 : index
    %c0_195 = arith.constant 0 : index
    %592 = vector.load %arg19[%c0_194, %c0_195] : memref<8x128xf32, #tpu.memory_space<vmem>>, vector<8x128xf32>
    tpu.vector_store %arg19[%c0_194, %c0_195], %582 {strides = array<i32>} : memref<8x128xf32, #tpu.memory_space<vmem>>, vector<8x128xf32>,
    %c0_196 = arith.constant 0 : index
    %c0_197 = arith.constant 0 : index
    %c0_198 = arith.constant 0 : index
    %593 = vector.load %arg20[%c0_196, %c0_197, %c0_198] : memref<8x8x128xf32, #tpu.memory_space<vmem>>, vector<8x8x128xf32>
    %c0_199 = arith.constant 0 : index
    %c0_200 = arith.constant 0 : index
    %594 = vector.load %arg8[%c0_199, %c0_200] : memref<1x128xf32, #tpu.memory_space<vmem>>, vector<1x128xf32>
    %595 = vector.shape_cast %594 : vector<1x128xf32> to vector<1x1x128xf32>
    %596 = vector.broadcast %595 : vector<1x1x128xf32> to vector<8x8x128xf32>
    %597 = arith.mulf %593, %596 : vector<8x8x128xf32>
    %cst_201 = arith.constant dense<0.000000e+00> : vector<8x8xf32>
    %598 = vector.multi_reduction <add>, %597, %cst_201 [2] : vector<8x8x128xf32> to vector<8x8xf32>
    %c0_202 = arith.constant 0 : index
    %c0_203 = arith.constant 0 : index
    %599 = vector.load %arg9[%c0_202, %c0_203] : memref<1x1xf32, #tpu.memory_space<vmem>>, vector<1x1xf32>
    %600 = vector.broadcast %599 : vector<1x1xf32> to vector<8x8xf32>
    %601 = arith.addf %598, %600 : vector<8x8xf32>
    %c0_204 = arith.constant 0 : index
    %c0_205 = arith.constant 0 : index
    %c0_206 = arith.constant 0 : index
    %602 = vector.load %arg10[%c0_204, %c0_205, %c0_206] : memref<1x8x8xf32, #tpu.memory_space<vmem>>, vector<1x8x8xf32>
    %603 = vector.shape_cast %602 : vector<1x8x8xf32> to vector<8x8xf32>
    %604 = vector.shape_cast %601 : vector<8x8xf32> to vector<1x8x8xf32>
    tpu.vector_store %arg10[%c0_204, %c0_205, %c0_206], %604 {strides = array<i32>} : memref<1x8x8xf32, #tpu.memory_space<vmem>>, vector<1x8x8xf32>,
    return
  }
  func.func @transform_0(%arg0: i32) -> (i32, i32, i32) {
    %c0_i32 = arith.constant 0 : i32
    %c0_i32_0 = arith.constant 0 : i32
    %c0_i32_1 = arith.constant 0 : i32
    return %arg0, %c0_i32, %c0_i32_0 : i32, i32, i32
  }
  func.func @transform_5(%arg0: i32) -> (i32, i32) {
    %c0_i32 = arith.constant 0 : i32
    %c0_i32_0 = arith.constant 0 : i32
    %c0_i32_1 = arith.constant 0 : i32
    return %c0_i32, %c0_i32_0 : i32, i32
  }
  func.func @transform_6(%arg0: i32) -> (i32, i32) {
    %c0_i32 = arith.constant 0 : i32
    %c0_i32_0 = arith.constant 0 : i32
    %c0_i32_1 = arith.constant 0 : i32
    return %c0_i32, %c0_i32_0 : i32, i32
  }
  func.func @transform_7(%arg0: i32) -> (i32, i32) {
    %c0_i32 = arith.constant 0 : i32
    %c0_i32_0 = arith.constant 0 : i32
    %c0_i32_1 = arith.constant 0 : i32
    return %c0_i32, %c0_i32_0 : i32, i32
  }
  func.func @transform_8(%arg0: i32) -> (i32, i32) {
    %c0_i32 = arith.constant 0 : i32
    %c0_i32_0 = arith.constant 0 : i32
    %c0_i32_1 = arith.constant 0 : i32
    return %c0_i32, %c0_i32_0 : i32, i32
  }
  func.func @transform_9(%arg0: i32) -> (i32, i32, i32) {
    %c0_i32 = arith.constant 0 : i32
    %c0_i32_0 = arith.constant 0 : i32
    %c0_i32_1 = arith.constant 0 : i32
    return %arg0, %c0_i32, %c0_i32_0 : i32, i32, i32
  }
}

</mosaic_0001>

<llo_original>
// kernel: tpu_custom_call.1
$region0: #{tpu_custom_call.1}
  #allocation0 [shape = 'u32[]', space=smem, size = 0x4, offset = 0x4, fixed_abs, tag = 'smem constant byte address 0x4 - core index']
  #allocation1 [shape = 'u32[72,128]{1,0:T(1,128)}', space=vmem, size = 0x9000, scoped, tag = 'internal scratch']
  #allocation2 [shape = 'bf16[8,512]{1,0:T(8,128)(2,1)}', space=vmem, size = 0x2000, scoped, tag = 'scratch operand']
  #allocation3 [shape = 'bf16[128,512]{1,0:T(8,128)(2,1)}', space=vmem, size = 0x20000, scoped, tag = 'scratch operand']
  #allocation4 [shape = 'bf16[128,512]{1,0:T(8,128)(2,1)}', space=vmem, size = 0x20000, scoped, tag = 'scratch operand']
  #allocation5 [shape = 'bf16[128,512]{1,0:T(8,128)(2,1)}', space=vmem, size = 0x20000, scoped, tag = 'scratch operand']
  #allocation6 [shape = 's32[4]{0}', space=sflag, size = 0x10, scoped, tag = 'scratch operand']
  #allocation7 [shape = 'f32[8,128]{1,0:T(8,128)}', space=vmem, size = 0x1000, scoped, tag = 'scratch operand']
  #allocation8 [shape = 'f32[8,128]{1,0:T(8,128)}', space=vmem, size = 0x1000, scoped, tag = 'scratch operand']
  #allocation9 [shape = 'f32[8,128]{1,0:T(8,128)}', space=vmem, size = 0x1000, scoped, tag = 'scratch operand']
  #allocation10 [shape = 'f32[8,128]{1,0:T(8,128)}', space=vmem, size = 0x1000, scoped, tag = 'scratch operand']
  #allocation11 [shape = 'f32[8,8,128]{2,1,0:T(8,128)}', space=vmem, size = 0x8000, scoped, tag = 'scratch operand']
  #allocation12 [shape = 'f32[1,1]{1,0:T(1,128)S(1)}', space=vmem, size = 0x200, scoped, tag = 'scoped memory for tpu_custom_call.1']
  #allocation19 [shape = 's32[]', space=sflag, size = 0x4, offset = 0, fixed_abs, tag = 'sflag constant byte address 0x0 - dummy sync flag']
  #allocation20 [shape = 's32[]', space=sflag, size = 0x4, offset = 0, fixed_abs, tag = 'sflag constant byte address 0x0 - dummy sync flag']
  #allocation21 [shape = 'u32[]', space=smem, size = 0x4, offset = 0x44, fixed_abs, tag = 'smem constant byte address 0x44 - assertion arg 0']
  #allocation22 [shape = 'u32[]', space=smem, size = 0x4, offset = 0x48, fixed_abs, tag = 'smem constant byte address 0x48 - assertion arg 1']
  #allocation23 [shape = 's32[]', space=sflag, size = 0x4, offset = 0, fixed_abs, tag = 'sflag constant byte address 0x0 - dummy sync flag']
  #allocation24 [shape = 's32[]', space=sflag, size = 0x4, offset = 0, fixed_abs, tag = 'sflag constant byte address 0x0 - dummy sync flag']
  #allocation25 [shape = 's32[]', space=sflag, size = 0x4, offset = 0, fixed_abs, tag = 'sflag constant byte address 0x0 - dummy sync flag']
  #allocation26 [shape = 's32[]', space=sflag, size = 0x4, offset = 0, fixed_abs, tag = 'sflag constant byte address 0x0 - dummy sync flag']
  #allocation27 [shape = 's32[]', space=sflag, size = 0x4, offset = 0, fixed_abs, tag = 'sflag constant byte address 0x0 - dummy sync flag']
  #allocation28 [shape = 's32[]', space=sflag, size = 0x4, offset = 0, fixed_abs, tag = 'sflag constant byte address 0x0 - dummy sync flag']
  %s0 = inlined_call_operand.hbm [shape: bf16[8,8,8], index: 0, kind: input, shape index: {}]
  %s1 = inlined_call_operand.hbm [shape: bf16[8,512], index: 1, kind: input, shape index: {}]
  %s2 = inlined_call_operand.hbm [shape: bf16[128,512], index: 2, kind: input, shape index: {}]
  %s3 = inlined_call_operand.hbm [shape: bf16[128,512], index: 3, kind: input, shape index: {}]
  %s4 = inlined_call_operand.hbm [shape: bf16[128,512], index: 4, kind: input, shape index: {}]
  %s5 = inlined_call_operand.vmem [shape: f32[1,512], index: 5, kind: input, shape index: {}]
  %s6 = inlined_call_operand.hbm [shape: f32[1,512], index: 6, kind: input, shape index: {}]
  %s7 = inlined_call_operand.vmem [shape: f32[1,128], index: 7, kind: input, shape index: {}]
  %s8 = inlined_call_operand.<no memory space> [shape: f32[1,1], index: 8, kind: input, shape index: {}]
  %s9 = inlined_call_operand.hbm [shape: f32[1,8,8], index: 9, kind: output, shape index: {}]
  %s10 = sld [smem:[#allocation0]]
  $region58: #{tpu_custom_call.1} parent=0
    _
  %s12 = ssub.s32 1, %s10
  %s13 = scalar_select 0, %s12, %s10
  %v14 = vstv %s8
  %15 = vst [vmem:[#allocation12] sm:$0x1] %v14
  $region1: #{tpu_custom_call.1} parent=0
    #allocation13 [shape = 'u8[16384]{0}', space=vmem, size = 0x4000, scoped, tag = 'input window, operand 0, single buffered']
    #allocation14 [shape = 's32[1]{0}', space=sflag, size = 0x4, scoped, tag = 'scoped memory for tpu_custom_call.1']
    #allocation15 [shape = 's32[1]{0}', space=sflag, size = 0x4, scoped, tag = 'scoped memory for tpu_custom_call.1']
    #allocation16 [shape = 'u8[2048]{0}', space=vmem, size = 0x800, scoped, tag = 'input window, operand 6, single buffered']
    #allocation17 [shape = 's32[1]{0}', space=sflag, size = 0x4, scoped, tag = 'scoped memory for tpu_custom_call.1']
    #allocation18 [shape = 'u8[4096]{0}', space=vmem, size = 0x1000, scoped, tag = 'output window, operand 0, single buffered']
    %16 = vsyncpa [#allocation14], 0
    %17 = vsyncpa [#allocation17], 0
    %18 = vsyncpa [#allocation15], 0
    // Predicated region
    $region2: #{tpu_custom_call.1} parent=1 // pred_check
      _
    $region3: #{tpu_custom_call.1} parent=1 // pred_check_branch
      %20 = sbr.rel (0) target = $region5
    $region4: #{tpu_custom_call.1} parent=1 // pred_region
      %22 = vsyncadd [#allocation14], 0
      %s23 = sshll.u32 %s0, 4
      %s24 = int_to_ptr.hbm [resolvable:$true] %s23
      %s25 = sshll.u32 [#allocation13], 4
      %s26 = int_to_ptr.vmem [resolvable:$true] %s25
      %31 = dma.hbm_to_vmem [thread:$0]  %s24, 512, %s26, [#allocation14], 64, 64, 4
    $region5: #{tpu_custom_call.1} parent=1 // pred_fallthru
      _
    // Predicated region
    $region6: #{tpu_custom_call.1} parent=1 // pred_check
      _
    $region7: #{tpu_custom_call.1} parent=1 // pred_check_branch
      %33 = sbr.rel (0) target = $region9
    $region8: #{tpu_custom_call.1} parent=1 // pred_region
      _
    $region9: #{tpu_custom_call.1} parent=1 // pred_fallthru
      _
    // Predicated region
    $region10: #{tpu_custom_call.1} parent=1 // pred_check
      _
    $region11: #{tpu_custom_call.1} parent=1 // pred_check_branch
      %35 = sbr.rel (0) target = $region13
    $region12: #{tpu_custom_call.1} parent=1 // pred_region
      %37 = vsyncadd [#allocation17], 0
      %s39 = sshll.u32 %s6, 4
      %s40 = int_to_ptr.hbm [resolvable:$true] %s39
      %s41 = sshll.u32 [#allocation16], 4
      %s42 = int_to_ptr.vmem [resolvable:$true] %s41
      %44 = dma.hbm_to_vmem [thread:$0]  %s40, 64, %s42, [#allocation17]
    $region13: #{tpu_custom_call.1} parent=1 // pred_fallthru
      _
    // Predicated region
    $region14: #{tpu_custom_call.1} parent=1 // pred_check
      _
    $region15: #{tpu_custom_call.1} parent=1 // pred_check_branch
      %46 = sbr.rel (0) target = $region17
    $region16: #{tpu_custom_call.1} parent=1 // pred_region
      _
    $region17: #{tpu_custom_call.1} parent=1 // pred_fallthru
      _
    // Predicated region
    $region18: #{tpu_custom_call.1} parent=1 // pred_check
      _
    $region19: #{tpu_custom_call.1} parent=1 // pred_check_branch
      %48 = sbr.rel (0) target = $region21
    $region20: #{tpu_custom_call.1} parent=1 // pred_region
      _
    $region21: #{tpu_custom_call.1} parent=1 // pred_fallthru
      _
    // Predicated region
    $region22: #{tpu_custom_call.1} parent=1 // pred_check
      _
    $region23: #{tpu_custom_call.1} parent=1 // pred_check_branch
      %50 = sbr.rel (0) target = $region25
    $region24: #{tpu_custom_call.1} parent=1 // pred_region
      %52 = dma.done [#allocation14], 512
    $region25: #{tpu_custom_call.1} parent=1 // pred_fallthru
      _
    // Predicated region
    $region26: #{tpu_custom_call.1} parent=1 // pred_check
      _
    $region27: #{tpu_custom_call.1} parent=1 // pred_check_branch
      %54 = sbr.rel (0) target = $region29
    $region28: #{tpu_custom_call.1} parent=1 // pred_region
      %56 = dma.done [#allocation17], 64
    $region29: #{tpu_custom_call.1} parent=1 // pred_fallthru
      _
    %p58 = scmp.eq.s32.totalorder 0, 0
    // Predicated region
    $region30: #{tpu_custom_call.1} parent=1 // pred_check
      %p59 = pneg %p58
    $region31: #{tpu_custom_call.1} parent=1 // pred_check_branch
      %61 = sbr.rel (%p59) target = $region33
    $region32: #{tpu_custom_call.1} parent=1 // pred_region
      // Predicated region
      $region34: #{tpu_custom_call.1} parent=32 // pred_check
        _
      $region35: #{tpu_custom_call.1} parent=32 // pred_check_branch
        %63 = sbr.rel target = $region37
      $region36: #{tpu_custom_call.1} parent=32 // pred_region
        %64 = sst [smem:[#allocation21]] [#allocation20]
        %65 = sst [smem:[#allocation22]] [#allocation19]
      $region37: #{tpu_custom_call.1} parent=32 // pred_fallthru
        _
      %67 = shalt.err (0)
      %s69 = sshll.u32 %s1, 4
      %s70 = int_to_ptr.hbm [resolvable:$true] %s69
      %s71 = sshll.u32 [#allocation2], 4
      %s72 = int_to_ptr.vmem [resolvable:$true] %s71
      %74 = dma.hbm_to_vmem [thread:$0]  %s70, 256, %s72, [#allocation6]
      %s75 = scalar_lea.sflag [#allocation6], 1
      // Predicated region
      $region38: #{tpu_custom_call.1} parent=32 // pred_check
        _
      $region39: #{tpu_custom_call.1} parent=32 // pred_check_branch
        %77 = sbr.rel target = $region41
      $region40: #{tpu_custom_call.1} parent=32 // pred_region
        %78 = sst [smem:[#allocation21]] [#allocation24]
        %79 = sst [smem:[#allocation22]] [#allocation23]
      $region41: #{tpu_custom_call.1} parent=32 // pred_fallthru
        _
      %81 = shalt.err (0)
      %s83 = sshll.u32 %s2, 4
      %s84 = int_to_ptr.hbm [resolvable:$true] %s83
      %s85 = sshll.u32 [#allocation3], 4
      %s86 = int_to_ptr.vmem [resolvable:$true] %s85
      %88 = dma.hbm_to_vmem [thread:$0]  %s84, 4096, %s86, %s75
      %s89 = scalar_lea.sflag [#allocation6], 2
      // Predicated region
      $region42: #{tpu_custom_call.1} parent=32 // pred_check
        _
      $region43: #{tpu_custom_call.1} parent=32 // pred_check_branch
        %91 = sbr.rel target = $region45
      $region44: #{tpu_custom_call.1} parent=32 // pred_region
        %92 = sst [smem:[#allocation21]] [#allocation26]
        %93 = sst [smem:[#allocation22]] [#allocation25]
      $region45: #{tpu_custom_call.1} parent=32 // pred_fallthru
        _
      %95 = shalt.err (0)
      %s97 = sshll.u32 %s3, 4
      %s98 = int_to_ptr.hbm [resolvable:$true] %s97
      %s99 = sshll.u32 [#allocation4], 4
      %s100 = int_to_ptr.vmem [resolvable:$true] %s99
      %102 = dma.hbm_to_vmem [thread:$0]  %s98, 4096, %s100, %s89
      %s103 = scalar_lea.sflag [#allocation6], 3
      // Predicated region
      $region46: #{tpu_custom_call.1} parent=32 // pred_check
        _
      $region47: #{tpu_custom_call.1} parent=32 // pred_check_branch
        %105 = sbr.rel target = $region49
      $region48: #{tpu_custom_call.1} parent=32 // pred_region
        %106 = sst [smem:[#allocation21]] [#allocation28]
        %107 = sst [smem:[#allocation22]] [#allocation27]
      $region49: #{tpu_custom_call.1} parent=32 // pred_fallthru
        _
      %109 = shalt.err (0)
      %s111 = sshll.u32 %s4, 4
      %s112 = int_to_ptr.hbm [resolvable:$true] %s111
      %s113 = sshll.u32 [#allocation5], 4
      %s114 = int_to_ptr.vmem [resolvable:$true] %s113
      %116 = dma.hbm_to_vmem [thread:$0]  %s112, 4096, %s114, %s103
      %s117 = smul.u32 4, 1
      %s118 = smul.u32 %s117, 4
      %s119 = sshll.u32 %s118, 4
      %120 = dma.done [#allocation6], %s119
      %s121 = smul.u32 4, 16
      %s122 = smul.u32 %s121, 4
      %s123 = sshll.u32 %s122, 4
      %124 = dma.done %s75, %s123
      %s125 = sshll.u32 %s122, 4
      %126 = dma.done %s89, %s125
      %s127 = sshll.u32 %s122, 4
      %128 = dma.done %s103, %s127
      %129 = vst [vmem:[#allocation7] sm:$0xff] 0.0
      %130 = vst [vmem:[#allocation8] sm:$0xff] 0.0
      %131 = vst [vmem:[#allocation9] sm:$0xff] 0.0
      %132 = vst [vmem:[#allocation10] sm:$0xff] 0.0
    $region33: #{tpu_custom_call.1} parent=1 // pred_fallthru
      _
    %v133 = vld [vmem:[%s5] sm:$0xf]
    %v135 = vperm.slane %v133, 0
    %v136 = vperm.slane %v133, 1
    %v137 = vperm.slane %v133, 2
    %v138 = vperm.slane %v133, 3
    %v143 = vld [vmem:[#allocation16] sm:$0xf]
    %v145 = vperm.slane %v143, 0
    %v146 = vperm.slane %v143, 1
    %v147 = vperm.slane %v143, 2
    %v148 = vperm.slane %v143, 3
    %v153 = vld [vmem:[#allocation7] sm:$0xff]
    %v154 = vld [vmem:[#allocation8] sm:$0xff]
    %v155 = vld [vmem:[#allocation9] sm:$0xff]
    %v156 = vld [vmem:[#allocation10] sm:$0xff]
    %v157 = vld [vmem:[#allocation13] sm:$0xf]
    %v158 = vld [vmem:[#allocation2] sm:$0xff]
    %v159 = vld [vmem:[#allocation2 + $0x8] sm:$0xff]
    %v160 = vpack.c.bf16 %v153, %v153
    %v161 = vld [vmem:[#allocation3] sm:$0xff]
    %v162 = vld [vmem:[#allocation3 + $0x8] sm:$0xff]
    %v163 = vld [vmem:[#allocation3 + $0x10] sm:$0xff]
    %v164 = vld [vmem:[#allocation3 + $0x18] sm:$0xff]
    %v165 = vld [vmem:[#allocation3 + $0x20] sm:$0xff]
    %v166 = vld [vmem:[#allocation3 + $0x28] sm:$0xff]
    %v167 = vld [vmem:[#allocation3 + $0x30] sm:$0xff]
    %v168 = vld [vmem:[#allocation3 + $0x38] sm:$0xff]
    %v169 = vld [vmem:[#allocation3 + $0x40] sm:$0xff]
    %v170 = vld [vmem:[#allocation3 + $0x48] sm:$0xff]
    %v171 = vld [vmem:[#allocation3 + $0x50] sm:$0xff]
    %v172 = vld [vmem:[#allocation3 + $0x58] sm:$0xff]
    %v173 = vld [vmem:[#allocation3 + $0x60] sm:$0xff]
    %v174 = vld [vmem:[#allocation3 + $0x68] sm:$0xff]
    %v175 = vld [vmem:[#allocation3 + $0x70] sm:$0xff]
    %v176 = vld [vmem:[#allocation3 + $0x78] sm:$0xff]
    %v177 = vld [vmem:[#allocation3 + $0x80] sm:$0xff]
    %v178 = vld [vmem:[#allocation3 + $0x88] sm:$0xff]
    %v179 = vld [vmem:[#allocation3 + $0x90] sm:$0xff]
    %v180 = vld [vmem:[#allocation3 + $0x98] sm:$0xff]
    %v181 = vld [vmem:[#allocation3 + $0xa0] sm:$0xff]
    %v182 = vld [vmem:[#allocation3 + $0xa8] sm:$0xff]
    %v183 = vld [vmem:[#allocation3 + $0xb0] sm:$0xff]
    %v184 = vld [vmem:[#allocation3 + $0xb8] sm:$0xff]
    %v185 = vld [vmem:[#allocation3 + $0xc0] sm:$0xff]
    %v186 = vld [vmem:[#allocation3 + $0xc8] sm:$0xff]
    %v187 = vld [vmem:[#allocation3 + $0xd0] sm:$0xff]
    %v188 = vld [vmem:[#allocation3 + $0xd8] sm:$0xff]
    %v189 = vld [vmem:[#allocation3 + $0xe0] sm:$0xff]
    %v190 = vld [vmem:[#allocation3 + $0xe8] sm:$0xff]
    %v191 = vld [vmem:[#allocation3 + $0xf0] sm:$0xff]
    %v192 = vld [vmem:[#allocation3 + $0xf8] sm:$0xff]
    %v225 = vunpack.c.l.b16 %v161
    %v226 = vunpack.c.h.b16 %v161
    %v227 = vunpack.c.l.b16 %v162
    %v228 = vunpack.c.h.b16 %v162
    %v229 = vunpack.c.l.b16 %v163
    %v230 = vunpack.c.h.b16 %v163
    %v231 = vunpack.c.l.b16 %v164
    %v232 = vunpack.c.h.b16 %v164
    %v233 = vunpack.c.l.b16 %v165
    %v234 = vunpack.c.h.b16 %v165
    %v235 = vunpack.c.l.b16 %v166
    %v236 = vunpack.c.h.b16 %v166
    %v237 = vunpack.c.l.b16 %v167
    %v238 = vunpack.c.h.b16 %v167
    %v239 = vunpack.c.l.b16 %v168
    %v240 = vunpack.c.h.b16 %v168
    %v241 = vunpack.c.l.b16 %v169
    %v242 = vunpack.c.h.b16 %v169
    %v243 = vunpack.c.l.b16 %v170
    %v244 = vunpack.c.h.b16 %v170
    %v245 = vunpack.c.l.b16 %v171
    %v246 = vunpack.c.h.b16 %v171
    %v247 = vunpack.c.l.b16 %v172
    %v248 = vunpack.c.h.b16 %v172
    %v249 = vunpack.c.l.b16 %v173
    %v250 = vunpack.c.h.b16 %v173
    %v251 = vunpack.c.l.b16 %v174
    %v252 = vunpack.c.h.b16 %v174
    %v253 = vunpack.c.l.b16 %v175
    %v254 = vunpack.c.h.b16 %v175
    %v255 = vunpack.c.l.b16 %v176
    %v256 = vunpack.c.h.b16 %v176
    %v257 = vunpack.c.l.b16 %v177
    %v258 = vunpack.c.h.b16 %v177
    %v259 = vunpack.c.l.b16 %v178
    %v260 = vunpack.c.h.b16 %v178
    %v261 = vunpack.c.l.b16 %v179
    %v262 = vunpack.c.h.b16 %v179
    %v263 = vunpack.c.l.b16 %v180
    %v264 = vunpack.c.h.b16 %v180
    %v265 = vunpack.c.l.b16 %v181
    %v266 = vunpack.c.h.b16 %v181
    %v267 = vunpack.c.l.b16 %v182
    %v268 = vunpack.c.h.b16 %v182
    %v269 = vunpack.c.l.b16 %v183
    %v270 = vunpack.c.h.b16 %v183
    %v271 = vunpack.c.l.b16 %v184
    %v272 = vunpack.c.h.b16 %v184
    %v273 = vunpack.c.l.b16 %v185
    %v274 = vunpack.c.h.b16 %v185
    %v275 = vunpack.c.l.b16 %v186
    %v276 = vunpack.c.h.b16 %v186
    %v277 = vunpack.c.l.b16 %v187
    %v278 = vunpack.c.h.b16 %v187
    %v279 = vunpack.c.l.b16 %v188
    %v280 = vunpack.c.h.b16 %v188
    %v281 = vunpack.c.l.b16 %v189
    %v282 = vunpack.c.h.b16 %v189
    %v283 = vunpack.c.l.b16 %v190
    %v284 = vunpack.c.h.b16 %v190
    %v285 = vunpack.c.l.b16 %v191
    %v286 = vunpack.c.h.b16 %v191
    %v287 = vunpack.c.l.b16 %v192
    %v288 = vunpack.c.h.b16 %v192
    %v289 = vpack.c.b16 %v229, %v225
    %v290 = vpack.c.b16 %v230, %v226
    %v291 = vpack.c.b16 %v231, %v227
    %v292 = vpack.c.b16 %v232, %v228
    %v293 = vpack.c.b16 %v237, %v233
    %v294 = vpack.c.b16 %v238, %v234
    %v295 = vpack.c.b16 %v239, %v235
    %v296 = vpack.c.b16 %v240, %v236
    %v297 = vpack.c.b16 %v245, %v241
    %v298 = vpack.c.b16 %v246, %v242
    %v299 = vpack.c.b16 %v247, %v243
    %v300 = vpack.c.b16 %v248, %v244
    %v301 = vpack.c.b16 %v253, %v249
    %v302 = vpack.c.b16 %v254, %v250
    %v303 = vpack.c.b16 %v255, %v251
    %v304 = vpack.c.b16 %v256, %v252
    %v305 = vpack.c.b16 %v261, %v257
    %v306 = vpack.c.b16 %v262, %v258
    %v307 = vpack.c.b16 %v263, %v259
    %v308 = vpack.c.b16 %v264, %v260
    %v309 = vpack.c.b16 %v269, %v265
    %v310 = vpack.c.b16 %v270, %v266
    %v311 = vpack.c.b16 %v271, %v267
    %v312 = vpack.c.b16 %v272, %v268
    %v313 = vpack.c.b16 %v277, %v273
    %v314 = vpack.c.b16 %v278, %v274
    %v315 = vpack.c.b16 %v279, %v275
    %v316 = vpack.c.b16 %v280, %v276
    %v317 = vpack.c.b16 %v285, %v281
    %v318 = vpack.c.b16 %v286, %v282
    %v319 = vpack.c.b16 %v287, %v283
    %v320 = vpack.c.b16 %v288, %v284
    %353 = vmatpush.bf16.msra.mxu0 %v317
    %354 = vmatpush.bf16.msra.mxu0 %v313
    %355 = vmatpush.bf16.msra.mxu0 %v309
    %356 = vmatpush.bf16.msra.mxu0 %v305
    %357 = vmatpush.bf16.msra.mxu0 %v301
    %358 = vmatpush.bf16.msra.mxu0 %v297
    %359 = vmatpush.bf16.msra.mxu0 %v293
    %360 = vmatpush.bf16.msra.mxu0 %v289
    %361 = vmatmul.bf16.gmra.mxu0 %v160
    %v362 = vpop.f32.mrf.mxu0
    %v363 = vadd.f32 0.0, %v362
    %v364 = vpop.f32.mrf.mxu0
    %365 = vdwg.mxu0
    %366 = vmatpush.bf16.msra.mxu0 %v318
    %367 = vmatpush.bf16.msra.mxu0 %v314
    %368 = vmatpush.bf16.msra.mxu0 %v310
    %369 = vmatpush.bf16.msra.mxu0 %v306
    %370 = vmatpush.bf16.msra.mxu0 %v302
    %371 = vmatpush.bf16.msra.mxu0 %v298
    %372 = vmatpush.bf16.msra.mxu0 %v294
    %373 = vmatpush.bf16.msra.mxu0 %v290
    %374 = vmatmul.bf16.gmra.mxu0 %v160
    %v375 = vpop.f32.mrf.mxu0
    %v376 = vadd.f32 0.0, %v375
    %v377 = vpop.f32.mrf.mxu0
    %378 = vdwg.mxu0
    %379 = vmatpush.bf16.msra.mxu0 %v319
    %380 = vmatpush.bf16.msra.mxu0 %v315
    %381 = vmatpush.bf16.msra.mxu0 %v311
    %382 = vmatpush.bf16.msra.mxu0 %v307
    %383 = vmatpush.bf16.msra.mxu0 %v303
    %384 = vmatpush.bf16.msra.mxu0 %v299
    %385 = vmatpush.bf16.msra.mxu0 %v295
    %386 = vmatpush.bf16.msra.mxu0 %v291
    %387 = vmatmul.bf16.gmra.mxu0 %v160
    %v388 = vpop.f32.mrf.mxu0
    %v389 = vadd.f32 0.0, %v388
    %v390 = vpop.f32.mrf.mxu0
    %391 = vdwg.mxu0
    %392 = vmatpush.bf16.msra.mxu0 %v320
    %393 = vmatpush.bf16.msra.mxu0 %v316
    %394 = vmatpush.bf16.msra.mxu0 %v312
    %395 = vmatpush.bf16.msra.mxu0 %v308
    %396 = vmatpush.bf16.msra.mxu0 %v304
    %397 = vmatpush.bf16.msra.mxu0 %v300
    %398 = vmatpush.bf16.msra.mxu0 %v296
    %399 = vmatpush.bf16.msra.mxu0 %v292
    %400 = vmatmul.bf16.gmra.mxu0 %v160
    %v401 = vpop.f32.mrf.mxu0
    %v402 = vadd.f32 0.0, %v401
    %v403 = vpop.f32.mrf.mxu0
    %404 = vdwg.mxu0
    %v407 = vunpack.c.l.b16 %v158
    %v408 = vunpack.c.h.b16 %v158
    %v409 = vunpack.c.l.b16 %v159
    %v410 = vunpack.c.h.b16 %v159
    %v411 = vpack.c.b16 %v407, %v407
    %v412 = vpack.c.b16 %v408, %v408
    %v413 = vpack.c.b16 %v409, %v409
    %v414 = vpack.c.b16 %v410, %v410
    %vm415 = vcmask 64512
    %v417 = vsel %vm415, %v157, 0
    %vm419 = vcmask 1043456
    %v421 = vsel %vm419, %v411, 0
    %v424 = vsel %vm419, %v412, 0
    %v427 = vsel %vm419, %v413, 0
    %v430 = vsel %vm419, %v414, 0
    %432 = vmatpush.bf16.msra.mxu0 0
    %433 = vmatpush.bf16.msra.mxu0 0
    %434 = vmatpush.bf16.msra.mxu0 0
    %435 = vmatpush.bf16.msra.mxu0 0
    %436 = vmatpush.bf16.msra.mxu0 0
    %437 = vmatpush.bf16.msra.mxu0 0
    %438 = vmatpush.bf16.msra.mxu0 0
    %439 = vmatpush.bf16.msra.mxu0 %v421
    %440 = vmatmul.bf16.gmra.mxu0 %v417
    %v441 = vpop.f32.mrf.mxu0
    %v442 = vadd.f32 %v363, %v441
    %v443 = vpop.f32.mrf.mxu0
    %444 = vdwg.mxu0
    %445 = vmatpush.bf16.msra.mxu0 0
    %446 = vmatpush.bf16.msra.mxu0 0
    %447 = vmatpush.bf16.msra.mxu0 0
    %448 = vmatpush.bf16.msra.mxu0 0
    %449 = vmatpush.bf16.msra.mxu0 0
    %450 = vmatpush.bf16.msra.mxu0 0
    %451 = vmatpush.bf16.msra.mxu0 0
    %452 = vmatpush.bf16.msra.mxu0 %v424
    %453 = vmatmul.bf16.gmra.mxu0 %v417
    %v454 = vpop.f32.mrf.mxu0
    %v455 = vadd.f32 %v376, %v454
    %v456 = vpop.f32.mrf.mxu0
    %457 = vdwg.mxu0
    %458 = vmatpush.bf16.msra.mxu0 0
    %459 = vmatpush.bf16.msra.mxu0 0
    %460 = vmatpush.bf16.msra.mxu0 0
    %461 = vmatpush.bf16.msra.mxu0 0
    %462 = vmatpush.bf16.msra.mxu0 0
    %463 = vmatpush.bf16.msra.mxu0 0
    %464 = vmatpush.bf16.msra.mxu0 0
    %465 = vmatpush.bf16.msra.mxu0 %v427
    %466 = vmatmul.bf16.gmra.mxu0 %v417
    %v467 = vpop.f32.mrf.mxu0
    %v468 = vadd.f32 %v389, %v467
    %v469 = vpop.f32.mrf.mxu0
    %470 = vdwg.mxu0
    %471 = vmatpush.bf16.msra.mxu0 0
    %472 = vmatpush.bf16.msra.mxu0 0
    %473 = vmatpush.bf16.msra.mxu0 0
    %474 = vmatpush.bf16.msra.mxu0 0
    %475 = vmatpush.bf16.msra.mxu0 0
    %476 = vmatpush.bf16.msra.mxu0 0
    %477 = vmatpush.bf16.msra.mxu0 0
    %478 = vmatpush.bf16.msra.mxu0 %v430
    %479 = vmatmul.bf16.gmra.mxu0 %v417
    %v480 = vpop.f32.mrf.mxu0
    %v481 = vadd.f32 %v402, %v480
    %v482 = vpop.f32.mrf.mxu0
    %483 = vdwg.mxu0
    %v484 = vadd.f32 %v442, %v135
    %v485 = vadd.f32 %v455, %v136
    %v486 = vadd.f32 %v468, %v137
    %v487 = vadd.f32 %v481, %v138
    %v488 = vxor.u32 %v484, 2147483648
    %v489 = vmul.f32 %v488, 1.442695
    %v490 = vpow.pop %v489
    %v491 = vadd.f32 %v490, 1.0
    %v492 = vrcp.pop %v491
    %v493 = vmul.f32 %v491, %v492
    %v494 = vsub.f32 1.0, %v493
    %v495 = vmul.f32 %v492, %v494
    %v496 = vadd.f32 %v492, %v495
    %vm497 = vweird.f32 %v491
    %vm498 = vweird.f32 %v492
    %vm499 = vmor %vm497, %vm498
    %v500 = vsel %vm499, %v492, %v496
    %v501 = vand.u32 2147483647, %v491
    %vm502 = vcmp.eq.f32.partialorder %v501, 8.507059e+37
    %v503 = vand.u32 %v491, 2147483648
    %v504 = vor.u32 1.1754944e-38, %v503
    %v505 = vsel %vm502, %v504, %v500
    %v506 = vmul.f32 1.0, %v505
    %v507 = vxor.u32 %v485, 2147483648
    %v508 = vmul.f32 %v507, 1.442695
    %v509 = vpow.pop %v508
    %v510 = vadd.f32 %v509, 1.0
    %v511 = vrcp.pop %v510
    %v512 = vmul.f32 %v510, %v511
    %v513 = vsub.f32 1.0, %v512
    %v514 = vmul.f32 %v511, %v513
    %v515 = vadd.f32 %v511, %v514
    %vm516 = vweird.f32 %v510
    %vm517 = vweird.f32 %v511
    %vm518 = vmor %vm516, %vm517
    %v519 = vsel %vm518, %v511, %v515
    %v520 = vand.u32 2147483647, %v510
    %vm521 = vcmp.eq.f32.partialorder %v520, 8.507059e+37
    %v522 = vand.u32 %v510, 2147483648
    %v523 = vor.u32 1.1754944e-38, %v522
    %v524 = vsel %vm521, %v523, %v519
    %v525 = vmul.f32 1.0, %v524
    %v526 = vtanh.pop %v486
    %v527 = vxor.u32 %v487, 2147483648
    %v528 = vmul.f32 %v527, 1.442695
    %v529 = vpow.pop %v528
    %v530 = vadd.f32 %v529, 1.0
    %v531 = vrcp.pop %v530
    %v532 = vmul.f32 %v530, %v531
    %v533 = vsub.f32 1.0, %v532
    %v534 = vmul.f32 %v531, %v533
    %v535 = vadd.f32 %v531, %v534
    %vm536 = vweird.f32 %v530
    %vm537 = vweird.f32 %v531
    %vm538 = vmor %vm536, %vm537
    %v539 = vsel %vm538, %v531, %v535
    %v540 = vand.u32 2147483647, %v530
    %vm541 = vcmp.eq.f32.partialorder %v540, 8.507059e+37
    %v542 = vand.u32 %v530, 2147483648
    %v543 = vor.u32 1.1754944e-38, %v542
    %v544 = vsel %vm541, %v543, %v539
    %v545 = vmul.f32 1.0, %v544
    %v546 = vmul.f32 %v525, %v154
    %v547 = vmul.f32 %v506, %v526
    %v548 = vadd.f32 %v546, %v547
    %v549 = vtanh.pop %v548
    %v550 = vmul.f32 %v545, %v549
    %v551 = vpack.c.bf16 %v550, %v550
    %v552 = vld [vmem:[#allocation4] sm:$0xff]
    %v553 = vld [vmem:[#allocation4 + $0x8] sm:$0xff]
    %v554 = vld [vmem:[#allocation4 + $0x10] sm:$0xff]
    %v555 = vld [vmem:[#allocation4 + $0x18] sm:$0xff]
    %v556 = vld [vmem:[#allocation4 + $0x20] sm:$0xff]
    %v557 = vld [vmem:[#allocation4 + $0x28] sm:$0xff]
    %v558 = vld [vmem:[#allocation4 + $0x30] sm:$0xff]
    %v559 = vld [vmem:[#allocation4 + $0x38] sm:$0xff]
    %v560 = vld [vmem:[#allocation4 + $0x40] sm:$0xff]
    %v561 = vld [vmem:[#allocation4 + $0x48] sm:$0xff]
    %v562 = vld [vmem:[#allocation4 + $0x50] sm:$0xff]
    %v563 = vld [vmem:[#allocation4 + $0x58] sm:$0xff]
    %v564 = vld [vmem:[#allocation4 + $0x60] sm:$0xff]
    %v565 = vld [vmem:[#allocation4 + $0x68] sm:$0xff]
    %v566 = vld [vmem:[#allocation4 + $0x70] sm:$0xff]
    %v567 = vld [vmem:[#allocation4 + $0x78] sm:$0xff]
    %v568 = vld [vmem:[#allocation4 + $0x80] sm:$0xff]
    %v569 = vld [vmem:[#allocation4 + $0x88] sm:$0xff]
    %v570 = vld [vmem:[#allocation4 + $0x90] sm:$0xff]
    %v571 = vld [vmem:[#allocation4 + $0x98] sm:$0xff]
    %v572 = vld [vmem:[#allocation4 + $0xa0] sm:$0xff]
    %v573 = vld [vmem:[#allocation4 + $0xa8] sm:$0xff]
    %v574 = vld [vmem:[#allocation4 + $0xb0] sm:$0xff]
    %v575 = vld [vmem:[#allocation4 + $0xb8] sm:$0xff]
    %v576 = vld [vmem:[#allocation4 + $0xc0] sm:$0xff]
    %v577 = vld [vmem:[#allocation4 + $0xc8] sm:$0xff]
    %v578 = vld [vmem:[#allocation4 + $0xd0] sm:$0xff]
    %v579 = vld [vmem:[#allocation4 + $0xd8] sm:$0xff]
    %v580 = vld [vmem:[#allocation4 + $0xe0] sm:$0xff]
    %v581 = vld [vmem:[#allocation4 + $0xe8] sm:$0xff]
    %v582 = vld [vmem:[#allocation4 + $0xf0] sm:$0xff]
    %v583 = vld [vmem:[#allocation4 + $0xf8] sm:$0xff]
    %v584 = vpack.c.bf16 %v155, %v155
    %v585 = vld [vmem:[#allocation5] sm:$0xff]
    %v586 = vld [vmem:[#allocation5 + $0x8] sm:$0xff]
    %v587 = vld [vmem:[#allocation5 + $0x10] sm:$0xff]
    %v588 = vld [vmem:[#allocation5 + $0x18] sm:$0xff]
    %v589 = vld [vmem:[#allocation5 + $0x20] sm:$0xff]
    %v590 = vld [vmem:[#allocation5 + $0x28] sm:$0xff]
    %v591 = vld [vmem:[#allocation5 + $0x30] sm:$0xff]
    %v592 = vld [vmem:[#allocation5 + $0x38] sm:$0xff]
    %v593 = vld [vmem:[#allocation5 + $0x40] sm:$0xff]
    %v594 = vld [vmem:[#allocation5 + $0x48] sm:$0xff]
    %v595 = vld [vmem:[#allocation5 + $0x50] sm:$0xff]
    %v596 = vld [vmem:[#allocation5 + $0x58] sm:$0xff]
    %v597 = vld [vmem:[#allocation5 + $0x60] sm:$0xff]
    %v598 = vld [vmem:[#allocation5 + $0x68] sm:$0xff]
    %v599 = vld [vmem:[#allocation5 + $0x70] sm:$0xff]
    %v600 = vld [vmem:[#allocation5 + $0x78] sm:$0xff]
    %v601 = vld [vmem:[#allocation5 + $0x80] sm:$0xff]
    %v602 = vld [vmem:[#allocation5 + $0x88] sm:$0xff]
    %v603 = vld [vmem:[#allocation5 + $0x90] sm:$0xff]
    %v604 = vld [vmem:[#allocation5 + $0x98] sm:$0xff]
    %v605 = vld [vmem:[#allocation5 + $0xa0] sm:$0xff]
    %v606 = vld [vmem:[#allocation5 + $0xa8] sm:$0xff]
    %v607 = vld [vmem:[#allocation5 + $0xb0] sm:$0xff]
    %v608 = vld [vmem:[#allocation5 + $0xb8] sm:$0xff]
    %v609 = vld [vmem:[#allocation5 + $0xc0] sm:$0xff]
    %v610 = vld [vmem:[#allocation5 + $0xc8] sm:$0xff]
    %v611 = vld [vmem:[#allocation5 + $0xd0] sm:$0xff]
    %v612 = vld [vmem:[#allocation5 + $0xd8] sm:$0xff]
    %v613 = vld [vmem:[#allocation5 + $0xe0] sm:$0xff]
    %v614 = vld [vmem:[#allocation5 + $0xe8] sm:$0xff]
    %v615 = vld [vmem:[#allocation5 + $0xf0] sm:$0xff]
    %v616 = vld [vmem:[#allocation5 + $0xf8] sm:$0xff]
    %v649 = vunpack.c.l.b16 %v585
    %v650 = vunpack.c.h.b16 %v585
    %v651 = vunpack.c.l.b16 %v586
    %v652 = vunpack.c.h.b16 %v586
    %v653 = vunpack.c.l.b16 %v587
    %v654 = vunpack.c.h.b16 %v587
    %v655 = vunpack.c.l.b16 %v588
    %v656 = vunpack.c.h.b16 %v588
    %v657 = vunpack.c.l.b16 %v589
    %v658 = vunpack.c.h.b16 %v589
    %v659 = vunpack.c.l.b16 %v590
    %v660 = vunpack.c.h.b16 %v590
    %v661 = vunpack.c.l.b16 %v591
    %v662 = vunpack.c.h.b16 %v591
    %v663 = vunpack.c.l.b16 %v592
    %v664 = vunpack.c.h.b16 %v592
    %v665 = vunpack.c.l.b16 %v593
    %v666 = vunpack.c.h.b16 %v593
    %v667 = vunpack.c.l.b16 %v594
    %v668 = vunpack.c.h.b16 %v594
    %v669 = vunpack.c.l.b16 %v595
    %v670 = vunpack.c.h.b16 %v595
    %v671 = vunpack.c.l.b16 %v596
    %v672 = vunpack.c.h.b16 %v596
    %v673 = vunpack.c.l.b16 %v597
    %v674 = vunpack.c.h.b16 %v597
    %v675 = vunpack.c.l.b16 %v598
    %v676 = vunpack.c.h.b16 %v598
    %v677 = vunpack.c.l.b16 %v599
    %v678 = vunpack.c.h.b16 %v599
    %v679 = vunpack.c.l.b16 %v600
    %v680 = vunpack.c.h.b16 %v600
    %v681 = vunpack.c.l.b16 %v601
    %v682 = vunpack.c.h.b16 %v601
    %v683 = vunpack.c.l.b16 %v602
    %v684 = vunpack.c.h.b16 %v602
    %v685 = vunpack.c.l.b16 %v603
    %v686 = vunpack.c.h.b16 %v603
    %v687 = vunpack.c.l.b16 %v604
    %v688 = vunpack.c.h.b16 %v604
    %v689 = vunpack.c.l.b16 %v605
    %v690 = vunpack.c.h.b16 %v605
    %v691 = vunpack.c.l.b16 %v606
    %v692 = vunpack.c.h.b16 %v606
    %v693 = vunpack.c.l.b16 %v607
    %v694 = vunpack.c.h.b16 %v607
    %v695 = vunpack.c.l.b16 %v608
    %v696 = vunpack.c.h.b16 %v608
    %v697 = vunpack.c.l.b16 %v609
    %v698 = vunpack.c.h.b16 %v609
    %v699 = vunpack.c.l.b16 %v610
    %v700 = vunpack.c.h.b16 %v610
    %v701 = vunpack.c.l.b16 %v611
    %v702 = vunpack.c.h.b16 %v611
    %v703 = vunpack.c.l.b16 %v612
    %v704 = vunpack.c.h.b16 %v612
    %v705 = vunpack.c.l.b16 %v613
    %v706 = vunpack.c.h.b16 %v613
    %v707 = vunpack.c.l.b16 %v614
    %v708 = vunpack.c.h.b16 %v614
    %v709 = vunpack.c.l.b16 %v615
    %v710 = vunpack.c.h.b16 %v615
    %v711 = vunpack.c.l.b16 %v616
    %v712 = vunpack.c.h.b16 %v616
    %v713 = vpack.c.b16 %v653, %v649
    %v714 = vpack.c.b16 %v654, %v650
    %v715 = vpack.c.b16 %v655, %v651
    %v716 = vpack.c.b16 %v656, %v652
    %v717 = vpack.c.b16 %v661, %v657
    %v718 = vpack.c.b16 %v662, %v658
    %v719 = vpack.c.b16 %v663, %v659
    %v720 = vpack.c.b16 %v664, %v660
    %v721 = vpack.c.b16 %v669, %v665
    %v722 = vpack.c.b16 %v670, %v666
    %v723 = vpack.c.b16 %v671, %v667
    %v724 = vpack.c.b16 %v672, %v668
    %v725 = vpack.c.b16 %v677, %v673
    %v726 = vpack.c.b16 %v678, %v674
    %v727 = vpack.c.b16 %v679, %v675
    %v728 = vpack.c.b16 %v680, %v676
    %v729 = vpack.c.b16 %v685, %v681
    %v730 = vpack.c.b16 %v686, %v682
    %v731 = vpack.c.b16 %v687, %v683
    %v732 = vpack.c.b16 %v688, %v684
    %v733 = vpack.c.b16 %v693, %v689
    %v734 = vpack.c.b16 %v694, %v690
    %v735 = vpack.c.b16 %v695, %v691
    %v736 = vpack.c.b16 %v696, %v692
    %v737 = vpack.c.b16 %v701, %v697
    %v738 = vpack.c.b16 %v702, %v698
    %v739 = vpack.c.b16 %v703, %v699
    %v740 = vpack.c.b16 %v704, %v700
    %v741 = vpack.c.b16 %v709, %v705
    %v742 = vpack.c.b16 %v710, %v706
    %v743 = vpack.c.b16 %v711, %v707
    %v744 = vpack.c.b16 %v712, %v708
    %777 = vmatpush.bf16.msra.mxu0 %v741
    %778 = vmatpush.bf16.msra.mxu0 %v737
    %779 = vmatpush.bf16.msra.mxu0 %v733
    %780 = vmatpush.bf16.msra.mxu0 %v729
    %781 = vmatpush.bf16.msra.mxu0 %v725
    %782 = vmatpush.bf16.msra.mxu0 %v721
    %783 = vmatpush.bf16.msra.mxu0 %v717
    %784 = vmatpush.bf16.msra.mxu0 %v713
    %785 = vmatmul.bf16.gmra.mxu0 %v584
    %v786 = vpop.f32.mrf.mxu0
    %v787 = vadd.f32 0.0, %v786
    %v788 = vpop.f32.mrf.mxu0
    %789 = vdwg.mxu0
    %790 = vmatpush.bf16.msra.mxu0 %v742
    %791 = vmatpush.bf16.msra.mxu0 %v738
    %792 = vmatpush.bf16.msra.mxu0 %v734
    %793 = vmatpush.bf16.msra.mxu0 %v730
    %794 = vmatpush.bf16.msra.mxu0 %v726
    %795 = vmatpush.bf16.msra.mxu0 %v722
    %796 = vmatpush.bf16.msra.mxu0 %v718
    %797 = vmatpush.bf16.msra.mxu0 %v714
    %798 = vmatmul.bf16.gmra.mxu0 %v584
    %v799 = vpop.f32.mrf.mxu0
    %v800 = vadd.f32 0.0, %v799
    %v801 = vpop.f32.mrf.mxu0
    %802 = vdwg.mxu0
    %803 = vmatpush.bf16.msra.mxu0 %v743
    %804 = vmatpush.bf16.msra.mxu0 %v739
    %805 = vmatpush.bf16.msra.mxu0 %v735
    %806 = vmatpush.bf16.msra.mxu0 %v731
    %807 = vmatpush.bf16.msra.mxu0 %v727
    %808 = vmatpush.bf16.msra.mxu0 %v723
    %809 = vmatpush.bf16.msra.mxu0 %v719
    %810 = vmatpush.bf16.msra.mxu0 %v715
    %811 = vmatmul.bf16.gmra.mxu0 %v584
    %v812 = vpop.f32.mrf.mxu0
    %v813 = vadd.f32 0.0, %v812
    %v814 = vpop.f32.mrf.mxu0
    %815 = vdwg.mxu0
    %816 = vmatpush.bf16.msra.mxu0 %v744
    %817 = vmatpush.bf16.msra.mxu0 %v740
    %818 = vmatpush.bf16.msra.mxu0 %v736
    %819 = vmatpush.bf16.msra.mxu0 %v732
    %820 = vmatpush.bf16.msra.mxu0 %v728
    %821 = vmatpush.bf16.msra.mxu0 %v724
    %822 = vmatpush.bf16.msra.mxu0 %v720
    %823 = vmatpush.bf16.msra.mxu0 %v716
    %824 = vmatmul.bf16.gmra.mxu0 %v584
    %v825 = vpop.f32.mrf.mxu0
    %v826 = vadd.f32 0.0, %v825
    %v827 = vpop.f32.mrf.mxu0
    %828 = vdwg.mxu0
    %v861 = vunpack.c.l.b16 %v552
    %v862 = vunpack.c.h.b16 %v552
    %v863 = vunpack.c.l.b16 %v553
    %v864 = vunpack.c.h.b16 %v553
    %v865 = vunpack.c.l.b16 %v554
    %v866 = vunpack.c.h.b16 %v554
    %v867 = vunpack.c.l.b16 %v555
    %v868 = vunpack.c.h.b16 %v555
    %v869 = vunpack.c.l.b16 %v556
    %v870 = vunpack.c.h.b16 %v556
    %v871 = vunpack.c.l.b16 %v557
    %v872 = vunpack.c.h.b16 %v557
    %v873 = vunpack.c.l.b16 %v558
    %v874 = vunpack.c.h.b16 %v558
    %v875 = vunpack.c.l.b16 %v559
    %v876 = vunpack.c.h.b16 %v559
    %v877 = vunpack.c.l.b16 %v560
    %v878 = vunpack.c.h.b16 %v560
    %v879 = vunpack.c.l.b16 %v561
    %v880 = vunpack.c.h.b16 %v561
    %v881 = vunpack.c.l.b16 %v562
    %v882 = vunpack.c.h.b16 %v562
    %v883 = vunpack.c.l.b16 %v563
    %v884 = vunpack.c.h.b16 %v563
    %v885 = vunpack.c.l.b16 %v564
    %v886 = vunpack.c.h.b16 %v564
    %v887 = vunpack.c.l.b16 %v565
    %v888 = vunpack.c.h.b16 %v565
    %v889 = vunpack.c.l.b16 %v566
    %v890 = vunpack.c.h.b16 %v566
    %v891 = vunpack.c.l.b16 %v567
    %v892 = vunpack.c.h.b16 %v567
    %v893 = vunpack.c.l.b16 %v568
    %v894 = vunpack.c.h.b16 %v568
    %v895 = vunpack.c.l.b16 %v569
    %v896 = vunpack.c.h.b16 %v569
    %v897 = vunpack.c.l.b16 %v570
    %v898 = vunpack.c.h.b16 %v570
    %v899 = vunpack.c.l.b16 %v571
    %v900 = vunpack.c.h.b16 %v571
    %v901 = vunpack.c.l.b16 %v572
    %v902 = vunpack.c.h.b16 %v572
    %v903 = vunpack.c.l.b16 %v573
    %v904 = vunpack.c.h.b16 %v573
    %v905 = vunpack.c.l.b16 %v574
    %v906 = vunpack.c.h.b16 %v574
    %v907 = vunpack.c.l.b16 %v575
    %v908 = vunpack.c.h.b16 %v575
    %v909 = vunpack.c.l.b16 %v576
    %v910 = vunpack.c.h.b16 %v576
    %v911 = vunpack.c.l.b16 %v577
    %v912 = vunpack.c.h.b16 %v577
    %v913 = vunpack.c.l.b16 %v578
    %v914 = vunpack.c.h.b16 %v578
    %v915 = vunpack.c.l.b16 %v579
    %v916 = vunpack.c.h.b16 %v579
    %v917 = vunpack.c.l.b16 %v580
    %v918 = vunpack.c.h.b16 %v580
    %v919 = vunpack.c.l.b16 %v581
    %v920 = vunpack.c.h.b16 %v581
    %v921 = vunpack.c.l.b16 %v582
    %v922 = vunpack.c.h.b16 %v582
    %v923 = vunpack.c.l.b16 %v583
    %v924 = vunpack.c.h.b16 %v583
    %v925 = vpack.c.b16 %v865, %v861
    %v926 = vpack.c.b16 %v866, %v862
    %v927 = vpack.c.b16 %v867, %v863
    %v928 = vpack.c.b16 %v868, %v864
    %v929 = vpack.c.b16 %v873, %v869
    %v930 = vpack.c.b16 %v874, %v870
    %v931 = vpack.c.b16 %v875, %v871
    %v932 = vpack.c.b16 %v876, %v872
    %v933 = vpack.c.b16 %v881, %v877
    %v934 = vpack.c.b16 %v882, %v878
    %v935 = vpack.c.b16 %v883, %v879
    %v936 = vpack.c.b16 %v884, %v880
    %v937 = vpack.c.b16 %v889, %v885
    %v938 = vpack.c.b16 %v890, %v886
    %v939 = vpack.c.b16 %v891, %v887
    %v940 = vpack.c.b16 %v892, %v888
    %v941 = vpack.c.b16 %v897, %v893
    %v942 = vpack.c.b16 %v898, %v894
    %v943 = vpack.c.b16 %v899, %v895
    %v944 = vpack.c.b16 %v900, %v896
    %v945 = vpack.c.b16 %v905, %v901
    %v946 = vpack.c.b16 %v906, %v902
    %v947 = vpack.c.b16 %v907, %v903
    %v948 = vpack.c.b16 %v908, %v904
    %v949 = vpack.c.b16 %v913, %v909
    %v950 = vpack.c.b16 %v914, %v910
    %v951 = vpack.c.b16 %v915, %v911
    %v952 = vpack.c.b16 %v916, %v912
    %v953 = vpack.c.b16 %v921, %v917
    %v954 = vpack.c.b16 %v922, %v918
    %v955 = vpack.c.b16 %v923, %v919
    %v956 = vpack.c.b16 %v924, %v920
    %989 = vmatpush.bf16.msra.mxu0 %v953
    %990 = vmatpush.bf16.msra.mxu0 %v949
    %991 = vmatpush.bf16.msra.mxu0 %v945
    %992 = vmatpush.bf16.msra.mxu0 %v941
    %993 = vmatpush.bf16.msra.mxu0 %v937
    %994 = vmatpush.bf16.msra.mxu0 %v933
    %995 = vmatpush.bf16.msra.mxu0 %v929
    %996 = vmatpush.bf16.msra.mxu0 %v925
    %997 = vmatmul.bf16.gmra.mxu0 %v551
    %v998 = vpop.f32.mrf.mxu0
    %v999 = vadd.f32 %v787, %v998
    %v1000 = vpop.f32.mrf.mxu0
    %1001 = vdwg.mxu0
    %1002 = vmatpush.bf16.msra.mxu0 %v954
    %1003 = vmatpush.bf16.msra.mxu0 %v950
    %1004 = vmatpush.bf16.msra.mxu0 %v946
    %1005 = vmatpush.bf16.msra.mxu0 %v942
    %1006 = vmatpush.bf16.msra.mxu0 %v938
    %1007 = vmatpush.bf16.msra.mxu0 %v934
    %1008 = vmatpush.bf16.msra.mxu0 %v930
    %1009 = vmatpush.bf16.msra.mxu0 %v926
    %1010 = vmatmul.bf16.gmra.mxu0 %v551
    %v1011 = vpop.f32.mrf.mxu0
    %v1012 = vadd.f32 %v800, %v1011
    %v1013 = vpop.f32.mrf.mxu0
    %1014 = vdwg.mxu0
    %1015 = vmatpush.bf16.msra.mxu0 %v955
    %1016 = vmatpush.bf16.msra.mxu0 %v951
    %1017 = vmatpush.bf16.msra.mxu0 %v947
    %1018 = vmatpush.bf16.msra.mxu0 %v943
    %1019 = vmatpush.bf16.msra.mxu0 %v939
    %1020 = vmatpush.bf16.msra.mxu0 %v935
    %1021 = vmatpush.bf16.msra.mxu0 %v931
    %1022 = vmatpush.bf16.msra.mxu0 %v927
    %1023 = vmatmul.bf16.gmra.mxu0 %v551
    %v1024 = vpop.f32.mrf.mxu0
    %v1025 = vadd.f32 %v813, %v1024
    %v1026 = vpop.f32.mrf.mxu0
    %1027 = vdwg.mxu0
    %1028 = vmatpush.bf16.msra.mxu0 %v956
    %1029 = vmatpush.bf16.msra.mxu0 %v952
    %1030 = vmatpush.bf16.msra.mxu0 %v948
    %1031 = vmatpush.bf16.msra.mxu0 %v944
    %1032 = vmatpush.bf16.msra.mxu0 %v940
    %1033 = vmatpush.bf16.msra.mxu0 %v936
    %1034 = vmatpush.bf16.msra.mxu0 %v932
    %1035 = vmatpush.bf16.msra.mxu0 %v928
    %1036 = vmatmul.bf16.gmra.mxu0 %v551
    %v1037 = vpop.f32.mrf.mxu0
    %v1038 = vadd.f32 %v826, %v1037
    %v1039 = vpop.f32.mrf.mxu0
    %1040 = vdwg.mxu0
    %v1041 = vadd.f32 %v999, %v145
    %v1042 = vadd.f32 %v1012, %v146
    %v1043 = vadd.f32 %v1025, %v147
    %v1044 = vadd.f32 %v1038, %v148
    %v1045 = vxor.u32 %v1041, 2147483648
    %v1046 = vmul.f32 %v1045, 1.442695
    %v1047 = vpow.pop %v1046
    %v1048 = vadd.f32 %v1047, 1.0
    %v1049 = vrcp.pop %v1048
    %v1050 = vmul.f32 %v1048, %v1049
    %v1051 = vsub.f32 1.0, %v1050
    %v1052 = vmul.f32 %v1049, %v1051
    %v1053 = vadd.f32 %v1049, %v1052
    %vm1054 = vweird.f32 %v1048
    %vm1055 = vweird.f32 %v1049
    %vm1056 = vmor %vm1054, %vm1055
    %v1057 = vsel %vm1056, %v1049, %v1053
    %v1058 = vand.u32 2147483647, %v1048
    %vm1059 = vcmp.eq.f32.partialorder %v1058, 8.507059e+37
    %v1060 = vand.u32 %v1048, 2147483648
    %v1061 = vor.u32 1.1754944e-38, %v1060
    %v1062 = vsel %vm1059, %v1061, %v1057
    %v1063 = vmul.f32 1.0, %v1062
    %v1064 = vxor.u32 %v1042, 2147483648
    %v1065 = vmul.f32 %v1064, 1.442695
    %v1066 = vpow.pop %v1065
    %v1067 = vadd.f32 %v1066, 1.0
    %v1068 = vrcp.pop %v1067
    %v1069 = vmul.f32 %v1067, %v1068
    %v1070 = vsub.f32 1.0, %v1069
    %v1071 = vmul.f32 %v1068, %v1070
    %v1072 = vadd.f32 %v1068, %v1071
    %vm1073 = vweird.f32 %v1067
    %vm1074 = vweird.f32 %v1068
    %vm1075 = vmor %vm1073, %vm1074
    %v1076 = vsel %vm1075, %v1068, %v1072
    %v1077 = vand.u32 2147483647, %v1067
    %vm1078 = vcmp.eq.f32.partialorder %v1077, 8.507059e+37
    %v1079 = vand.u32 %v1067, 2147483648
    %v1080 = vor.u32 1.1754944e-38, %v1079
    %v1081 = vsel %vm1078, %v1080, %v1076
    %v1082 = vmul.f32 1.0, %v1081
    %v1083 = vtanh.pop %v1043
    %v1084 = vxor.u32 %v1044, 2147483648
    %v1085 = vmul.f32 %v1084, 1.442695
    %v1086 = vpow.pop %v1085
    %v1087 = vadd.f32 %v1086, 1.0
    %v1088 = vrcp.pop %v1087
    %v1089 = vmul.f32 %v1087, %v1088
    %v1090 = vsub.f32 1.0, %v1089
    %v1091 = vmul.f32 %v1088, %v1090
    %v1092 = vadd.f32 %v1088, %v1091
    %vm1093 = vweird.f32 %v1087
    %vm1094 = vweird.f32 %v1088
    %vm1095 = vmor %vm1093, %vm1094
    %v1096 = vsel %vm1095, %v1088, %v1092
    %v1097 = vand.u32 2147483647, %v1087
    %vm1098 = vcmp.eq.f32.partialorder %v1097, 8.507059e+37
    %v1099 = vand.u32 %v1087, 2147483648
    %v1100 = vor.u32 1.1754944e-38, %v1099
    %v1101 = vsel %vm1098, %v1100, %v1096
    %v1102 = vmul.f32 1.0, %v1101
    %v1103 = vmul.f32 %v1082, %v156
    %v1104 = vmul.f32 %v1063, %v1083
    %v1105 = vadd.f32 %v1103, %v1104
    %v1106 = vtanh.pop %v1105
    %v1107 = vmul.f32 %v1102, %v1106
    %1108 = vst [vmem:[#allocation11] sm:$0xff] %v1107
    %s1109 = scalar_lea.vmem [#allocation13], 4
    %v1110 = vld [vmem:[%s1109] sm:$0xf]
    %v1111 = vld [vmem:[#allocation2] sm:$0xff]
    %v1112 = vld [vmem:[#allocation2 + $0x8] sm:$0xff]
    %v1113 = vld [vmem:[#allocation3] sm:$0xff]
    %v1114 = vld [vmem:[#allocation3 + $0x8] sm:$0xff]
    %v1115 = vld [vmem:[#allocation3 + $0x10] sm:$0xff]
    %v1116 = vld [vmem:[#allocation3 + $0x18] sm:$0xff]
    %v1117 = vld [vmem:[#allocation3 + $0x20] sm:$0xff]
    %v1118 = vld [vmem:[#allocation3 + $0x28] sm:$0xff]
    %v1119 = vld [vmem:[#allocation3 + $0x30] sm:$0xff]
    %v1120 = vld [vmem:[#allocation3 + $0x38] sm:$0xff]
    %v1121 = vld [vmem:[#allocation3 + $0x40] sm:$0xff]
    %v1122 = vld [vmem:[#allocation3 + $0x48] sm:$0xff]
    %v1123 = vld [vmem:[#allocation3 + $0x50] sm:$0xff]
    %v1124 = vld [vmem:[#allocation3 + $0x58] sm:$0xff]
    %v1125 = vld [vmem:[#allocation3 + $0x60] sm:$0xff]
    %v1126 = vld [vmem:[#allocation3 + $0x68] sm:$0xff]
    %v1127 = vld [vmem:[#allocation3 + $0x70] sm:$0xff]
    %v1128 = vld [vmem:[#allocation3 + $0x78] sm:$0xff]
    %v1129 = vld [vmem:[#allocation3 + $0x80] sm:$0xff]
    %v1130 = vld [vmem:[#allocation3 + $0x88] sm:$0xff]
    %v1131 = vld [vmem:[#allocation3 + $0x90] sm:$0xff]
    %v1132 = vld [vmem:[#allocation3 + $0x98] sm:$0xff]
    %v1133 = vld [vmem:[#allocation3 + $0xa0] sm:$0xff]
    %v1134 = vld [vmem:[#allocation3 + $0xa8] sm:$0xff]
    %v1135 = vld [vmem:[#allocation3 + $0xb0] sm:$0xff]
    %v1136 = vld [vmem:[#allocation3 + $0xb8] sm:$0xff]
    %v1137 = vld [vmem:[#allocation3 + $0xc0] sm:$0xff]
    %v1138 = vld [vmem:[#allocation3 + $0xc8] sm:$0xff]
    %v1139 = vld [vmem:[#allocation3 + $0xd0] sm:$0xff]
    %v1140 = vld [vmem:[#allocation3 + $0xd8] sm:$0xff]
    %v1141 = vld [vmem:[#allocation3 + $0xe0] sm:$0xff]
    %v1142 = vld [vmem:[#allocation3 + $0xe8] sm:$0xff]
    %v1143 = vld [vmem:[#allocation3 + $0xf0] sm:$0xff]
    %v1144 = vld [vmem:[#allocation3 + $0xf8] sm:$0xff]
    %v1177 = vunpack.c.l.b16 %v1113
    %v1178 = vunpack.c.h.b16 %v1113
    %v1179 = vunpack.c.l.b16 %v1114
    %v1180 = vunpack.c.h.b16 %v1114
    %v1181 = vunpack.c.l.b16 %v1115
    %v1182 = vunpack.c.h.b16 %v1115
    %v1183 = vunpack.c.l.b16 %v1116
    %v1184 = vunpack.c.h.b16 %v1116
    %v1185 = vunpack.c.l.b16 %v1117
    %v1186 = vunpack.c.h.b16 %v1117
    %v1187 = vunpack.c.l.b16 %v1118
    %v1188 = vunpack.c.h.b16 %v1118
    %v1189 = vunpack.c.l.b16 %v1119
    %v1190 = vunpack.c.h.b16 %v1119
    %v1191 = vunpack.c.l.b16 %v1120
    %v1192 = vunpack.c.h.b16 %v1120
    %v1193 = vunpack.c.l.b16 %v1121
    %v1194 = vunpack.c.h.b16 %v1121
    %v1195 = vunpack.c.l.b16 %v1122
    %v1196 = vunpack.c.h.b16 %v1122
    %v1197 = vunpack.c.l.b16 %v1123
    %v1198 = vunpack.c.h.b16 %v1123
    %v1199 = vunpack.c.l.b16 %v1124
    %v1200 = vunpack.c.h.b16 %v1124
    %v1201 = vunpack.c.l.b16 %v1125
    %v1202 = vunpack.c.h.b16 %v1125
    %v1203 = vunpack.c.l.b16 %v1126
    %v1204 = vunpack.c.h.b16 %v1126
    %v1205 = vunpack.c.l.b16 %v1127
    %v1206 = vunpack.c.h.b16 %v1127
    %v1207 = vunpack.c.l.b16 %v1128
    %v1208 = vunpack.c.h.b16 %v1128
    %v1209 = vunpack.c.l.b16 %v1129
    %v1210 = vunpack.c.h.b16 %v1129
    %v1211 = vunpack.c.l.b16 %v1130
    %v1212 = vunpack.c.h.b16 %v1130
    %v1213 = vunpack.c.l.b16 %v1131
    %v1214 = vunpack.c.h.b16 %v1131
    %v1215 = vunpack.c.l.b16 %v1132
    %v1216 = vunpack.c.h.b16 %v1132
    %v1217 = vunpack.c.l.b16 %v1133
    %v1218 = vunpack.c.h.b16 %v1133
    %v1219 = vunpack.c.l.b16 %v1134
    %v1220 = vunpack.c.h.b16 %v1134
    %v1221 = vunpack.c.l.b16 %v1135
    %v1222 = vunpack.c.h.b16 %v1135
    %v1223 = vunpack.c.l.b16 %v1136
    %v1224 = vunpack.c.h.b16 %v1136
    %v1225 = vunpack.c.l.b16 %v1137
    %v1226 = vunpack.c.h.b16 %v1137
    %v1227 = vunpack.c.l.b16 %v1138
    %v1228 = vunpack.c.h.b16 %v1138
    %v1229 = vunpack.c.l.b16 %v1139
    %v1230 = vunpack.c.h.b16 %v1139
    %v1231 = vunpack.c.l.b16 %v1140
    %v1232 = vunpack.c.h.b16 %v1140
    %v1233 = vunpack.c.l.b16 %v1141
    %v1234 = vunpack.c.h.b16 %v1141
    %v1235 = vunpack.c.l.b16 %v1142
    %v1236 = vunpack.c.h.b16 %v1142
    %v1237 = vunpack.c.l.b16 %v1143
    %v1238 = vunpack.c.h.b16 %v1143
    %v1239 = vunpack.c.l.b16 %v1144
    %v1240 = vunpack.c.h.b16 %v1144
    %v1241 = vpack.c.b16 %v1181, %v1177
    %v1242 = vpack.c.b16 %v1182, %v1178
    %v1243 = vpack.c.b16 %v1183, %v1179
    %v1244 = vpack.c.b16 %v1184, %v1180
    %v1245 = vpack.c.b16 %v1189, %v1185
    %v1246 = vpack.c.b16 %v1190, %v1186
    %v1247 = vpack.c.b16 %v1191, %v1187
    %v1248 = vpack.c.b16 %v1192, %v1188
    %v1249 = vpack.c.b16 %v1197, %v1193
    %v1250 = vpack.c.b16 %v1198, %v1194
    %v1251 = vpack.c.b16 %v1199, %v1195
    %v1252 = vpack.c.b16 %v1200, %v1196
    %v1253 = vpack.c.b16 %v1205, %v1201
    %v1254 = vpack.c.b16 %v1206, %v1202
    %v1255 = vpack.c.b16 %v1207, %v1203
    %v1256 = vpack.c.b16 %v1208, %v1204
    %v1257 = vpack.c.b16 %v1213, %v1209
    %v1258 = vpack.c.b16 %v1214, %v1210
    %v1259 = vpack.c.b16 %v1215, %v1211
    %v1260 = vpack.c.b16 %v1216, %v1212
    %v1261 = vpack.c.b16 %v1221, %v1217
    %v1262 = vpack.c.b16 %v1222, %v1218
    %v1263 = vpack.c.b16 %v1223, %v1219
    %v1264 = vpack.c.b16 %v1224, %v1220
    %v1265 = vpack.c.b16 %v1229, %v1225
    %v1266 = vpack.c.b16 %v1230, %v1226
    %v1267 = vpack.c.b16 %v1231, %v1227
    %v1268 = vpack.c.b16 %v1232, %v1228
    %v1269 = vpack.c.b16 %v1237, %v1233
    %v1270 = vpack.c.b16 %v1238, %v1234
    %v1271 = vpack.c.b16 %v1239, %v1235
    %v1272 = vpack.c.b16 %v1240, %v1236
    %1305 = vmatpush.bf16.msra.mxu0 %v1269
    %1306 = vmatpush.bf16.msra.mxu0 %v1265
    %1307 = vmatpush.bf16.msra.mxu0 %v1261
    %1308 = vmatpush.bf16.msra.mxu0 %v1257
    %1309 = vmatpush.bf16.msra.mxu0 %v1253
    %1310 = vmatpush.bf16.msra.mxu0 %v1249
    %1311 = vmatpush.bf16.msra.mxu0 %v1245
    %1312 = vmatpush.bf16.msra.mxu0 %v1241
    %1313 = vmatmul.bf16.gmra.mxu0 %v551
    %v1314 = vpop.f32.mrf.mxu0
    %v1315 = vadd.f32 0.0, %v1314
    %v1316 = vpop.f32.mrf.mxu0
    %1317 = vdwg.mxu0
    %1318 = vmatpush.bf16.msra.mxu0 %v1270
    %1319 = vmatpush.bf16.msra.mxu0 %v1266
    %1320 = vmatpush.bf16.msra.mxu0 %v1262
    %1321 = vmatpush.bf16.msra.mxu0 %v1258
    %1322 = vmatpush.bf16.msra.mxu0 %v1254
    %1323 = vmatpush.bf16.msra.mxu0 %v1250
    %1324 = vmatpush.bf16.msra.mxu0 %v1246
    %1325 = vmatpush.bf16.msra.mxu0 %v1242
    %1326 = vmatmul.bf16.gmra.mxu0 %v551
    %v1327 = vpop.f32.mrf.mxu0
    %v1328 = vadd.f32 0.0, %v1327
    %v1329 = vpop.f32.mrf.mxu0
    %1330 = vdwg.mxu0
    %1331 = vmatpush.bf16.msra.mxu0 %v1271
    %1332 = vmatpush.bf16.msra.mxu0 %v1267
    %1333 = vmatpush.bf16.msra.mxu0 %v1263
    %1334 = vmatpush.bf16.msra.mxu0 %v1259
    %1335 = vmatpush.bf16.msra.mxu0 %v1255
    %1336 = vmatpush.bf16.msra.mxu0 %v1251
    %1337 = vmatpush.bf16.msra.mxu0 %v1247
    %1338 = vmatpush.bf16.msra.mxu0 %v1243
    %1339 = vmatmul.bf16.gmra.mxu0 %v551
    %v1340 = vpop.f32.mrf.mxu0
    %v1341 = vadd.f32 0.0, %v1340
    %v1342 = vpop.f32.mrf.mxu0
    %1343 = vdwg.mxu0
    %1344 = vmatpush.bf16.msra.mxu0 %v1272
    %1345 = vmatpush.bf16.msra.mxu0 %v1268
    %1346 = vmatpush.bf16.msra.mxu0 %v1264
    %1347 = vmatpush.bf16.msra.mxu0 %v1260
    %1348 = vmatpush.bf16.msra.mxu0 %v1256
    %1349 = vmatpush.bf16.msra.mxu0 %v1252
    %1350 = vmatpush.bf16.msra.mxu0 %v1248
    %1351 = vmatpush.bf16.msra.mxu0 %v1244
    %1352 = vmatmul.bf16.gmra.mxu0 %v551
    %v1353 = vpop.f32.mrf.mxu0
    %v1354 = vadd.f32 0.0, %v1353
    %v1355 = vpop.f32.mrf.mxu0
    %1356 = vdwg.mxu0
    %v1359 = vunpack.c.l.b16 %v1111
    %v1360 = vunpack.c.h.b16 %v1111
    %v1361 = vunpack.c.l.b16 %v1112
    %v1362 = vunpack.c.h.b16 %v1112
    %v1363 = vpack.c.b16 %v1359, %v1359
    %v1364 = vpack.c.b16 %v1360, %v1360
    %v1365 = vpack.c.b16 %v1361, %v1361
    %v1366 = vpack.c.b16 %v1362, %v1362
    %v1368 = vsel %vm415, %v1110, 0
    %v1371 = vsel %vm419, %v1363, 0
    %v1374 = vsel %vm419, %v1364, 0
    %v1377 = vsel %vm419, %v1365, 0
    %v1380 = vsel %vm419, %v1366, 0
    %1382 = vmatpush.bf16.msra.mxu0 0
    %1383 = vmatpush.bf16.msra.mxu0 0
    %1384 = vmatpush.bf16.msra.mxu0 0
    %1385 = vmatpush.bf16.msra.mxu0 0
    %1386 = vmatpush.bf16.msra.mxu0 0
    %1387 = vmatpush.bf16.msra.mxu0 0
    %1388 = vmatpush.bf16.msra.mxu0 0
    %1389 = vmatpush.bf16.msra.mxu0 %v1371
    %1390 = vmatmul.bf16.gmra.mxu0 %v1368
    %v1391 = vpop.f32.mrf.mxu0
    %v1392 = vadd.f32 %v1315, %v1391
    %v1393 = vpop.f32.mrf.mxu0
    %1394 = vdwg.mxu0
    %1395 = vmatpush.bf16.msra.mxu0 0
    %1396 = vmatpush.bf16.msra.mxu0 0
    %1397 = vmatpush.bf16.msra.mxu0 0
    %1398 = vmatpush.bf16.msra.mxu0 0
    %1399 = vmatpush.bf16.msra.mxu0 0
    %1400 = vmatpush.bf16.msra.mxu0 0
    %1401 = vmatpush.bf16.msra.mxu0 0
    %1402 = vmatpush.bf16.msra.mxu0 %v1374
    %1403 = vmatmul.bf16.gmra.mxu0 %v1368
    %v1404 = vpop.f32.mrf.mxu0
    %v1405 = vadd.f32 %v1328, %v1404
    %v1406 = vpop.f32.mrf.mxu0
    %1407 = vdwg.mxu0
    %1408 = vmatpush.bf16.msra.mxu0 0
    %1409 = vmatpush.bf16.msra.mxu0 0
    %1410 = vmatpush.bf16.msra.mxu0 0
    %1411 = vmatpush.bf16.msra.mxu0 0
    %1412 = vmatpush.bf16.msra.mxu0 0
    %1413 = vmatpush.bf16.msra.mxu0 0
    %1414 = vmatpush.bf16.msra.mxu0 0
    %1415 = vmatpush.bf16.msra.mxu0 %v1377
    %1416 = vmatmul.bf16.gmra.mxu0 %v1368
    %v1417 = vpop.f32.mrf.mxu0
    %v1418 = vadd.f32 %v1341, %v1417
    %v1419 = vpop.f32.mrf.mxu0
    %1420 = vdwg.mxu0
    %1421 = vmatpush.bf16.msra.mxu0 0
    %1422 = vmatpush.bf16.msra.mxu0 0
    %1423 = vmatpush.bf16.msra.mxu0 0
    %1424 = vmatpush.bf16.msra.mxu0 0
    %1425 = vmatpush.bf16.msra.mxu0 0
    %1426 = vmatpush.bf16.msra.mxu0 0
    %1427 = vmatpush.bf16.msra.mxu0 0
    %1428 = vmatpush.bf16.msra.mxu0 %v1380
    %1429 = vmatmul.bf16.gmra.mxu0 %v1368
    %v1430 = vpop.f32.mrf.mxu0
    %v1431 = vadd.f32 %v1354, %v1430
    %v1432 = vpop.f32.mrf.mxu0
    %1433 = vdwg.mxu0
    %v1434 = vadd.f32 %v1392, %v135
    %v1435 = vadd.f32 %v1405, %v136
    %v1436 = vadd.f32 %v1418, %v137
    %v1437 = vadd.f32 %v1431, %v138
    %v1438 = vxor.u32 %v1434, 2147483648
    %v1439 = vmul.f32 %v1438, 1.442695
    %v1440 = vpow.pop %v1439
    %v1441 = vadd.f32 %v1440, 1.0
    %v1442 = vrcp.pop %v1441
    %v1443 = vmul.f32 %v1441, %v1442
    %v1444 = vsub.f32 1.0, %v1443
    %v1445 = vmul.f32 %v1442, %v1444
    %v1446 = vadd.f32 %v1442, %v1445
    %vm1447 = vweird.f32 %v1441
    %vm1448 = vweird.f32 %v1442
    %vm1449 = vmor %vm1447, %vm1448
    %v1450 = vsel %vm1449, %v1442, %v1446
    %v1451 = vand.u32 2147483647, %v1441
    %vm1452 = vcmp.eq.f32.partialorder %v1451, 8.507059e+37
    %v1453 = vand.u32 %v1441, 2147483648
    %v1454 = vor.u32 1.1754944e-38, %v1453
    %v1455 = vsel %vm1452, %v1454, %v1450
    %v1456 = vmul.f32 1.0, %v1455
    %v1457 = vxor.u32 %v1435, 2147483648
    %v1458 = vmul.f32 %v1457, 1.442695
    %v1459 = vpow.pop %v1458
    %v1460 = vadd.f32 %v1459, 1.0
    %v1461 = vrcp.pop %v1460
    %v1462 = vmul.f32 %v1460, %v1461
    %v1463 = vsub.f32 1.0, %v1462
    %v1464 = vmul.f32 %v1461, %v1463
    %v1465 = vadd.f32 %v1461, %v1464
    %vm1466 = vweird.f32 %v1460
    %vm1467 = vweird.f32 %v1461
    %vm1468 = vmor %vm1466, %vm1467
    %v1469 = vsel %vm1468, %v1461, %v1465
    %v1470 = vand.u32 2147483647, %v1460
    %vm1471 = vcmp.eq.f32.partialorder %v1470, 8.507059e+37
    %v1472 = vand.u32 %v1460, 2147483648
    %v1473 = vor.u32 1.1754944e-38, %v1472
    %v1474 = vsel %vm1471, %v1473, %v1469
    %v1475 = vmul.f32 1.0, %v1474
    %v1476 = vtanh.pop %v1436
    %v1477 = vxor.u32 %v1437, 2147483648
    %v1478 = vmul.f32 %v1477, 1.442695
    %v1479 = vpow.pop %v1478
    %v1480 = vadd.f32 %v1479, 1.0
    %v1481 = vrcp.pop %v1480
    %v1482 = vmul.f32 %v1480, %v1481
    %v1483 = vsub.f32 1.0, %v1482
    %v1484 = vmul.f32 %v1481, %v1483
    %v1485 = vadd.f32 %v1481, %v1484
    %vm1486 = vweird.f32 %v1480
    %vm1487 = vweird.f32 %v1481
    %vm1488 = vmor %vm1486, %vm1487
    %v1489 = vsel %vm1488, %v1481, %v1485
    %v1490 = vand.u32 2147483647, %v1480
    %vm1491 = vcmp.eq.f32.partialorder %v1490, 8.507059e+37
    %v1492 = vand.u32 %v1480, 2147483648
    %v1493 = vor.u32 1.1754944e-38, %v1492
    %v1494 = vsel %vm1491, %v1493, %v1489
    %v1495 = vmul.f32 1.0, %v1494
    %v1496 = vmul.f32 %v1475, %v548
    %v1497 = vmul.f32 %v1456, %v1476
    %v1498 = vadd.f32 %v1496, %v1497
    %v1499 = vtanh.pop %v1498
    %v1500 = vmul.f32 %v1495, %v1499
    %v1501 = vpack.c.bf16 %v1500, %v1500
    %v1502 = vld [vmem:[#allocation4] sm:$0xff]
    %v1503 = vld [vmem:[#allocation4 + $0x8] sm:$0xff]
    %v1504 = vld [vmem:[#allocation4 + $0x10] sm:$0xff]
    %v1505 = vld [vmem:[#allocation4 + $0x18] sm:$0xff]
    %v1506 = vld [vmem:[#allocation4 + $0x20] sm:$0xff]
    %v1507 = vld [vmem:[#allocation4 + $0x28] sm:$0xff]
    %v1508 = vld [vmem:[#allocation4 + $0x30] sm:$0xff]
    %v1509 = vld [vmem:[#allocation4 + $0x38] sm:$0xff]
    %v1510 = vld [vmem:[#allocation4 + $0x40] sm:$0xff]
    %v1511 = vld [vmem:[#allocation4 + $0x48] sm:$0xff]
    %v1512 = vld [vmem:[#allocation4 + $0x50] sm:$0xff]
    %v1513 = vld [vmem:[#allocation4 + $0x58] sm:$0xff]
    %v1514 = vld [vmem:[#allocation4 + $0x60] sm:$0xff]
    %v1515 = vld [vmem:[#allocation4 + $0x68] sm:$0xff]
    %v1516 = vld [vmem:[#allocation4 + $0x70] sm:$0xff]
    %v1517 = vld [vmem:[#allocation4 + $0x78] sm:$0xff]
    %v1518 = vld [vmem:[#allocation4 + $0x80] sm:$0xff]
    %v1519 = vld [vmem:[#allocation4 + $0x88] sm:$0xff]
    %v1520 = vld [vmem:[#allocation4 + $0x90] sm:$0xff]
    %v1521 = vld [vmem:[#allocation4 + $0x98] sm:$0xff]
    %v1522 = vld [vmem:[#allocation4 + $0xa0] sm:$0xff]
    %v1523 = vld [vmem:[#allocation4 + $0xa8] sm:$0xff]
    %v1524 = vld [vmem:[#allocation4 + $0xb0] sm:$0xff]
    %v1525 = vld [vmem:[#allocation4 + $0xb8] sm:$0xff]
    %v1526 = vld [vmem:[#allocation4 + $0xc0] sm:$0xff]
    %v1527 = vld [vmem:[#allocation4 + $0xc8] sm:$0xff]
    %v1528 = vld [vmem:[#allocation4 + $0xd0] sm:$0xff]
    %v1529 = vld [vmem:[#allocation4 + $0xd8] sm:$0xff]
    %v1530 = vld [vmem:[#allocation4 + $0xe0] sm:$0xff]
    %v1531 = vld [vmem:[#allocation4 + $0xe8] sm:$0xff]
    %v1532 = vld [vmem:[#allocation4 + $0xf0] sm:$0xff]
    %v1533 = vld [vmem:[#allocation4 + $0xf8] sm:$0xff]
    %v1534 = vpack.c.bf16 %v1107, %v1107
    %v1535 = vld [vmem:[#allocation5] sm:$0xff]
    %v1536 = vld [vmem:[#allocation5 + $0x8] sm:$0xff]
    %v1537 = vld [vmem:[#allocation5 + $0x10] sm:$0xff]
    %v1538 = vld [vmem:[#allocation5 + $0x18] sm:$0xff]
    %v1539 = vld [vmem:[#allocation5 + $0x20] sm:$0xff]
    %v1540 = vld [vmem:[#allocation5 + $0x28] sm:$0xff]
    %v1541 = vld [vmem:[#allocation5 + $0x30] sm:$0xff]
    %v1542 = vld [vmem:[#allocation5 + $0x38] sm:$0xff]
    %v1543 = vld [vmem:[#allocation5 + $0x40] sm:$0xff]
    %v1544 = vld [vmem:[#allocation5 + $0x48] sm:$0xff]
    %v1545 = vld [vmem:[#allocation5 + $0x50] sm:$0xff]
    %v1546 = vld [vmem:[#allocation5 + $0x58] sm:$0xff]
    %v1547 = vld [vmem:[#allocation5 + $0x60] sm:$0xff]
    %v1548 = vld [vmem:[#allocation5 + $0x68] sm:$0xff]
    %v1549 = vld [vmem:[#allocation5 + $0x70] sm:$0xff]
    %v1550 = vld [vmem:[#allocation5 + $0x78] sm:$0xff]
    %v1551 = vld [vmem:[#allocation5 + $0x80] sm:$0xff]
    %v1552 = vld [vmem:[#allocation5 + $0x88] sm:$0xff]
    %v1553 = vld [vmem:[#allocation5 + $0x90] sm:$0xff]
    %v1554 = vld [vmem:[#allocation5 + $0x98] sm:$0xff]
    %v1555 = vld [vmem:[#allocation5 + $0xa0] sm:$0xff]
    %v1556 = vld [vmem:[#allocation5 + $0xa8] sm:$0xff]
    %v1557 = vld [vmem:[#allocation5 + $0xb0] sm:$0xff]
    %v1558 = vld [vmem:[#allocation5 + $0xb8] sm:$0xff]
    %v1559 = vld [vmem:[#allocation5 + $0xc0] sm:$0xff]
    %v1560 = vld [vmem:[#allocation5 + $0xc8] sm:$0xff]
    %v1561 = vld [vmem:[#allocation5 + $0xd0] sm:$0xff]
    %v1562 = vld [vmem:[#allocation5 + $0xd8] sm:$0xff]
    %v1563 = vld [vmem:[#allocation5 + $0xe0] sm:$0xff]
    %v1564 = vld [vmem:[#allocation5 + $0xe8] sm:$0xff]
    %v1565 = vld [vmem:[#allocation5 + $0xf0] sm:$0xff]
    %v1566 = vld [vmem:[#allocation5 + $0xf8] sm:$0xff]
    %v1599 = vunpack.c.l.b16 %v1535
    %v1600 = vunpack.c.h.b16 %v1535
    %v1601 = vunpack.c.l.b16 %v1536
    %v1602 = vunpack.c.h.b16 %v1536
    %v1603 = vunpack.c.l.b16 %v1537
    %v1604 = vunpack.c.h.b16 %v1537
    %v1605 = vunpack.c.l.b16 %v1538
    %v1606 = vunpack.c.h.b16 %v1538
    %v1607 = vunpack.c.l.b16 %v1539
    %v1608 = vunpack.c.h.b16 %v1539
    %v1609 = vunpack.c.l.b16 %v1540
    %v1610 = vunpack.c.h.b16 %v1540
    %v1611 = vunpack.c.l.b16 %v1541
    %v1612 = vunpack.c.h.b16 %v1541
    %v1613 = vunpack.c.l.b16 %v1542
    %v1614 = vunpack.c.h.b16 %v1542
    %v1615 = vunpack.c.l.b16 %v1543
    %v1616 = vunpack.c.h.b16 %v1543
    %v1617 = vunpack.c.l.b16 %v1544
    %v1618 = vunpack.c.h.b16 %v1544
    %v1619 = vunpack.c.l.b16 %v1545
    %v1620 = vunpack.c.h.b16 %v1545
    %v1621 = vunpack.c.l.b16 %v1546
    %v1622 = vunpack.c.h.b16 %v1546
    %v1623 = vunpack.c.l.b16 %v1547
    %v1624 = vunpack.c.h.b16 %v1547
    %v1625 = vunpack.c.l.b16 %v1548
    %v1626 = vunpack.c.h.b16 %v1548
    %v1627 = vunpack.c.l.b16 %v1549
    %v1628 = vunpack.c.h.b16 %v1549
    %v1629 = vunpack.c.l.b16 %v1550
    %v1630 = vunpack.c.h.b16 %v1550
    %v1631 = vunpack.c.l.b16 %v1551
    %v1632 = vunpack.c.h.b16 %v1551
    %v1633 = vunpack.c.l.b16 %v1552
    %v1634 = vunpack.c.h.b16 %v1552
    %v1635 = vunpack.c.l.b16 %v1553
    %v1636 = vunpack.c.h.b16 %v1553
    %v1637 = vunpack.c.l.b16 %v1554
    %v1638 = vunpack.c.h.b16 %v1554
    %v1639 = vunpack.c.l.b16 %v1555
    %v1640 = vunpack.c.h.b16 %v1555
    %v1641 = vunpack.c.l.b16 %v1556
    %v1642 = vunpack.c.h.b16 %v1556
    %v1643 = vunpack.c.l.b16 %v1557
    %v1644 = vunpack.c.h.b16 %v1557
    %v1645 = vunpack.c.l.b16 %v1558
    %v1646 = vunpack.c.h.b16 %v1558
    %v1647 = vunpack.c.l.b16 %v1559
    %v1648 = vunpack.c.h.b16 %v1559
    %v1649 = vunpack.c.l.b16 %v1560
    %v1650 = vunpack.c.h.b16 %v1560
    %v1651 = vunpack.c.l.b16 %v1561
    %v1652 = vunpack.c.h.b16 %v1561
    %v1653 = vunpack.c.l.b16 %v1562
    %v1654 = vunpack.c.h.b16 %v1562
    %v1655 = vunpack.c.l.b16 %v1563
    %v1656 = vunpack.c.h.b16 %v1563
    %v1657 = vunpack.c.l.b16 %v1564
    %v1658 = vunpack.c.h.b16 %v1564
    %v1659 = vunpack.c.l.b16 %v1565
    %v1660 = vunpack.c.h.b16 %v1565
    %v1661 = vunpack.c.l.b16 %v1566
    %v1662 = vunpack.c.h.b16 %v1566
    %v1663 = vpack.c.b16 %v1603, %v1599
    %v1664 = vpack.c.b16 %v1604, %v1600
    %v1665 = vpack.c.b16 %v1605, %v1601
    %v1666 = vpack.c.b16 %v1606, %v1602
    %v1667 = vpack.c.b16 %v1611, %v1607
    %v1668 = vpack.c.b16 %v1612, %v1608
    %v1669 = vpack.c.b16 %v1613, %v1609
    %v1670 = vpack.c.b16 %v1614, %v1610
    %v1671 = vpack.c.b16 %v1619, %v1615
    %v1672 = vpack.c.b16 %v1620, %v1616
    %v1673 = vpack.c.b16 %v1621, %v1617
    %v1674 = vpack.c.b16 %v1622, %v1618
    %v1675 = vpack.c.b16 %v1627, %v1623
    %v1676 = vpack.c.b16 %v1628, %v1624
    %v1677 = vpack.c.b16 %v1629, %v1625
    %v1678 = vpack.c.b16 %v1630, %v1626
    %v1679 = vpack.c.b16 %v1635, %v1631
    %v1680 = vpack.c.b16 %v1636, %v1632
    %v1681 = vpack.c.b16 %v1637, %v1633
    %v1682 = vpack.c.b16 %v1638, %v1634
    %v1683 = vpack.c.b16 %v1643, %v1639
    %v1684 = vpack.c.b16 %v1644, %v1640
    %v1685 = vpack.c.b16 %v1645, %v1641
    %v1686 = vpack.c.b16 %v1646, %v1642
    %v1687 = vpack.c.b16 %v1651, %v1647
    %v1688 = vpack.c.b16 %v1652, %v1648
    %v1689 = vpack.c.b16 %v1653, %v1649
    %v1690 = vpack.c.b16 %v1654, %v1650
    %v1691 = vpack.c.b16 %v1659, %v1655
    %v1692 = vpack.c.b16 %v1660, %v1656
    %v1693 = vpack.c.b16 %v1661, %v1657
    %v1694 = vpack.c.b16 %v1662, %v1658
    %1727 = vmatpush.bf16.msra.mxu0 %v1691
    %1728 = vmatpush.bf16.msra.mxu0 %v1687
    %1729 = vmatpush.bf16.msra.mxu0 %v1683
    %1730 = vmatpush.bf16.msra.mxu0 %v1679
    %1731 = vmatpush.bf16.msra.mxu0 %v1675
    %1732 = vmatpush.bf16.msra.mxu0 %v1671
    %1733 = vmatpush.bf16.msra.mxu0 %v1667
    %1734 = vmatpush.bf16.msra.mxu0 %v1663
    %1735 = vmatmul.bf16.gmra.mxu0 %v1534
    %v1736 = vpop.f32.mrf.mxu0
    %v1737 = vadd.f32 0.0, %v1736
    %v1738 = vpop.f32.mrf.mxu0
    %1739 = vdwg.mxu0
    %1740 = vmatpush.bf16.msra.mxu0 %v1692
    %1741 = vmatpush.bf16.msra.mxu0 %v1688
    %1742 = vmatpush.bf16.msra.mxu0 %v1684
    %1743 = vmatpush.bf16.msra.mxu0 %v1680
    %1744 = vmatpush.bf16.msra.mxu0 %v1676
    %1745 = vmatpush.bf16.msra.mxu0 %v1672
    %1746 = vmatpush.bf16.msra.mxu0 %v1668
    %1747 = vmatpush.bf16.msra.mxu0 %v1664
    %1748 = vmatmul.bf16.gmra.mxu0 %v1534
    %v1749 = vpop.f32.mrf.mxu0
    %v1750 = vadd.f32 0.0, %v1749
    %v1751 = vpop.f32.mrf.mxu0
    %1752 = vdwg.mxu0
    %1753 = vmatpush.bf16.msra.mxu0 %v1693
    %1754 = vmatpush.bf16.msra.mxu0 %v1689
    %1755 = vmatpush.bf16.msra.mxu0 %v1685
    %1756 = vmatpush.bf16.msra.mxu0 %v1681
    %1757 = vmatpush.bf16.msra.mxu0 %v1677
    %1758 = vmatpush.bf16.msra.mxu0 %v1673
    %1759 = vmatpush.bf16.msra.mxu0 %v1669
    %1760 = vmatpush.bf16.msra.mxu0 %v1665
    %1761 = vmatmul.bf16.gmra.mxu0 %v1534
    %v1762 = vpop.f32.mrf.mxu0
    %v1763 = vadd.f32 0.0, %v1762
    %v1764 = vpop.f32.mrf.mxu0
    %1765 = vdwg.mxu0
    %1766 = vmatpush.bf16.msra.mxu0 %v1694
    %1767 = vmatpush.bf16.msra.mxu0 %v1690
    %1768 = vmatpush.bf16.msra.mxu0 %v1686
    %1769 = vmatpush.bf16.msra.mxu0 %v1682
    %1770 = vmatpush.bf16.msra.mxu0 %v1678
    %1771 = vmatpush.bf16.msra.mxu0 %v1674
    %1772 = vmatpush.bf16.msra.mxu0 %v1670
    %1773 = vmatpush.bf16.msra.mxu0 %v1666
    %1774 = vmatmul.bf16.gmra.mxu0 %v1534
    %v1775 = vpop.f32.mrf.mxu0
    %v1776 = vadd.f32 0.0, %v1775
    %v1777 = vpop.f32.mrf.mxu0
    %1778 = vdwg.mxu0
    %v1811 = vunpack.c.l.b16 %v1502
    %v1812 = vunpack.c.h.b16 %v1502
    %v1813 = vunpack.c.l.b16 %v1503
    %v1814 = vunpack.c.h.b16 %v1503
    %v1815 = vunpack.c.l.b16 %v1504
    %v1816 = vunpack.c.h.b16 %v1504
    %v1817 = vunpack.c.l.b16 %v1505
    %v1818 = vunpack.c.h.b16 %v1505
    %v1819 = vunpack.c.l.b16 %v1506
    %v1820 = vunpack.c.h.b16 %v1506
    %v1821 = vunpack.c.l.b16 %v1507
    %v1822 = vunpack.c.h.b16 %v1507
    %v1823 = vunpack.c.l.b16 %v1508
    %v1824 = vunpack.c.h.b16 %v1508
    %v1825 = vunpack.c.l.b16 %v1509
    %v1826 = vunpack.c.h.b16 %v1509
    %v1827 = vunpack.c.l.b16 %v1510
    %v1828 = vunpack.c.h.b16 %v1510
    %v1829 = vunpack.c.l.b16 %v1511
    %v1830 = vunpack.c.h.b16 %v1511
    %v1831 = vunpack.c.l.b16 %v1512
    %v1832 = vunpack.c.h.b16 %v1512
    %v1833 = vunpack.c.l.b16 %v1513
    %v1834 = vunpack.c.h.b16 %v1513
    %v1835 = vunpack.c.l.b16 %v1514
    %v1836 = vunpack.c.h.b16 %v1514
    %v1837 = vunpack.c.l.b16 %v1515
    %v1838 = vunpack.c.h.b16 %v1515
    %v1839 = vunpack.c.l.b16 %v1516
    %v1840 = vunpack.c.h.b16 %v1516
    %v1841 = vunpack.c.l.b16 %v1517
    %v1842 = vunpack.c.h.b16 %v1517
    %v1843 = vunpack.c.l.b16 %v1518
    %v1844 = vunpack.c.h.b16 %v1518
    %v1845 = vunpack.c.l.b16 %v1519
    %v1846 = vunpack.c.h.b16 %v1519
    %v1847 = vunpack.c.l.b16 %v1520
    %v1848 = vunpack.c.h.b16 %v1520
    %v1849 = vunpack.c.l.b16 %v1521
    %v1850 = vunpack.c.h.b16 %v1521
    %v1851 = vunpack.c.l.b16 %v1522
    %v1852 = vunpack.c.h.b16 %v1522
    %v1853 = vunpack.c.l.b16 %v1523
    %v1854 = vunpack.c.h.b16 %v1523
    %v1855 = vunpack.c.l.b16 %v1524
    %v1856 = vunpack.c.h.b16 %v1524
    %v1857 = vunpack.c.l.b16 %v1525
    %v1858 = vunpack.c.h.b16 %v1525
    %v1859 = vunpack.c.l.b16 %v1526
    %v1860 = vunpack.c.h.b16 %v1526
    %v1861 = vunpack.c.l.b16 %v1527
    %v1862 = vunpack.c.h.b16 %v1527
    %v1863 = vunpack.c.l.b16 %v1528
    %v1864 = vunpack.c.h.b16 %v1528
    %v1865 = vunpack.c.l.b16 %v1529
    %v1866 = vunpack.c.h.b16 %v1529
    %v1867 = vunpack.c.l.b16 %v1530
    %v1868 = vunpack.c.h.b16 %v1530
    %v1869 = vunpack.c.l.b16 %v1531
    %v1870 = vunpack.c.h.b16 %v1531
    %v1871 = vunpack.c.l.b16 %v1532
    %v1872 = vunpack.c.h.b16 %v1532
    %v1873 = vunpack.c.l.b16 %v1533
    %v1874 = vunpack.c.h.b16 %v1533
    %v1875 = vpack.c.b16 %v1815, %v1811
    %v1876 = vpack.c.b16 %v1816, %v1812
    %v1877 = vpack.c.b16 %v1817, %v1813
    %v1878 = vpack.c.b16 %v1818, %v1814
    %v1879 = vpack.c.b16 %v1823, %v1819
    %v1880 = vpack.c.b16 %v1824, %v1820
    %v1881 = vpack.c.b16 %v1825, %v1821
    %v1882 = vpack.c.b16 %v1826, %v1822
    %v1883 = vpack.c.b16 %v1831, %v1827
    %v1884 = vpack.c.b16 %v1832, %v1828
    %v1885 = vpack.c.b16 %v1833, %v1829
    %v1886 = vpack.c.b16 %v1834, %v1830
    %v1887 = vpack.c.b16 %v1839, %v1835
    %v1888 = vpack.c.b16 %v1840, %v1836
    %v1889 = vpack.c.b16 %v1841, %v1837
    %v1890 = vpack.c.b16 %v1842, %v1838
    %v1891 = vpack.c.b16 %v1847, %v1843
    %v1892 = vpack.c.b16 %v1848, %v1844
    %v1893 = vpack.c.b16 %v1849, %v1845
    %v1894 = vpack.c.b16 %v1850, %v1846
    %v1895 = vpack.c.b16 %v1855, %v1851
    %v1896 = vpack.c.b16 %v1856, %v1852
    %v1897 = vpack.c.b16 %v1857, %v1853
    %v1898 = vpack.c.b16 %v1858, %v1854
    %v1899 = vpack.c.b16 %v1863, %v1859
    %v1900 = vpack.c.b16 %v1864, %v1860
    %v1901 = vpack.c.b16 %v1865, %v1861
    %v1902 = vpack.c.b16 %v1866, %v1862
    %v1903 = vpack.c.b16 %v1871, %v1867
    %v1904 = vpack.c.b16 %v1872, %v1868
    %v1905 = vpack.c.b16 %v1873, %v1869
    %v1906 = vpack.c.b16 %v1874, %v1870
    %1939 = vmatpush.bf16.msra.mxu0 %v1903
    %1940 = vmatpush.bf16.msra.mxu0 %v1899
    %1941 = vmatpush.bf16.msra.mxu0 %v1895
    %1942 = vmatpush.bf16.msra.mxu0 %v1891
    %1943 = vmatpush.bf16.msra.mxu0 %v1887
    %1944 = vmatpush.bf16.msra.mxu0 %v1883
    %1945 = vmatpush.bf16.msra.mxu0 %v1879
    %1946 = vmatpush.bf16.msra.mxu0 %v1875
    %1947 = vmatmul.bf16.gmra.mxu0 %v1501
    %v1948 = vpop.f32.mrf.mxu0
    %v1949 = vadd.f32 %v1737, %v1948
    %v1950 = vpop.f32.mrf.mxu0
    %1951 = vdwg.mxu0
    %1952 = vmatpush.bf16.msra.mxu0 %v1904
    %1953 = vmatpush.bf16.msra.mxu0 %v1900
    %1954 = vmatpush.bf16.msra.mxu0 %v1896
    %1955 = vmatpush.bf16.msra.mxu0 %v1892
    %1956 = vmatpush.bf16.msra.mxu0 %v1888
    %1957 = vmatpush.bf16.msra.mxu0 %v1884
    %1958 = vmatpush.bf16.msra.mxu0 %v1880
    %1959 = vmatpush.bf16.msra.mxu0 %v1876
    %1960 = vmatmul.bf16.gmra.mxu0 %v1501
    %v1961 = vpop.f32.mrf.mxu0
    %v1962 = vadd.f32 %v1750, %v1961
    %v1963 = vpop.f32.mrf.mxu0
    %1964 = vdwg.mxu0
    %1965 = vmatpush.bf16.msra.mxu0 %v1905
    %1966 = vmatpush.bf16.msra.mxu0 %v1901
    %1967 = vmatpush.bf16.msra.mxu0 %v1897
    %1968 = vmatpush.bf16.msra.mxu0 %v1893
    %1969 = vmatpush.bf16.msra.mxu0 %v1889
    %1970 = vmatpush.bf16.msra.mxu0 %v1885
    %1971 = vmatpush.bf16.msra.mxu0 %v1881
    %1972 = vmatpush.bf16.msra.mxu0 %v1877
    %1973 = vmatmul.bf16.gmra.mxu0 %v1501
    %v1974 = vpop.f32.mrf.mxu0
    %v1975 = vadd.f32 %v1763, %v1974
    %v1976 = vpop.f32.mrf.mxu0
    %1977 = vdwg.mxu0
    %1978 = vmatpush.bf16.msra.mxu0 %v1906
    %1979 = vmatpush.bf16.msra.mxu0 %v1902
    %1980 = vmatpush.bf16.msra.mxu0 %v1898
    %1981 = vmatpush.bf16.msra.mxu0 %v1894
    %1982 = vmatpush.bf16.msra.mxu0 %v1890
    %1983 = vmatpush.bf16.msra.mxu0 %v1886
    %1984 = vmatpush.bf16.msra.mxu0 %v1882
    %1985 = vmatpush.bf16.msra.mxu0 %v1878
    %1986 = vmatmul.bf16.gmra.mxu0 %v1501
    %v1987 = vpop.f32.mrf.mxu0
    %v1988 = vadd.f32 %v1776, %v1987
    %v1989 = vpop.f32.mrf.mxu0
    %1990 = vdwg.mxu0
    %v1991 = vadd.f32 %v1949, %v145
    %v1992 = vadd.f32 %v1962, %v146
    %v1993 = vadd.f32 %v1975, %v147
    %v1994 = vadd.f32 %v1988, %v148
    %v1995 = vxor.u32 %v1991, 2147483648
    %v1996 = vmul.f32 %v1995, 1.442695
    %v1997 = vpow.pop %v1996
    %v1998 = vadd.f32 %v1997, 1.0
    %v1999 = vrcp.pop %v1998
    %v2000 = vmul.f32 %v1998, %v1999
    %v2001 = vsub.f32 1.0, %v2000
    %v2002 = vmul.f32 %v1999, %v2001
    %v2003 = vadd.f32 %v1999, %v2002
    %vm2004 = vweird.f32 %v1998
    %vm2005 = vweird.f32 %v1999
    %vm2006 = vmor %vm2004, %vm2005
    %v2007 = vsel %vm2006, %v1999, %v2003
    %v2008 = vand.u32 2147483647, %v1998
    %vm2009 = vcmp.eq.f32.partialorder %v2008, 8.507059e+37
    %v2010 = vand.u32 %v1998, 2147483648
    %v2011 = vor.u32 1.1754944e-38, %v2010
    %v2012 = vsel %vm2009, %v2011, %v2007
    %v2013 = vmul.f32 1.0, %v2012
    %v2014 = vxor.u32 %v1992, 2147483648
    %v2015 = vmul.f32 %v2014, 1.442695
    %v2016 = vpow.pop %v2015
    %v2017 = vadd.f32 %v2016, 1.0
    %v2018 = vrcp.pop %v2017
    %v2019 = vmul.f32 %v2017, %v2018
    %v2020 = vsub.f32 1.0, %v2019
    %v2021 = vmul.f32 %v2018, %v2020
    %v2022 = vadd.f32 %v2018, %v2021
    %vm2023 = vweird.f32 %v2017
    %vm2024 = vweird.f32 %v2018
    %vm2025 = vmor %vm2023, %vm2024
    %v2026 = vsel %vm2025, %v2018, %v2022
    %v2027 = vand.u32 2147483647, %v2017
    %vm2028 = vcmp.eq.f32.partialorder %v2027, 8.507059e+37
    %v2029 = vand.u32 %v2017, 2147483648
    %v2030 = vor.u32 1.1754944e-38, %v2029
    %v2031 = vsel %vm2028, %v2030, %v2026
    %v2032 = vmul.f32 1.0, %v2031
    %v2033 = vtanh.pop %v1993
    %v2034 = vxor.u32 %v1994, 2147483648
    %v2035 = vmul.f32 %v2034, 1.442695
    %v2036 = vpow.pop %v2035
    %v2037 = vadd.f32 %v2036, 1.0
    %v2038 = vrcp.pop %v2037
    %v2039 = vmul.f32 %v2037, %v2038
    %v2040 = vsub.f32 1.0, %v2039
    %v2041 = vmul.f32 %v2038, %v2040
    %v2042 = vadd.f32 %v2038, %v2041
    %vm2043 = vweird.f32 %v2037
    %vm2044 = vweird.f32 %v2038
    %vm2045 = vmor %vm2043, %vm2044
    %v2046 = vsel %vm2045, %v2038, %v2042
    %v2047 = vand.u32 2147483647, %v2037
    %vm2048 = vcmp.eq.f32.partialorder %v2047, 8.507059e+37
    %v2049 = vand.u32 %v2037, 2147483648
    %v2050 = vor.u32 1.1754944e-38, %v2049
    %v2051 = vsel %vm2048, %v2050, %v2046
    %v2052 = vmul.f32 1.0, %v2051
    %v2053 = vmul.f32 %v2032, %v1105
    %v2054 = vmul.f32 %v2013, %v2033
    %v2055 = vadd.f32 %v2053, %v2054
    %v2056 = vtanh.pop %v2055
    %v2057 = vmul.f32 %v2052, %v2056
    %s2058 = scalar_lea.vmem [#allocation11], 8
    %2059 = vst [vmem:[%s2058] sm:$0xff] %v2057
    %s2060 = scalar_lea.vmem [#allocation13], 8
    %v2061 = vld [vmem:[%s2060] sm:$0xf]
    %v2062 = vld [vmem:[#allocation2] sm:$0xff]
    %v2063 = vld [vmem:[#allocation2 + $0x8] sm:$0xff]
    %v2064 = vld [vmem:[#allocation3] sm:$0xff]
    %v2065 = vld [vmem:[#allocation3 + $0x8] sm:$0xff]
    %v2066 = vld [vmem:[#allocation3 + $0x10] sm:$0xff]
    %v2067 = vld [vmem:[#allocation3 + $0x18] sm:$0xff]
    %v2068 = vld [vmem:[#allocation3 + $0x20] sm:$0xff]
    %v2069 = vld [vmem:[#allocation3 + $0x28] sm:$0xff]
    %v2070 = vld [vmem:[#allocation3 + $0x30] sm:$0xff]
    %v2071 = vld [vmem:[#allocation3 + $0x38] sm:$0xff]
    %v2072 = vld [vmem:[#allocation3 + $0x40] sm:$0xff]
    %v2073 = vld [vmem:[#allocation3 + $0x48] sm:$0xff]
    %v2074 = vld [vmem:[#allocation3 + $0x50] sm:$0xff]
    %v2075 = vld [vmem:[#allocation3 + $0x58] sm:$0xff]
    %v2076 = vld [vmem:[#allocation3 + $0x60] sm:$0xff]
    %v2077 = vld [vmem:[#allocation3 + $0x68] sm:$0xff]
    %v2078 = vld [vmem:[#allocation3 + $0x70] sm:$0xff]
    %v2079 = vld [vmem:[#allocation3 + $0x78] sm:$0xff]
    %v2080 = vld [vmem:[#allocation3 + $0x80] sm:$0xff]
    %v2081 = vld [vmem:[#allocation3 + $0x88] sm:$0xff]
    %v2082 = vld [vmem:[#allocation3 + $0x90] sm:$0xff]
    %v2083 = vld [vmem:[#allocation3 + $0x98] sm:$0xff]
    %v2084 = vld [vmem:[#allocation3 + $0xa0] sm:$0xff]
    %v2085 = vld [vmem:[#allocation3 + $0xa8] sm:$0xff]
    %v2086 = vld [vmem:[#allocation3 + $0xb0] sm:$0xff]
    %v2087 = vld [vmem:[#allocation3 + $0xb8] sm:$0xff]
    %v2088 = vld [vmem:[#allocation3 + $0xc0] sm:$0xff]
    %v2089 = vld [vmem:[#allocation3 + $0xc8] sm:$0xff]
    %v2090 = vld [vmem:[#allocation3 + $0xd0] sm:$0xff]
    %v2091 = vld [vmem:[#allocation3 + $0xd8] sm:$0xff]
    %v2092 = vld [vmem:[#allocation3 + $0xe0] sm:$0xff]
    %v2093 = vld [vmem:[#allocation3 + $0xe8] sm:$0xff]
    %v2094 = vld [vmem:[#allocation3 + $0xf0] sm:$0xff]
    %v2095 = vld [vmem:[#allocation3 + $0xf8] sm:$0xff]
    %v2128 = vunpack.c.l.b16 %v2064
    %v2129 = vunpack.c.h.b16 %v2064
    %v2130 = vunpack.c.l.b16 %v2065
    %v2131 = vunpack.c.h.b16 %v2065
    %v2132 = vunpack.c.l.b16 %v2066
    %v2133 = vunpack.c.h.b16 %v2066
    %v2134 = vunpack.c.l.b16 %v2067
    %v2135 = vunpack.c.h.b16 %v2067
    %v2136 = vunpack.c.l.b16 %v2068
    %v2137 = vunpack.c.h.b16 %v2068
    %v2138 = vunpack.c.l.b16 %v2069
    %v2139 = vunpack.c.h.b16 %v2069
    %v2140 = vunpack.c.l.b16 %v2070
    %v2141 = vunpack.c.h.b16 %v2070
    %v2142 = vunpack.c.l.b16 %v2071
    %v2143 = vunpack.c.h.b16 %v2071
    %v2144 = vunpack.c.l.b16 %v2072
    %v2145 = vunpack.c.h.b16 %v2072
    %v2146 = vunpack.c.l.b16 %v2073
    %v2147 = vunpack.c.h.b16 %v2073
    %v2148 = vunpack.c.l.b16 %v2074
    %v2149 = vunpack.c.h.b16 %v2074
    %v2150 = vunpack.c.l.b16 %v2075
    %v2151 = vunpack.c.h.b16 %v2075
    %v2152 = vunpack.c.l.b16 %v2076
    %v2153 = vunpack.c.h.b16 %v2076
    %v2154 = vunpack.c.l.b16 %v2077
    %v2155 = vunpack.c.h.b16 %v2077
    %v2156 = vunpack.c.l.b16 %v2078
    %v2157 = vunpack.c.h.b16 %v2078
    %v2158 = vunpack.c.l.b16 %v2079
    %v2159 = vunpack.c.h.b16 %v2079
    %v2160 = vunpack.c.l.b16 %v2080
    %v2161 = vunpack.c.h.b16 %v2080
    %v2162 = vunpack.c.l.b16 %v2081
    %v2163 = vunpack.c.h.b16 %v2081
    %v2164 = vunpack.c.l.b16 %v2082
    %v2165 = vunpack.c.h.b16 %v2082
    %v2166 = vunpack.c.l.b16 %v2083
    %v2167 = vunpack.c.h.b16 %v2083
    %v2168 = vunpack.c.l.b16 %v2084
    %v2169 = vunpack.c.h.b16 %v2084
    %v2170 = vunpack.c.l.b16 %v2085
    %v2171 = vunpack.c.h.b16 %v2085
    %v2172 = vunpack.c.l.b16 %v2086
    %v2173 = vunpack.c.h.b16 %v2086
    %v2174 = vunpack.c.l.b16 %v2087
    %v2175 = vunpack.c.h.b16 %v2087
    %v2176 = vunpack.c.l.b16 %v2088
    %v2177 = vunpack.c.h.b16 %v2088
    %v2178 = vunpack.c.l.b16 %v2089
    %v2179 = vunpack.c.h.b16 %v2089
    %v2180 = vunpack.c.l.b16 %v2090
    %v2181 = vunpack.c.h.b16 %v2090
    %v2182 = vunpack.c.l.b16 %v2091
    %v2183 = vunpack.c.h.b16 %v2091
    %v2184 = vunpack.c.l.b16 %v2092
    %v2185 = vunpack.c.h.b16 %v2092
    %v2186 = vunpack.c.l.b16 %v2093
    %v2187 = vunpack.c.h.b16 %v2093
    %v2188 = vunpack.c.l.b16 %v2094
    %v2189 = vunpack.c.h.b16 %v2094
    %v2190 = vunpack.c.l.b16 %v2095
    %v2191 = vunpack.c.h.b16 %v2095
    %v2192 = vpack.c.b16 %v2132, %v2128
    %v2193 = vpack.c.b16 %v2133, %v2129
    %v2194 = vpack.c.b16 %v2134, %v2130
    %v2195 = vpack.c.b16 %v2135, %v2131
    %v2196 = vpack.c.b16 %v2140, %v2136
    %v2197 = vpack.c.b16 %v2141, %v2137
    %v2198 = vpack.c.b16 %v2142, %v2138
    %v2199 = vpack.c.b16 %v2143, %v2139
    %v2200 = vpack.c.b16 %v2148, %v2144
    %v2201 = vpack.c.b16 %v2149, %v2145
    %v2202 = vpack.c.b16 %v2150, %v2146
    %v2203 = vpack.c.b16 %v2151, %v2147
    %v2204 = vpack.c.b16 %v2156, %v2152
    %v2205 = vpack.c.b16 %v2157, %v2153
    %v2206 = vpack.c.b16 %v2158, %v2154
    %v2207 = vpack.c.b16 %v2159, %v2155
    %v2208 = vpack.c.b16 %v2164, %v2160
    %v2209 = vpack.c.b16 %v2165, %v2161
    %v2210 = vpack.c.b16 %v2166, %v2162
    %v2211 = vpack.c.b16 %v2167, %v2163
    %v2212 = vpack.c.b16 %v2172, %v2168
    %v2213 = vpack.c.b16 %v2173, %v2169
    %v2214 = vpack.c.b16 %v2174, %v2170
    %v2215 = vpack.c.b16 %v2175, %v2171
    %v2216 = vpack.c.b16 %v2180, %v2176
    %v2217 = vpack.c.b16 %v2181, %v2177
    %v2218 = vpack.c.b16 %v2182, %v2178
    %v2219 = vpack.c.b16 %v2183, %v2179
    %v2220 = vpack.c.b16 %v2188, %v2184
    %v2221 = vpack.c.b16 %v2189, %v2185
    %v2222 = vpack.c.b16 %v2190, %v2186
    %v2223 = vpack.c.b16 %v2191, %v2187
    %2256 = vmatpush.bf16.msra.mxu0 %v2220
    %2257 = vmatpush.bf16.msra.mxu0 %v2216
    %2258 = vmatpush.bf16.msra.mxu0 %v2212
    %2259 = vmatpush.bf16.msra.mxu0 %v2208
    %2260 = vmatpush.bf16.msra.mxu0 %v2204
    %2261 = vmatpush.bf16.msra.mxu0 %v2200
    %2262 = vmatpush.bf16.msra.mxu0 %v2196
    %2263 = vmatpush.bf16.msra.mxu0 %v2192
    %2264 = vmatmul.bf16.gmra.mxu0 %v1501
    %v2265 = vpop.f32.mrf.mxu0
    %v2266 = vadd.f32 0.0, %v2265
    %v2267 = vpop.f32.mrf.mxu0
    %2268 = vdwg.mxu0
    %2269 = vmatpush.bf16.msra.mxu0 %v2221
    %2270 = vmatpush.bf16.msra.mxu0 %v2217
    %2271 = vmatpush.bf16.msra.mxu0 %v2213
    %2272 = vmatpush.bf16.msra.mxu0 %v2209
    %2273 = vmatpush.bf16.msra.mxu0 %v2205
    %2274 = vmatpush.bf16.msra.mxu0 %v2201
    %2275 = vmatpush.bf16.msra.mxu0 %v2197
    %2276 = vmatpush.bf16.msra.mxu0 %v2193
    %2277 = vmatmul.bf16.gmra.mxu0 %v1501
    %v2278 = vpop.f32.mrf.mxu0
    %v2279 = vadd.f32 0.0, %v2278
    %v2280 = vpop.f32.mrf.mxu0
    %2281 = vdwg.mxu0
    %2282 = vmatpush.bf16.msra.mxu0 %v2222
    %2283 = vmatpush.bf16.msra.mxu0 %v2218
    %2284 = vmatpush.bf16.msra.mxu0 %v2214
    %2285 = vmatpush.bf16.msra.mxu0 %v2210
    %2286 = vmatpush.bf16.msra.mxu0 %v2206
    %2287 = vmatpush.bf16.msra.mxu0 %v2202
    %2288 = vmatpush.bf16.msra.mxu0 %v2198
    %2289 = vmatpush.bf16.msra.mxu0 %v2194
    %2290 = vmatmul.bf16.gmra.mxu0 %v1501
    %v2291 = vpop.f32.mrf.mxu0
    %v2292 = vadd.f32 0.0, %v2291
    %v2293 = vpop.f32.mrf.mxu0
    %2294 = vdwg.mxu0
    %2295 = vmatpush.bf16.msra.mxu0 %v2223
    %2296 = vmatpush.bf16.msra.mxu0 %v2219
    %2297 = vmatpush.bf16.msra.mxu0 %v2215
    %2298 = vmatpush.bf16.msra.mxu0 %v2211
    %2299 = vmatpush.bf16.msra.mxu0 %v2207
    %2300 = vmatpush.bf16.msra.mxu0 %v2203
    %2301 = vmatpush.bf16.msra.mxu0 %v2199
    %2302 = vmatpush.bf16.msra.mxu0 %v2195
    %2303 = vmatmul.bf16.gmra.mxu0 %v1501
    %v2304 = vpop.f32.mrf.mxu0
    %v2305 = vadd.f32 0.0, %v2304
    %v2306 = vpop.f32.mrf.mxu0
    %2307 = vdwg.mxu0
    %v2310 = vunpack.c.l.b16 %v2062
    %v2311 = vunpack.c.h.b16 %v2062
    %v2312 = vunpack.c.l.b16 %v2063
    %v2313 = vunpack.c.h.b16 %v2063
    %v2314 = vpack.c.b16 %v2310, %v2310
    %v2315 = vpack.c.b16 %v2311, %v2311
    %v2316 = vpack.c.b16 %v2312, %v2312
    %v2317 = vpack.c.b16 %v2313, %v2313
    %v2319 = vsel %vm415, %v2061, 0
    %v2322 = vsel %vm419, %v2314, 0
    %v2325 = vsel %vm419, %v2315, 0
    %v2328 = vsel %vm419, %v2316, 0
    %v2331 = vsel %vm419, %v2317, 0
    %2333 = vmatpush.bf16.msra.mxu0 0
    %2334 = vmatpush.bf16.msra.mxu0 0
    %2335 = vmatpush.bf16.msra.mxu0 0
    %2336 = vmatpush.bf16.msra.mxu0 0
    %2337 = vmatpush.bf16.msra.mxu0 0
    %2338 = vmatpush.bf16.msra.mxu0 0
    %2339 = vmatpush.bf16.msra.mxu0 0
    %2340 = vmatpush.bf16.msra.mxu0 %v2322
    %2341 = vmatmul.bf16.gmra.mxu0 %v2319
    %v2342 = vpop.f32.mrf.mxu0
    %v2343 = vadd.f32 %v2266, %v2342
    %v2344 = vpop.f32.mrf.mxu0
    %2345 = vdwg.mxu0
    %2346 = vmatpush.bf16.msra.mxu0 0
    %2347 = vmatpush.bf16.msra.mxu0 0
    %2348 = vmatpush.bf16.msra.mxu0 0
    %2349 = vmatpush.bf16.msra.mxu0 0
    %2350 = vmatpush.bf16.msra.mxu0 0
    %2351 = vmatpush.bf16.msra.mxu0 0
    %2352 = vmatpush.bf16.msra.mxu0 0
    %2353 = vmatpush.bf16.msra.mxu0 %v2325
    %2354 = vmatmul.bf16.gmra.mxu0 %v2319
    %v2355 = vpop.f32.mrf.mxu0
    %v2356 = vadd.f32 %v2279, %v2355
    %v2357 = vpop.f32.mrf.mxu0
    %2358 = vdwg.mxu0
    %2359 = vmatpush.bf16.msra.mxu0 0
    %2360 = vmatpush.bf16.msra.mxu0 0
    %2361 = vmatpush.bf16.msra.mxu0 0
    %2362 = vmatpush.bf16.msra.mxu0 0
    %2363 = vmatpush.bf16.msra.mxu0 0
    %2364 = vmatpush.bf16.msra.mxu0 0
    %2365 = vmatpush.bf16.msra.mxu0 0
    %2366 = vmatpush.bf16.msra.mxu0 %v2328
    %2367 = vmatmul.bf16.gmra.mxu0 %v2319
    %v2368 = vpop.f32.mrf.mxu0
    %v2369 = vadd.f32 %v2292, %v2368
    %v2370 = vpop.f32.mrf.mxu0
    %2371 = vdwg.mxu0
    %2372 = vmatpush.bf16.msra.mxu0 0
    %2373 = vmatpush.bf16.msra.mxu0 0
    %2374 = vmatpush.bf16.msra.mxu0 0
    %2375 = vmatpush.bf16.msra.mxu0 0
    %2376 = vmatpush.bf16.msra.mxu0 0
    %2377 = vmatpush.bf16.msra.mxu0 0
    %2378 = vmatpush.bf16.msra.mxu0 0
    %2379 = vmatpush.bf16.msra.mxu0 %v2331
    %2380 = vmatmul.bf16.gmra.mxu0 %v2319
    %v2381 = vpop.f32.mrf.mxu0
    %v2382 = vadd.f32 %v2305, %v2381
    %v2383 = vpop.f32.mrf.mxu0
    %2384 = vdwg.mxu0
    %v2385 = vadd.f32 %v2343, %v135
    %v2386 = vadd.f32 %v2356, %v136
    %v2387 = vadd.f32 %v2369, %v137
    %v2388 = vadd.f32 %v2382, %v138
    %v2389 = vxor.u32 %v2385, 2147483648
    %v2390 = vmul.f32 %v2389, 1.442695
    %v2391 = vpow.pop %v2390
    %v2392 = vadd.f32 %v2391, 1.0
    %v2393 = vrcp.pop %v2392
    %v2394 = vmul.f32 %v2392, %v2393
    %v2395 = vsub.f32 1.0, %v2394
    %v2396 = vmul.f32 %v2393, %v2395
    %v2397 = vadd.f32 %v2393, %v2396
    %vm2398 = vweird.f32 %v2392
    %vm2399 = vweird.f32 %v2393
    %vm2400 = vmor %vm2398, %vm2399
    %v2401 = vsel %vm2400, %v2393, %v2397
    %v2402 = vand.u32 2147483647, %v2392
    %vm2403 = vcmp.eq.f32.partialorder %v2402, 8.507059e+37
    %v2404 = vand.u32 %v2392, 2147483648
    %v2405 = vor.u32 1.1754944e-38, %v2404
    %v2406 = vsel %vm2403, %v2405, %v2401
    %v2407 = vmul.f32 1.0, %v2406
    %v2408 = vxor.u32 %v2386, 2147483648
    %v2409 = vmul.f32 %v2408, 1.442695
    %v2410 = vpow.pop %v2409
    %v2411 = vadd.f32 %v2410, 1.0
    %v2412 = vrcp.pop %v2411
    %v2413 = vmul.f32 %v2411, %v2412
    %v2414 = vsub.f32 1.0, %v2413
    %v2415 = vmul.f32 %v2412, %v2414
    %v2416 = vadd.f32 %v2412, %v2415
    %vm2417 = vweird.f32 %v2411
    %vm2418 = vweird.f32 %v2412
    %vm2419 = vmor %vm2417, %vm2418
    %v2420 = vsel %vm2419, %v2412, %v2416
    %v2421 = vand.u32 2147483647, %v2411
    %vm2422 = vcmp.eq.f32.partialorder %v2421, 8.507059e+37
    %v2423 = vand.u32 %v2411, 2147483648
    %v2424 = vor.u32 1.1754944e-38, %v2423
    %v2425 = vsel %vm2422, %v2424, %v2420
    %v2426 = vmul.f32 1.0, %v2425
    %v2427 = vtanh.pop %v2387
    %v2428 = vxor.u32 %v2388, 2147483648
    %v2429 = vmul.f32 %v2428, 1.442695
    %v2430 = vpow.pop %v2429
    %v2431 = vadd.f32 %v2430, 1.0
    %v2432 = vrcp.pop %v2431
    %v2433 = vmul.f32 %v2431, %v2432
    %v2434 = vsub.f32 1.0, %v2433
    %v2435 = vmul.f32 %v2432, %v2434
    %v2436 = vadd.f32 %v2432, %v2435
    %vm2437 = vweird.f32 %v2431
    %vm2438 = vweird.f32 %v2432
    %vm2439 = vmor %vm2437, %vm2438
    %v2440 = vsel %vm2439, %v2432, %v2436
    %v2441 = vand.u32 2147483647, %v2431
    %vm2442 = vcmp.eq.f32.partialorder %v2441, 8.507059e+37
    %v2443 = vand.u32 %v2431, 2147483648
    %v2444 = vor.u32 1.1754944e-38, %v2443
    %v2445 = vsel %vm2442, %v2444, %v2440
    %v2446 = vmul.f32 1.0, %v2445
    %v2447 = vmul.f32 %v2426, %v1498
    %v2448 = vmul.f32 %v2407, %v2427
    %v2449 = vadd.f32 %v2447, %v2448
    %v2450 = vtanh.pop %v2449
    %v2451 = vmul.f32 %v2446, %v2450
    %v2452 = vpack.c.bf16 %v2451, %v2451
    %v2453 = vld [vmem:[#allocation4] sm:$0xff]
    %v2454 = vld [vmem:[#allocation4 + $0x8] sm:$0xff]
    %v2455 = vld [vmem:[#allocation4 + $0x10] sm:$0xff]
    %v2456 = vld [vmem:[#allocation4 + $0x18] sm:$0xff]
    %v2457 = vld [vmem:[#allocation4 + $0x20] sm:$0xff]
    %v2458 = vld [vmem:[#allocation4 + $0x28] sm:$0xff]
    %v2459 = vld [vmem:[#allocation4 + $0x30] sm:$0xff]
    %v2460 = vld [vmem:[#allocation4 + $0x38] sm:$0xff]
    %v2461 = vld [vmem:[#allocation4 + $0x40] sm:$0xff]
    %v2462 = vld [vmem:[#allocation4 + $0x48] sm:$0xff]
    %v2463 = vld [vmem:[#allocation4 + $0x50] sm:$0xff]
    %v2464 = vld [vmem:[#allocation4 + $0x58] sm:$0xff]
    %v2465 = vld [vmem:[#allocation4 + $0x60] sm:$0xff]
    %v2466 = vld [vmem:[#allocation4 + $0x68] sm:$0xff]
    %v2467 = vld [vmem:[#allocation4 + $0x70] sm:$0xff]
    %v2468 = vld [vmem:[#allocation4 + $0x78] sm:$0xff]
    %v2469 = vld [vmem:[#allocation4 + $0x80] sm:$0xff]
    %v2470 = vld [vmem:[#allocation4 + $0x88] sm:$0xff]
    %v2471 = vld [vmem:[#allocation4 + $0x90] sm:$0xff]
    %v2472 = vld [vmem:[#allocation4 + $0x98] sm:$0xff]
    %v2473 = vld [vmem:[#allocation4 + $0xa0] sm:$0xff]
    %v2474 = vld [vmem:[#allocation4 + $0xa8] sm:$0xff]
    %v2475 = vld [vmem:[#allocation4 + $0xb0] sm:$0xff]
    %v2476 = vld [vmem:[#allocation4 + $0xb8] sm:$0xff]
    %v2477 = vld [vmem:[#allocation4 + $0xc0] sm:$0xff]
    %v2478 = vld [vmem:[#allocation4 + $0xc8] sm:$0xff]
    %v2479 = vld [vmem:[#allocation4 + $0xd0] sm:$0xff]
    %v2480 = vld [vmem:[#allocation4 + $0xd8] sm:$0xff]
    %v2481 = vld [vmem:[#allocation4 + $0xe0] sm:$0xff]
    %v2482 = vld [vmem:[#allocation4 + $0xe8] sm:$0xff]
    %v2483 = vld [vmem:[#allocation4 + $0xf0] sm:$0xff]
    %v2484 = vld [vmem:[#allocation4 + $0xf8] sm:$0xff]
    %v2485 = vpack.c.bf16 %v2057, %v2057
    %v2486 = vld [vmem:[#allocation5] sm:$0xff]
    %v2487 = vld [vmem:[#allocation5 + $0x8] sm:$0xff]
    %v2488 = vld [vmem:[#allocation5 + $0x10] sm:$0xff]
    %v2489 = vld [vmem:[#allocation5 + $0x18] sm:$0xff]
    %v2490 = vld [vmem:[#allocation5 + $0x20] sm:$0xff]
    %v2491 = vld [vmem:[#allocation5 + $0x28] sm:$0xff]
    %v2492 = vld [vmem:[#allocation5 + $0x30] sm:$0xff]
    %v2493 = vld [vmem:[#allocation5 + $0x38] sm:$0xff]
    %v2494 = vld [vmem:[#allocation5 + $0x40] sm:$0xff]
    %v2495 = vld [vmem:[#allocation5 + $0x48] sm:$0xff]
    %v2496 = vld [vmem:[#allocation5 + $0x50] sm:$0xff]
    %v2497 = vld [vmem:[#allocation5 + $0x58] sm:$0xff]
    %v2498 = vld [vmem:[#allocation5 + $0x60] sm:$0xff]
    %v2499 = vld [vmem:[#allocation5 + $0x68] sm:$0xff]
    %v2500 = vld [vmem:[#allocation5 + $0x70] sm:$0xff]
    %v2501 = vld [vmem:[#allocation5 + $0x78] sm:$0xff]
    %v2502 = vld [vmem:[#allocation5 + $0x80] sm:$0xff]
    %v2503 = vld [vmem:[#allocation5 + $0x88] sm:$0xff]
    %v2504 = vld [vmem:[#allocation5 + $0x90] sm:$0xff]
    %v2505 = vld [vmem:[#allocation5 + $0x98] sm:$0xff]
    %v2506 = vld [vmem:[#allocation5 + $0xa0] sm:$0xff]
    %v2507 = vld [vmem:[#allocation5 + $0xa8] sm:$0xff]
    %v2508 = vld [vmem:[#allocation5 + $0xb0] sm:$0xff]
    %v2509 = vld [vmem:[#allocation5 + $0xb8] sm:$0xff]
    %v2510 = vld [vmem:[#allocation5 + $0xc0] sm:$0xff]
    %v2511 = vld [vmem:[#allocation5 + $0xc8] sm:$0xff]
    %v2512 = vld [vmem:[#allocation5 + $0xd0] sm:$0xff]
    %v2513 = vld [vmem:[#allocation5 + $0xd8] sm:$0xff]
    %v2514 = vld [vmem:[#allocation5 + $0xe0] sm:$0xff]
    %v2515 = vld [vmem:[#allocation5 + $0xe8] sm:$0xff]
    %v2516 = vld [vmem:[#allocation5 + $0xf0] sm:$0xff]
    %v2517 = vld [vmem:[#allocation5 + $0xf8] sm:$0xff]
    %v2550 = vunpack.c.l.b16 %v2486
    %v2551 = vunpack.c.h.b16 %v2486
    %v2552 = vunpack.c.l.b16 %v2487
    %v2553 = vunpack.c.h.b16 %v2487
    %v2554 = vunpack.c.l.b16 %v2488
    %v2555 = vunpack.c.h.b16 %v2488
    %v2556 = vunpack.c.l.b16 %v2489
    %v2557 = vunpack.c.h.b16 %v2489
    %v2558 = vunpack.c.l.b16 %v2490
    %v2559 = vunpack.c.h.b16 %v2490
    %v2560 = vunpack.c.l.b16 %v2491
    %v2561 = vunpack.c.h.b16 %v2491
    %v2562 = vunpack.c.l.b16 %v2492
    %v2563 = vunpack.c.h.b16 %v2492
    %v2564 = vunpack.c.l.b16 %v2493
    %v2565 = vunpack.c.h.b16 %v2493
    %v2566 = vunpack.c.l.b16 %v2494
    %v2567 = vunpack.c.h.b16 %v2494
    %v2568 = vunpack.c.l.b16 %v2495
    %v2569 = vunpack.c.h.b16 %v2495
    %v2570 = vunpack.c.l.b16 %v2496
    %v2571 = vunpack.c.h.b16 %v2496
    %v2572 = vunpack.c.l.b16 %v2497
    %v2573 = vunpack.c.h.b16 %v2497
    %v2574 = vunpack.c.l.b16 %v2498
    %v2575 = vunpack.c.h.b16 %v2498
    %v2576 = vunpack.c.l.b16 %v2499
    %v2577 = vunpack.c.h.b16 %v2499
    %v2578 = vunpack.c.l.b16 %v2500
    %v2579 = vunpack.c.h.b16 %v2500
    %v2580 = vunpack.c.l.b16 %v2501
    %v2581 = vunpack.c.h.b16 %v2501
    %v2582 = vunpack.c.l.b16 %v2502
    %v2583 = vunpack.c.h.b16 %v2502
    %v2584 = vunpack.c.l.b16 %v2503
    %v2585 = vunpack.c.h.b16 %v2503
    %v2586 = vunpack.c.l.b16 %v2504
    %v2587 = vunpack.c.h.b16 %v2504
    %v2588 = vunpack.c.l.b16 %v2505
    %v2589 = vunpack.c.h.b16 %v2505
    %v2590 = vunpack.c.l.b16 %v2506
    %v2591 = vunpack.c.h.b16 %v2506
    %v2592 = vunpack.c.l.b16 %v2507
    %v2593 = vunpack.c.h.b16 %v2507
    %v2594 = vunpack.c.l.b16 %v2508
    %v2595 = vunpack.c.h.b16 %v2508
    %v2596 = vunpack.c.l.b16 %v2509
    %v2597 = vunpack.c.h.b16 %v2509
    %v2598 = vunpack.c.l.b16 %v2510
    %v2599 = vunpack.c.h.b16 %v2510
    %v2600 = vunpack.c.l.b16 %v2511
    %v2601 = vunpack.c.h.b16 %v2511
    %v2602 = vunpack.c.l.b16 %v2512
    %v2603 = vunpack.c.h.b16 %v2512
    %v2604 = vunpack.c.l.b16 %v2513
    %v2605 = vunpack.c.h.b16 %v2513
    %v2606 = vunpack.c.l.b16 %v2514
    %v2607 = vunpack.c.h.b16 %v2514
    %v2608 = vunpack.c.l.b16 %v2515
    %v2609 = vunpack.c.h.b16 %v2515
    %v2610 = vunpack.c.l.b16 %v2516
    %v2611 = vunpack.c.h.b16 %v2516
    %v2612 = vunpack.c.l.b16 %v2517
    %v2613 = vunpack.c.h.b16 %v2517
    %v2614 = vpack.c.b16 %v2554, %v2550
    %v2615 = vpack.c.b16 %v2555, %v2551
    %v2616 = vpack.c.b16 %v2556, %v2552
    %v2617 = vpack.c.b16 %v2557, %v2553
    %v2618 = vpack.c.b16 %v2562, %v2558
    %v2619 = vpack.c.b16 %v2563, %v2559
    %v2620 = vpack.c.b16 %v2564, %v2560
    %v2621 = vpack.c.b16 %v2565, %v2561
    %v2622 = vpack.c.b16 %v2570, %v2566
    %v2623 = vpack.c.b16 %v2571, %v2567
    %v2624 = vpack.c.b16 %v2572, %v2568
    %v2625 = vpack.c.b16 %v2573, %v2569
    %v2626 = vpack.c.b16 %v2578, %v2574
    %v2627 = vpack.c.b16 %v2579, %v2575
    %v2628 = vpack.c.b16 %v2580, %v2576
    %v2629 = vpack.c.b16 %v2581, %v2577
    %v2630 = vpack.c.b16 %v2586, %v2582
    %v2631 = vpack.c.b16 %v2587, %v2583
    %v2632 = vpack.c.b16 %v2588, %v2584
    %v2633 = vpack.c.b16 %v2589, %v2585
    %v2634 = vpack.c.b16 %v2594, %v2590
    %v2635 = vpack.c.b16 %v2595, %v2591
    %v2636 = vpack.c.b16 %v2596, %v2592
    %v2637 = vpack.c.b16 %v2597, %v2593
    %v2638 = vpack.c.b16 %v2602, %v2598
    %v2639 = vpack.c.b16 %v2603, %v2599
    %v2640 = vpack.c.b16 %v2604, %v2600
    %v2641 = vpack.c.b16 %v2605, %v2601
    %v2642 = vpack.c.b16 %v2610, %v2606
    %v2643 = vpack.c.b16 %v2611, %v2607
    %v2644 = vpack.c.b16 %v2612, %v2608
    %v2645 = vpack.c.b16 %v2613, %v2609
    %2678 = vmatpush.bf16.msra.mxu0 %v2642
    %2679 = vmatpush.bf16.msra.mxu0 %v2638
    %2680 = vmatpush.bf16.msra.mxu0 %v2634
    %2681 = vmatpush.bf16.msra.mxu0 %v2630
    %2682 = vmatpush.bf16.msra.mxu0 %v2626
    %2683 = vmatpush.bf16.msra.mxu0 %v2622
    %2684 = vmatpush.bf16.msra.mxu0 %v2618
    %2685 = vmatpush.bf16.msra.mxu0 %v2614
    %2686 = vmatmul.bf16.gmra.mxu0 %v2485
    %v2687 = vpop.f32.mrf.mxu0
    %v2688 = vadd.f32 0.0, %v2687
    %v2689 = vpop.f32.mrf.mxu0
    %2690 = vdwg.mxu0
    %2691 = vmatpush.bf16.msra.mxu0 %v2643
    %2692 = vmatpush.bf16.msra.mxu0 %v2639
    %2693 = vmatpush.bf16.msra.mxu0 %v2635
    %2694 = vmatpush.bf16.msra.mxu0 %v2631
    %2695 = vmatpush.bf16.msra.mxu0 %v2627
    %2696 = vmatpush.bf16.msra.mxu0 %v2623
    %2697 = vmatpush.bf16.msra.mxu0 %v2619
    %2698 = vmatpush.bf16.msra.mxu0 %v2615
    %2699 = vmatmul.bf16.gmra.mxu0 %v2485
    %v2700 = vpop.f32.mrf.mxu0
    %v2701 = vadd.f32 0.0, %v2700
    %v2702 = vpop.f32.mrf.mxu0
    %2703 = vdwg.mxu0
    %2704 = vmatpush.bf16.msra.mxu0 %v2644
    %2705 = vmatpush.bf16.msra.mxu0 %v2640
    %2706 = vmatpush.bf16.msra.mxu0 %v2636
    %2707 = vmatpush.bf16.msra.mxu0 %v2632
    %2708 = vmatpush.bf16.msra.mxu0 %v2628
    %2709 = vmatpush.bf16.msra.mxu0 %v2624
    %2710 = vmatpush.bf16.msra.mxu0 %v2620
    %2711 = vmatpush.bf16.msra.mxu0 %v2616
    %2712 = vmatmul.bf16.gmra.mxu0 %v2485
    %v2713 = vpop.f32.mrf.mxu0
    %v2714 = vadd.f32 0.0, %v2713
    %v2715 = vpop.f32.mrf.mxu0
    %2716 = vdwg.mxu0
    %2717 = vmatpush.bf16.msra.mxu0 %v2645
    %2718 = vmatpush.bf16.msra.mxu0 %v2641
    %2719 = vmatpush.bf16.msra.mxu0 %v2637
    %2720 = vmatpush.bf16.msra.mxu0 %v2633
    %2721 = vmatpush.bf16.msra.mxu0 %v2629
    %2722 = vmatpush.bf16.msra.mxu0 %v2625
    %2723 = vmatpush.bf16.msra.mxu0 %v2621
    %2724 = vmatpush.bf16.msra.mxu0 %v2617
    %2725 = vmatmul.bf16.gmra.mxu0 %v2485
    %v2726 = vpop.f32.mrf.mxu0
    %v2727 = vadd.f32 0.0, %v2726
    %v2728 = vpop.f32.mrf.mxu0
    %2729 = vdwg.mxu0
    %v2762 = vunpack.c.l.b16 %v2453
    %v2763 = vunpack.c.h.b16 %v2453
    %v2764 = vunpack.c.l.b16 %v2454
    %v2765 = vunpack.c.h.b16 %v2454
    %v2766 = vunpack.c.l.b16 %v2455
    %v2767 = vunpack.c.h.b16 %v2455
    %v2768 = vunpack.c.l.b16 %v2456
    %v2769 = vunpack.c.h.b16 %v2456
    %v2770 = vunpack.c.l.b16 %v2457
    %v2771 = vunpack.c.h.b16 %v2457
    %v2772 = vunpack.c.l.b16 %v2458
    %v2773 = vunpack.c.h.b16 %v2458
    %v2774 = vunpack.c.l.b16 %v2459
    %v2775 = vunpack.c.h.b16 %v2459
    %v2776 = vunpack.c.l.b16 %v2460
    %v2777 = vunpack.c.h.b16 %v2460
    %v2778 = vunpack.c.l.b16 %v2461
    %v2779 = vunpack.c.h.b16 %v2461
    %v2780 = vunpack.c.l.b16 %v2462
    %v2781 = vunpack.c.h.b16 %v2462
    %v2782 = vunpack.c.l.b16 %v2463
    %v2783 = vunpack.c.h.b16 %v2463
    %v2784 = vunpack.c.l.b16 %v2464
    %v2785 = vunpack.c.h.b16 %v2464
    %v2786 = vunpack.c.l.b16 %v2465
    %v2787 = vunpack.c.h.b16 %v2465
    %v2788 = vunpack.c.l.b16 %v2466
    %v2789 = vunpack.c.h.b16 %v2466
    %v2790 = vunpack.c.l.b16 %v2467
    %v2791 = vunpack.c.h.b16 %v2467
    %v2792 = vunpack.c.l.b16 %v2468
    %v2793 = vunpack.c.h.b16 %v2468
    %v2794 = vunpack.c.l.b16 %v2469
    %v2795 = vunpack.c.h.b16 %v2469
    %v2796 = vunpack.c.l.b16 %v2470
    %v2797 = vunpack.c.h.b16 %v2470
    %v2798 = vunpack.c.l.b16 %v2471
    %v2799 = vunpack.c.h.b16 %v2471
    %v2800 = vunpack.c.l.b16 %v2472
    %v2801 = vunpack.c.h.b16 %v2472
    %v2802 = vunpack.c.l.b16 %v2473
    %v2803 = vunpack.c.h.b16 %v2473
    %v2804 = vunpack.c.l.b16 %v2474
    %v2805 = vunpack.c.h.b16 %v2474
    %v2806 = vunpack.c.l.b16 %v2475
    %v2807 = vunpack.c.h.b16 %v2475
    %v2808 = vunpack.c.l.b16 %v2476
    %v2809 = vunpack.c.h.b16 %v2476
    %v2810 = vunpack.c.l.b16 %v2477
    %v2811 = vunpack.c.h.b16 %v2477
    %v2812 = vunpack.c.l.b16 %v2478
    %v2813 = vunpack.c.h.b16 %v2478
    %v2814 = vunpack.c.l.b16 %v2479
    %v2815 = vunpack.c.h.b16 %v2479
    %v2816 = vunpack.c.l.b16 %v2480
    %v2817 = vunpack.c.h.b16 %v2480
    %v2818 = vunpack.c.l.b16 %v2481
    %v2819 = vunpack.c.h.b16 %v2481
    %v2820 = vunpack.c.l.b16 %v2482
    %v2821 = vunpack.c.h.b16 %v2482
    %v2822 = vunpack.c.l.b16 %v2483
    %v2823 = vunpack.c.h.b16 %v2483
    %v2824 = vunpack.c.l.b16 %v2484
    %v2825 = vunpack.c.h.b16 %v2484
    %v2826 = vpack.c.b16 %v2766, %v2762
    %v2827 = vpack.c.b16 %v2767, %v2763
    %v2828 = vpack.c.b16 %v2768, %v2764
    %v2829 = vpack.c.b16 %v2769, %v2765
    %v2830 = vpack.c.b16 %v2774, %v2770
    %v2831 = vpack.c.b16 %v2775, %v2771
    %v2832 = vpack.c.b16 %v2776, %v2772
    %v2833 = vpack.c.b16 %v2777, %v2773
    %v2834 = vpack.c.b16 %v2782, %v2778
    %v2835 = vpack.c.b16 %v2783, %v2779
    %v2836 = vpack.c.b16 %v2784, %v2780
    %v2837 = vpack.c.b16 %v2785, %v2781
    %v2838 = vpack.c.b16 %v2790, %v2786
    %v2839 = vpack.c.b16 %v2791, %v2787
    %v2840 = vpack.c.b16 %v2792, %v2788
    %v2841 = vpack.c.b16 %v2793, %v2789
    %v2842 = vpack.c.b16 %v2798, %v2794
    %v2843 = vpack.c.b16 %v2799, %v2795
    %v2844 = vpack.c.b16 %v2800, %v2796
    %v2845 = vpack.c.b16 %v2801, %v2797
    %v2846 = vpack.c.b16 %v2806, %v2802
    %v2847 = vpack.c.b16 %v2807, %v2803
    %v2848 = vpack.c.b16 %v2808, %v2804
    %v2849 = vpack.c.b16 %v2809, %v2805
    %v2850 = vpack.c.b16 %v2814, %v2810
    %v2851 = vpack.c.b16 %v2815, %v2811
    %v2852 = vpack.c.b16 %v2816, %v2812
    %v2853 = vpack.c.b16 %v2817, %v2813
    %v2854 = vpack.c.b16 %v2822, %v2818
    %v2855 = vpack.c.b16 %v2823, %v2819
    %v2856 = vpack.c.b16 %v2824, %v2820
    %v2857 = vpack.c.b16 %v2825, %v2821
    %2890 = vmatpush.bf16.msra.mxu0 %v2854
    %2891 = vmatpush.bf16.msra.mxu0 %v2850
    %2892 = vmatpush.bf16.msra.mxu0 %v2846
    %2893 = vmatpush.bf16.msra.mxu0 %v2842
    %2894 = vmatpush.bf16.msra.mxu0 %v2838
    %2895 = vmatpush.bf16.msra.mxu0 %v2834
    %2896 = vmatpush.bf16.msra.mxu0 %v2830
    %2897 = vmatpush.bf16.msra.mxu0 %v2826
    %2898 = vmatmul.bf16.gmra.mxu0 %v2452
    %v2899 = vpop.f32.mrf.mxu0
    %v2900 = vadd.f32 %v2688, %v2899
    %v2901 = vpop.f32.mrf.mxu0
    %2902 = vdwg.mxu0
    %2903 = vmatpush.bf16.msra.mxu0 %v2855
    %2904 = vmatpush.bf16.msra.mxu0 %v2851
    %2905 = vmatpush.bf16.msra.mxu0 %v2847
    %2906 = vmatpush.bf16.msra.mxu0 %v2843
    %2907 = vmatpush.bf16.msra.mxu0 %v2839
    %2908 = vmatpush.bf16.msra.mxu0 %v2835
    %2909 = vmatpush.bf16.msra.mxu0 %v2831
    %2910 = vmatpush.bf16.msra.mxu0 %v2827
    %2911 = vmatmul.bf16.gmra.mxu0 %v2452
    %v2912 = vpop.f32.mrf.mxu0
    %v2913 = vadd.f32 %v2701, %v2912
    %v2914 = vpop.f32.mrf.mxu0
    %2915 = vdwg.mxu0
    %2916 = vmatpush.bf16.msra.mxu0 %v2856
    %2917 = vmatpush.bf16.msra.mxu0 %v2852
    %2918 = vmatpush.bf16.msra.mxu0 %v2848
    %2919 = vmatpush.bf16.msra.mxu0 %v2844
    %2920 = vmatpush.bf16.msra.mxu0 %v2840
    %2921 = vmatpush.bf16.msra.mxu0 %v2836
    %2922 = vmatpush.bf16.msra.mxu0 %v2832
    %2923 = vmatpush.bf16.msra.mxu0 %v2828
    %2924 = vmatmul.bf16.gmra.mxu0 %v2452
    %v2925 = vpop.f32.mrf.mxu0
    %v2926 = vadd.f32 %v2714, %v2925
    %v2927 = vpop.f32.mrf.mxu0
    %2928 = vdwg.mxu0
    %2929 = vmatpush.bf16.msra.mxu0 %v2857
    %2930 = vmatpush.bf16.msra.mxu0 %v2853
    %2931 = vmatpush.bf16.msra.mxu0 %v2849
    %2932 = vmatpush.bf16.msra.mxu0 %v2845
    %2933 = vmatpush.bf16.msra.mxu0 %v2841
    %2934 = vmatpush.bf16.msra.mxu0 %v2837
    %2935 = vmatpush.bf16.msra.mxu0 %v2833
    %2936 = vmatpush.bf16.msra.mxu0 %v2829
    %2937 = vmatmul.bf16.gmra.mxu0 %v2452
    %v2938 = vpop.f32.mrf.mxu0
    %v2939 = vadd.f32 %v2727, %v2938
    %v2940 = vpop.f32.mrf.mxu0
    %2941 = vdwg.mxu0
    %v2942 = vadd.f32 %v2900, %v145
    %v2943 = vadd.f32 %v2913, %v146
    %v2944 = vadd.f32 %v2926, %v147
    %v2945 = vadd.f32 %v2939, %v148
    %v2946 = vxor.u32 %v2942, 2147483648
    %v2947 = vmul.f32 %v2946, 1.442695
    %v2948 = vpow.pop %v2947
    %v2949 = vadd.f32 %v2948, 1.0
    %v2950 = vrcp.pop %v2949
    %v2951 = vmul.f32 %v2949, %v2950
    %v2952 = vsub.f32 1.0, %v2951
    %v2953 = vmul.f32 %v2950, %v2952
    %v2954 = vadd.f32 %v2950, %v2953
    %vm2955 = vweird.f32 %v2949
    %vm2956 = vweird.f32 %v2950
    %vm2957 = vmor %vm2955, %vm2956
    %v2958 = vsel %vm2957, %v2950, %v2954
    %v2959 = vand.u32 2147483647, %v2949
    %vm2960 = vcmp.eq.f32.partialorder %v2959, 8.507059e+37
    %v2961 = vand.u32 %v2949, 2147483648
    %v2962 = vor.u32 1.1754944e-38, %v2961
    %v2963 = vsel %vm2960, %v2962, %v2958
    %v2964 = vmul.f32 1.0, %v2963
    %v2965 = vxor.u32 %v2943, 2147483648
    %v2966 = vmul.f32 %v2965, 1.442695
    %v2967 = vpow.pop %v2966
    %v2968 = vadd.f32 %v2967, 1.0
    %v2969 = vrcp.pop %v2968
    %v2970 = vmul.f32 %v2968, %v2969
    %v2971 = vsub.f32 1.0, %v2970
    %v2972 = vmul.f32 %v2969, %v2971
    %v2973 = vadd.f32 %v2969, %v2972
    %vm2974 = vweird.f32 %v2968
    %vm2975 = vweird.f32 %v2969
    %vm2976 = vmor %vm2974, %vm2975
    %v2977 = vsel %vm2976, %v2969, %v2973
    %v2978 = vand.u32 2147483647, %v2968
    %vm2979 = vcmp.eq.f32.partialorder %v2978, 8.507059e+37
    %v2980 = vand.u32 %v2968, 2147483648
    %v2981 = vor.u32 1.1754944e-38, %v2980
    %v2982 = vsel %vm2979, %v2981, %v2977
    %v2983 = vmul.f32 1.0, %v2982
    %v2984 = vtanh.pop %v2944
    %v2985 = vxor.u32 %v2945, 2147483648
    %v2986 = vmul.f32 %v2985, 1.442695
    %v2987 = vpow.pop %v2986
    %v2988 = vadd.f32 %v2987, 1.0
    %v2989 = vrcp.pop %v2988
    %v2990 = vmul.f32 %v2988, %v2989
    %v2991 = vsub.f32 1.0, %v2990
    %v2992 = vmul.f32 %v2989, %v2991
    %v2993 = vadd.f32 %v2989, %v2992
    %vm2994 = vweird.f32 %v2988
    %vm2995 = vweird.f32 %v2989
    %vm2996 = vmor %vm2994, %vm2995
    %v2997 = vsel %vm2996, %v2989, %v2993
    %v2998 = vand.u32 2147483647, %v2988
    %vm2999 = vcmp.eq.f32.partialorder %v2998, 8.507059e+37
    %v3000 = vand.u32 %v2988, 2147483648
    %v3001 = vor.u32 1.1754944e-38, %v3000
    %v3002 = vsel %vm2999, %v3001, %v2997
    %v3003 = vmul.f32 1.0, %v3002
    %v3004 = vmul.f32 %v2983, %v2055
    %v3005 = vmul.f32 %v2964, %v2984
    %v3006 = vadd.f32 %v3004, %v3005
    %v3007 = vtanh.pop %v3006
    %v3008 = vmul.f32 %v3003, %v3007
    %s3009 = scalar_lea.vmem [#allocation11], 16
    %3010 = vst [vmem:[%s3009] sm:$0xff] %v3008
    %s3011 = scalar_lea.vmem [#allocation13], 12
    %v3012 = vld [vmem:[%s3011] sm:$0xf]
    %v3013 = vld [vmem:[#allocation2] sm:$0xff]
    %v3014 = vld [vmem:[#allocation2 + $0x8] sm:$0xff]
    %v3015 = vld [vmem:[#allocation3] sm:$0xff]
    %v3016 = vld [vmem:[#allocation3 + $0x8] sm:$0xff]
    %v3017 = vld [vmem:[#allocation3 + $0x10] sm:$0xff]
    %v3018 = vld [vmem:[#allocation3 + $0x18] sm:$0xff]
    %v3019 = vld [vmem:[#allocation3 + $0x20] sm:$0xff]
    %v3020 = vld [vmem:[#allocation3 + $0x28] sm:$0xff]
    %v3021 = vld [vmem:[#allocation3 + $0x30] sm:$0xff]
    %v3022 = vld [vmem:[#allocation3 + $0x38] sm:$0xff]
    %v3023 = vld [vmem:[#allocation3 + $0x40] sm:$0xff]
    %v3024 = vld [vmem:[#allocation3 + $0x48] sm:$0xff]
    %v3025 = vld [vmem:[#allocation3 + $0x50] sm:$0xff]
    %v3026 = vld [vmem:[#allocation3 + $0x58] sm:$0xff]
    %v3027 = vld [vmem:[#allocation3 + $0x60] sm:$0xff]
    %v3028 = vld [vmem:[#allocation3 + $0x68] sm:$0xff]
    %v3029 = vld [vmem:[#allocation3 + $0x70] sm:$0xff]
    %v3030 = vld [vmem:[#allocation3 + $0x78] sm:$0xff]
    %v3031 = vld [vmem:[#allocation3 + $0x80] sm:$0xff]
    %v3032 = vld [vmem:[#allocation3 + $0x88] sm:$0xff]
    %v3033 = vld [vmem:[#allocation3 + $0x90] sm:$0xff]
    %v3034 = vld [vmem:[#allocation3 + $0x98] sm:$0xff]
    %v3035 = vld [vmem:[#allocation3 + $0xa0] sm:$0xff]
    %v3036 = vld [vmem:[#allocation3 + $0xa8] sm:$0xff]
    %v3037 = vld [vmem:[#allocation3 + $0xb0] sm:$0xff]
    %v3038 = vld [vmem:[#allocation3 + $0xb8] sm:$0xff]
    %v3039 = vld [vmem:[#allocation3 + $0xc0] sm:$0xff]
    %v3040 = vld [vmem:[#allocation3 + $0xc8] sm:$0xff]
    %v3041 = vld [vmem:[#allocation3 + $0xd0] sm:$0xff]
    %v3042 = vld [vmem:[#allocation3 + $0xd8] sm:$0xff]
    %v3043 = vld [vmem:[#allocation3 + $0xe0] sm:$0xff]
    %v3044 = vld [vmem:[#allocation3 + $0xe8] sm:$0xff]
    %v3045 = vld [vmem:[#allocation3 + $0xf0] sm:$0xff]
    %v3046 = vld [vmem:[#allocation3 + $0xf8] sm:$0xff]
    %v3079 = vunpack.c.l.b16 %v3015
    %v3080 = vunpack.c.h.b16 %v3015
    %v3081 = vunpack.c.l.b16 %v3016
    %v3082 = vunpack.c.h.b16 %v3016
    %v3083 = vunpack.c.l.b16 %v3017
    %v3084 = vunpack.c.h.b16 %v3017
    %v3085 = vunpack.c.l.b16 %v3018
    %v3086 = vunpack.c.h.b16 %v3018
    %v3087 = vunpack.c.l.b16 %v3019
    %v3088 = vunpack.c.h.b16 %v3019
    %v3089 = vunpack.c.l.b16 %v3020
    %v3090 = vunpack.c.h.b16 %v3020
    %v3091 = vunpack.c.l.b16 %v3021
    %v3092 = vunpack.c.h.b16 %v3021
    %v3093 = vunpack.c.l.b16 %v3022
    %v3094 = vunpack.c.h.b16 %v3022
    %v3095 = vunpack.c.l.b16 %v3023
    %v3096 = vunpack.c.h.b16 %v3023
    %v3097 = vunpack.c.l.b16 %v3024
    %v3098 = vunpack.c.h.b16 %v3024
    %v3099 = vunpack.c.l.b16 %v3025
    %v3100 = vunpack.c.h.b16 %v3025
    %v3101 = vunpack.c.l.b16 %v3026
    %v3102 = vunpack.c.h.b16 %v3026
    %v3103 = vunpack.c.l.b16 %v3027
    %v3104 = vunpack.c.h.b16 %v3027
    %v3105 = vunpack.c.l.b16 %v3028
    %v3106 = vunpack.c.h.b16 %v3028
    %v3107 = vunpack.c.l.b16 %v3029
    %v3108 = vunpack.c.h.b16 %v3029
    %v3109 = vunpack.c.l.b16 %v3030
    %v3110 = vunpack.c.h.b16 %v3030
    %v3111 = vunpack.c.l.b16 %v3031
    %v3112 = vunpack.c.h.b16 %v3031
    %v3113 = vunpack.c.l.b16 %v3032
    %v3114 = vunpack.c.h.b16 %v3032
    %v3115 = vunpack.c.l.b16 %v3033
    %v3116 = vunpack.c.h.b16 %v3033
    %v3117 = vunpack.c.l.b16 %v3034
    %v3118 = vunpack.c.h.b16 %v3034
    %v3119 = vunpack.c.l.b16 %v3035
    %v3120 = vunpack.c.h.b16 %v3035
    %v3121 = vunpack.c.l.b16 %v3036
    %v3122 = vunpack.c.h.b16 %v3036
    %v3123 = vunpack.c.l.b16 %v3037
    %v3124 = vunpack.c.h.b16 %v3037
    %v3125 = vunpack.c.l.b16 %v3038
    %v3126 = vunpack.c.h.b16 %v3038
    %v3127 = vunpack.c.l.b16 %v3039
    %v3128 = vunpack.c.h.b16 %v3039
    %v3129 = vunpack.c.l.b16 %v3040
    %v3130 = vunpack.c.h.b16 %v3040
    %v3131 = vunpack.c.l.b16 %v3041
    %v3132 = vunpack.c.h.b16 %v3041
    %v3133 = vunpack.c.l.b16 %v3042
    %v3134 = vunpack.c.h.b16 %v3042
    %v3135 = vunpack.c.l.b16 %v3043
    %v3136 = vunpack.c.h.b16 %v3043
    %v3137 = vunpack.c.l.b16 %v3044
    %v3138 = vunpack.c.h.b16 %v3044
    %v3139 = vunpack.c.l.b16 %v3045
    %v3140 = vunpack.c.h.b16 %v3045
    %v3141 = vunpack.c.l.b16 %v3046
    %v3142 = vunpack.c.h.b16 %v3046
    %v3143 = vpack.c.b16 %v3083, %v3079
    %v3144 = vpack.c.b16 %v3084, %v3080
    %v3145 = vpack.c.b16 %v3085, %v3081
    %v3146 = vpack.c.b16 %v3086, %v3082
    %v3147 = vpack.c.b16 %v3091, %v3087
    %v3148 = vpack.c.b16 %v3092, %v3088
    %v3149 = vpack.c.b16 %v3093, %v3089
    %v3150 = vpack.c.b16 %v3094, %v3090
    %v3151 = vpack.c.b16 %v3099, %v3095
    %v3152 = vpack.c.b16 %v3100, %v3096
    %v3153 = vpack.c.b16 %v3101, %v3097
    %v3154 = vpack.c.b16 %v3102, %v3098
    %v3155 = vpack.c.b16 %v3107, %v3103
    %v3156 = vpack.c.b16 %v3108, %v3104
    %v3157 = vpack.c.b16 %v3109, %v3105
    %v3158 = vpack.c.b16 %v3110, %v3106
    %v3159 = vpack.c.b16 %v3115, %v3111
    %v3160 = vpack.c.b16 %v3116, %v3112
    %v3161 = vpack.c.b16 %v3117, %v3113
    %v3162 = vpack.c.b16 %v3118, %v3114
    %v3163 = vpack.c.b16 %v3123, %v3119
    %v3164 = vpack.c.b16 %v3124, %v3120
    %v3165 = vpack.c.b16 %v3125, %v3121
    %v3166 = vpack.c.b16 %v3126, %v3122
    %v3167 = vpack.c.b16 %v3131, %v3127
    %v3168 = vpack.c.b16 %v3132, %v3128
    %v3169 = vpack.c.b16 %v3133, %v3129
    %v3170 = vpack.c.b16 %v3134, %v3130
    %v3171 = vpack.c.b16 %v3139, %v3135
    %v3172 = vpack.c.b16 %v3140, %v3136
    %v3173 = vpack.c.b16 %v3141, %v3137
    %v3174 = vpack.c.b16 %v3142, %v3138
    %3207 = vmatpush.bf16.msra.mxu0 %v3171
    %3208 = vmatpush.bf16.msra.mxu0 %v3167
    %3209 = vmatpush.bf16.msra.mxu0 %v3163
    %3210 = vmatpush.bf16.msra.mxu0 %v3159
    %3211 = vmatpush.bf16.msra.mxu0 %v3155
    %3212 = vmatpush.bf16.msra.mxu0 %v3151
    %3213 = vmatpush.bf16.msra.mxu0 %v3147
    %3214 = vmatpush.bf16.msra.mxu0 %v3143
    %3215 = vmatmul.bf16.gmra.mxu0 %v2452
    %v3216 = vpop.f32.mrf.mxu0
    %v3217 = vadd.f32 0.0, %v3216
    %v3218 = vpop.f32.mrf.mxu0
    %3219 = vdwg.mxu0
    %3220 = vmatpush.bf16.msra.mxu0 %v3172
    %3221 = vmatpush.bf16.msra.mxu0 %v3168
    %3222 = vmatpush.bf16.msra.mxu0 %v3164
    %3223 = vmatpush.bf16.msra.mxu0 %v3160
    %3224 = vmatpush.bf16.msra.mxu0 %v3156
    %3225 = vmatpush.bf16.msra.mxu0 %v3152
    %3226 = vmatpush.bf16.msra.mxu0 %v3148
    %3227 = vmatpush.bf16.msra.mxu0 %v3144
    %3228 = vmatmul.bf16.gmra.mxu0 %v2452
    %v3229 = vpop.f32.mrf.mxu0
    %v3230 = vadd.f32 0.0, %v3229
    %v3231 = vpop.f32.mrf.mxu0
    %3232 = vdwg.mxu0
    %3233 = vmatpush.bf16.msra.mxu0 %v3173
    %3234 = vmatpush.bf16.msra.mxu0 %v3169
    %3235 = vmatpush.bf16.msra.mxu0 %v3165
    %3236 = vmatpush.bf16.msra.mxu0 %v3161
    %3237 = vmatpush.bf16.msra.mxu0 %v3157
    %3238 = vmatpush.bf16.msra.mxu0 %v3153
    %3239 = vmatpush.bf16.msra.mxu0 %v3149
    %3240 = vmatpush.bf16.msra.mxu0 %v3145
    %3241 = vmatmul.bf16.gmra.mxu0 %v2452
    %v3242 = vpop.f32.mrf.mxu0
    %v3243 = vadd.f32 0.0, %v3242
    %v3244 = vpop.f32.mrf.mxu0
    %3245 = vdwg.mxu0
    %3246 = vmatpush.bf16.msra.mxu0 %v3174
    %3247 = vmatpush.bf16.msra.mxu0 %v3170
    %3248 = vmatpush.bf16.msra.mxu0 %v3166
    %3249 = vmatpush.bf16.msra.mxu0 %v3162
    %3250 = vmatpush.bf16.msra.mxu0 %v3158
    %3251 = vmatpush.bf16.msra.mxu0 %v3154
    %3252 = vmatpush.bf16.msra.mxu0 %v3150
    %3253 = vmatpush.bf16.msra.mxu0 %v3146
    %3254 = vmatmul.bf16.gmra.mxu0 %v2452
    %v3255 = vpop.f32.mrf.mxu0
    %v3256 = vadd.f32 0.0, %v3255
    %v3257 = vpop.f32.mrf.mxu0
    %3258 = vdwg.mxu0
    %v3261 = vunpack.c.l.b16 %v3013
    %v3262 = vunpack.c.h.b16 %v3013
    %v3263 = vunpack.c.l.b16 %v3014
    %v3264 = vunpack.c.h.b16 %v3014
    %v3265 = vpack.c.b16 %v3261, %v3261
    %v3266 = vpack.c.b16 %v3262, %v3262
    %v3267 = vpack.c.b16 %v3263, %v3263
    %v3268 = vpack.c.b16 %v3264, %v3264
    %v3270 = vsel %vm415, %v3012, 0
    %v3273 = vsel %vm419, %v3265, 0
    %v3276 = vsel %vm419, %v3266, 0
    %v3279 = vsel %vm419, %v3267, 0
    %v3282 = vsel %vm419, %v3268, 0
    %3284 = vmatpush.bf16.msra.mxu0 0
    %3285 = vmatpush.bf16.msra.mxu0 0
    %3286 = vmatpush.bf16.msra.mxu0 0
    %3287 = vmatpush.bf16.msra.mxu0 0
    %3288 = vmatpush.bf16.msra.mxu0 0
    %3289 = vmatpush.bf16.msra.mxu0 0
    %3290 = vmatpush.bf16.msra.mxu0 0
    %3291 = vmatpush.bf16.msra.mxu0 %v3273
    %3292 = vmatmul.bf16.gmra.mxu0 %v3270
    %v3293 = vpop.f32.mrf.mxu0
    %v3294 = vadd.f32 %v3217, %v3293
    %v3295 = vpop.f32.mrf.mxu0
    %3296 = vdwg.mxu0
    %3297 = vmatpush.bf16.msra.mxu0 0
    %3298 = vmatpush.bf16.msra.mxu0 0
    %3299 = vmatpush.bf16.msra.mxu0 0
    %3300 = vmatpush.bf16.msra.mxu0 0
    %3301 = vmatpush.bf16.msra.mxu0 0
    %3302 = vmatpush.bf16.msra.mxu0 0
    %3303 = vmatpush.bf16.msra.mxu0 0
    %3304 = vmatpush.bf16.msra.mxu0 %v3276
    %3305 = vmatmul.bf16.gmra.mxu0 %v3270
    %v3306 = vpop.f32.mrf.mxu0
    %v3307 = vadd.f32 %v3230, %v3306
    %v3308 = vpop.f32.mrf.mxu0
    %3309 = vdwg.mxu0
    %3310 = vmatpush.bf16.msra.mxu0 0
    %3311 = vmatpush.bf16.msra.mxu0 0
    %3312 = vmatpush.bf16.msra.mxu0 0
    %3313 = vmatpush.bf16.msra.mxu0 0
    %3314 = vmatpush.bf16.msra.mxu0 0
    %3315 = vmatpush.bf16.msra.mxu0 0
    %3316 = vmatpush.bf16.msra.mxu0 0
    %3317 = vmatpush.bf16.msra.mxu0 %v3279
    %3318 = vmatmul.bf16.gmra.mxu0 %v3270
    %v3319 = vpop.f32.mrf.mxu0
    %v3320 = vadd.f32 %v3243, %v3319
    %v3321 = vpop.f32.mrf.mxu0
    %3322 = vdwg.mxu0
    %3323 = vmatpush.bf16.msra.mxu0 0
    %3324 = vmatpush.bf16.msra.mxu0 0
    %3325 = vmatpush.bf16.msra.mxu0 0
    %3326 = vmatpush.bf16.msra.mxu0 0
    %3327 = vmatpush.bf16.msra.mxu0 0
    %3328 = vmatpush.bf16.msra.mxu0 0
    %3329 = vmatpush.bf16.msra.mxu0 0
    %3330 = vmatpush.bf16.msra.mxu0 %v3282
    %3331 = vmatmul.bf16.gmra.mxu0 %v3270
    %v3332 = vpop.f32.mrf.mxu0
    %v3333 = vadd.f32 %v3256, %v3332
    %v3334 = vpop.f32.mrf.mxu0
    %3335 = vdwg.mxu0
    %v3336 = vadd.f32 %v3294, %v135
    %v3337 = vadd.f32 %v3307, %v136
    %v3338 = vadd.f32 %v3320, %v137
    %v3339 = vadd.f32 %v3333, %v138
    %v3340 = vxor.u32 %v3336, 2147483648
    %v3341 = vmul.f32 %v3340, 1.442695
    %v3342 = vpow.pop %v3341
    %v3343 = vadd.f32 %v3342, 1.0
    %v3344 = vrcp.pop %v3343
    %v3345 = vmul.f32 %v3343, %v3344
    %v3346 = vsub.f32 1.0, %v3345
    %v3347 = vmul.f32 %v3344, %v3346
    %v3348 = vadd.f32 %v3344, %v3347
    %vm3349 = vweird.f32 %v3343
    %vm3350 = vweird.f32 %v3344
    %vm3351 = vmor %vm3349, %vm3350
    %v3352 = vsel %vm3351, %v3344, %v3348
    %v3353 = vand.u32 2147483647, %v3343
    %vm3354 = vcmp.eq.f32.partialorder %v3353, 8.507059e+37
    %v3355 = vand.u32 %v3343, 2147483648
    %v3356 = vor.u32 1.1754944e-38, %v3355
    %v3357 = vsel %vm3354, %v3356, %v3352
    %v3358 = vmul.f32 1.0, %v3357
    %v3359 = vxor.u32 %v3337, 2147483648
    %v3360 = vmul.f32 %v3359, 1.442695
    %v3361 = vpow.pop %v3360
    %v3362 = vadd.f32 %v3361, 1.0
    %v3363 = vrcp.pop %v3362
    %v3364 = vmul.f32 %v3362, %v3363
    %v3365 = vsub.f32 1.0, %v3364
    %v3366 = vmul.f32 %v3363, %v3365
    %v3367 = vadd.f32 %v3363, %v3366
    %vm3368 = vweird.f32 %v3362
    %vm3369 = vweird.f32 %v3363
    %vm3370 = vmor %vm3368, %vm3369
    %v3371 = vsel %vm3370, %v3363, %v3367
    %v3372 = vand.u32 2147483647, %v3362
    %vm3373 = vcmp.eq.f32.partialorder %v3372, 8.507059e+37
    %v3374 = vand.u32 %v3362, 2147483648
    %v3375 = vor.u32 1.1754944e-38, %v3374
    %v3376 = vsel %vm3373, %v3375, %v3371
    %v3377 = vmul.f32 1.0, %v3376
    %v3378 = vtanh.pop %v3338
    %v3379 = vxor.u32 %v3339, 2147483648
    %v3380 = vmul.f32 %v3379, 1.442695
    %v3381 = vpow.pop %v3380
    %v3382 = vadd.f32 %v3381, 1.0
    %v3383 = vrcp.pop %v3382
    %v3384 = vmul.f32 %v3382, %v3383
    %v3385 = vsub.f32 1.0, %v3384
    %v3386 = vmul.f32 %v3383, %v3385
    %v3387 = vadd.f32 %v3383, %v3386
    %vm3388 = vweird.f32 %v3382
    %vm3389 = vweird.f32 %v3383
    %vm3390 = vmor %vm3388, %vm3389
    %v3391 = vsel %vm3390, %v3383, %v3387
    %v3392 = vand.u32 2147483647, %v3382
    %vm3393 = vcmp.eq.f32.partialorder %v3392, 8.507059e+37
    %v3394 = vand.u32 %v3382, 2147483648
    %v3395 = vor.u32 1.1754944e-38, %v3394
    %v3396 = vsel %vm3393, %v3395, %v3391
    %v3397 = vmul.f32 1.0, %v3396
    %v3398 = vmul.f32 %v3377, %v2449
    %v3399 = vmul.f32 %v3358, %v3378
    %v3400 = vadd.f32 %v3398, %v3399
    %v3401 = vtanh.pop %v3400
    %v3402 = vmul.f32 %v3397, %v3401
    %v3403 = vpack.c.bf16 %v3402, %v3402
    %v3404 = vld [vmem:[#allocation4] sm:$0xff]
    %v3405 = vld [vmem:[#allocation4 + $0x8] sm:$0xff]
    %v3406 = vld [vmem:[#allocation4 + $0x10] sm:$0xff]
    %v3407 = vld [vmem:[#allocation4 + $0x18] sm:$0xff]
    %v3408 = vld [vmem:[#allocation4 + $0x20] sm:$0xff]
    %v3409 = vld [vmem:[#allocation4 + $0x28] sm:$0xff]
    %v3410 = vld [vmem:[#allocation4 + $0x30] sm:$0xff]
    %v3411 = vld [vmem:[#allocation4 + $0x38] sm:$0xff]
    %v3412 = vld [vmem:[#allocation4 + $0x40] sm:$0xff]
    %v3413 = vld [vmem:[#allocation4 + $0x48] sm:$0xff]
    %v3414 = vld [vmem:[#allocation4 + $0x50] sm:$0xff]
    %v3415 = vld [vmem:[#allocation4 + $0x58] sm:$0xff]
    %v3416 = vld [vmem:[#allocation4 + $0x60] sm:$0xff]
    %v3417 = vld [vmem:[#allocation4 + $0x68] sm:$0xff]
    %v3418 = vld [vmem:[#allocation4 + $0x70] sm:$0xff]
    %v3419 = vld [vmem:[#allocation4 + $0x78] sm:$0xff]
    %v3420 = vld [vmem:[#allocation4 + $0x80] sm:$0xff]
    %v3421 = vld [vmem:[#allocation4 + $0x88] sm:$0xff]
    %v3422 = vld [vmem:[#allocation4 + $0x90] sm:$0xff]
    %v3423 = vld [vmem:[#allocation4 + $0x98] sm:$0xff]
    %v3424 = vld [vmem:[#allocation4 + $0xa0] sm:$0xff]
    %v3425 = vld [vmem:[#allocation4 + $0xa8] sm:$0xff]
    %v3426 = vld [vmem:[#allocation4 + $0xb0] sm:$0xff]
    %v3427 = vld [vmem:[#allocation4 + $0xb8] sm:$0xff]
    %v3428 = vld [vmem:[#allocation4 + $0xc0] sm:$0xff]
    %v3429 = vld [vmem:[#allocation4 + $0xc8] sm:$0xff]
    %v3430 = vld [vmem:[#allocation4 + $0xd0] sm:$0xff]
    %v3431 = vld [vmem:[#allocation4 + $0xd8] sm:$0xff]
    %v3432 = vld [vmem:[#allocation4 + $0xe0] sm:$0xff]
    %v3433 = vld [vmem:[#allocation4 + $0xe8] sm:$0xff]
    %v3434 = vld [vmem:[#allocation4 + $0xf0] sm:$0xff]
    %v3435 = vld [vmem:[#allocation4 + $0xf8] sm:$0xff]
    %v3436 = vpack.c.bf16 %v3008, %v3008
    %v3437 = vld [vmem:[#allocation5] sm:$0xff]
    %v3438 = vld [vmem:[#allocation5 + $0x8] sm:$0xff]
    %v3439 = vld [vmem:[#allocation5 + $0x10] sm:$0xff]
    %v3440 = vld [vmem:[#allocation5 + $0x18] sm:$0xff]
    %v3441 = vld [vmem:[#allocation5 + $0x20] sm:$0xff]
    %v3442 = vld [vmem:[#allocation5 + $0x28] sm:$0xff]
    %v3443 = vld [vmem:[#allocation5 + $0x30] sm:$0xff]
    %v3444 = vld [vmem:[#allocation5 + $0x38] sm:$0xff]
    %v3445 = vld [vmem:[#allocation5 + $0x40] sm:$0xff]
    %v3446 = vld [vmem:[#allocation5 + $0x48] sm:$0xff]
    %v3447 = vld [vmem:[#allocation5 + $0x50] sm:$0xff]
    %v3448 = vld [vmem:[#allocation5 + $0x58] sm:$0xff]
    %v3449 = vld [vmem:[#allocation5 + $0x60] sm:$0xff]
    %v3450 = vld [vmem:[#allocation5 + $0x68] sm:$0xff]
    %v3451 = vld [vmem:[#allocation5 + $0x70] sm:$0xff]
    %v3452 = vld [vmem:[#allocation5 + $0x78] sm:$0xff]
    %v3453 = vld [vmem:[#allocation5 + $0x80] sm:$0xff]
    %v3454 = vld [vmem:[#allocation5 + $0x88] sm:$0xff]
    %v3455 = vld [vmem:[#allocation5 + $0x90] sm:$0xff]
    %v3456 = vld [vmem:[#allocation5 + $0x98] sm:$0xff]
    %v3457 = vld [vmem:[#allocation5 + $0xa0] sm:$0xff]
    %v3458 = vld [vmem:[#allocation5 + $0xa8] sm:$0xff]
    %v3459 = vld [vmem:[#allocation5 + $0xb0] sm:$0xff]
    %v3460 = vld [vmem:[#allocation5 + $0xb8] sm:$0xff]
    %v3461 = vld [vmem:[#allocation5 + $0xc0] sm:$0xff]
    %v3462 = vld [vmem:[#allocation5 + $0xc8] sm:$0xff]
    %v3463 = vld [vmem:[#allocation5 + $0xd0] sm:$0xff]
    %v3464 = vld [vmem:[#allocation5 + $0xd8] sm:$0xff]
    %v3465 = vld [vmem:[#allocation5 + $0xe0] sm:$0xff]
    %v3466 = vld [vmem:[#allocation5 + $0xe8] sm:$0xff]
    %v3467 = vld [vmem:[#allocation5 + $0xf0] sm:$0xff]
    %v3468 = vld [vmem:[#allocation5 + $0xf8] sm:$0xff]
    %v3501 = vunpack.c.l.b16 %v3437
    %v3502 = vunpack.c.h.b16 %v3437
    %v3503 = vunpack.c.l.b16 %v3438
    %v3504 = vunpack.c.h.b16 %v3438
    %v3505 = vunpack.c.l.b16 %v3439
    %v3506 = vunpack.c.h.b16 %v3439
    %v3507 = vunpack.c.l.b16 %v3440
    %v3508 = vunpack.c.h.b16 %v3440
    %v3509 = vunpack.c.l.b16 %v3441
    %v3510 = vunpack.c.h.b16 %v3441
    %v3511 = vunpack.c.l.b16 %v3442
    %v3512 = vunpack.c.h.b16 %v3442
    %v3513 = vunpack.c.l.b16 %v3443
    %v3514 = vunpack.c.h.b16 %v3443
    %v3515 = vunpack.c.l.b16 %v3444
    %v3516 = vunpack.c.h.b16 %v3444
    %v3517 = vunpack.c.l.b16 %v3445
    %v3518 = vunpack.c.h.b16 %v3445
    %v3519 = vunpack.c.l.b16 %v3446
    %v3520 = vunpack.c.h.b16 %v3446
    %v3521 = vunpack.c.l.b16 %v3447
    %v3522 = vunpack.c.h.b16 %v3447
    %v3523 = vunpack.c.l.b16 %v3448
    %v3524 = vunpack.c.h.b16 %v3448
    %v3525 = vunpack.c.l.b16 %v3449
    %v3526 = vunpack.c.h.b16 %v3449
    %v3527 = vunpack.c.l.b16 %v3450
    %v3528 = vunpack.c.h.b16 %v3450
    %v3529 = vunpack.c.l.b16 %v3451
    %v3530 = vunpack.c.h.b16 %v3451
    %v3531 = vunpack.c.l.b16 %v3452
    %v3532 = vunpack.c.h.b16 %v3452
    %v3533 = vunpack.c.l.b16 %v3453
    %v3534 = vunpack.c.h.b16 %v3453
    %v3535 = vunpack.c.l.b16 %v3454
    %v3536 = vunpack.c.h.b16 %v3454
    %v3537 = vunpack.c.l.b16 %v3455
    %v3538 = vunpack.c.h.b16 %v3455
    %v3539 = vunpack.c.l.b16 %v3456
    %v3540 = vunpack.c.h.b16 %v3456
    %v3541 = vunpack.c.l.b16 %v3457
    %v3542 = vunpack.c.h.b16 %v3457
    %v3543 = vunpack.c.l.b16 %v3458
    %v3544 = vunpack.c.h.b16 %v3458
    %v3545 = vunpack.c.l.b16 %v3459
    %v3546 = vunpack.c.h.b16 %v3459
    %v3547 = vunpack.c.l.b16 %v3460
    %v3548 = vunpack.c.h.b16 %v3460
    %v3549 = vunpack.c.l.b16 %v3461
    %v3550 = vunpack.c.h.b16 %v3461
    %v3551 = vunpack.c.l.b16 %v3462
    %v3552 = vunpack.c.h.b16 %v3462
    %v3553 = vunpack.c.l.b16 %v3463
    %v3554 = vunpack.c.h.b16 %v3463
    %v3555 = vunpack.c.l.b16 %v3464
    %v3556 = vunpack.c.h.b16 %v3464
    %v3557 = vunpack.c.l.b16 %v3465
    %v3558 = vunpack.c.h.b16 %v3465
    %v3559 = vunpack.c.l.b16 %v3466
    %v3560 = vunpack.c.h.b16 %v3466
    %v3561 = vunpack.c.l.b16 %v3467
    %v3562 = vunpack.c.h.b16 %v3467
    %v3563 = vunpack.c.l.b16 %v3468
    %v3564 = vunpack.c.h.b16 %v3468
    %v3565 = vpack.c.b16 %v3505, %v3501
    %v3566 = vpack.c.b16 %v3506, %v3502
    %v3567 = vpack.c.b16 %v3507, %v3503
    %v3568 = vpack.c.b16 %v3508, %v3504
    %v3569 = vpack.c.b16 %v3513, %v3509
    %v3570 = vpack.c.b16 %v3514, %v3510
    %v3571 = vpack.c.b16 %v3515, %v3511
    %v3572 = vpack.c.b16 %v3516, %v3512
    %v3573 = vpack.c.b16 %v3521, %v3517
    %v3574 = vpack.c.b16 %v3522, %v3518
    %v3575 = vpack.c.b16 %v3523, %v3519
    %v3576 = vpack.c.b16 %v3524, %v3520
    %v3577 = vpack.c.b16 %v3529, %v3525
    %v3578 = vpack.c.b16 %v3530, %v3526
    %v3579 = vpack.c.b16 %v3531, %v3527
    %v3580 = vpack.c.b16 %v3532, %v3528
    %v3581 = vpack.c.b16 %v3537, %v3533
    %v3582 = vpack.c.b16 %v3538, %v3534
    %v3583 = vpack.c.b16 %v3539, %v3535
    %v3584 = vpack.c.b16 %v3540, %v3536
    %v3585 = vpack.c.b16 %v3545, %v3541
    %v3586 = vpack.c.b16 %v3546, %v3542
    %v3587 = vpack.c.b16 %v3547, %v3543
    %v3588 = vpack.c.b16 %v3548, %v3544
    %v3589 = vpack.c.b16 %v3553, %v3549
    %v3590 = vpack.c.b16 %v3554, %v3550
    %v3591 = vpack.c.b16 %v3555, %v3551
    %v3592 = vpack.c.b16 %v3556, %v3552
    %v3593 = vpack.c.b16 %v3561, %v3557
    %v3594 = vpack.c.b16 %v3562, %v3558
    %v3595 = vpack.c.b16 %v3563, %v3559
    %v3596 = vpack.c.b16 %v3564, %v3560
    %3629 = vmatpush.bf16.msra.mxu0 %v3593
    %3630 = vmatpush.bf16.msra.mxu0 %v3589
    %3631 = vmatpush.bf16.msra.mxu0 %v3585
    %3632 = vmatpush.bf16.msra.mxu0 %v3581
    %3633 = vmatpush.bf16.msra.mxu0 %v3577
    %3634 = vmatpush.bf16.msra.mxu0 %v3573
    %3635 = vmatpush.bf16.msra.mxu0 %v3569
    %3636 = vmatpush.bf16.msra.mxu0 %v3565
    %3637 = vmatmul.bf16.gmra.mxu0 %v3436
    %v3638 = vpop.f32.mrf.mxu0
    %v3639 = vadd.f32 0.0, %v3638
    %v3640 = vpop.f32.mrf.mxu0
    %3641 = vdwg.mxu0
    %3642 = vmatpush.bf16.msra.mxu0 %v3594
    %3643 = vmatpush.bf16.msra.mxu0 %v3590
    %3644 = vmatpush.bf16.msra.mxu0 %v3586
    %3645 = vmatpush.bf16.msra.mxu0 %v3582
    %3646 = vmatpush.bf16.msra.mxu0 %v3578
    %3647 = vmatpush.bf16.msra.mxu0 %v3574
    %3648 = vmatpush.bf16.msra.mxu0 %v3570
    %3649 = vmatpush.bf16.msra.mxu0 %v3566
    %3650 = vmatmul.bf16.gmra.mxu0 %v3436
    %v3651 = vpop.f32.mrf.mxu0
    %v3652 = vadd.f32 0.0, %v3651
    %v3653 = vpop.f32.mrf.mxu0
    %3654 = vdwg.mxu0
    %3655 = vmatpush.bf16.msra.mxu0 %v3595
    %3656 = vmatpush.bf16.msra.mxu0 %v3591
    %3657 = vmatpush.bf16.msra.mxu0 %v3587
    %3658 = vmatpush.bf16.msra.mxu0 %v3583
    %3659 = vmatpush.bf16.msra.mxu0 %v3579
    %3660 = vmatpush.bf16.msra.mxu0 %v3575
    %3661 = vmatpush.bf16.msra.mxu0 %v3571
    %3662 = vmatpush.bf16.msra.mxu0 %v3567
    %3663 = vmatmul.bf16.gmra.mxu0 %v3436
    %v3664 = vpop.f32.mrf.mxu0
    %v3665 = vadd.f32 0.0, %v3664
    %v3666 = vpop.f32.mrf.mxu0
    %3667 = vdwg.mxu0
    %3668 = vmatpush.bf16.msra.mxu0 %v3596
    %3669 = vmatpush.bf16.msra.mxu0 %v3592
    %3670 = vmatpush.bf16.msra.mxu0 %v3588
    %3671 = vmatpush.bf16.msra.mxu0 %v3584
    %3672 = vmatpush.bf16.msra.mxu0 %v3580
    %3673 = vmatpush.bf16.msra.mxu0 %v3576
    %3674 = vmatpush.bf16.msra.mxu0 %v3572
    %3675 = vmatpush.bf16.msra.mxu0 %v3568
    %3676 = vmatmul.bf16.gmra.mxu0 %v3436
    %v3677 = vpop.f32.mrf.mxu0
    %v3678 = vadd.f32 0.0, %v3677
    %v3679 = vpop.f32.mrf.mxu0
    %3680 = vdwg.mxu0
    %v3713 = vunpack.c.l.b16 %v3404
    %v3714 = vunpack.c.h.b16 %v3404
    %v3715 = vunpack.c.l.b16 %v3405
    %v3716 = vunpack.c.h.b16 %v3405
    %v3717 = vunpack.c.l.b16 %v3406
    %v3718 = vunpack.c.h.b16 %v3406
    %v3719 = vunpack.c.l.b16 %v3407
    %v3720 = vunpack.c.h.b16 %v3407
    %v3721 = vunpack.c.l.b16 %v3408
    %v3722 = vunpack.c.h.b16 %v3408
    %v3723 = vunpack.c.l.b16 %v3409
    %v3724 = vunpack.c.h.b16 %v3409
    %v3725 = vunpack.c.l.b16 %v3410
    %v3726 = vunpack.c.h.b16 %v3410
    %v3727 = vunpack.c.l.b16 %v3411
    %v3728 = vunpack.c.h.b16 %v3411
    %v3729 = vunpack.c.l.b16 %v3412
    %v3730 = vunpack.c.h.b16 %v3412
    %v3731 = vunpack.c.l.b16 %v3413
    %v3732 = vunpack.c.h.b16 %v3413
    %v3733 = vunpack.c.l.b16 %v3414
    %v3734 = vunpack.c.h.b16 %v3414
    %v3735 = vunpack.c.l.b16 %v3415
    %v3736 = vunpack.c.h.b16 %v3415
    %v3737 = vunpack.c.l.b16 %v3416
    %v3738 = vunpack.c.h.b16 %v3416
    %v3739 = vunpack.c.l.b16 %v3417
    %v3740 = vunpack.c.h.b16 %v3417
    %v3741 = vunpack.c.l.b16 %v3418
    %v3742 = vunpack.c.h.b16 %v3418
    %v3743 = vunpack.c.l.b16 %v3419
    %v3744 = vunpack.c.h.b16 %v3419
    %v3745 = vunpack.c.l.b16 %v3420
    %v3746 = vunpack.c.h.b16 %v3420
    %v3747 = vunpack.c.l.b16 %v3421
    %v3748 = vunpack.c.h.b16 %v3421
    %v3749 = vunpack.c.l.b16 %v3422
    %v3750 = vunpack.c.h.b16 %v3422
    %v3751 = vunpack.c.l.b16 %v3423
    %v3752 = vunpack.c.h.b16 %v3423
    %v3753 = vunpack.c.l.b16 %v3424
    %v3754 = vunpack.c.h.b16 %v3424
    %v3755 = vunpack.c.l.b16 %v3425
    %v3756 = vunpack.c.h.b16 %v3425
    %v3757 = vunpack.c.l.b16 %v3426
    %v3758 = vunpack.c.h.b16 %v3426
    %v3759 = vunpack.c.l.b16 %v3427
    %v3760 = vunpack.c.h.b16 %v3427
    %v3761 = vunpack.c.l.b16 %v3428
    %v3762 = vunpack.c.h.b16 %v3428
    %v3763 = vunpack.c.l.b16 %v3429
    %v3764 = vunpack.c.h.b16 %v3429
    %v3765 = vunpack.c.l.b16 %v3430
    %v3766 = vunpack.c.h.b16 %v3430
    %v3767 = vunpack.c.l.b16 %v3431
    %v3768 = vunpack.c.h.b16 %v3431
    %v3769 = vunpack.c.l.b16 %v3432
    %v3770 = vunpack.c.h.b16 %v3432
    %v3771 = vunpack.c.l.b16 %v3433
    %v3772 = vunpack.c.h.b16 %v3433
    %v3773 = vunpack.c.l.b16 %v3434
    %v3774 = vunpack.c.h.b16 %v3434
    %v3775 = vunpack.c.l.b16 %v3435
    %v3776 = vunpack.c.h.b16 %v3435
    %v3777 = vpack.c.b16 %v3717, %v3713
    %v3778 = vpack.c.b16 %v3718, %v3714
    %v3779 = vpack.c.b16 %v3719, %v3715
    %v3780 = vpack.c.b16 %v3720, %v3716
    %v3781 = vpack.c.b16 %v3725, %v3721
    %v3782 = vpack.c.b16 %v3726, %v3722
    %v3783 = vpack.c.b16 %v3727, %v3723
    %v3784 = vpack.c.b16 %v3728, %v3724
    %v3785 = vpack.c.b16 %v3733, %v3729
    %v3786 = vpack.c.b16 %v3734, %v3730
    %v3787 = vpack.c.b16 %v3735, %v3731
    %v3788 = vpack.c.b16 %v3736, %v3732
    %v3789 = vpack.c.b16 %v3741, %v3737
    %v3790 = vpack.c.b16 %v3742, %v3738
    %v3791 = vpack.c.b16 %v3743, %v3739
    %v3792 = vpack.c.b16 %v3744, %v3740
    %v3793 = vpack.c.b16 %v3749, %v3745
    %v3794 = vpack.c.b16 %v3750, %v3746
    %v3795 = vpack.c.b16 %v3751, %v3747
    %v3796 = vpack.c.b16 %v3752, %v3748
    %v3797 = vpack.c.b16 %v3757, %v3753
    %v3798 = vpack.c.b16 %v3758, %v3754
    %v3799 = vpack.c.b16 %v3759, %v3755
    %v3800 = vpack.c.b16 %v3760, %v3756
    %v3801 = vpack.c.b16 %v3765, %v3761
    %v3802 = vpack.c.b16 %v3766, %v3762
    %v3803 = vpack.c.b16 %v3767, %v3763
    %v3804 = vpack.c.b16 %v3768, %v3764
    %v3805 = vpack.c.b16 %v3773, %v3769
    %v3806 = vpack.c.b16 %v3774, %v3770
    %v3807 = vpack.c.b16 %v3775, %v3771
    %v3808 = vpack.c.b16 %v3776, %v3772
    %3841 = vmatpush.bf16.msra.mxu0 %v3805
    %3842 = vmatpush.bf16.msra.mxu0 %v3801
    %3843 = vmatpush.bf16.msra.mxu0 %v3797
    %3844 = vmatpush.bf16.msra.mxu0 %v3793
    %3845 = vmatpush.bf16.msra.mxu0 %v3789
    %3846 = vmatpush.bf16.msra.mxu0 %v3785
    %3847 = vmatpush.bf16.msra.mxu0 %v3781
    %3848 = vmatpush.bf16.msra.mxu0 %v3777
    %3849 = vmatmul.bf16.gmra.mxu0 %v3403
    %v3850 = vpop.f32.mrf.mxu0
    %v3851 = vadd.f32 %v3639, %v3850
    %v3852 = vpop.f32.mrf.mxu0
    %3853 = vdwg.mxu0
    %3854 = vmatpush.bf16.msra.mxu0 %v3806
    %3855 = vmatpush.bf16.msra.mxu0 %v3802
    %3856 = vmatpush.bf16.msra.mxu0 %v3798
    %3857 = vmatpush.bf16.msra.mxu0 %v3794
    %3858 = vmatpush.bf16.msra.mxu0 %v3790
    %3859 = vmatpush.bf16.msra.mxu0 %v3786
    %3860 = vmatpush.bf16.msra.mxu0 %v3782
    %3861 = vmatpush.bf16.msra.mxu0 %v3778
    %3862 = vmatmul.bf16.gmra.mxu0 %v3403
    %v3863 = vpop.f32.mrf.mxu0
    %v3864 = vadd.f32 %v3652, %v3863
    %v3865 = vpop.f32.mrf.mxu0
    %3866 = vdwg.mxu0
    %3867 = vmatpush.bf16.msra.mxu0 %v3807
    %3868 = vmatpush.bf16.msra.mxu0 %v3803
    %3869 = vmatpush.bf16.msra.mxu0 %v3799
    %3870 = vmatpush.bf16.msra.mxu0 %v3795
    %3871 = vmatpush.bf16.msra.mxu0 %v3791
    %3872 = vmatpush.bf16.msra.mxu0 %v3787
    %3873 = vmatpush.bf16.msra.mxu0 %v3783
    %3874 = vmatpush.bf16.msra.mxu0 %v3779
    %3875 = vmatmul.bf16.gmra.mxu0 %v3403
    %v3876 = vpop.f32.mrf.mxu0
    %v3877 = vadd.f32 %v3665, %v3876
    %v3878 = vpop.f32.mrf.mxu0
    %3879 = vdwg.mxu0
    %3880 = vmatpush.bf16.msra.mxu0 %v3808
    %3881 = vmatpush.bf16.msra.mxu0 %v3804
    %3882 = vmatpush.bf16.msra.mxu0 %v3800
    %3883 = vmatpush.bf16.msra.mxu0 %v3796
    %3884 = vmatpush.bf16.msra.mxu0 %v3792
    %3885 = vmatpush.bf16.msra.mxu0 %v3788
    %3886 = vmatpush.bf16.msra.mxu0 %v3784
    %3887 = vmatpush.bf16.msra.mxu0 %v3780
    %3888 = vmatmul.bf16.gmra.mxu0 %v3403
    %v3889 = vpop.f32.mrf.mxu0
    %v3890 = vadd.f32 %v3678, %v3889
    %v3891 = vpop.f32.mrf.mxu0
    %3892 = vdwg.mxu0
    %v3893 = vadd.f32 %v3851, %v145
    %v3894 = vadd.f32 %v3864, %v146
    %v3895 = vadd.f32 %v3877, %v147
    %v3896 = vadd.f32 %v3890, %v148
    %v3897 = vxor.u32 %v3893, 2147483648
    %v3898 = vmul.f32 %v3897, 1.442695
    %v3899 = vpow.pop %v3898
    %v3900 = vadd.f32 %v3899, 1.0
    %v3901 = vrcp.pop %v3900
    %v3902 = vmul.f32 %v3900, %v3901
    %v3903 = vsub.f32 1.0, %v3902
    %v3904 = vmul.f32 %v3901, %v3903
    %v3905 = vadd.f32 %v3901, %v3904
    %vm3906 = vweird.f32 %v3900
    %vm3907 = vweird.f32 %v3901
    %vm3908 = vmor %vm3906, %vm3907
    %v3909 = vsel %vm3908, %v3901, %v3905
    %v3910 = vand.u32 2147483647, %v3900
    %vm3911 = vcmp.eq.f32.partialorder %v3910, 8.507059e+37
    %v3912 = vand.u32 %v3900, 2147483648
    %v3913 = vor.u32 1.1754944e-38, %v3912
    %v3914 = vsel %vm3911, %v3913, %v3909
    %v3915 = vmul.f32 1.0, %v3914
    %v3916 = vxor.u32 %v3894, 2147483648
    %v3917 = vmul.f32 %v3916, 1.442695
    %v3918 = vpow.pop %v3917
    %v3919 = vadd.f32 %v3918, 1.0
    %v3920 = vrcp.pop %v3919
    %v3921 = vmul.f32 %v3919, %v3920
    %v3922 = vsub.f32 1.0, %v3921
    %v3923 = vmul.f32 %v3920, %v3922
    %v3924 = vadd.f32 %v3920, %v3923
    %vm3925 = vweird.f32 %v3919
    %vm3926 = vweird.f32 %v3920
    %vm3927 = vmor %vm3925, %vm3926
    %v3928 = vsel %vm3927, %v3920, %v3924
    %v3929 = vand.u32 2147483647, %v3919
    %vm3930 = vcmp.eq.f32.partialorder %v3929, 8.507059e+37
    %v3931 = vand.u32 %v3919, 2147483648
    %v3932 = vor.u32 1.1754944e-38, %v3931
    %v3933 = vsel %vm3930, %v3932, %v3928
    %v3934 = vmul.f32 1.0, %v3933
    %v3935 = vtanh.pop %v3895
    %v3936 = vxor.u32 %v3896, 2147483648
    %v3937 = vmul.f32 %v3936, 1.442695
    %v3938 = vpow.pop %v3937
    %v3939 = vadd.f32 %v3938, 1.0
    %v3940 = vrcp.pop %v3939
    %v3941 = vmul.f32 %v3939, %v3940
    %v3942 = vsub.f32 1.0, %v3941
    %v3943 = vmul.f32 %v3940, %v3942
    %v3944 = vadd.f32 %v3940, %v3943
    %vm3945 = vweird.f32 %v3939
    %vm3946 = vweird.f32 %v3940
    %vm3947 = vmor %vm3945, %vm3946
    %v3948 = vsel %vm3947, %v3940, %v3944
    %v3949 = vand.u32 2147483647, %v3939
    %vm3950 = vcmp.eq.f32.partialorder %v3949, 8.507059e+37
    %v3951 = vand.u32 %v3939, 2147483648
    %v3952 = vor.u32 1.1754944e-38, %v3951
    %v3953 = vsel %vm3950, %v3952, %v3948
    %v3954 = vmul.f32 1.0, %v3953
    %v3955 = vmul.f32 %v3934, %v3006
    %v3956 = vmul.f32 %v3915, %v3935
    %v3957 = vadd.f32 %v3955, %v3956
    %v3958 = vtanh.pop %v3957
    %v3959 = vmul.f32 %v3954, %v3958
    %s3960 = scalar_lea.vmem [#allocation11], 24
    %3961 = vst [vmem:[%s3960] sm:$0xff] %v3959
    %s3962 = scalar_lea.vmem [#allocation13], 16
    %v3963 = vld [vmem:[%s3962] sm:$0xf]
    %v3964 = vld [vmem:[#allocation2] sm:$0xff]
    %v3965 = vld [vmem:[#allocation2 + $0x8] sm:$0xff]
    %v3966 = vld [vmem:[#allocation3] sm:$0xff]
    %v3967 = vld [vmem:[#allocation3 + $0x8] sm:$0xff]
    %v3968 = vld [vmem:[#allocation3 + $0x10] sm:$0xff]
    %v3969 = vld [vmem:[#allocation3 + $0x18] sm:$0xff]
    %v3970 = vld [vmem:[#allocation3 + $0x20] sm:$0xff]
    %v3971 = vld [vmem:[#allocation3 + $0x28] sm:$0xff]
    %v3972 = vld [vmem:[#allocation3 + $0x30] sm:$0xff]
    %v3973 = vld [vmem:[#allocation3 + $0x38] sm:$0xff]
    %v3974 = vld [vmem:[#allocation3 + $0x40] sm:$0xff]
    %v3975 = vld [vmem:[#allocation3 + $0x48] sm:$0xff]
    %v3976 = vld [vmem:[#allocation3 + $0x50] sm:$0xff]
    %v3977 = vld [vmem:[#allocation3 + $0x58] sm:$0xff]
    %v3978 = vld [vmem:[#allocation3 + $0x60] sm:$0xff]
    %v3979 = vld [vmem:[#allocation3 + $0x68] sm:$0xff]
    %v3980 = vld [vmem:[#allocation3 + $0x70] sm:$0xff]
    %v3981 = vld [vmem:[#allocation3 + $0x78] sm:$0xff]
    %v3982 = vld [vmem:[#allocation3 + $0x80] sm:$0xff]
    %v3983 = vld [vmem:[#allocation3 + $0x88] sm:$0xff]
    %v3984 = vld [vmem:[#allocation3 + $0x90] sm:$0xff]
    %v3985 = vld [vmem:[#allocation3 + $0x98] sm:$0xff]
    %v3986 = vld [vmem:[#allocation3 + $0xa0] sm:$0xff]
    %v3987 = vld [vmem:[#allocation3 + $0xa8] sm:$0xff]
    %v3988 = vld [vmem:[#allocation3 + $0xb0] sm:$0xff]
    %v3989 = vld [vmem:[#allocation3 + $0xb8] sm:$0xff]
    %v3990 = vld [vmem:[#allocation3 + $0xc0] sm:$0xff]
    %v3991 = vld [vmem:[#allocation3 + $0xc8] sm:$0xff]
    %v3992 = vld [vmem:[#allocation3 + $0xd0] sm:$0xff]
    %v3993 = vld [vmem:[#allocation3 + $0xd8] sm:$0xff]
    %v3994 = vld [vmem:[#allocation3 + $0xe0] sm:$0xff]
    %v3995 = vld [vmem:[#allocation3 + $0xe8] sm:$0xff]
    %v3996 = vld [vmem:[#allocation3 + $0xf0] sm:$0xff]
    %v3997 = vld [vmem:[#allocation3 + $0xf8] sm:$0xff]
    %v4030 = vunpack.c.l.b16 %v3966
    %v4031 = vunpack.c.h.b16 %v3966
    %v4032 = vunpack.c.l.b16 %v3967
    %v4033 = vunpack.c.h.b16 %v3967
    %v4034 = vunpack.c.l.b16 %v3968
    %v4035 = vunpack.c.h.b16 %v3968
    %v4036 = vunpack.c.l.b16 %v3969
    %v4037 = vunpack.c.h.b16 %v3969
    %v4038 = vunpack.c.l.b16 %v3970
    %v4039 = vunpack.c.h.b16 %v3970
    %v4040 = vunpack.c.l.b16 %v3971
    %v4041 = vunpack.c.h.b16 %v3971
    %v4042 = vunpack.c.l.b16 %v3972
    %v4043 = vunpack.c.h.b16 %v3972
    %v4044 = vunpack.c.l.b16 %v3973
    %v4045 = vunpack.c.h.b16 %v3973
    %v4046 = vunpack.c.l.b16 %v3974
    %v4047 = vunpack.c.h.b16 %v3974
    %v4048 = vunpack.c.l.b16 %v3975
    %v4049 = vunpack.c.h.b16 %v3975
    %v4050 = vunpack.c.l.b16 %v3976
    %v4051 = vunpack.c.h.b16 %v3976
    %v4052 = vunpack.c.l.b16 %v3977
    %v4053 = vunpack.c.h.b16 %v3977
    %v4054 = vunpack.c.l.b16 %v3978
    %v4055 = vunpack.c.h.b16 %v3978
    %v4056 = vunpack.c.l.b16 %v3979
    %v4057 = vunpack.c.h.b16 %v3979
    %v4058 = vunpack.c.l.b16 %v3980
    %v4059 = vunpack.c.h.b16 %v3980
    %v4060 = vunpack.c.l.b16 %v3981
    %v4061 = vunpack.c.h.b16 %v3981
    %v4062 = vunpack.c.l.b16 %v3982
    %v4063 = vunpack.c.h.b16 %v3982
    %v4064 = vunpack.c.l.b16 %v3983
    %v4065 = vunpack.c.h.b16 %v3983
    %v4066 = vunpack.c.l.b16 %v3984
    %v4067 = vunpack.c.h.b16 %v3984
    %v4068 = vunpack.c.l.b16 %v3985
    %v4069 = vunpack.c.h.b16 %v3985
    %v4070 = vunpack.c.l.b16 %v3986
    %v4071 = vunpack.c.h.b16 %v3986
    %v4072 = vunpack.c.l.b16 %v3987
    %v4073 = vunpack.c.h.b16 %v3987
    %v4074 = vunpack.c.l.b16 %v3988
    %v4075 = vunpack.c.h.b16 %v3988
    %v4076 = vunpack.c.l.b16 %v3989
    %v4077 = vunpack.c.h.b16 %v3989
    %v4078 = vunpack.c.l.b16 %v3990
    %v4079 = vunpack.c.h.b16 %v3990
    %v4080 = vunpack.c.l.b16 %v3991
    %v4081 = vunpack.c.h.b16 %v3991
    %v4082 = vunpack.c.l.b16 %v3992
    %v4083 = vunpack.c.h.b16 %v3992
    %v4084 = vunpack.c.l.b16 %v3993
    %v4085 = vunpack.c.h.b16 %v3993
    %v4086 = vunpack.c.l.b16 %v3994
    %v4087 = vunpack.c.h.b16 %v3994
    %v4088 = vunpack.c.l.b16 %v3995
    %v4089 = vunpack.c.h.b16 %v3995
    %v4090 = vunpack.c.l.b16 %v3996
    %v4091 = vunpack.c.h.b16 %v3996
    %v4092 = vunpack.c.l.b16 %v3997
    %v4093 = vunpack.c.h.b16 %v3997
    %v4094 = vpack.c.b16 %v4034, %v4030
    %v4095 = vpack.c.b16 %v4035, %v4031
    %v4096 = vpack.c.b16 %v4036, %v4032
    %v4097 = vpack.c.b16 %v4037, %v4033
    %v4098 = vpack.c.b16 %v4042, %v4038
    %v4099 = vpack.c.b16 %v4043, %v4039
    %v4100 = vpack.c.b16 %v4044, %v4040
    %v4101 = vpack.c.b16 %v4045, %v4041
    %v4102 = vpack.c.b16 %v4050, %v4046
    %v4103 = vpack.c.b16 %v4051, %v4047
    %v4104 = vpack.c.b16 %v4052, %v4048
    %v4105 = vpack.c.b16 %v4053, %v4049
    %v4106 = vpack.c.b16 %v4058, %v4054
    %v4107 = vpack.c.b16 %v4059, %v4055
    %v4108 = vpack.c.b16 %v4060, %v4056
    %v4109 = vpack.c.b16 %v4061, %v4057
    %v4110 = vpack.c.b16 %v4066, %v4062
    %v4111 = vpack.c.b16 %v4067, %v4063
    %v4112 = vpack.c.b16 %v4068, %v4064
    %v4113 = vpack.c.b16 %v4069, %v4065
    %v4114 = vpack.c.b16 %v4074, %v4070
    %v4115 = vpack.c.b16 %v4075, %v4071
    %v4116 = vpack.c.b16 %v4076, %v4072
    %v4117 = vpack.c.b16 %v4077, %v4073
    %v4118 = vpack.c.b16 %v4082, %v4078
    %v4119 = vpack.c.b16 %v4083, %v4079
    %v4120 = vpack.c.b16 %v4084, %v4080
    %v4121 = vpack.c.b16 %v4085, %v4081
    %v4122 = vpack.c.b16 %v4090, %v4086
    %v4123 = vpack.c.b16 %v4091, %v4087
    %v4124 = vpack.c.b16 %v4092, %v4088
    %v4125 = vpack.c.b16 %v4093, %v4089
    %4158 = vmatpush.bf16.msra.mxu0 %v4122
    %4159 = vmatpush.bf16.msra.mxu0 %v4118
    %4160 = vmatpush.bf16.msra.mxu0 %v4114
    %4161 = vmatpush.bf16.msra.mxu0 %v4110
    %4162 = vmatpush.bf16.msra.mxu0 %v4106
    %4163 = vmatpush.bf16.msra.mxu0 %v4102
    %4164 = vmatpush.bf16.msra.mxu0 %v4098
    %4165 = vmatpush.bf16.msra.mxu0 %v4094
    %4166 = vmatmul.bf16.gmra.mxu0 %v3403
    %v4167 = vpop.f32.mrf.mxu0
    %v4168 = vadd.f32 0.0, %v4167
    %v4169 = vpop.f32.mrf.mxu0
    %4170 = vdwg.mxu0
    %4171 = vmatpush.bf16.msra.mxu0 %v4123
    %4172 = vmatpush.bf16.msra.mxu0 %v4119
    %4173 = vmatpush.bf16.msra.mxu0 %v4115
    %4174 = vmatpush.bf16.msra.mxu0 %v4111
    %4175 = vmatpush.bf16.msra.mxu0 %v4107
    %4176 = vmatpush.bf16.msra.mxu0 %v4103
    %4177 = vmatpush.bf16.msra.mxu0 %v4099
    %4178 = vmatpush.bf16.msra.mxu0 %v4095
    %4179 = vmatmul.bf16.gmra.mxu0 %v3403
    %v4180 = vpop.f32.mrf.mxu0
    %v4181 = vadd.f32 0.0, %v4180
    %v4182 = vpop.f32.mrf.mxu0
    %4183 = vdwg.mxu0
    %4184 = vmatpush.bf16.msra.mxu0 %v4124
    %4185 = vmatpush.bf16.msra.mxu0 %v4120
    %4186 = vmatpush.bf16.msra.mxu0 %v4116
    %4187 = vmatpush.bf16.msra.mxu0 %v4112
    %4188 = vmatpush.bf16.msra.mxu0 %v4108
    %4189 = vmatpush.bf16.msra.mxu0 %v4104
    %4190 = vmatpush.bf16.msra.mxu0 %v4100
    %4191 = vmatpush.bf16.msra.mxu0 %v4096
    %4192 = vmatmul.bf16.gmra.mxu0 %v3403
    %v4193 = vpop.f32.mrf.mxu0
    %v4194 = vadd.f32 0.0, %v4193
    %v4195 = vpop.f32.mrf.mxu0
    %4196 = vdwg.mxu0
    %4197 = vmatpush.bf16.msra.mxu0 %v4125
    %4198 = vmatpush.bf16.msra.mxu0 %v4121
    %4199 = vmatpush.bf16.msra.mxu0 %v4117
    %4200 = vmatpush.bf16.msra.mxu0 %v4113
    %4201 = vmatpush.bf16.msra.mxu0 %v4109
    %4202 = vmatpush.bf16.msra.mxu0 %v4105
    %4203 = vmatpush.bf16.msra.mxu0 %v4101
    %4204 = vmatpush.bf16.msra.mxu0 %v4097
    %4205 = vmatmul.bf16.gmra.mxu0 %v3403
    %v4206 = vpop.f32.mrf.mxu0
    %v4207 = vadd.f32 0.0, %v4206
    %v4208 = vpop.f32.mrf.mxu0
    %4209 = vdwg.mxu0
    %v4212 = vunpack.c.l.b16 %v3964
    %v4213 = vunpack.c.h.b16 %v3964
    %v4214 = vunpack.c.l.b16 %v3965
    %v4215 = vunpack.c.h.b16 %v3965
    %v4216 = vpack.c.b16 %v4212, %v4212
    %v4217 = vpack.c.b16 %v4213, %v4213
    %v4218 = vpack.c.b16 %v4214, %v4214
    %v4219 = vpack.c.b16 %v4215, %v4215
    %v4221 = vsel %vm415, %v3963, 0
    %v4224 = vsel %vm419, %v4216, 0
    %v4227 = vsel %vm419, %v4217, 0
    %v4230 = vsel %vm419, %v4218, 0
    %v4233 = vsel %vm419, %v4219, 0
    %4235 = vmatpush.bf16.msra.mxu0 0
    %4236 = vmatpush.bf16.msra.mxu0 0
    %4237 = vmatpush.bf16.msra.mxu0 0
    %4238 = vmatpush.bf16.msra.mxu0 0
    %4239 = vmatpush.bf16.msra.mxu0 0
    %4240 = vmatpush.bf16.msra.mxu0 0
    %4241 = vmatpush.bf16.msra.mxu0 0
    %4242 = vmatpush.bf16.msra.mxu0 %v4224
    %4243 = vmatmul.bf16.gmra.mxu0 %v4221
    %v4244 = vpop.f32.mrf.mxu0
    %v4245 = vadd.f32 %v4168, %v4244
    %v4246 = vpop.f32.mrf.mxu0
    %4247 = vdwg.mxu0
    %4248 = vmatpush.bf16.msra.mxu0 0
    %4249 = vmatpush.bf16.msra.mxu0 0
    %4250 = vmatpush.bf16.msra.mxu0 0
    %4251 = vmatpush.bf16.msra.mxu0 0
    %4252 = vmatpush.bf16.msra.mxu0 0
    %4253 = vmatpush.bf16.msra.mxu0 0
    %4254 = vmatpush.bf16.msra.mxu0 0
    %4255 = vmatpush.bf16.msra.mxu0 %v4227
    %4256 = vmatmul.bf16.gmra.mxu0 %v4221
    %v4257 = vpop.f32.mrf.mxu0
    %v4258 = vadd.f32 %v4181, %v4257
    %v4259 = vpop.f32.mrf.mxu0
    %4260 = vdwg.mxu0
    %4261 = vmatpush.bf16.msra.mxu0 0
    %4262 = vmatpush.bf16.msra.mxu0 0
    %4263 = vmatpush.bf16.msra.mxu0 0
    %4264 = vmatpush.bf16.msra.mxu0 0
    %4265 = vmatpush.bf16.msra.mxu0 0
    %4266 = vmatpush.bf16.msra.mxu0 0
    %4267 = vmatpush.bf16.msra.mxu0 0
    %4268 = vmatpush.bf16.msra.mxu0 %v4230
    %4269 = vmatmul.bf16.gmra.mxu0 %v4221
    %v4270 = vpop.f32.mrf.mxu0
    %v4271 = vadd.f32 %v4194, %v4270
    %v4272 = vpop.f32.mrf.mxu0
    %4273 = vdwg.mxu0
    %4274 = vmatpush.bf16.msra.mxu0 0
    %4275 = vmatpush.bf16.msra.mxu0 0
    %4276 = vmatpush.bf16.msra.mxu0 0
    %4277 = vmatpush.bf16.msra.mxu0 0
    %4278 = vmatpush.bf16.msra.mxu0 0
    %4279 = vmatpush.bf16.msra.mxu0 0
    %4280 = vmatpush.bf16.msra.mxu0 0
    %4281 = vmatpush.bf16.msra.mxu0 %v4233
    %4282 = vmatmul.bf16.gmra.mxu0 %v4221
    %v4283 = vpop.f32.mrf.mxu0
    %v4284 = vadd.f32 %v4207, %v4283
    %v4285 = vpop.f32.mrf.mxu0
    %4286 = vdwg.mxu0
    %v4287 = vadd.f32 %v4245, %v135
    %v4288 = vadd.f32 %v4258, %v136
    %v4289 = vadd.f32 %v4271, %v137
    %v4290 = vadd.f32 %v4284, %v138
    %v4291 = vxor.u32 %v4287, 2147483648
    %v4292 = vmul.f32 %v4291, 1.442695
    %v4293 = vpow.pop %v4292
    %v4294 = vadd.f32 %v4293, 1.0
    %v4295 = vrcp.pop %v4294
    %v4296 = vmul.f32 %v4294, %v4295
    %v4297 = vsub.f32 1.0, %v4296
    %v4298 = vmul.f32 %v4295, %v4297
    %v4299 = vadd.f32 %v4295, %v4298
    %vm4300 = vweird.f32 %v4294
    %vm4301 = vweird.f32 %v4295
    %vm4302 = vmor %vm4300, %vm4301
    %v4303 = vsel %vm4302, %v4295, %v4299
    %v4304 = vand.u32 2147483647, %v4294
    %vm4305 = vcmp.eq.f32.partialorder %v4304, 8.507059e+37
    %v4306 = vand.u32 %v4294, 2147483648
    %v4307 = vor.u32 1.1754944e-38, %v4306
    %v4308 = vsel %vm4305, %v4307, %v4303
    %v4309 = vmul.f32 1.0, %v4308
    %v4310 = vxor.u32 %v4288, 2147483648
    %v4311 = vmul.f32 %v4310, 1.442695
    %v4312 = vpow.pop %v4311
    %v4313 = vadd.f32 %v4312, 1.0
    %v4314 = vrcp.pop %v4313
    %v4315 = vmul.f32 %v4313, %v4314
    %v4316 = vsub.f32 1.0, %v4315
    %v4317 = vmul.f32 %v4314, %v4316
    %v4318 = vadd.f32 %v4314, %v4317
    %vm4319 = vweird.f32 %v4313
    %vm4320 = vweird.f32 %v4314
    %vm4321 = vmor %vm4319, %vm4320
    %v4322 = vsel %vm4321, %v4314, %v4318
    %v4323 = vand.u32 2147483647, %v4313
    %vm4324 = vcmp.eq.f32.partialorder %v4323, 8.507059e+37
    %v4325 = vand.u32 %v4313, 2147483648
    %v4326 = vor.u32 1.1754944e-38, %v4325
    %v4327 = vsel %vm4324, %v4326, %v4322
    %v4328 = vmul.f32 1.0, %v4327
    %v4329 = vtanh.pop %v4289
    %v4330 = vxor.u32 %v4290, 2147483648
    %v4331 = vmul.f32 %v4330, 1.442695
    %v4332 = vpow.pop %v4331
    %v4333 = vadd.f32 %v4332, 1.0
    %v4334 = vrcp.pop %v4333
    %v4335 = vmul.f32 %v4333, %v4334
    %v4336 = vsub.f32 1.0, %v4335
    %v4337 = vmul.f32 %v4334, %v4336
    %v4338 = vadd.f32 %v4334, %v4337
    %vm4339 = vweird.f32 %v4333
    %vm4340 = vweird.f32 %v4334
    %vm4341 = vmor %vm4339, %vm4340
    %v4342 = vsel %vm4341, %v4334, %v4338
    %v4343 = vand.u32 2147483647, %v4333
    %vm4344 = vcmp.eq.f32.partialorder %v4343, 8.507059e+37
    %v4345 = vand.u32 %v4333, 2147483648
    %v4346 = vor.u32 1.1754944e-38, %v4345
    %v4347 = vsel %vm4344, %v4346, %v4342
    %v4348 = vmul.f32 1.0, %v4347
    %v4349 = vmul.f32 %v4328, %v3400
    %v4350 = vmul.f32 %v4309, %v4329
    %v4351 = vadd.f32 %v4349, %v4350
    %v4352 = vtanh.pop %v4351
    %v4353 = vmul.f32 %v4348, %v4352
    %v4354 = vpack.c.bf16 %v4353, %v4353
    %v4355 = vld [vmem:[#allocation4] sm:$0xff]
    %v4356 = vld [vmem:[#allocation4 + $0x8] sm:$0xff]
    %v4357 = vld [vmem:[#allocation4 + $0x10] sm:$0xff]
    %v4358 = vld [vmem:[#allocation4 + $0x18] sm:$0xff]
    %v4359 = vld [vmem:[#allocation4 + $0x20] sm:$0xff]
    %v4360 = vld [vmem:[#allocation4 + $0x28] sm:$0xff]
    %v4361 = vld [vmem:[#allocation4 + $0x30] sm:$0xff]
    %v4362 = vld [vmem:[#allocation4 + $0x38] sm:$0xff]
    %v4363 = vld [vmem:[#allocation4 + $0x40] sm:$0xff]
    %v4364 = vld [vmem:[#allocation4 + $0x48] sm:$0xff]
    %v4365 = vld [vmem:[#allocation4 + $0x50] sm:$0xff]
    %v4366 = vld [vmem:[#allocation4 + $0x58] sm:$0xff]
    %v4367 = vld [vmem:[#allocation4 + $0x60] sm:$0xff]
    %v4368 = vld [vmem:[#allocation4 + $0x68] sm:$0xff]
    %v4369 = vld [vmem:[#allocation4 + $0x70] sm:$0xff]
    %v4370 = vld [vmem:[#allocation4 + $0x78] sm:$0xff]
    %v4371 = vld [vmem:[#allocation4 + $0x80] sm:$0xff]
    %v4372 = vld [vmem:[#allocation4 + $0x88] sm:$0xff]
    %v4373 = vld [vmem:[#allocation4 + $0x90] sm:$0xff]
    %v4374 = vld [vmem:[#allocation4 + $0x98] sm:$0xff]
    %v4375 = vld [vmem:[#allocation4 + $0xa0] sm:$0xff]
    %v4376 = vld [vmem:[#allocation4 + $0xa8] sm:$0xff]
    %v4377 = vld [vmem:[#allocation4 + $0xb0] sm:$0xff]
    %v4378 = vld [vmem:[#allocation4 + $0xb8] sm:$0xff]
    %v4379 = vld [vmem:[#allocation4 + $0xc0] sm:$0xff]
    %v4380 = vld [vmem:[#allocation4 + $0xc8] sm:$0xff]
    %v4381 = vld [vmem:[#allocation4 + $0xd0] sm:$0xff]
    %v4382 = vld [vmem:[#allocation4 + $0xd8] sm:$0xff]
    %v4383 = vld [vmem:[#allocation4 + $0xe0] sm:$0xff]
    %v4384 = vld [vmem:[#allocation4 + $0xe8] sm:$0xff]
    %v4385 = vld [vmem:[#allocation4 + $0xf0] sm:$0xff]
    %v4386 = vld [vmem:[#allocation4 + $0xf8] sm:$0xff]
    %v4387 = vpack.c.bf16 %v3959, %v3959
    %v4388 = vld [vmem:[#allocation5] sm:$0xff]
    %v4389 = vld [vmem:[#allocation5 + $0x8] sm:$0xff]
    %v4390 = vld [vmem:[#allocation5 + $0x10] sm:$0xff]
    %v4391 = vld [vmem:[#allocation5 + $0x18] sm:$0xff]
    %v4392 = vld [vmem:[#allocation5 + $0x20] sm:$0xff]
    %v4393 = vld [vmem:[#allocation5 + $0x28] sm:$0xff]
    %v4394 = vld [vmem:[#allocation5 + $0x30] sm:$0xff]
    %v4395 = vld [vmem:[#allocation5 + $0x38] sm:$0xff]
    %v4396 = vld [vmem:[#allocation5 + $0x40] sm:$0xff]
    %v4397 = vld [vmem:[#allocation5 + $0x48] sm:$0xff]
    %v4398 = vld [vmem:[#allocation5 + $0x50] sm:$0xff]
    %v4399 = vld [vmem:[#allocation5 + $0x58] sm:$0xff]
    %v4400 = vld [vmem:[#allocation5 + $0x60] sm:$0xff]
    %v4401 = vld [vmem:[#allocation5 + $0x68] sm:$0xff]
    %v4402 = vld [vmem:[#allocation5 + $0x70] sm:$0xff]
    %v4403 = vld [vmem:[#allocation5 + $0x78] sm:$0xff]
    %v4404 = vld [vmem:[#allocation5 + $0x80] sm:$0xff]
    %v4405 = vld [vmem:[#allocation5 + $0x88] sm:$0xff]
    %v4406 = vld [vmem:[#allocation5 + $0x90] sm:$0xff]
    %v4407 = vld [vmem:[#allocation5 + $0x98] sm:$0xff]
    %v4408 = vld [vmem:[#allocation5 + $0xa0] sm:$0xff]
    %v4409 = vld [vmem:[#allocation5 + $0xa8] sm:$0xff]
    %v4410 = vld [vmem:[#allocation5 + $0xb0] sm:$0xff]
    %v4411 = vld [vmem:[#allocation5 + $0xb8] sm:$0xff]
    %v4412 = vld [vmem:[#allocation5 + $0xc0] sm:$0xff]
    %v4413 = vld [vmem:[#allocation5 + $0xc8] sm:$0xff]
    %v4414 = vld [vmem:[#allocation5 + $0xd0] sm:$0xff]
    %v4415 = vld [vmem:[#allocation5 + $0xd8] sm:$0xff]
    %v4416 = vld [vmem:[#allocation5 + $0xe0] sm:$0xff]
    %v4417 = vld [vmem:[#allocation5 + $0xe8] sm:$0xff]
    %v4418 = vld [vmem:[#allocation5 + $0xf0] sm:$0xff]
    %v4419 = vld [vmem:[#allocation5 + $0xf8] sm:$0xff]
    %v4452 = vunpack.c.l.b16 %v4388
    %v4453 = vunpack.c.h.b16 %v4388
    %v4454 = vunpack.c.l.b16 %v4389
    %v4455 = vunpack.c.h.b16 %v4389
    %v4456 = vunpack.c.l.b16 %v4390
    %v4457 = vunpack.c.h.b16 %v4390
    %v4458 = vunpack.c.l.b16 %v4391
    %v4459 = vunpack.c.h.b16 %v4391
    %v4460 = vunpack.c.l.b16 %v4392
    %v4461 = vunpack.c.h.b16 %v4392
    %v4462 = vunpack.c.l.b16 %v4393
    %v4463 = vunpack.c.h.b16 %v4393
    %v4464 = vunpack.c.l.b16 %v4394
    %v4465 = vunpack.c.h.b16 %v4394
    %v4466 = vunpack.c.l.b16 %v4395
    %v4467 = vunpack.c.h.b16 %v4395
    %v4468 = vunpack.c.l.b16 %v4396
    %v4469 = vunpack.c.h.b16 %v4396
    %v4470 = vunpack.c.l.b16 %v4397
    %v4471 = vunpack.c.h.b16 %v4397
    %v4472 = vunpack.c.l.b16 %v4398
    %v4473 = vunpack.c.h.b16 %v4398
    %v4474 = vunpack.c.l.b16 %v4399
    %v4475 = vunpack.c.h.b16 %v4399
    %v4476 = vunpack.c.l.b16 %v4400
    %v4477 = vunpack.c.h.b16 %v4400
    %v4478 = vunpack.c.l.b16 %v4401
    %v4479 = vunpack.c.h.b16 %v4401
    %v4480 = vunpack.c.l.b16 %v4402
    %v4481 = vunpack.c.h.b16 %v4402
    %v4482 = vunpack.c.l.b16 %v4403
    %v4483 = vunpack.c.h.b16 %v4403
    %v4484 = vunpack.c.l.b16 %v4404
    %v4485 = vunpack.c.h.b16 %v4404
    %v4486 = vunpack.c.l.b16 %v4405
    %v4487 = vunpack.c.h.b16 %v4405
    %v4488 = vunpack.c.l.b16 %v4406
    %v4489 = vunpack.c.h.b16 %v4406
    %v4490 = vunpack.c.l.b16 %v4407
    %v4491 = vunpack.c.h.b16 %v4407
    %v4492 = vunpack.c.l.b16 %v4408
    %v4493 = vunpack.c.h.b16 %v4408
    %v4494 = vunpack.c.l.b16 %v4409
    %v4495 = vunpack.c.h.b16 %v4409
    %v4496 = vunpack.c.l.b16 %v4410
    %v4497 = vunpack.c.h.b16 %v4410
    %v4498 = vunpack.c.l.b16 %v4411
    %v4499 = vunpack.c.h.b16 %v4411
    %v4500 = vunpack.c.l.b16 %v4412
    %v4501 = vunpack.c.h.b16 %v4412
    %v4502 = vunpack.c.l.b16 %v4413
    %v4503 = vunpack.c.h.b16 %v4413
    %v4504 = vunpack.c.l.b16 %v4414
    %v4505 = vunpack.c.h.b16 %v4414
    %v4506 = vunpack.c.l.b16 %v4415
    %v4507 = vunpack.c.h.b16 %v4415
    %v4508 = vunpack.c.l.b16 %v4416
    %v4509 = vunpack.c.h.b16 %v4416
    %v4510 = vunpack.c.l.b16 %v4417
    %v4511 = vunpack.c.h.b16 %v4417
    %v4512 = vunpack.c.l.b16 %v4418
    %v4513 = vunpack.c.h.b16 %v4418
    %v4514 = vunpack.c.l.b16 %v4419
    %v4515 = vunpack.c.h.b16 %v4419
    %v4516 = vpack.c.b16 %v4456, %v4452
    %v4517 = vpack.c.b16 %v4457, %v4453
    %v4518 = vpack.c.b16 %v4458, %v4454
    %v4519 = vpack.c.b16 %v4459, %v4455
    %v4520 = vpack.c.b16 %v4464, %v4460
    %v4521 = vpack.c.b16 %v4465, %v4461
    %v4522 = vpack.c.b16 %v4466, %v4462
    %v4523 = vpack.c.b16 %v4467, %v4463
    %v4524 = vpack.c.b16 %v4472, %v4468
    %v4525 = vpack.c.b16 %v4473, %v4469
    %v4526 = vpack.c.b16 %v4474, %v4470
    %v4527 = vpack.c.b16 %v4475, %v4471
    %v4528 = vpack.c.b16 %v4480, %v4476
    %v4529 = vpack.c.b16 %v4481, %v4477
    %v4530 = vpack.c.b16 %v4482, %v4478
    %v4531 = vpack.c.b16 %v4483, %v4479
    %v4532 = vpack.c.b16 %v4488, %v4484
    %v4533 = vpack.c.b16 %v4489, %v4485
    %v4534 = vpack.c.b16 %v4490, %v4486
    %v4535 = vpack.c.b16 %v4491, %v4487
    %v4536 = vpack.c.b16 %v4496, %v4492
    %v4537 = vpack.c.b16 %v4497, %v4493
    %v4538 = vpack.c.b16 %v4498, %v4494
    %v4539 = vpack.c.b16 %v4499, %v4495
    %v4540 = vpack.c.b16 %v4504, %v4500
    %v4541 = vpack.c.b16 %v4505, %v4501
    %v4542 = vpack.c.b16 %v4506, %v4502
    %v4543 = vpack.c.b16 %v4507, %v4503
    %v4544 = vpack.c.b16 %v4512, %v4508
    %v4545 = vpack.c.b16 %v4513, %v4509
    %v4546 = vpack.c.b16 %v4514, %v4510
    %v4547 = vpack.c.b16 %v4515, %v4511
    %4580 = vmatpush.bf16.msra.mxu0 %v4544
    %4581 = vmatpush.bf16.msra.mxu0 %v4540
    %4582 = vmatpush.bf16.msra.mxu0 %v4536
    %4583 = vmatpush.bf16.msra.mxu0 %v4532
    %4584 = vmatpush.bf16.msra.mxu0 %v4528
    %4585 = vmatpush.bf16.msra.mxu0 %v4524
    %4586 = vmatpush.bf16.msra.mxu0 %v4520
    %4587 = vmatpush.bf16.msra.mxu0 %v4516
    %4588 = vmatmul.bf16.gmra.mxu0 %v4387
    %v4589 = vpop.f32.mrf.mxu0
    %v4590 = vadd.f32 0.0, %v4589
    %v4591 = vpop.f32.mrf.mxu0
    %4592 = vdwg.mxu0
    %4593 = vmatpush.bf16.msra.mxu0 %v4545
    %4594 = vmatpush.bf16.msra.mxu0 %v4541
    %4595 = vmatpush.bf16.msra.mxu0 %v4537
    %4596 = vmatpush.bf16.msra.mxu0 %v4533
    %4597 = vmatpush.bf16.msra.mxu0 %v4529
    %4598 = vmatpush.bf16.msra.mxu0 %v4525
    %4599 = vmatpush.bf16.msra.mxu0 %v4521
    %4600 = vmatpush.bf16.msra.mxu0 %v4517
    %4601 = vmatmul.bf16.gmra.mxu0 %v4387
    %v4602 = vpop.f32.mrf.mxu0
    %v4603 = vadd.f32 0.0, %v4602
    %v4604 = vpop.f32.mrf.mxu0
    %4605 = vdwg.mxu0
    %4606 = vmatpush.bf16.msra.mxu0 %v4546
    %4607 = vmatpush.bf16.msra.mxu0 %v4542
    %4608 = vmatpush.bf16.msra.mxu0 %v4538
    %4609 = vmatpush.bf16.msra.mxu0 %v4534
    %4610 = vmatpush.bf16.msra.mxu0 %v4530
    %4611 = vmatpush.bf16.msra.mxu0 %v4526
    %4612 = vmatpush.bf16.msra.mxu0 %v4522
    %4613 = vmatpush.bf16.msra.mxu0 %v4518
    %4614 = vmatmul.bf16.gmra.mxu0 %v4387
    %v4615 = vpop.f32.mrf.mxu0
    %v4616 = vadd.f32 0.0, %v4615
    %v4617 = vpop.f32.mrf.mxu0
    %4618 = vdwg.mxu0
    %4619 = vmatpush.bf16.msra.mxu0 %v4547
    %4620 = vmatpush.bf16.msra.mxu0 %v4543
    %4621 = vmatpush.bf16.msra.mxu0 %v4539
    %4622 = vmatpush.bf16.msra.mxu0 %v4535
    %4623 = vmatpush.bf16.msra.mxu0 %v4531
    %4624 = vmatpush.bf16.msra.mxu0 %v4527
    %4625 = vmatpush.bf16.msra.mxu0 %v4523
    %4626 = vmatpush.bf16.msra.mxu0 %v4519
    %4627 = vmatmul.bf16.gmra.mxu0 %v4387
    %v4628 = vpop.f32.mrf.mxu0
    %v4629 = vadd.f32 0.0, %v4628
    %v4630 = vpop.f32.mrf.mxu0
    %4631 = vdwg.mxu0
    %v4664 = vunpack.c.l.b16 %v4355
    %v4665 = vunpack.c.h.b16 %v4355
    %v4666 = vunpack.c.l.b16 %v4356
    %v4667 = vunpack.c.h.b16 %v4356
    %v4668 = vunpack.c.l.b16 %v4357
    %v4669 = vunpack.c.h.b16 %v4357
    %v4670 = vunpack.c.l.b16 %v4358
    %v4671 = vunpack.c.h.b16 %v4358
    %v4672 = vunpack.c.l.b16 %v4359
    %v4673 = vunpack.c.h.b16 %v4359
    %v4674 = vunpack.c.l.b16 %v4360
    %v4675 = vunpack.c.h.b16 %v4360
    %v4676 = vunpack.c.l.b16 %v4361
    %v4677 = vunpack.c.h.b16 %v4361
    %v4678 = vunpack.c.l.b16 %v4362
    %v4679 = vunpack.c.h.b16 %v4362
    %v4680 = vunpack.c.l.b16 %v4363
    %v4681 = vunpack.c.h.b16 %v4363
    %v4682 = vunpack.c.l.b16 %v4364
    %v4683 = vunpack.c.h.b16 %v4364
    %v4684 = vunpack.c.l.b16 %v4365
    %v4685 = vunpack.c.h.b16 %v4365
    %v4686 = vunpack.c.l.b16 %v4366
    %v4687 = vunpack.c.h.b16 %v4366
    %v4688 = vunpack.c.l.b16 %v4367
    %v4689 = vunpack.c.h.b16 %v4367
    %v4690 = vunpack.c.l.b16 %v4368
    %v4691 = vunpack.c.h.b16 %v4368
    %v4692 = vunpack.c.l.b16 %v4369
    %v4693 = vunpack.c.h.b16 %v4369
    %v4694 = vunpack.c.l.b16 %v4370
    %v4695 = vunpack.c.h.b16 %v4370
    %v4696 = vunpack.c.l.b16 %v4371
    %v4697 = vunpack.c.h.b16 %v4371
    %v4698 = vunpack.c.l.b16 %v4372
    %v4699 = vunpack.c.h.b16 %v4372
    %v4700 = vunpack.c.l.b16 %v4373
    %v4701 = vunpack.c.h.b16 %v4373
    %v4702 = vunpack.c.l.b16 %v4374
    %v4703 = vunpack.c.h.b16 %v4374
    %v4704 = vunpack.c.l.b16 %v4375
    %v4705 = vunpack.c.h.b16 %v4375
    %v4706 = vunpack.c.l.b16 %v4376
    %v4707 = vunpack.c.h.b16 %v4376
    %v4708 = vunpack.c.l.b16 %v4377
    %v4709 = vunpack.c.h.b16 %v4377
    %v4710 = vunpack.c.l.b16 %v4378
    %v4711 = vunpack.c.h.b16 %v4378
    %v4712 = vunpack.c.l.b16 %v4379
    %v4713 = vunpack.c.h.b16 %v4379
    %v4714 = vunpack.c.l.b16 %v4380
    %v4715 = vunpack.c.h.b16 %v4380
    %v4716 = vunpack.c.l.b16 %v4381
    %v4717 = vunpack.c.h.b16 %v4381
    %v4718 = vunpack.c.l.b16 %v4382
    %v4719 = vunpack.c.h.b16 %v4382
    %v4720 = vunpack.c.l.b16 %v4383
    %v4721 = vunpack.c.h.b16 %v4383
    %v4722 = vunpack.c.l.b16 %v4384
    %v4723 = vunpack.c.h.b16 %v4384
    %v4724 = vunpack.c.l.b16 %v4385
    %v4725 = vunpack.c.h.b16 %v4385
    %v4726 = vunpack.c.l.b16 %v4386
    %v4727 = vunpack.c.h.b16 %v4386
    %v4728 = vpack.c.b16 %v4668, %v4664
    %v4729 = vpack.c.b16 %v4669, %v4665
    %v4730 = vpack.c.b16 %v4670, %v4666
    %v4731 = vpack.c.b16 %v4671, %v4667
    %v4732 = vpack.c.b16 %v4676, %v4672
    %v4733 = vpack.c.b16 %v4677, %v4673
    %v4734 = vpack.c.b16 %v4678, %v4674
    %v4735 = vpack.c.b16 %v4679, %v4675
    %v4736 = vpack.c.b16 %v4684, %v4680
    %v4737 = vpack.c.b16 %v4685, %v4681
    %v4738 = vpack.c.b16 %v4686, %v4682
    %v4739 = vpack.c.b16 %v4687, %v4683
    %v4740 = vpack.c.b16 %v4692, %v4688
    %v4741 = vpack.c.b16 %v4693, %v4689
    %v4742 = vpack.c.b16 %v4694, %v4690
    %v4743 = vpack.c.b16 %v4695, %v4691
    %v4744 = vpack.c.b16 %v4700, %v4696
    %v4745 = vpack.c.b16 %v4701, %v4697
    %v4746 = vpack.c.b16 %v4702, %v4698
    %v4747 = vpack.c.b16 %v4703, %v4699
    %v4748 = vpack.c.b16 %v4708, %v4704
    %v4749 = vpack.c.b16 %v4709, %v4705
    %v4750 = vpack.c.b16 %v4710, %v4706
    %v4751 = vpack.c.b16 %v4711, %v4707
    %v4752 = vpack.c.b16 %v4716, %v4712
    %v4753 = vpack.c.b16 %v4717, %v4713
    %v4754 = vpack.c.b16 %v4718, %v4714
    %v4755 = vpack.c.b16 %v4719, %v4715
    %v4756 = vpack.c.b16 %v4724, %v4720
    %v4757 = vpack.c.b16 %v4725, %v4721
    %v4758 = vpack.c.b16 %v4726, %v4722
    %v4759 = vpack.c.b16 %v4727, %v4723
    %4792 = vmatpush.bf16.msra.mxu0 %v4756
    %4793 = vmatpush.bf16.msra.mxu0 %v4752
    %4794 = vmatpush.bf16.msra.mxu0 %v4748
    %4795 = vmatpush.bf16.msra.mxu0 %v4744
    %4796 = vmatpush.bf16.msra.mxu0 %v4740
    %4797 = vmatpush.bf16.msra.mxu0 %v4736
    %4798 = vmatpush.bf16.msra.mxu0 %v4732
    %4799 = vmatpush.bf16.msra.mxu0 %v4728
    %4800 = vmatmul.bf16.gmra.mxu0 %v4354
    %v4801 = vpop.f32.mrf.mxu0
    %v4802 = vadd.f32 %v4590, %v4801
    %v4803 = vpop.f32.mrf.mxu0
    %4804 = vdwg.mxu0
    %4805 = vmatpush.bf16.msra.mxu0 %v4757
    %4806 = vmatpush.bf16.msra.mxu0 %v4753
    %4807 = vmatpush.bf16.msra.mxu0 %v4749
    %4808 = vmatpush.bf16.msra.mxu0 %v4745
    %4809 = vmatpush.bf16.msra.mxu0 %v4741
    %4810 = vmatpush.bf16.msra.mxu0 %v4737
    %4811 = vmatpush.bf16.msra.mxu0 %v4733
    %4812 = vmatpush.bf16.msra.mxu0 %v4729
    %4813 = vmatmul.bf16.gmra.mxu0 %v4354
    %v4814 = vpop.f32.mrf.mxu0
    %v4815 = vadd.f32 %v4603, %v4814
    %v4816 = vpop.f32.mrf.mxu0
    %4817 = vdwg.mxu0
    %4818 = vmatpush.bf16.msra.mxu0 %v4758
    %4819 = vmatpush.bf16.msra.mxu0 %v4754
    %4820 = vmatpush.bf16.msra.mxu0 %v4750
    %4821 = vmatpush.bf16.msra.mxu0 %v4746
    %4822 = vmatpush.bf16.msra.mxu0 %v4742
    %4823 = vmatpush.bf16.msra.mxu0 %v4738
    %4824 = vmatpush.bf16.msra.mxu0 %v4734
    %4825 = vmatpush.bf16.msra.mxu0 %v4730
    %4826 = vmatmul.bf16.gmra.mxu0 %v4354
    %v4827 = vpop.f32.mrf.mxu0
    %v4828 = vadd.f32 %v4616, %v4827
    %v4829 = vpop.f32.mrf.mxu0
    %4830 = vdwg.mxu0
    %4831 = vmatpush.bf16.msra.mxu0 %v4759
    %4832 = vmatpush.bf16.msra.mxu0 %v4755
    %4833 = vmatpush.bf16.msra.mxu0 %v4751
    %4834 = vmatpush.bf16.msra.mxu0 %v4747
    %4835 = vmatpush.bf16.msra.mxu0 %v4743
    %4836 = vmatpush.bf16.msra.mxu0 %v4739
    %4837 = vmatpush.bf16.msra.mxu0 %v4735
    %4838 = vmatpush.bf16.msra.mxu0 %v4731
    %4839 = vmatmul.bf16.gmra.mxu0 %v4354
    %v4840 = vpop.f32.mrf.mxu0
    %v4841 = vadd.f32 %v4629, %v4840
    %v4842 = vpop.f32.mrf.mxu0
    %4843 = vdwg.mxu0
    %v4844 = vadd.f32 %v4802, %v145
    %v4845 = vadd.f32 %v4815, %v146
    %v4846 = vadd.f32 %v4828, %v147
    %v4847 = vadd.f32 %v4841, %v148
    %v4848 = vxor.u32 %v4844, 2147483648
    %v4849 = vmul.f32 %v4848, 1.442695
    %v4850 = vpow.pop %v4849
    %v4851 = vadd.f32 %v4850, 1.0
    %v4852 = vrcp.pop %v4851
    %v4853 = vmul.f32 %v4851, %v4852
    %v4854 = vsub.f32 1.0, %v4853
    %v4855 = vmul.f32 %v4852, %v4854
    %v4856 = vadd.f32 %v4852, %v4855
    %vm4857 = vweird.f32 %v4851
    %vm4858 = vweird.f32 %v4852
    %vm4859 = vmor %vm4857, %vm4858
    %v4860 = vsel %vm4859, %v4852, %v4856
    %v4861 = vand.u32 2147483647, %v4851
    %vm4862 = vcmp.eq.f32.partialorder %v4861, 8.507059e+37
    %v4863 = vand.u32 %v4851, 2147483648
    %v4864 = vor.u32 1.1754944e-38, %v4863
    %v4865 = vsel %vm4862, %v4864, %v4860
    %v4866 = vmul.f32 1.0, %v4865
    %v4867 = vxor.u32 %v4845, 2147483648
    %v4868 = vmul.f32 %v4867, 1.442695
    %v4869 = vpow.pop %v4868
    %v4870 = vadd.f32 %v4869, 1.0
    %v4871 = vrcp.pop %v4870
    %v4872 = vmul.f32 %v4870, %v4871
    %v4873 = vsub.f32 1.0, %v4872
    %v4874 = vmul.f32 %v4871, %v4873
    %v4875 = vadd.f32 %v4871, %v4874
    %vm4876 = vweird.f32 %v4870
    %vm4877 = vweird.f32 %v4871
    %vm4878 = vmor %vm4876, %vm4877
    %v4879 = vsel %vm4878, %v4871, %v4875
    %v4880 = vand.u32 2147483647, %v4870
    %vm4881 = vcmp.eq.f32.partialorder %v4880, 8.507059e+37
    %v4882 = vand.u32 %v4870, 2147483648
    %v4883 = vor.u32 1.1754944e-38, %v4882
    %v4884 = vsel %vm4881, %v4883, %v4879
    %v4885 = vmul.f32 1.0, %v4884
    %v4886 = vtanh.pop %v4846
    %v4887 = vxor.u32 %v4847, 2147483648
    %v4888 = vmul.f32 %v4887, 1.442695
    %v4889 = vpow.pop %v4888
    %v4890 = vadd.f32 %v4889, 1.0
    %v4891 = vrcp.pop %v4890
    %v4892 = vmul.f32 %v4890, %v4891
    %v4893 = vsub.f32 1.0, %v4892
    %v4894 = vmul.f32 %v4891, %v4893
    %v4895 = vadd.f32 %v4891, %v4894
    %vm4896 = vweird.f32 %v4890
    %vm4897 = vweird.f32 %v4891
    %vm4898 = vmor %vm4896, %vm4897
    %v4899 = vsel %vm4898, %v4891, %v4895
    %v4900 = vand.u32 2147483647, %v4890
    %vm4901 = vcmp.eq.f32.partialorder %v4900, 8.507059e+37
    %v4902 = vand.u32 %v4890, 2147483648
    %v4903 = vor.u32 1.1754944e-38, %v4902
    %v4904 = vsel %vm4901, %v4903, %v4899
    %v4905 = vmul.f32 1.0, %v4904
    %v4906 = vmul.f32 %v4885, %v3957
    %v4907 = vmul.f32 %v4866, %v4886
    %v4908 = vadd.f32 %v4906, %v4907
    %v4909 = vtanh.pop %v4908
    %v4910 = vmul.f32 %v4905, %v4909
    %s4911 = scalar_lea.vmem [#allocation11], 32
    %4912 = vst [vmem:[%s4911] sm:$0xff] %v4910
    %s4913 = scalar_lea.vmem [#allocation13], 20
    %v4914 = vld [vmem:[%s4913] sm:$0xf]
    %v4915 = vld [vmem:[#allocation2] sm:$0xff]
    %v4916 = vld [vmem:[#allocation2 + $0x8] sm:$0xff]
    %v4917 = vld [vmem:[#allocation3] sm:$0xff]
    %v4918 = vld [vmem:[#allocation3 + $0x8] sm:$0xff]
    %v4919 = vld [vmem:[#allocation3 + $0x10] sm:$0xff]
    %v4920 = vld [vmem:[#allocation3 + $0x18] sm:$0xff]
    %v4921 = vld [vmem:[#allocation3 + $0x20] sm:$0xff]
    %v4922 = vld [vmem:[#allocation3 + $0x28] sm:$0xff]
    %v4923 = vld [vmem:[#allocation3 + $0x30] sm:$0xff]
    %v4924 = vld [vmem:[#allocation3 + $0x38] sm:$0xff]
    %v4925 = vld [vmem:[#allocation3 + $0x40] sm:$0xff]
    %v4926 = vld [vmem:[#allocation3 + $0x48] sm:$0xff]
    %v4927 = vld [vmem:[#allocation3 + $0x50] sm:$0xff]
    %v4928 = vld [vmem:[#allocation3 + $0x58] sm:$0xff]
    %v4929 = vld [vmem:[#allocation3 + $0x60] sm:$0xff]
    %v4930 = vld [vmem:[#allocation3 + $0x68] sm:$0xff]
    %v4931 = vld [vmem:[#allocation3 + $0x70] sm:$0xff]
    %v4932 = vld [vmem:[#allocation3 + $0x78] sm:$0xff]
    %v4933 = vld [vmem:[#allocation3 + $0x80] sm:$0xff]
    %v4934 = vld [vmem:[#allocation3 + $0x88] sm:$0xff]
    %v4935 = vld [vmem:[#allocation3 + $0x90] sm:$0xff]
    %v4936 = vld [vmem:[#allocation3 + $0x98] sm:$0xff]
    %v4937 = vld [vmem:[#allocation3 + $0xa0] sm:$0xff]
    %v4938 = vld [vmem:[#allocation3 + $0xa8] sm:$0xff]
    %v4939 = vld [vmem:[#allocation3 + $0xb0] sm:$0xff]
    %v4940 = vld [vmem:[#allocation3 + $0xb8] sm:$0xff]
    %v4941 = vld [vmem:[#allocation3 + $0xc0] sm:$0xff]
    %v4942 = vld [vmem:[#allocation3 + $0xc8] sm:$0xff]
    %v4943 = vld [vmem:[#allocation3 + $0xd0] sm:$0xff]
    %v4944 = vld [vmem:[#allocation3 + $0xd8] sm:$0xff]
    %v4945 = vld [vmem:[#allocation3 + $0xe0] sm:$0xff]
    %v4946 = vld [vmem:[#allocation3 + $0xe8] sm:$0xff]
    %v4947 = vld [vmem:[#allocation3 + $0xf0] sm:$0xff]
    %v4948 = vld [vmem:[#allocation3 + $0xf8] sm:$0xff]
    %v4981 = vunpack.c.l.b16 %v4917
    %v4982 = vunpack.c.h.b16 %v4917
    %v4983 = vunpack.c.l.b16 %v4918
    %v4984 = vunpack.c.h.b16 %v4918
    %v4985 = vunpack.c.l.b16 %v4919
    %v4986 = vunpack.c.h.b16 %v4919
    %v4987 = vunpack.c.l.b16 %v4920
    %v4988 = vunpack.c.h.b16 %v4920
    %v4989 = vunpack.c.l.b16 %v4921
    %v4990 = vunpack.c.h.b16 %v4921
    %v4991 = vunpack.c.l.b16 %v4922
    %v4992 = vunpack.c.h.b16 %v4922
    %v4993 = vunpack.c.l.b16 %v4923
    %v4994 = vunpack.c.h.b16 %v4923
    %v4995 = vunpack.c.l.b16 %v4924
    %v4996 = vunpack.c.h.b16 %v4924
    %v4997 = vunpack.c.l.b16 %v4925
    %v4998 = vunpack.c.h.b16 %v4925
    %v4999 = vunpack.c.l.b16 %v4926
    %v5000 = vunpack.c.h.b16 %v4926
    %v5001 = vunpack.c.l.b16 %v4927
    %v5002 = vunpack.c.h.b16 %v4927
    %v5003 = vunpack.c.l.b16 %v4928
    %v5004 = vunpack.c.h.b16 %v4928
    %v5005 = vunpack.c.l.b16 %v4929
    %v5006 = vunpack.c.h.b16 %v4929
    %v5007 = vunpack.c.l.b16 %v4930
    %v5008 = vunpack.c.h.b16 %v4930
    %v5009 = vunpack.c.l.b16 %v4931
    %v5010 = vunpack.c.h.b16 %v4931
    %v5011 = vunpack.c.l.b16 %v4932
    %v5012 = vunpack.c.h.b16 %v4932
    %v5013 = vunpack.c.l.b16 %v4933
    %v5014 = vunpack.c.h.b16 %v4933
    %v5015 = vunpack.c.l.b16 %v4934
    %v5016 = vunpack.c.h.b16 %v4934
    %v5017 = vunpack.c.l.b16 %v4935
    %v5018 = vunpack.c.h.b16 %v4935
    %v5019 = vunpack.c.l.b16 %v4936
    %v5020 = vunpack.c.h.b16 %v4936
    %v5021 = vunpack.c.l.b16 %v4937
    %v5022 = vunpack.c.h.b16 %v4937
    %v5023 = vunpack.c.l.b16 %v4938
    %v5024 = vunpack.c.h.b16 %v4938
    %v5025 = vunpack.c.l.b16 %v4939
    %v5026 = vunpack.c.h.b16 %v4939
    %v5027 = vunpack.c.l.b16 %v4940
    %v5028 = vunpack.c.h.b16 %v4940
    %v5029 = vunpack.c.l.b16 %v4941
    %v5030 = vunpack.c.h.b16 %v4941
    %v5031 = vunpack.c.l.b16 %v4942
    %v5032 = vunpack.c.h.b16 %v4942
    %v5033 = vunpack.c.l.b16 %v4943
    %v5034 = vunpack.c.h.b16 %v4943
    %v5035 = vunpack.c.l.b16 %v4944
    %v5036 = vunpack.c.h.b16 %v4944
    %v5037 = vunpack.c.l.b16 %v4945
    %v5038 = vunpack.c.h.b16 %v4945
    %v5039 = vunpack.c.l.b16 %v4946
    %v5040 = vunpack.c.h.b16 %v4946
    %v5041 = vunpack.c.l.b16 %v4947
    %v5042 = vunpack.c.h.b16 %v4947
    %v5043 = vunpack.c.l.b16 %v4948
    %v5044 = vunpack.c.h.b16 %v4948
    %v5045 = vpack.c.b16 %v4985, %v4981
    %v5046 = vpack.c.b16 %v4986, %v4982
    %v5047 = vpack.c.b16 %v4987, %v4983
    %v5048 = vpack.c.b16 %v4988, %v4984
    %v5049 = vpack.c.b16 %v4993, %v4989
    %v5050 = vpack.c.b16 %v4994, %v4990
    %v5051 = vpack.c.b16 %v4995, %v4991
    %v5052 = vpack.c.b16 %v4996, %v4992
    %v5053 = vpack.c.b16 %v5001, %v4997
    %v5054 = vpack.c.b16 %v5002, %v4998
    %v5055 = vpack.c.b16 %v5003, %v4999
    %v5056 = vpack.c.b16 %v5004, %v5000
    %v5057 = vpack.c.b16 %v5009, %v5005
    %v5058 = vpack.c.b16 %v5010, %v5006
    %v5059 = vpack.c.b16 %v5011, %v5007
    %v5060 = vpack.c.b16 %v5012, %v5008
    %v5061 = vpack.c.b16 %v5017, %v5013
    %v5062 = vpack.c.b16 %v5018, %v5014
    %v5063 = vpack.c.b16 %v5019, %v5015
    %v5064 = vpack.c.b16 %v5020, %v5016
    %v5065 = vpack.c.b16 %v5025, %v5021
    %v5066 = vpack.c.b16 %v5026, %v5022
    %v5067 = vpack.c.b16 %v5027, %v5023
    %v5068 = vpack.c.b16 %v5028, %v5024
    %v5069 = vpack.c.b16 %v5033, %v5029
    %v5070 = vpack.c.b16 %v5034, %v5030
    %v5071 = vpack.c.b16 %v5035, %v5031
    %v5072 = vpack.c.b16 %v5036, %v5032
    %v5073 = vpack.c.b16 %v5041, %v5037
    %v5074 = vpack.c.b16 %v5042, %v5038
    %v5075 = vpack.c.b16 %v5043, %v5039
    %v5076 = vpack.c.b16 %v5044, %v5040
    %5109 = vmatpush.bf16.msra.mxu0 %v5073
    %5110 = vmatpush.bf16.msra.mxu0 %v5069
    %5111 = vmatpush.bf16.msra.mxu0 %v5065
    %5112 = vmatpush.bf16.msra.mxu0 %v5061
    %5113 = vmatpush.bf16.msra.mxu0 %v5057
    %5114 = vmatpush.bf16.msra.mxu0 %v5053
    %5115 = vmatpush.bf16.msra.mxu0 %v5049
    %5116 = vmatpush.bf16.msra.mxu0 %v5045
    %5117 = vmatmul.bf16.gmra.mxu0 %v4354
    %v5118 = vpop.f32.mrf.mxu0
    %v5119 = vadd.f32 0.0, %v5118
    %v5120 = vpop.f32.mrf.mxu0
    %5121 = vdwg.mxu0
    %5122 = vmatpush.bf16.msra.mxu0 %v5074
    %5123 = vmatpush.bf16.msra.mxu0 %v5070
    %5124 = vmatpush.bf16.msra.mxu0 %v5066
    %5125 = vmatpush.bf16.msra.mxu0 %v5062
    %5126 = vmatpush.bf16.msra.mxu0 %v5058
    %5127 = vmatpush.bf16.msra.mxu0 %v5054
    %5128 = vmatpush.bf16.msra.mxu0 %v5050
    %5129 = vmatpush.bf16.msra.mxu0 %v5046
    %5130 = vmatmul.bf16.gmra.mxu0 %v4354
    %v5131 = vpop.f32.mrf.mxu0
    %v5132 = vadd.f32 0.0, %v5131
    %v5133 = vpop.f32.mrf.mxu0
    %5134 = vdwg.mxu0
    %5135 = vmatpush.bf16.msra.mxu0 %v5075
    %5136 = vmatpush.bf16.msra.mxu0 %v5071
    %5137 = vmatpush.bf16.msra.mxu0 %v5067
    %5138 = vmatpush.bf16.msra.mxu0 %v5063
    %5139 = vmatpush.bf16.msra.mxu0 %v5059
    %5140 = vmatpush.bf16.msra.mxu0 %v5055
    %5141 = vmatpush.bf16.msra.mxu0 %v5051
    %5142 = vmatpush.bf16.msra.mxu0 %v5047
    %5143 = vmatmul.bf16.gmra.mxu0 %v4354
    %v5144 = vpop.f32.mrf.mxu0
    %v5145 = vadd.f32 0.0, %v5144
    %v5146 = vpop.f32.mrf.mxu0
    %5147 = vdwg.mxu0
    %5148 = vmatpush.bf16.msra.mxu0 %v5076
    %5149 = vmatpush.bf16.msra.mxu0 %v5072
    %5150 = vmatpush.bf16.msra.mxu0 %v5068
    %5151 = vmatpush.bf16.msra.mxu0 %v5064
    %5152 = vmatpush.bf16.msra.mxu0 %v5060
    %5153 = vmatpush.bf16.msra.mxu0 %v5056
    %5154 = vmatpush.bf16.msra.mxu0 %v5052
    %5155 = vmatpush.bf16.msra.mxu0 %v5048
    %5156 = vmatmul.bf16.gmra.mxu0 %v4354
    %v5157 = vpop.f32.mrf.mxu0
    %v5158 = vadd.f32 0.0, %v5157
    %v5159 = vpop.f32.mrf.mxu0
    %5160 = vdwg.mxu0
    %v5163 = vunpack.c.l.b16 %v4915
    %v5164 = vunpack.c.h.b16 %v4915
    %v5165 = vunpack.c.l.b16 %v4916
    %v5166 = vunpack.c.h.b16 %v4916
    %v5167 = vpack.c.b16 %v5163, %v5163
    %v5168 = vpack.c.b16 %v5164, %v5164
    %v5169 = vpack.c.b16 %v5165, %v5165
    %v5170 = vpack.c.b16 %v5166, %v5166
    %v5172 = vsel %vm415, %v4914, 0
    %v5175 = vsel %vm419, %v5167, 0
    %v5178 = vsel %vm419, %v5168, 0
    %v5181 = vsel %vm419, %v5169, 0
    %v5184 = vsel %vm419, %v5170, 0
    %5186 = vmatpush.bf16.msra.mxu0 0
    %5187 = vmatpush.bf16.msra.mxu0 0
    %5188 = vmatpush.bf16.msra.mxu0 0
    %5189 = vmatpush.bf16.msra.mxu0 0
    %5190 = vmatpush.bf16.msra.mxu0 0
    %5191 = vmatpush.bf16.msra.mxu0 0
    %5192 = vmatpush.bf16.msra.mxu0 0
    %5193 = vmatpush.bf16.msra.mxu0 %v5175
    %5194 = vmatmul.bf16.gmra.mxu0 %v5172
    %v5195 = vpop.f32.mrf.mxu0
    %v5196 = vadd.f32 %v5119, %v5195
    %v5197 = vpop.f32.mrf.mxu0
    %5198 = vdwg.mxu0
    %5199 = vmatpush.bf16.msra.mxu0 0
    %5200 = vmatpush.bf16.msra.mxu0 0
    %5201 = vmatpush.bf16.msra.mxu0 0
    %5202 = vmatpush.bf16.msra.mxu0 0
    %5203 = vmatpush.bf16.msra.mxu0 0
    %5204 = vmatpush.bf16.msra.mxu0 0
    %5205 = vmatpush.bf16.msra.mxu0 0
    %5206 = vmatpush.bf16.msra.mxu0 %v5178
    %5207 = vmatmul.bf16.gmra.mxu0 %v5172
    %v5208 = vpop.f32.mrf.mxu0
    %v5209 = vadd.f32 %v5132, %v5208
    %v5210 = vpop.f32.mrf.mxu0
    %5211 = vdwg.mxu0
    %5212 = vmatpush.bf16.msra.mxu0 0
    %5213 = vmatpush.bf16.msra.mxu0 0
    %5214 = vmatpush.bf16.msra.mxu0 0
    %5215 = vmatpush.bf16.msra.mxu0 0
    %5216 = vmatpush.bf16.msra.mxu0 0
    %5217 = vmatpush.bf16.msra.mxu0 0
    %5218 = vmatpush.bf16.msra.mxu0 0
    %5219 = vmatpush.bf16.msra.mxu0 %v5181
    %5220 = vmatmul.bf16.gmra.mxu0 %v5172
    %v5221 = vpop.f32.mrf.mxu0
    %v5222 = vadd.f32 %v5145, %v5221
    %v5223 = vpop.f32.mrf.mxu0
    %5224 = vdwg.mxu0
    %5225 = vmatpush.bf16.msra.mxu0 0
    %5226 = vmatpush.bf16.msra.mxu0 0
    %5227 = vmatpush.bf16.msra.mxu0 0
    %5228 = vmatpush.bf16.msra.mxu0 0
    %5229 = vmatpush.bf16.msra.mxu0 0
    %5230 = vmatpush.bf16.msra.mxu0 0
    %5231 = vmatpush.bf16.msra.mxu0 0
    %5232 = vmatpush.bf16.msra.mxu0 %v5184
    %5233 = vmatmul.bf16.gmra.mxu0 %v5172
    %v5234 = vpop.f32.mrf.mxu0
    %v5235 = vadd.f32 %v5158, %v5234
    %v5236 = vpop.f32.mrf.mxu0
    %5237 = vdwg.mxu0
    %v5238 = vadd.f32 %v5196, %v135
    %v5239 = vadd.f32 %v5209, %v136
    %v5240 = vadd.f32 %v5222, %v137
    %v5241 = vadd.f32 %v5235, %v138
    %v5242 = vxor.u32 %v5238, 2147483648
    %v5243 = vmul.f32 %v5242, 1.442695
    %v5244 = vpow.pop %v5243
    %v5245 = vadd.f32 %v5244, 1.0
    %v5246 = vrcp.pop %v5245
    %v5247 = vmul.f32 %v5245, %v5246
    %v5248 = vsub.f32 1.0, %v5247
    %v5249 = vmul.f32 %v5246, %v5248
    %v5250 = vadd.f32 %v5246, %v5249
    %vm5251 = vweird.f32 %v5245
    %vm5252 = vweird.f32 %v5246
    %vm5253 = vmor %vm5251, %vm5252
    %v5254 = vsel %vm5253, %v5246, %v5250
    %v5255 = vand.u32 2147483647, %v5245
    %vm5256 = vcmp.eq.f32.partialorder %v5255, 8.507059e+37
    %v5257 = vand.u32 %v5245, 2147483648
    %v5258 = vor.u32 1.1754944e-38, %v5257
    %v5259 = vsel %vm5256, %v5258, %v5254
    %v5260 = vmul.f32 1.0, %v5259
    %v5261 = vxor.u32 %v5239, 2147483648
    %v5262 = vmul.f32 %v5261, 1.442695
    %v5263 = vpow.pop %v5262
    %v5264 = vadd.f32 %v5263, 1.0
    %v5265 = vrcp.pop %v5264
    %v5266 = vmul.f32 %v5264, %v5265
    %v5267 = vsub.f32 1.0, %v5266
    %v5268 = vmul.f32 %v5265, %v5267
    %v5269 = vadd.f32 %v5265, %v5268
    %vm5270 = vweird.f32 %v5264
    %vm5271 = vweird.f32 %v5265
    %vm5272 = vmor %vm5270, %vm5271
    %v5273 = vsel %vm5272, %v5265, %v5269
    %v5274 = vand.u32 2147483647, %v5264
    %vm5275 = vcmp.eq.f32.partialorder %v5274, 8.507059e+37
    %v5276 = vand.u32 %v5264, 2147483648
    %v5277 = vor.u32 1.1754944e-38, %v5276
    %v5278 = vsel %vm5275, %v5277, %v5273
    %v5279 = vmul.f32 1.0, %v5278
    %v5280 = vtanh.pop %v5240
    %v5281 = vxor.u32 %v5241, 2147483648
    %v5282 = vmul.f32 %v5281, 1.442695
    %v5283 = vpow.pop %v5282
    %v5284 = vadd.f32 %v5283, 1.0
    %v5285 = vrcp.pop %v5284
    %v5286 = vmul.f32 %v5284, %v5285
    %v5287 = vsub.f32 1.0, %v5286
    %v5288 = vmul.f32 %v5285, %v5287
    %v5289 = vadd.f32 %v5285, %v5288
    %vm5290 = vweird.f32 %v5284
    %vm5291 = vweird.f32 %v5285
    %vm5292 = vmor %vm5290, %vm5291
    %v5293 = vsel %vm5292, %v5285, %v5289
    %v5294 = vand.u32 2147483647, %v5284
    %vm5295 = vcmp.eq.f32.partialorder %v5294, 8.507059e+37
    %v5296 = vand.u32 %v5284, 2147483648
    %v5297 = vor.u32 1.1754944e-38, %v5296
    %v5298 = vsel %vm5295, %v5297, %v5293
    %v5299 = vmul.f32 1.0, %v5298
    %v5300 = vmul.f32 %v5279, %v4351
    %v5301 = vmul.f32 %v5260, %v5280
    %v5302 = vadd.f32 %v5300, %v5301
    %v5303 = vtanh.pop %v5302
    %v5304 = vmul.f32 %v5299, %v5303
    %v5305 = vpack.c.bf16 %v5304, %v5304
    %v5306 = vld [vmem:[#allocation4] sm:$0xff]
    %v5307 = vld [vmem:[#allocation4 + $0x8] sm:$0xff]
    %v5308 = vld [vmem:[#allocation4 + $0x10] sm:$0xff]
    %v5309 = vld [vmem:[#allocation4 + $0x18] sm:$0xff]
    %v5310 = vld [vmem:[#allocation4 + $0x20] sm:$0xff]
    %v5311 = vld [vmem:[#allocation4 + $0x28] sm:$0xff]
    %v5312 = vld [vmem:[#allocation4 + $0x30] sm:$0xff]
    %v5313 = vld [vmem:[#allocation4 + $0x38] sm:$0xff]
    %v5314 = vld [vmem:[#allocation4 + $0x40] sm:$0xff]
    %v5315 = vld [vmem:[#allocation4 + $0x48] sm:$0xff]
    %v5316 = vld [vmem:[#allocation4 + $0x50] sm:$0xff]
    %v5317 = vld [vmem:[#allocation4 + $0x58] sm:$0xff]
    %v5318 = vld [vmem:[#allocation4 + $0x60] sm:$0xff]
    %v5319 = vld [vmem:[#allocation4 + $0x68] sm:$0xff]
    %v5320 = vld [vmem:[#allocation4 + $0x70] sm:$0xff]
    %v5321 = vld [vmem:[#allocation4 + $0x78] sm:$0xff]
    %v5322 = vld [vmem:[#allocation4 + $0x80] sm:$0xff]
    %v5323 = vld [vmem:[#allocation4 + $0x88] sm:$0xff]
    %v5324 = vld [vmem:[#allocation4 + $0x90] sm:$0xff]
    %v5325 = vld [vmem:[#allocation4 + $0x98] sm:$0xff]
    %v5326 = vld [vmem:[#allocation4 + $0xa0] sm:$0xff]
    %v5327 = vld [vmem:[#allocation4 + $0xa8] sm:$0xff]
    %v5328 = vld [vmem:[#allocation4 + $0xb0] sm:$0xff]
    %v5329 = vld [vmem:[#allocation4 + $0xb8] sm:$0xff]
    %v5330 = vld [vmem:[#allocation4 + $0xc0] sm:$0xff]
    %v5331 = vld [vmem:[#allocation4 + $0xc8] sm:$0xff]
    %v5332 = vld [vmem:[#allocation4 + $0xd0] sm:$0xff]
    %v5333 = vld [vmem:[#allocation4 + $0xd8] sm:$0xff]
    %v5334 = vld [vmem:[#allocation4 + $0xe0] sm:$0xff]
    %v5335 = vld [vmem:[#allocation4 + $0xe8] sm:$0xff]
    %v5336 = vld [vmem:[#allocation4 + $0xf0] sm:$0xff]
    %v5337 = vld [vmem:[#allocation4 + $0xf8] sm:$0xff]
    %v5338 = vpack.c.bf16 %v4910, %v4910
    %v5339 = vld [vmem:[#allocation5] sm:$0xff]
    %v5340 = vld [vmem:[#allocation5 + $0x8] sm:$0xff]
    %v5341 = vld [vmem:[#allocation5 + $0x10] sm:$0xff]
    %v5342 = vld [vmem:[#allocation5 + $0x18] sm:$0xff]
    %v5343 = vld [vmem:[#allocation5 + $0x20] sm:$0xff]
    %v5344 = vld [vmem:[#allocation5 + $0x28] sm:$0xff]
    %v5345 = vld [vmem:[#allocation5 + $0x30] sm:$0xff]
    %v5346 = vld [vmem:[#allocation5 + $0x38] sm:$0xff]
    %v5347 = vld [vmem:[#allocation5 + $0x40] sm:$0xff]
    %v5348 = vld [vmem:[#allocation5 + $0x48] sm:$0xff]
    %v5349 = vld [vmem:[#allocation5 + $0x50] sm:$0xff]
    %v5350 = vld [vmem:[#allocation5 + $0x58] sm:$0xff]
    %v5351 = vld [vmem:[#allocation5 + $0x60] sm:$0xff]
    %v5352 = vld [vmem:[#allocation5 + $0x68] sm:$0xff]
    %v5353 = vld [vmem:[#allocation5 + $0x70] sm:$0xff]
    %v5354 = vld [vmem:[#allocation5 + $0x78] sm:$0xff]
    %v5355 = vld [vmem:[#allocation5 + $0x80] sm:$0xff]
    %v5356 = vld [vmem:[#allocation5 + $0x88] sm:$0xff]
    %v5357 = vld [vmem:[#allocation5 + $0x90] sm:$0xff]
    %v5358 = vld [vmem:[#allocation5 + $0x98] sm:$0xff]
    %v5359 = vld [vmem:[#allocation5 + $0xa0] sm:$0xff]
    %v5360 = vld [vmem:[#allocation5 + $0xa8] sm:$0xff]
    %v5361 = vld [vmem:[#allocation5 + $0xb0] sm:$0xff]
    %v5362 = vld [vmem:[#allocation5 + $0xb8] sm:$0xff]
    %v5363 = vld [vmem:[#allocation5 + $0xc0] sm:$0xff]
    %v5364 = vld [vmem:[#allocation5 + $0xc8] sm:$0xff]
    %v5365 = vld [vmem:[#allocation5 + $0xd0] sm:$0xff]
    %v5366 = vld [vmem:[#allocation5 + $0xd8] sm:$0xff]
    %v5367 = vld [vmem:[#allocation5 + $0xe0] sm:$0xff]
    %v5368 = vld [vmem:[#allocation5 + $0xe8] sm:$0xff]
    %v5369 = vld [vmem:[#allocation5 + $0xf0] sm:$0xff]
    %v5370 = vld [vmem:[#allocation5 + $0xf8] sm:$0xff]
    %v5403 = vunpack.c.l.b16 %v5339
    %v5404 = vunpack.c.h.b16 %v5339
    %v5405 = vunpack.c.l.b16 %v5340
    %v5406 = vunpack.c.h.b16 %v5340
    %v5407 = vunpack.c.l.b16 %v5341
    %v5408 = vunpack.c.h.b16 %v5341
    %v5409 = vunpack.c.l.b16 %v5342
    %v5410 = vunpack.c.h.b16 %v5342
    %v5411 = vunpack.c.l.b16 %v5343
    %v5412 = vunpack.c.h.b16 %v5343
    %v5413 = vunpack.c.l.b16 %v5344
    %v5414 = vunpack.c.h.b16 %v5344
    %v5415 = vunpack.c.l.b16 %v5345
    %v5416 = vunpack.c.h.b16 %v5345
    %v5417 = vunpack.c.l.b16 %v5346
    %v5418 = vunpack.c.h.b16 %v5346
    %v5419 = vunpack.c.l.b16 %v5347
    %v5420 = vunpack.c.h.b16 %v5347
    %v5421 = vunpack.c.l.b16 %v5348
    %v5422 = vunpack.c.h.b16 %v5348
    %v5423 = vunpack.c.l.b16 %v5349
    %v5424 = vunpack.c.h.b16 %v5349
    %v5425 = vunpack.c.l.b16 %v5350
    %v5426 = vunpack.c.h.b16 %v5350
    %v5427 = vunpack.c.l.b16 %v5351
    %v5428 = vunpack.c.h.b16 %v5351
    %v5429 = vunpack.c.l.b16 %v5352
    %v5430 = vunpack.c.h.b16 %v5352
    %v5431 = vunpack.c.l.b16 %v5353
    %v5432 = vunpack.c.h.b16 %v5353
    %v5433 = vunpack.c.l.b16 %v5354
    %v5434 = vunpack.c.h.b16 %v5354
    %v5435 = vunpack.c.l.b16 %v5355
    %v5436 = vunpack.c.h.b16 %v5355
    %v5437 = vunpack.c.l.b16 %v5356
    %v5438 = vunpack.c.h.b16 %v5356
    %v5439 = vunpack.c.l.b16 %v5357
    %v5440 = vunpack.c.h.b16 %v5357
    %v5441 = vunpack.c.l.b16 %v5358
    %v5442 = vunpack.c.h.b16 %v5358
    %v5443 = vunpack.c.l.b16 %v5359
    %v5444 = vunpack.c.h.b16 %v5359
    %v5445 = vunpack.c.l.b16 %v5360
    %v5446 = vunpack.c.h.b16 %v5360
    %v5447 = vunpack.c.l.b16 %v5361
    %v5448 = vunpack.c.h.b16 %v5361
    %v5449 = vunpack.c.l.b16 %v5362
    %v5450 = vunpack.c.h.b16 %v5362
    %v5451 = vunpack.c.l.b16 %v5363
    %v5452 = vunpack.c.h.b16 %v5363
    %v5453 = vunpack.c.l.b16 %v5364
    %v5454 = vunpack.c.h.b16 %v5364
    %v5455 = vunpack.c.l.b16 %v5365
    %v5456 = vunpack.c.h.b16 %v5365
    %v5457 = vunpack.c.l.b16 %v5366
    %v5458 = vunpack.c.h.b16 %v5366
    %v5459 = vunpack.c.l.b16 %v5367
    %v5460 = vunpack.c.h.b16 %v5367
    %v5461 = vunpack.c.l.b16 %v5368
    %v5462 = vunpack.c.h.b16 %v5368
    %v5463 = vunpack.c.l.b16 %v5369
    %v5464 = vunpack.c.h.b16 %v5369
    %v5465 = vunpack.c.l.b16 %v5370
    %v5466 = vunpack.c.h.b16 %v5370
    %v5467 = vpack.c.b16 %v5407, %v5403
    %v5468 = vpack.c.b16 %v5408, %v5404
    %v5469 = vpack.c.b16 %v5409, %v5405
    %v5470 = vpack.c.b16 %v5410, %v5406
    %v5471 = vpack.c.b16 %v5415, %v5411
    %v5472 = vpack.c.b16 %v5416, %v5412
    %v5473 = vpack.c.b16 %v5417, %v5413
    %v5474 = vpack.c.b16 %v5418, %v5414
    %v5475 = vpack.c.b16 %v5423, %v5419
    %v5476 = vpack.c.b16 %v5424, %v5420
    %v5477 = vpack.c.b16 %v5425, %v5421
    %v5478 = vpack.c.b16 %v5426, %v5422
    %v5479 = vpack.c.b16 %v5431, %v5427
    %v5480 = vpack.c.b16 %v5432, %v5428
    %v5481 = vpack.c.b16 %v5433, %v5429
    %v5482 = vpack.c.b16 %v5434, %v5430
    %v5483 = vpack.c.b16 %v5439, %v5435
    %v5484 = vpack.c.b16 %v5440, %v5436
    %v5485 = vpack.c.b16 %v5441, %v5437
    %v5486 = vpack.c.b16 %v5442, %v5438
    %v5487 = vpack.c.b16 %v5447, %v5443
    %v5488 = vpack.c.b16 %v5448, %v5444
    %v5489 = vpack.c.b16 %v5449, %v5445
    %v5490 = vpack.c.b16 %v5450, %v5446
    %v5491 = vpack.c.b16 %v5455, %v5451
    %v5492 = vpack.c.b16 %v5456, %v5452
    %v5493 = vpack.c.b16 %v5457, %v5453
    %v5494 = vpack.c.b16 %v5458, %v5454
    %v5495 = vpack.c.b16 %v5463, %v5459
    %v5496 = vpack.c.b16 %v5464, %v5460
    %v5497 = vpack.c.b16 %v5465, %v5461
    %v5498 = vpack.c.b16 %v5466, %v5462
    %5531 = vmatpush.bf16.msra.mxu0 %v5495
    %5532 = vmatpush.bf16.msra.mxu0 %v5491
    %5533 = vmatpush.bf16.msra.mxu0 %v5487
    %5534 = vmatpush.bf16.msra.mxu0 %v5483
    %5535 = vmatpush.bf16.msra.mxu0 %v5479
    %5536 = vmatpush.bf16.msra.mxu0 %v5475
    %5537 = vmatpush.bf16.msra.mxu0 %v5471
    %5538 = vmatpush.bf16.msra.mxu0 %v5467
    %5539 = vmatmul.bf16.gmra.mxu0 %v5338
    %v5540 = vpop.f32.mrf.mxu0
    %v5541 = vadd.f32 0.0, %v5540
    %v5542 = vpop.f32.mrf.mxu0
    %5543 = vdwg.mxu0
    %5544 = vmatpush.bf16.msra.mxu0 %v5496
    %5545 = vmatpush.bf16.msra.mxu0 %v5492
    %5546 = vmatpush.bf16.msra.mxu0 %v5488
    %5547 = vmatpush.bf16.msra.mxu0 %v5484
    %5548 = vmatpush.bf16.msra.mxu0 %v5480
    %5549 = vmatpush.bf16.msra.mxu0 %v5476
    %5550 = vmatpush.bf16.msra.mxu0 %v5472
    %5551 = vmatpush.bf16.msra.mxu0 %v5468
    %5552 = vmatmul.bf16.gmra.mxu0 %v5338
    %v5553 = vpop.f32.mrf.mxu0
    %v5554 = vadd.f32 0.0, %v5553
    %v5555 = vpop.f32.mrf.mxu0
    %5556 = vdwg.mxu0
    %5557 = vmatpush.bf16.msra.mxu0 %v5497
    %5558 = vmatpush.bf16.msra.mxu0 %v5493
    %5559 = vmatpush.bf16.msra.mxu0 %v5489
    %5560 = vmatpush.bf16.msra.mxu0 %v5485
    %5561 = vmatpush.bf16.msra.mxu0 %v5481
    %5562 = vmatpush.bf16.msra.mxu0 %v5477
    %5563 = vmatpush.bf16.msra.mxu0 %v5473
    %5564 = vmatpush.bf16.msra.mxu0 %v5469
    %5565 = vmatmul.bf16.gmra.mxu0 %v5338
    %v5566 = vpop.f32.mrf.mxu0
    %v5567 = vadd.f32 0.0, %v5566
    %v5568 = vpop.f32.mrf.mxu0
    %5569 = vdwg.mxu0
    %5570 = vmatpush.bf16.msra.mxu0 %v5498
    %5571 = vmatpush.bf16.msra.mxu0 %v5494
    %5572 = vmatpush.bf16.msra.mxu0 %v5490
    %5573 = vmatpush.bf16.msra.mxu0 %v5486
    %5574 = vmatpush.bf16.msra.mxu0 %v5482
    %5575 = vmatpush.bf16.msra.mxu0 %v5478
    %5576 = vmatpush.bf16.msra.mxu0 %v5474
    %5577 = vmatpush.bf16.msra.mxu0 %v5470
    %5578 = vmatmul.bf16.gmra.mxu0 %v5338
    %v5579 = vpop.f32.mrf.mxu0
    %v5580 = vadd.f32 0.0, %v5579
    %v5581 = vpop.f32.mrf.mxu0
    %5582 = vdwg.mxu0
    %v5615 = vunpack.c.l.b16 %v5306
    %v5616 = vunpack.c.h.b16 %v5306
    %v5617 = vunpack.c.l.b16 %v5307
    %v5618 = vunpack.c.h.b16 %v5307
    %v5619 = vunpack.c.l.b16 %v5308
    %v5620 = vunpack.c.h.b16 %v5308
    %v5621 = vunpack.c.l.b16 %v5309
    %v5622 = vunpack.c.h.b16 %v5309
    %v5623 = vunpack.c.l.b16 %v5310
    %v5624 = vunpack.c.h.b16 %v5310
    %v5625 = vunpack.c.l.b16 %v5311
    %v5626 = vunpack.c.h.b16 %v5311
    %v5627 = vunpack.c.l.b16 %v5312
    %v5628 = vunpack.c.h.b16 %v5312
    %v5629 = vunpack.c.l.b16 %v5313
    %v5630 = vunpack.c.h.b16 %v5313
    %v5631 = vunpack.c.l.b16 %v5314
    %v5632 = vunpack.c.h.b16 %v5314
    %v5633 = vunpack.c.l.b16 %v5315
    %v5634 = vunpack.c.h.b16 %v5315
    %v5635 = vunpack.c.l.b16 %v5316
    %v5636 = vunpack.c.h.b16 %v5316
    %v5637 = vunpack.c.l.b16 %v5317
    %v5638 = vunpack.c.h.b16 %v5317
    %v5639 = vunpack.c.l.b16 %v5318
    %v5640 = vunpack.c.h.b16 %v5318
    %v5641 = vunpack.c.l.b16 %v5319
    %v5642 = vunpack.c.h.b16 %v5319
    %v5643 = vunpack.c.l.b16 %v5320
    %v5644 = vunpack.c.h.b16 %v5320
    %v5645 = vunpack.c.l.b16 %v5321
    %v5646 = vunpack.c.h.b16 %v5321
    %v5647 = vunpack.c.l.b16 %v5322
    %v5648 = vunpack.c.h.b16 %v5322
    %v5649 = vunpack.c.l.b16 %v5323
    %v5650 = vunpack.c.h.b16 %v5323
    %v5651 = vunpack.c.l.b16 %v5324
    %v5652 = vunpack.c.h.b16 %v5324
    %v5653 = vunpack.c.l.b16 %v5325
    %v5654 = vunpack.c.h.b16 %v5325
    %v5655 = vunpack.c.l.b16 %v5326
    %v5656 = vunpack.c.h.b16 %v5326
    %v5657 = vunpack.c.l.b16 %v5327
    %v5658 = vunpack.c.h.b16 %v5327
    %v5659 = vunpack.c.l.b16 %v5328
    %v5660 = vunpack.c.h.b16 %v5328
    %v5661 = vunpack.c.l.b16 %v5329
    %v5662 = vunpack.c.h.b16 %v5329
    %v5663 = vunpack.c.l.b16 %v5330
    %v5664 = vunpack.c.h.b16 %v5330
    %v5665 = vunpack.c.l.b16 %v5331
    %v5666 = vunpack.c.h.b16 %v5331
    %v5667 = vunpack.c.l.b16 %v5332
    %v5668 = vunpack.c.h.b16 %v5332
    %v5669 = vunpack.c.l.b16 %v5333
    %v5670 = vunpack.c.h.b16 %v5333
    %v5671 = vunpack.c.l.b16 %v5334
    %v5672 = vunpack.c.h.b16 %v5334
    %v5673 = vunpack.c.l.b16 %v5335
    %v5674 = vunpack.c.h.b16 %v5335
    %v5675 = vunpack.c.l.b16 %v5336
    %v5676 = vunpack.c.h.b16 %v5336
    %v5677 = vunpack.c.l.b16 %v5337
    %v5678 = vunpack.c.h.b16 %v5337
    %v5679 = vpack.c.b16 %v5619, %v5615
    %v5680 = vpack.c.b16 %v5620, %v5616
    %v5681 = vpack.c.b16 %v5621, %v5617
    %v5682 = vpack.c.b16 %v5622, %v5618
    %v5683 = vpack.c.b16 %v5627, %v5623
    %v5684 = vpack.c.b16 %v5628, %v5624
    %v5685 = vpack.c.b16 %v5629, %v5625
    %v5686 = vpack.c.b16 %v5630, %v5626
    %v5687 = vpack.c.b16 %v5635, %v5631
    %v5688 = vpack.c.b16 %v5636, %v5632
    %v5689 = vpack.c.b16 %v5637, %v5633
    %v5690 = vpack.c.b16 %v5638, %v5634
    %v5691 = vpack.c.b16 %v5643, %v5639
    %v5692 = vpack.c.b16 %v5644, %v5640
    %v5693 = vpack.c.b16 %v5645, %v5641
    %v5694 = vpack.c.b16 %v5646, %v5642
    %v5695 = vpack.c.b16 %v5651, %v5647
    %v5696 = vpack.c.b16 %v5652, %v5648
    %v5697 = vpack.c.b16 %v5653, %v5649
    %v5698 = vpack.c.b16 %v5654, %v5650
    %v5699 = vpack.c.b16 %v5659, %v5655
    %v5700 = vpack.c.b16 %v5660, %v5656
    %v5701 = vpack.c.b16 %v5661, %v5657
    %v5702 = vpack.c.b16 %v5662, %v5658
    %v5703 = vpack.c.b16 %v5667, %v5663
    %v5704 = vpack.c.b16 %v5668, %v5664
    %v5705 = vpack.c.b16 %v5669, %v5665
    %v5706 = vpack.c.b16 %v5670, %v5666
    %v5707 = vpack.c.b16 %v5675, %v5671
    %v5708 = vpack.c.b16 %v5676, %v5672
    %v5709 = vpack.c.b16 %v5677, %v5673
    %v5710 = vpack.c.b16 %v5678, %v5674
    %5743 = vmatpush.bf16.msra.mxu0 %v5707
    %5744 = vmatpush.bf16.msra.mxu0 %v5703
    %5745 = vmatpush.bf16.msra.mxu0 %v5699
    %5746 = vmatpush.bf16.msra.mxu0 %v5695
    %5747 = vmatpush.bf16.msra.mxu0 %v5691
    %5748 = vmatpush.bf16.msra.mxu0 %v5687
    %5749 = vmatpush.bf16.msra.mxu0 %v5683
    %5750 = vmatpush.bf16.msra.mxu0 %v5679
    %5751 = vmatmul.bf16.gmra.mxu0 %v5305
    %v5752 = vpop.f32.mrf.mxu0
    %v5753 = vadd.f32 %v5541, %v5752
    %v5754 = vpop.f32.mrf.mxu0
    %5755 = vdwg.mxu0
    %5756 = vmatpush.bf16.msra.mxu0 %v5708
    %5757 = vmatpush.bf16.msra.mxu0 %v5704
    %5758 = vmatpush.bf16.msra.mxu0 %v5700
    %5759 = vmatpush.bf16.msra.mxu0 %v5696
    %5760 = vmatpush.bf16.msra.mxu0 %v5692
    %5761 = vmatpush.bf16.msra.mxu0 %v5688
    %5762 = vmatpush.bf16.msra.mxu0 %v5684
    %5763 = vmatpush.bf16.msra.mxu0 %v5680
    %5764 = vmatmul.bf16.gmra.mxu0 %v5305
    %v5765 = vpop.f32.mrf.mxu0
    %v5766 = vadd.f32 %v5554, %v5765
    %v5767 = vpop.f32.mrf.mxu0
    %5768 = vdwg.mxu0
    %5769 = vmatpush.bf16.msra.mxu0 %v5709
    %5770 = vmatpush.bf16.msra.mxu0 %v5705
    %5771 = vmatpush.bf16.msra.mxu0 %v5701
    %5772 = vmatpush.bf16.msra.mxu0 %v5697
    %5773 = vmatpush.bf16.msra.mxu0 %v5693
    %5774 = vmatpush.bf16.msra.mxu0 %v5689
    %5775 = vmatpush.bf16.msra.mxu0 %v5685
    %5776 = vmatpush.bf16.msra.mxu0 %v5681
    %5777 = vmatmul.bf16.gmra.mxu0 %v5305
    %v5778 = vpop.f32.mrf.mxu0
    %v5779 = vadd.f32 %v5567, %v5778
    %v5780 = vpop.f32.mrf.mxu0
    %5781 = vdwg.mxu0
    %5782 = vmatpush.bf16.msra.mxu0 %v5710
    %5783 = vmatpush.bf16.msra.mxu0 %v5706
    %5784 = vmatpush.bf16.msra.mxu0 %v5702
    %5785 = vmatpush.bf16.msra.mxu0 %v5698
    %5786 = vmatpush.bf16.msra.mxu0 %v5694
    %5787 = vmatpush.bf16.msra.mxu0 %v5690
    %5788 = vmatpush.bf16.msra.mxu0 %v5686
    %5789 = vmatpush.bf16.msra.mxu0 %v5682
    %5790 = vmatmul.bf16.gmra.mxu0 %v5305
    %v5791 = vpop.f32.mrf.mxu0
    %v5792 = vadd.f32 %v5580, %v5791
    %v5793 = vpop.f32.mrf.mxu0
    %5794 = vdwg.mxu0
    %v5795 = vadd.f32 %v5753, %v145
    %v5796 = vadd.f32 %v5766, %v146
    %v5797 = vadd.f32 %v5779, %v147
    %v5798 = vadd.f32 %v5792, %v148
    %v5799 = vxor.u32 %v5795, 2147483648
    %v5800 = vmul.f32 %v5799, 1.442695
    %v5801 = vpow.pop %v5800
    %v5802 = vadd.f32 %v5801, 1.0
    %v5803 = vrcp.pop %v5802
    %v5804 = vmul.f32 %v5802, %v5803
    %v5805 = vsub.f32 1.0, %v5804
    %v5806 = vmul.f32 %v5803, %v5805
    %v5807 = vadd.f32 %v5803, %v5806
    %vm5808 = vweird.f32 %v5802
    %vm5809 = vweird.f32 %v5803
    %vm5810 = vmor %vm5808, %vm5809
    %v5811 = vsel %vm5810, %v5803, %v5807
    %v5812 = vand.u32 2147483647, %v5802
    %vm5813 = vcmp.eq.f32.partialorder %v5812, 8.507059e+37
    %v5814 = vand.u32 %v5802, 2147483648
    %v5815 = vor.u32 1.1754944e-38, %v5814
    %v5816 = vsel %vm5813, %v5815, %v5811
    %v5817 = vmul.f32 1.0, %v5816
    %v5818 = vxor.u32 %v5796, 2147483648
    %v5819 = vmul.f32 %v5818, 1.442695
    %v5820 = vpow.pop %v5819
    %v5821 = vadd.f32 %v5820, 1.0
    %v5822 = vrcp.pop %v5821
    %v5823 = vmul.f32 %v5821, %v5822
    %v5824 = vsub.f32 1.0, %v5823
    %v5825 = vmul.f32 %v5822, %v5824
    %v5826 = vadd.f32 %v5822, %v5825
    %vm5827 = vweird.f32 %v5821
    %vm5828 = vweird.f32 %v5822
    %vm5829 = vmor %vm5827, %vm5828
    %v5830 = vsel %vm5829, %v5822, %v5826
    %v5831 = vand.u32 2147483647, %v5821
    %vm5832 = vcmp.eq.f32.partialorder %v5831, 8.507059e+37
    %v5833 = vand.u32 %v5821, 2147483648
    %v5834 = vor.u32 1.1754944e-38, %v5833
    %v5835 = vsel %vm5832, %v5834, %v5830
    %v5836 = vmul.f32 1.0, %v5835
    %v5837 = vtanh.pop %v5797
    %v5838 = vxor.u32 %v5798, 2147483648
    %v5839 = vmul.f32 %v5838, 1.442695
    %v5840 = vpow.pop %v5839
    %v5841 = vadd.f32 %v5840, 1.0
    %v5842 = vrcp.pop %v5841
    %v5843 = vmul.f32 %v5841, %v5842
    %v5844 = vsub.f32 1.0, %v5843
    %v5845 = vmul.f32 %v5842, %v5844
    %v5846 = vadd.f32 %v5842, %v5845
    %vm5847 = vweird.f32 %v5841
    %vm5848 = vweird.f32 %v5842
    %vm5849 = vmor %vm5847, %vm5848
    %v5850 = vsel %vm5849, %v5842, %v5846
    %v5851 = vand.u32 2147483647, %v5841
    %vm5852 = vcmp.eq.f32.partialorder %v5851, 8.507059e+37
    %v5853 = vand.u32 %v5841, 2147483648
    %v5854 = vor.u32 1.1754944e-38, %v5853
    %v5855 = vsel %vm5852, %v5854, %v5850
    %v5856 = vmul.f32 1.0, %v5855
    %v5857 = vmul.f32 %v5836, %v4908
    %v5858 = vmul.f32 %v5817, %v5837
    %v5859 = vadd.f32 %v5857, %v5858
    %v5860 = vtanh.pop %v5859
    %v5861 = vmul.f32 %v5856, %v5860
    %s5862 = scalar_lea.vmem [#allocation11], 40
    %5863 = vst [vmem:[%s5862] sm:$0xff] %v5861
    %s5864 = scalar_lea.vmem [#allocation13], 24
    %v5865 = vld [vmem:[%s5864] sm:$0xf]
    %v5866 = vld [vmem:[#allocation2] sm:$0xff]
    %v5867 = vld [vmem:[#allocation2 + $0x8] sm:$0xff]
    %v5868 = vld [vmem:[#allocation3] sm:$0xff]
    %v5869 = vld [vmem:[#allocation3 + $0x8] sm:$0xff]
    %v5870 = vld [vmem:[#allocation3 + $0x10] sm:$0xff]
    %v5871 = vld [vmem:[#allocation3 + $0x18] sm:$0xff]
    %v5872 = vld [vmem:[#allocation3 + $0x20] sm:$0xff]
    %v5873 = vld [vmem:[#allocation3 + $0x28] sm:$0xff]
    %v5874 = vld [vmem:[#allocation3 + $0x30] sm:$0xff]
    %v5875 = vld [vmem:[#allocation3 + $0x38] sm:$0xff]
    %v5876 = vld [vmem:[#allocation3 + $0x40] sm:$0xff]
    %v5877 = vld [vmem:[#allocation3 + $0x48] sm:$0xff]
    %v5878 = vld [vmem:[#allocation3 + $0x50] sm:$0xff]
    %v5879 = vld [vmem:[#allocation3 + $0x58] sm:$0xff]
    %v5880 = vld [vmem:[#allocation3 + $0x60] sm:$0xff]
    %v5881 = vld [vmem:[#allocation3 + $0x68] sm:$0xff]
    %v5882 = vld [vmem:[#allocation3 + $0x70] sm:$0xff]
    %v5883 = vld [vmem:[#allocation3 + $0x78] sm:$0xff]
    %v5884 = vld [vmem:[#allocation3 + $0x80] sm:$0xff]
    %v5885 = vld [vmem:[#allocation3 + $0x88] sm:$0xff]
    %v5886 = vld [vmem:[#allocation3 + $0x90] sm:$0xff]
    %v5887 = vld [vmem:[#allocation3 + $0x98] sm:$0xff]
    %v5888 = vld [vmem:[#allocation3 + $0xa0] sm:$0xff]
    %v5889 = vld [vmem:[#allocation3 + $0xa8] sm:$0xff]
    %v5890 = vld [vmem:[#allocation3 + $0xb0] sm:$0xff]
    %v5891 = vld [vmem:[#allocation3 + $0xb8] sm:$0xff]
    %v5892 = vld [vmem:[#allocation3 + $0xc0] sm:$0xff]
    %v5893 = vld [vmem:[#allocation3 + $0xc8] sm:$0xff]
    %v5894 = vld [vmem:[#allocation3 + $0xd0] sm:$0xff]
    %v5895 = vld [vmem:[#allocation3 + $0xd8] sm:$0xff]
    %v5896 = vld [vmem:[#allocation3 + $0xe0] sm:$0xff]
    %v5897 = vld [vmem:[#allocation3 + $0xe8] sm:$0xff]
    %v5898 = vld [vmem:[#allocation3 + $0xf0] sm:$0xff]
    %v5899 = vld [vmem:[#allocation3 + $0xf8] sm:$0xff]
    %v5932 = vunpack.c.l.b16 %v5868
    %v5933 = vunpack.c.h.b16 %v5868
    %v5934 = vunpack.c.l.b16 %v5869
    %v5935 = vunpack.c.h.b16 %v5869
    %v5936 = vunpack.c.l.b16 %v5870
    %v5937 = vunpack.c.h.b16 %v5870
    %v5938 = vunpack.c.l.b16 %v5871
    %v5939 = vunpack.c.h.b16 %v5871
    %v5940 = vunpack.c.l.b16 %v5872
    %v5941 = vunpack.c.h.b16 %v5872
    %v5942 = vunpack.c.l.b16 %v5873
    %v5943 = vunpack.c.h.b16 %v5873
    %v5944 = vunpack.c.l.b16 %v5874
    %v5945 = vunpack.c.h.b16 %v5874
    %v5946 = vunpack.c.l.b16 %v5875
    %v5947 = vunpack.c.h.b16 %v5875
    %v5948 = vunpack.c.l.b16 %v5876
    %v5949 = vunpack.c.h.b16 %v5876
    %v5950 = vunpack.c.l.b16 %v5877
    %v5951 = vunpack.c.h.b16 %v5877
    %v5952 = vunpack.c.l.b16 %v5878
    %v5953 = vunpack.c.h.b16 %v5878
    %v5954 = vunpack.c.l.b16 %v5879
    %v5955 = vunpack.c.h.b16 %v5879
    %v5956 = vunpack.c.l.b16 %v5880
    %v5957 = vunpack.c.h.b16 %v5880
    %v5958 = vunpack.c.l.b16 %v5881
    %v5959 = vunpack.c.h.b16 %v5881
    %v5960 = vunpack.c.l.b16 %v5882
    %v5961 = vunpack.c.h.b16 %v5882
    %v5962 = vunpack.c.l.b16 %v5883
    %v5963 = vunpack.c.h.b16 %v5883
    %v5964 = vunpack.c.l.b16 %v5884
    %v5965 = vunpack.c.h.b16 %v5884
    %v5966 = vunpack.c.l.b16 %v5885
    %v5967 = vunpack.c.h.b16 %v5885
    %v5968 = vunpack.c.l.b16 %v5886
    %v5969 = vunpack.c.h.b16 %v5886
    %v5970 = vunpack.c.l.b16 %v5887
    %v5971 = vunpack.c.h.b16 %v5887
    %v5972 = vunpack.c.l.b16 %v5888
    %v5973 = vunpack.c.h.b16 %v5888
    %v5974 = vunpack.c.l.b16 %v5889
    %v5975 = vunpack.c.h.b16 %v5889
    %v5976 = vunpack.c.l.b16 %v5890
    %v5977 = vunpack.c.h.b16 %v5890
    %v5978 = vunpack.c.l.b16 %v5891
    %v5979 = vunpack.c.h.b16 %v5891
    %v5980 = vunpack.c.l.b16 %v5892
    %v5981 = vunpack.c.h.b16 %v5892
    %v5982 = vunpack.c.l.b16 %v5893
    %v5983 = vunpack.c.h.b16 %v5893
    %v5984 = vunpack.c.l.b16 %v5894
    %v5985 = vunpack.c.h.b16 %v5894
    %v5986 = vunpack.c.l.b16 %v5895
    %v5987 = vunpack.c.h.b16 %v5895
    %v5988 = vunpack.c.l.b16 %v5896
    %v5989 = vunpack.c.h.b16 %v5896
    %v5990 = vunpack.c.l.b16 %v5897
    %v5991 = vunpack.c.h.b16 %v5897
    %v5992 = vunpack.c.l.b16 %v5898
    %v5993 = vunpack.c.h.b16 %v5898
    %v5994 = vunpack.c.l.b16 %v5899
    %v5995 = vunpack.c.h.b16 %v5899
    %v5996 = vpack.c.b16 %v5936, %v5932
    %v5997 = vpack.c.b16 %v5937, %v5933
    %v5998 = vpack.c.b16 %v5938, %v5934
    %v5999 = vpack.c.b16 %v5939, %v5935
    %v6000 = vpack.c.b16 %v5944, %v5940
    %v6001 = vpack.c.b16 %v5945, %v5941
    %v6002 = vpack.c.b16 %v5946, %v5942
    %v6003 = vpack.c.b16 %v5947, %v5943
    %v6004 = vpack.c.b16 %v5952, %v5948
    %v6005 = vpack.c.b16 %v5953, %v5949
    %v6006 = vpack.c.b16 %v5954, %v5950
    %v6007 = vpack.c.b16 %v5955, %v5951
    %v6008 = vpack.c.b16 %v5960, %v5956
    %v6009 = vpack.c.b16 %v5961, %v5957
    %v6010 = vpack.c.b16 %v5962, %v5958
    %v6011 = vpack.c.b16 %v5963, %v5959
    %v6012 = vpack.c.b16 %v5968, %v5964
    %v6013 = vpack.c.b16 %v5969, %v5965
    %v6014 = vpack.c.b16 %v5970, %v5966
    %v6015 = vpack.c.b16 %v5971, %v5967
    %v6016 = vpack.c.b16 %v5976, %v5972
    %v6017 = vpack.c.b16 %v5977, %v5973
    %v6018 = vpack.c.b16 %v5978, %v5974
    %v6019 = vpack.c.b16 %v5979, %v5975
    %v6020 = vpack.c.b16 %v5984, %v5980
    %v6021 = vpack.c.b16 %v5985, %v5981
    %v6022 = vpack.c.b16 %v5986, %v5982
    %v6023 = vpack.c.b16 %v5987, %v5983
    %v6024 = vpack.c.b16 %v5992, %v5988
    %v6025 = vpack.c.b16 %v5993, %v5989
    %v6026 = vpack.c.b16 %v5994, %v5990
    %v6027 = vpack.c.b16 %v5995, %v5991
    %6060 = vmatpush.bf16.msra.mxu0 %v6024
    %6061 = vmatpush.bf16.msra.mxu0 %v6020
    %6062 = vmatpush.bf16.msra.mxu0 %v6016
    %6063 = vmatpush.bf16.msra.mxu0 %v6012
    %6064 = vmatpush.bf16.msra.mxu0 %v6008
    %6065 = vmatpush.bf16.msra.mxu0 %v6004
    %6066 = vmatpush.bf16.msra.mxu0 %v6000
    %6067 = vmatpush.bf16.msra.mxu0 %v5996
    %6068 = vmatmul.bf16.gmra.mxu0 %v5305
    %v6069 = vpop.f32.mrf.mxu0
    %v6070 = vadd.f32 0.0, %v6069
    %v6071 = vpop.f32.mrf.mxu0
    %6072 = vdwg.mxu0
    %6073 = vmatpush.bf16.msra.mxu0 %v6025
    %6074 = vmatpush.bf16.msra.mxu0 %v6021
    %6075 = vmatpush.bf16.msra.mxu0 %v6017
    %6076 = vmatpush.bf16.msra.mxu0 %v6013
    %6077 = vmatpush.bf16.msra.mxu0 %v6009
    %6078 = vmatpush.bf16.msra.mxu0 %v6005
    %6079 = vmatpush.bf16.msra.mxu0 %v6001
    %6080 = vmatpush.bf16.msra.mxu0 %v5997
    %6081 = vmatmul.bf16.gmra.mxu0 %v5305
    %v6082 = vpop.f32.mrf.mxu0
    %v6083 = vadd.f32 0.0, %v6082
    %v6084 = vpop.f32.mrf.mxu0
    %6085 = vdwg.mxu0
    %6086 = vmatpush.bf16.msra.mxu0 %v6026
    %6087 = vmatpush.bf16.msra.mxu0 %v6022
    %6088 = vmatpush.bf16.msra.mxu0 %v6018
    %6089 = vmatpush.bf16.msra.mxu0 %v6014
    %6090 = vmatpush.bf16.msra.mxu0 %v6010
    %6091 = vmatpush.bf16.msra.mxu0 %v6006
    %6092 = vmatpush.bf16.msra.mxu0 %v6002
    %6093 = vmatpush.bf16.msra.mxu0 %v5998
    %6094 = vmatmul.bf16.gmra.mxu0 %v5305
    %v6095 = vpop.f32.mrf.mxu0
    %v6096 = vadd.f32 0.0, %v6095
    %v6097 = vpop.f32.mrf.mxu0
    %6098 = vdwg.mxu0
    %6099 = vmatpush.bf16.msra.mxu0 %v6027
    %6100 = vmatpush.bf16.msra.mxu0 %v6023
    %6101 = vmatpush.bf16.msra.mxu0 %v6019
    %6102 = vmatpush.bf16.msra.mxu0 %v6015
    %6103 = vmatpush.bf16.msra.mxu0 %v6011
    %6104 = vmatpush.bf16.msra.mxu0 %v6007
    %6105 = vmatpush.bf16.msra.mxu0 %v6003
    %6106 = vmatpush.bf16.msra.mxu0 %v5999
    %6107 = vmatmul.bf16.gmra.mxu0 %v5305
    %v6108 = vpop.f32.mrf.mxu0
    %v6109 = vadd.f32 0.0, %v6108
    %v6110 = vpop.f32.mrf.mxu0
    %6111 = vdwg.mxu0
    %v6114 = vunpack.c.l.b16 %v5866
    %v6115 = vunpack.c.h.b16 %v5866
    %v6116 = vunpack.c.l.b16 %v5867
    %v6117 = vunpack.c.h.b16 %v5867
    %v6118 = vpack.c.b16 %v6114, %v6114
    %v6119 = vpack.c.b16 %v6115, %v6115
    %v6120 = vpack.c.b16 %v6116, %v6116
    %v6121 = vpack.c.b16 %v6117, %v6117
    %v6123 = vsel %vm415, %v5865, 0
    %v6126 = vsel %vm419, %v6118, 0
    %v6129 = vsel %vm419, %v6119, 0
    %v6132 = vsel %vm419, %v6120, 0
    %v6135 = vsel %vm419, %v6121, 0
    %6137 = vmatpush.bf16.msra.mxu0 0
    %6138 = vmatpush.bf16.msra.mxu0 0
    %6139 = vmatpush.bf16.msra.mxu0 0
    %6140 = vmatpush.bf16.msra.mxu0 0
    %6141 = vmatpush.bf16.msra.mxu0 0
    %6142 = vmatpush.bf16.msra.mxu0 0
    %6143 = vmatpush.bf16.msra.mxu0 0
    %6144 = vmatpush.bf16.msra.mxu0 %v6126
    %6145 = vmatmul.bf16.gmra.mxu0 %v6123
    %v6146 = vpop.f32.mrf.mxu0
    %v6147 = vadd.f32 %v6070, %v6146
    %v6148 = vpop.f32.mrf.mxu0
    %6149 = vdwg.mxu0
    %6150 = vmatpush.bf16.msra.mxu0 0
    %6151 = vmatpush.bf16.msra.mxu0 0
    %6152 = vmatpush.bf16.msra.mxu0 0
    %6153 = vmatpush.bf16.msra.mxu0 0
    %6154 = vmatpush.bf16.msra.mxu0 0
    %6155 = vmatpush.bf16.msra.mxu0 0
    %6156 = vmatpush.bf16.msra.mxu0 0
    %6157 = vmatpush.bf16.msra.mxu0 %v6129
    %6158 = vmatmul.bf16.gmra.mxu0 %v6123
    %v6159 = vpop.f32.mrf.mxu0
    %v6160 = vadd.f32 %v6083, %v6159
    %v6161 = vpop.f32.mrf.mxu0
    %6162 = vdwg.mxu0
    %6163 = vmatpush.bf16.msra.mxu0 0
    %6164 = vmatpush.bf16.msra.mxu0 0
    %6165 = vmatpush.bf16.msra.mxu0 0
    %6166 = vmatpush.bf16.msra.mxu0 0
    %6167 = vmatpush.bf16.msra.mxu0 0
    %6168 = vmatpush.bf16.msra.mxu0 0
    %6169 = vmatpush.bf16.msra.mxu0 0
    %6170 = vmatpush.bf16.msra.mxu0 %v6132
    %6171 = vmatmul.bf16.gmra.mxu0 %v6123
    %v6172 = vpop.f32.mrf.mxu0
    %v6173 = vadd.f32 %v6096, %v6172
    %v6174 = vpop.f32.mrf.mxu0
    %6175 = vdwg.mxu0
    %6176 = vmatpush.bf16.msra.mxu0 0
    %6177 = vmatpush.bf16.msra.mxu0 0
    %6178 = vmatpush.bf16.msra.mxu0 0
    %6179 = vmatpush.bf16.msra.mxu0 0
    %6180 = vmatpush.bf16.msra.mxu0 0
    %6181 = vmatpush.bf16.msra.mxu0 0
    %6182 = vmatpush.bf16.msra.mxu0 0
    %6183 = vmatpush.bf16.msra.mxu0 %v6135
    %6184 = vmatmul.bf16.gmra.mxu0 %v6123
    %v6185 = vpop.f32.mrf.mxu0
    %v6186 = vadd.f32 %v6109, %v6185
    %v6187 = vpop.f32.mrf.mxu0
    %6188 = vdwg.mxu0
    %v6189 = vadd.f32 %v6147, %v135
    %v6190 = vadd.f32 %v6160, %v136
    %v6191 = vadd.f32 %v6173, %v137
    %v6192 = vadd.f32 %v6186, %v138
    %v6193 = vxor.u32 %v6189, 2147483648
    %v6194 = vmul.f32 %v6193, 1.442695
    %v6195 = vpow.pop %v6194
    %v6196 = vadd.f32 %v6195, 1.0
    %v6197 = vrcp.pop %v6196
    %v6198 = vmul.f32 %v6196, %v6197
    %v6199 = vsub.f32 1.0, %v6198
    %v6200 = vmul.f32 %v6197, %v6199
    %v6201 = vadd.f32 %v6197, %v6200
    %vm6202 = vweird.f32 %v6196
    %vm6203 = vweird.f32 %v6197
    %vm6204 = vmor %vm6202, %vm6203
    %v6205 = vsel %vm6204, %v6197, %v6201
    %v6206 = vand.u32 2147483647, %v6196
    %vm6207 = vcmp.eq.f32.partialorder %v6206, 8.507059e+37
    %v6208 = vand.u32 %v6196, 2147483648
    %v6209 = vor.u32 1.1754944e-38, %v6208
    %v6210 = vsel %vm6207, %v6209, %v6205
    %v6211 = vmul.f32 1.0, %v6210
    %v6212 = vxor.u32 %v6190, 2147483648
    %v6213 = vmul.f32 %v6212, 1.442695
    %v6214 = vpow.pop %v6213
    %v6215 = vadd.f32 %v6214, 1.0
    %v6216 = vrcp.pop %v6215
    %v6217 = vmul.f32 %v6215, %v6216
    %v6218 = vsub.f32 1.0, %v6217
    %v6219 = vmul.f32 %v6216, %v6218
    %v6220 = vadd.f32 %v6216, %v6219
    %vm6221 = vweird.f32 %v6215
    %vm6222 = vweird.f32 %v6216
    %vm6223 = vmor %vm6221, %vm6222
    %v6224 = vsel %vm6223, %v6216, %v6220
    %v6225 = vand.u32 2147483647, %v6215
    %vm6226 = vcmp.eq.f32.partialorder %v6225, 8.507059e+37
    %v6227 = vand.u32 %v6215, 2147483648
    %v6228 = vor.u32 1.1754944e-38, %v6227
    %v6229 = vsel %vm6226, %v6228, %v6224
    %v6230 = vmul.f32 1.0, %v6229
    %v6231 = vtanh.pop %v6191
    %v6232 = vxor.u32 %v6192, 2147483648
    %v6233 = vmul.f32 %v6232, 1.442695
    %v6234 = vpow.pop %v6233
    %v6235 = vadd.f32 %v6234, 1.0
    %v6236 = vrcp.pop %v6235
    %v6237 = vmul.f32 %v6235, %v6236
    %v6238 = vsub.f32 1.0, %v6237
    %v6239 = vmul.f32 %v6236, %v6238
    %v6240 = vadd.f32 %v6236, %v6239
    %vm6241 = vweird.f32 %v6235
    %vm6242 = vweird.f32 %v6236
    %vm6243 = vmor %vm6241, %vm6242
    %v6244 = vsel %vm6243, %v6236, %v6240
    %v6245 = vand.u32 2147483647, %v6235
    %vm6246 = vcmp.eq.f32.partialorder %v6245, 8.507059e+37
    %v6247 = vand.u32 %v6235, 2147483648
    %v6248 = vor.u32 1.1754944e-38, %v6247
    %v6249 = vsel %vm6246, %v6248, %v6244
    %v6250 = vmul.f32 1.0, %v6249
    %v6251 = vmul.f32 %v6230, %v5302
    %v6252 = vmul.f32 %v6211, %v6231
    %v6253 = vadd.f32 %v6251, %v6252
    %v6254 = vtanh.pop %v6253
    %v6255 = vmul.f32 %v6250, %v6254
    %v6256 = vpack.c.bf16 %v6255, %v6255
    %v6257 = vld [vmem:[#allocation4] sm:$0xff]
    %v6258 = vld [vmem:[#allocation4 + $0x8] sm:$0xff]
    %v6259 = vld [vmem:[#allocation4 + $0x10] sm:$0xff]
    %v6260 = vld [vmem:[#allocation4 + $0x18] sm:$0xff]
    %v6261 = vld [vmem:[#allocation4 + $0x20] sm:$0xff]
    %v6262 = vld [vmem:[#allocation4 + $0x28] sm:$0xff]
    %v6263 = vld [vmem:[#allocation4 + $0x30] sm:$0xff]
    %v6264 = vld [vmem:[#allocation4 + $0x38] sm:$0xff]
    %v6265 = vld [vmem:[#allocation4 + $0x40] sm:$0xff]
    %v6266 = vld [vmem:[#allocation4 + $0x48] sm:$0xff]
    %v6267 = vld [vmem:[#allocation4 + $0x50] sm:$0xff]
    %v6268 = vld [vmem:[#allocation4 + $0x58] sm:$0xff]
    %v6269 = vld [vmem:[#allocation4 + $0x60] sm:$0xff]
    %v6270 = vld [vmem:[#allocation4 + $0x68] sm:$0xff]
    %v6271 = vld [vmem:[#allocation4 + $0x70] sm:$0xff]
    %v6272 = vld [vmem:[#allocation4 + $0x78] sm:$0xff]
    %v6273 = vld [vmem:[#allocation4 + $0x80] sm:$0xff]
    %v6274 = vld [vmem:[#allocation4 + $0x88] sm:$0xff]
    %v6275 = vld [vmem:[#allocation4 + $0x90] sm:$0xff]
    %v6276 = vld [vmem:[#allocation4 + $0x98] sm:$0xff]
    %v6277 = vld [vmem:[#allocation4 + $0xa0] sm:$0xff]
    %v6278 = vld [vmem:[#allocation4 + $0xa8] sm:$0xff]
    %v6279 = vld [vmem:[#allocation4 + $0xb0] sm:$0xff]
    %v6280 = vld [vmem:[#allocation4 + $0xb8] sm:$0xff]
    %v6281 = vld [vmem:[#allocation4 + $0xc0] sm:$0xff]
    %v6282 = vld [vmem:[#allocation4 + $0xc8] sm:$0xff]
    %v6283 = vld [vmem:[#allocation4 + $0xd0] sm:$0xff]
    %v6284 = vld [vmem:[#allocation4 + $0xd8] sm:$0xff]
    %v6285 = vld [vmem:[#allocation4 + $0xe0] sm:$0xff]
    %v6286 = vld [vmem:[#allocation4 + $0xe8] sm:$0xff]
    %v6287 = vld [vmem:[#allocation4 + $0xf0] sm:$0xff]
    %v6288 = vld [vmem:[#allocation4 + $0xf8] sm:$0xff]
    %v6289 = vpack.c.bf16 %v5861, %v5861
    %v6290 = vld [vmem:[#allocation5] sm:$0xff]
    %v6291 = vld [vmem:[#allocation5 + $0x8] sm:$0xff]
    %v6292 = vld [vmem:[#allocation5 + $0x10] sm:$0xff]
    %v6293 = vld [vmem:[#allocation5 + $0x18] sm:$0xff]
    %v6294 = vld [vmem:[#allocation5 + $0x20] sm:$0xff]
    %v6295 = vld [vmem:[#allocation5 + $0x28] sm:$0xff]
    %v6296 = vld [vmem:[#allocation5 + $0x30] sm:$0xff]
    %v6297 = vld [vmem:[#allocation5 + $0x38] sm:$0xff]
    %v6298 = vld [vmem:[#allocation5 + $0x40] sm:$0xff]
    %v6299 = vld [vmem:[#allocation5 + $0x48] sm:$0xff]
    %v6300 = vld [vmem:[#allocation5 + $0x50] sm:$0xff]
    %v6301 = vld [vmem:[#allocation5 + $0x58] sm:$0xff]
    %v6302 = vld [vmem:[#allocation5 + $0x60] sm:$0xff]
    %v6303 = vld [vmem:[#allocation5 + $0x68] sm:$0xff]
    %v6304 = vld [vmem:[#allocation5 + $0x70] sm:$0xff]
    %v6305 = vld [vmem:[#allocation5 + $0x78] sm:$0xff]
    %v6306 = vld [vmem:[#allocation5 + $0x80] sm:$0xff]
    %v6307 = vld [vmem:[#allocation5 + $0x88] sm:$0xff]
    %v6308 = vld [vmem:[#allocation5 + $0x90] sm:$0xff]
    %v6309 = vld [vmem:[#allocation5 + $0x98] sm:$0xff]
    %v6310 = vld [vmem:[#allocation5 + $0xa0] sm:$0xff]
    %v6311 = vld [vmem:[#allocation5 + $0xa8] sm:$0xff]
    %v6312 = vld [vmem:[#allocation5 + $0xb0] sm:$0xff]
    %v6313 = vld [vmem:[#allocation5 + $0xb8] sm:$0xff]
    %v6314 = vld [vmem:[#allocation5 + $0xc0] sm:$0xff]
    %v6315 = vld [vmem:[#allocation5 + $0xc8] sm:$0xff]
    %v6316 = vld [vmem:[#allocation5 + $0xd0] sm:$0xff]
    %v6317 = vld [vmem:[#allocation5 + $0xd8] sm:$0xff]
    %v6318 = vld [vmem:[#allocation5 + $0xe0] sm:$0xff]
    %v6319 = vld [vmem:[#allocation5 + $0xe8] sm:$0xff]
    %v6320 = vld [vmem:[#allocation5 + $0xf0] sm:$0xff]
    %v6321 = vld [vmem:[#allocation5 + $0xf8] sm:$0xff]
    %v6354 = vunpack.c.l.b16 %v6290
    %v6355 = vunpack.c.h.b16 %v6290
    %v6356 = vunpack.c.l.b16 %v6291
    %v6357 = vunpack.c.h.b16 %v6291
    %v6358 = vunpack.c.l.b16 %v6292
    %v6359 = vunpack.c.h.b16 %v6292
    %v6360 = vunpack.c.l.b16 %v6293
    %v6361 = vunpack.c.h.b16 %v6293
    %v6362 = vunpack.c.l.b16 %v6294
    %v6363 = vunpack.c.h.b16 %v6294
    %v6364 = vunpack.c.l.b16 %v6295
    %v6365 = vunpack.c.h.b16 %v6295
    %v6366 = vunpack.c.l.b16 %v6296
    %v6367 = vunpack.c.h.b16 %v6296
    %v6368 = vunpack.c.l.b16 %v6297
    %v6369 = vunpack.c.h.b16 %v6297
    %v6370 = vunpack.c.l.b16 %v6298
    %v6371 = vunpack.c.h.b16 %v6298
    %v6372 = vunpack.c.l.b16 %v6299
    %v6373 = vunpack.c.h.b16 %v6299
    %v6374 = vunpack.c.l.b16 %v6300
    %v6375 = vunpack.c.h.b16 %v6300
    %v6376 = vunpack.c.l.b16 %v6301
    %v6377 = vunpack.c.h.b16 %v6301
    %v6378 = vunpack.c.l.b16 %v6302
    %v6379 = vunpack.c.h.b16 %v6302
    %v6380 = vunpack.c.l.b16 %v6303
    %v6381 = vunpack.c.h.b16 %v6303
    %v6382 = vunpack.c.l.b16 %v6304
    %v6383 = vunpack.c.h.b16 %v6304
    %v6384 = vunpack.c.l.b16 %v6305
    %v6385 = vunpack.c.h.b16 %v6305
    %v6386 = vunpack.c.l.b16 %v6306
    %v6387 = vunpack.c.h.b16 %v6306
    %v6388 = vunpack.c.l.b16 %v6307
    %v6389 = vunpack.c.h.b16 %v6307
    %v6390 = vunpack.c.l.b16 %v6308
    %v6391 = vunpack.c.h.b16 %v6308
    %v6392 = vunpack.c.l.b16 %v6309
    %v6393 = vunpack.c.h.b16 %v6309
    %v6394 = vunpack.c.l.b16 %v6310
    %v6395 = vunpack.c.h.b16 %v6310
    %v6396 = vunpack.c.l.b16 %v6311
    %v6397 = vunpack.c.h.b16 %v6311
    %v6398 = vunpack.c.l.b16 %v6312
    %v6399 = vunpack.c.h.b16 %v6312
    %v6400 = vunpack.c.l.b16 %v6313
    %v6401 = vunpack.c.h.b16 %v6313
    %v6402 = vunpack.c.l.b16 %v6314
    %v6403 = vunpack.c.h.b16 %v6314
    %v6404 = vunpack.c.l.b16 %v6315
    %v6405 = vunpack.c.h.b16 %v6315
    %v6406 = vunpack.c.l.b16 %v6316
    %v6407 = vunpack.c.h.b16 %v6316
    %v6408 = vunpack.c.l.b16 %v6317
    %v6409 = vunpack.c.h.b16 %v6317
    %v6410 = vunpack.c.l.b16 %v6318
    %v6411 = vunpack.c.h.b16 %v6318
    %v6412 = vunpack.c.l.b16 %v6319
    %v6413 = vunpack.c.h.b16 %v6319
    %v6414 = vunpack.c.l.b16 %v6320
    %v6415 = vunpack.c.h.b16 %v6320
    %v6416 = vunpack.c.l.b16 %v6321
    %v6417 = vunpack.c.h.b16 %v6321
    %v6418 = vpack.c.b16 %v6358, %v6354
    %v6419 = vpack.c.b16 %v6359, %v6355
    %v6420 = vpack.c.b16 %v6360, %v6356
    %v6421 = vpack.c.b16 %v6361, %v6357
    %v6422 = vpack.c.b16 %v6366, %v6362
    %v6423 = vpack.c.b16 %v6367, %v6363
    %v6424 = vpack.c.b16 %v6368, %v6364
    %v6425 = vpack.c.b16 %v6369, %v6365
    %v6426 = vpack.c.b16 %v6374, %v6370
    %v6427 = vpack.c.b16 %v6375, %v6371
    %v6428 = vpack.c.b16 %v6376, %v6372
    %v6429 = vpack.c.b16 %v6377, %v6373
    %v6430 = vpack.c.b16 %v6382, %v6378
    %v6431 = vpack.c.b16 %v6383, %v6379
    %v6432 = vpack.c.b16 %v6384, %v6380
    %v6433 = vpack.c.b16 %v6385, %v6381
    %v6434 = vpack.c.b16 %v6390, %v6386
    %v6435 = vpack.c.b16 %v6391, %v6387
    %v6436 = vpack.c.b16 %v6392, %v6388
    %v6437 = vpack.c.b16 %v6393, %v6389
    %v6438 = vpack.c.b16 %v6398, %v6394
    %v6439 = vpack.c.b16 %v6399, %v6395
    %v6440 = vpack.c.b16 %v6400, %v6396
    %v6441 = vpack.c.b16 %v6401, %v6397
    %v6442 = vpack.c.b16 %v6406, %v6402
    %v6443 = vpack.c.b16 %v6407, %v6403
    %v6444 = vpack.c.b16 %v6408, %v6404
    %v6445 = vpack.c.b16 %v6409, %v6405
    %v6446 = vpack.c.b16 %v6414, %v6410
    %v6447 = vpack.c.b16 %v6415, %v6411
    %v6448 = vpack.c.b16 %v6416, %v6412
    %v6449 = vpack.c.b16 %v6417, %v6413
    %6482 = vmatpush.bf16.msra.mxu0 %v6446
    %6483 = vmatpush.bf16.msra.mxu0 %v6442
    %6484 = vmatpush.bf16.msra.mxu0 %v6438
    %6485 = vmatpush.bf16.msra.mxu0 %v6434
    %6486 = vmatpush.bf16.msra.mxu0 %v6430
    %6487 = vmatpush.bf16.msra.mxu0 %v6426
    %6488 = vmatpush.bf16.msra.mxu0 %v6422
    %6489 = vmatpush.bf16.msra.mxu0 %v6418
    %6490 = vmatmul.bf16.gmra.mxu0 %v6289
    %v6491 = vpop.f32.mrf.mxu0
    %v6492 = vadd.f32 0.0, %v6491
    %v6493 = vpop.f32.mrf.mxu0
    %6494 = vdwg.mxu0
    %6495 = vmatpush.bf16.msra.mxu0 %v6447
    %6496 = vmatpush.bf16.msra.mxu0 %v6443
    %6497 = vmatpush.bf16.msra.mxu0 %v6439
    %6498 = vmatpush.bf16.msra.mxu0 %v6435
    %6499 = vmatpush.bf16.msra.mxu0 %v6431
    %6500 = vmatpush.bf16.msra.mxu0 %v6427
    %6501 = vmatpush.bf16.msra.mxu0 %v6423
    %6502 = vmatpush.bf16.msra.mxu0 %v6419
    %6503 = vmatmul.bf16.gmra.mxu0 %v6289
    %v6504 = vpop.f32.mrf.mxu0
    %v6505 = vadd.f32 0.0, %v6504
    %v6506 = vpop.f32.mrf.mxu0
    %6507 = vdwg.mxu0
    %6508 = vmatpush.bf16.msra.mxu0 %v6448
    %6509 = vmatpush.bf16.msra.mxu0 %v6444
    %6510 = vmatpush.bf16.msra.mxu0 %v6440
    %6511 = vmatpush.bf16.msra.mxu0 %v6436
    %6512 = vmatpush.bf16.msra.mxu0 %v6432
    %6513 = vmatpush.bf16.msra.mxu0 %v6428
    %6514 = vmatpush.bf16.msra.mxu0 %v6424
    %6515 = vmatpush.bf16.msra.mxu0 %v6420
    %6516 = vmatmul.bf16.gmra.mxu0 %v6289
    %v6517 = vpop.f32.mrf.mxu0
    %v6518 = vadd.f32 0.0, %v6517
    %v6519 = vpop.f32.mrf.mxu0
    %6520 = vdwg.mxu0
    %6521 = vmatpush.bf16.msra.mxu0 %v6449
    %6522 = vmatpush.bf16.msra.mxu0 %v6445
    %6523 = vmatpush.bf16.msra.mxu0 %v6441
    %6524 = vmatpush.bf16.msra.mxu0 %v6437
    %6525 = vmatpush.bf16.msra.mxu0 %v6433
    %6526 = vmatpush.bf16.msra.mxu0 %v6429
    %6527 = vmatpush.bf16.msra.mxu0 %v6425
    %6528 = vmatpush.bf16.msra.mxu0 %v6421
    %6529 = vmatmul.bf16.gmra.mxu0 %v6289
    %v6530 = vpop.f32.mrf.mxu0
    %v6531 = vadd.f32 0.0, %v6530
    %v6532 = vpop.f32.mrf.mxu0
    %6533 = vdwg.mxu0
    %v6566 = vunpack.c.l.b16 %v6257
    %v6567 = vunpack.c.h.b16 %v6257
    %v6568 = vunpack.c.l.b16 %v6258
    %v6569 = vunpack.c.h.b16 %v6258
    %v6570 = vunpack.c.l.b16 %v6259
    %v6571 = vunpack.c.h.b16 %v6259
    %v6572 = vunpack.c.l.b16 %v6260
    %v6573 = vunpack.c.h.b16 %v6260
    %v6574 = vunpack.c.l.b16 %v6261
    %v6575 = vunpack.c.h.b16 %v6261
    %v6576 = vunpack.c.l.b16 %v6262
    %v6577 = vunpack.c.h.b16 %v6262
    %v6578 = vunpack.c.l.b16 %v6263
    %v6579 = vunpack.c.h.b16 %v6263
    %v6580 = vunpack.c.l.b16 %v6264
    %v6581 = vunpack.c.h.b16 %v6264
    %v6582 = vunpack.c.l.b16 %v6265
    %v6583 = vunpack.c.h.b16 %v6265
    %v6584 = vunpack.c.l.b16 %v6266
    %v6585 = vunpack.c.h.b16 %v6266
    %v6586 = vunpack.c.l.b16 %v6267
    %v6587 = vunpack.c.h.b16 %v6267
    %v6588 = vunpack.c.l.b16 %v6268
    %v6589 = vunpack.c.h.b16 %v6268
    %v6590 = vunpack.c.l.b16 %v6269
    %v6591 = vunpack.c.h.b16 %v6269
    %v6592 = vunpack.c.l.b16 %v6270
    %v6593 = vunpack.c.h.b16 %v6270
    %v6594 = vunpack.c.l.b16 %v6271
    %v6595 = vunpack.c.h.b16 %v6271
    %v6596 = vunpack.c.l.b16 %v6272
    %v6597 = vunpack.c.h.b16 %v6272
    %v6598 = vunpack.c.l.b16 %v6273
    %v6599 = vunpack.c.h.b16 %v6273
    %v6600 = vunpack.c.l.b16 %v6274
    %v6601 = vunpack.c.h.b16 %v6274
    %v6602 = vunpack.c.l.b16 %v6275
    %v6603 = vunpack.c.h.b16 %v6275
    %v6604 = vunpack.c.l.b16 %v6276
    %v6605 = vunpack.c.h.b16 %v6276
    %v6606 = vunpack.c.l.b16 %v6277
    %v6607 = vunpack.c.h.b16 %v6277
    %v6608 = vunpack.c.l.b16 %v6278
    %v6609 = vunpack.c.h.b16 %v6278
    %v6610 = vunpack.c.l.b16 %v6279
    %v6611 = vunpack.c.h.b16 %v6279
    %v6612 = vunpack.c.l.b16 %v6280
    %v6613 = vunpack.c.h.b16 %v6280
    %v6614 = vunpack.c.l.b16 %v6281
    %v6615 = vunpack.c.h.b16 %v6281
    %v6616 = vunpack.c.l.b16 %v6282
    %v6617 = vunpack.c.h.b16 %v6282
    %v6618 = vunpack.c.l.b16 %v6283
    %v6619 = vunpack.c.h.b16 %v6283
    %v6620 = vunpack.c.l.b16 %v6284
    %v6621 = vunpack.c.h.b16 %v6284
    %v6622 = vunpack.c.l.b16 %v6285
    %v6623 = vunpack.c.h.b16 %v6285
    %v6624 = vunpack.c.l.b16 %v6286
    %v6625 = vunpack.c.h.b16 %v6286
    %v6626 = vunpack.c.l.b16 %v6287
    %v6627 = vunpack.c.h.b16 %v6287
    %v6628 = vunpack.c.l.b16 %v6288
    %v6629 = vunpack.c.h.b16 %v6288
    %v6630 = vpack.c.b16 %v6570, %v6566
    %v6631 = vpack.c.b16 %v6571, %v6567
    %v6632 = vpack.c.b16 %v6572, %v6568
    %v6633 = vpack.c.b16 %v6573, %v6569
    %v6634 = vpack.c.b16 %v6578, %v6574
    %v6635 = vpack.c.b16 %v6579, %v6575
    %v6636 = vpack.c.b16 %v6580, %v6576
    %v6637 = vpack.c.b16 %v6581, %v6577
    %v6638 = vpack.c.b16 %v6586, %v6582
    %v6639 = vpack.c.b16 %v6587, %v6583
    %v6640 = vpack.c.b16 %v6588, %v6584
    %v6641 = vpack.c.b16 %v6589, %v6585
    %v6642 = vpack.c.b16 %v6594, %v6590
    %v6643 = vpack.c.b16 %v6595, %v6591
    %v6644 = vpack.c.b16 %v6596, %v6592
    %v6645 = vpack.c.b16 %v6597, %v6593
    %v6646 = vpack.c.b16 %v6602, %v6598
    %v6647 = vpack.c.b16 %v6603, %v6599
    %v6648 = vpack.c.b16 %v6604, %v6600
    %v6649 = vpack.c.b16 %v6605, %v6601
    %v6650 = vpack.c.b16 %v6610, %v6606
    %v6651 = vpack.c.b16 %v6611, %v6607
    %v6652 = vpack.c.b16 %v6612, %v6608
    %v6653 = vpack.c.b16 %v6613, %v6609
    %v6654 = vpack.c.b16 %v6618, %v6614
    %v6655 = vpack.c.b16 %v6619, %v6615
    %v6656 = vpack.c.b16 %v6620, %v6616
    %v6657 = vpack.c.b16 %v6621, %v6617
    %v6658 = vpack.c.b16 %v6626, %v6622
    %v6659 = vpack.c.b16 %v6627, %v6623
    %v6660 = vpack.c.b16 %v6628, %v6624
    %v6661 = vpack.c.b16 %v6629, %v6625
    %6694 = vmatpush.bf16.msra.mxu0 %v6658
    %6695 = vmatpush.bf16.msra.mxu0 %v6654
    %6696 = vmatpush.bf16.msra.mxu0 %v6650
    %6697 = vmatpush.bf16.msra.mxu0 %v6646
    %6698 = vmatpush.bf16.msra.mxu0 %v6642
    %6699 = vmatpush.bf16.msra.mxu0 %v6638
    %6700 = vmatpush.bf16.msra.mxu0 %v6634
    %6701 = vmatpush.bf16.msra.mxu0 %v6630
    %6702 = vmatmul.bf16.gmra.mxu0 %v6256
    %v6703 = vpop.f32.mrf.mxu0
    %v6704 = vadd.f32 %v6492, %v6703
    %v6705 = vpop.f32.mrf.mxu0
    %6706 = vdwg.mxu0
    %6707 = vmatpush.bf16.msra.mxu0 %v6659
    %6708 = vmatpush.bf16.msra.mxu0 %v6655
    %6709 = vmatpush.bf16.msra.mxu0 %v6651
    %6710 = vmatpush.bf16.msra.mxu0 %v6647
    %6711 = vmatpush.bf16.msra.mxu0 %v6643
    %6712 = vmatpush.bf16.msra.mxu0 %v6639
    %6713 = vmatpush.bf16.msra.mxu0 %v6635
    %6714 = vmatpush.bf16.msra.mxu0 %v6631
    %6715 = vmatmul.bf16.gmra.mxu0 %v6256
    %v6716 = vpop.f32.mrf.mxu0
    %v6717 = vadd.f32 %v6505, %v6716
    %v6718 = vpop.f32.mrf.mxu0
    %6719 = vdwg.mxu0
    %6720 = vmatpush.bf16.msra.mxu0 %v6660
    %6721 = vmatpush.bf16.msra.mxu0 %v6656
    %6722 = vmatpush.bf16.msra.mxu0 %v6652
    %6723 = vmatpush.bf16.msra.mxu0 %v6648
    %6724 = vmatpush.bf16.msra.mxu0 %v6644
    %6725 = vmatpush.bf16.msra.mxu0 %v6640
    %6726 = vmatpush.bf16.msra.mxu0 %v6636
    %6727 = vmatpush.bf16.msra.mxu0 %v6632
    %6728 = vmatmul.bf16.gmra.mxu0 %v6256
    %v6729 = vpop.f32.mrf.mxu0
    %v6730 = vadd.f32 %v6518, %v6729
    %v6731 = vpop.f32.mrf.mxu0
    %6732 = vdwg.mxu0
    %6733 = vmatpush.bf16.msra.mxu0 %v6661
    %6734 = vmatpush.bf16.msra.mxu0 %v6657
    %6735 = vmatpush.bf16.msra.mxu0 %v6653
    %6736 = vmatpush.bf16.msra.mxu0 %v6649
    %6737 = vmatpush.bf16.msra.mxu0 %v6645
    %6738 = vmatpush.bf16.msra.mxu0 %v6641
    %6739 = vmatpush.bf16.msra.mxu0 %v6637
    %6740 = vmatpush.bf16.msra.mxu0 %v6633
    %6741 = vmatmul.bf16.gmra.mxu0 %v6256
    %v6742 = vpop.f32.mrf.mxu0
    %v6743 = vadd.f32 %v6531, %v6742
    %v6744 = vpop.f32.mrf.mxu0
    %6745 = vdwg.mxu0
    %v6746 = vadd.f32 %v6704, %v145
    %v6747 = vadd.f32 %v6717, %v146
    %v6748 = vadd.f32 %v6730, %v147
    %v6749 = vadd.f32 %v6743, %v148
    %v6750 = vxor.u32 %v6746, 2147483648
    %v6751 = vmul.f32 %v6750, 1.442695
    %v6752 = vpow.pop %v6751
    %v6753 = vadd.f32 %v6752, 1.0
    %v6754 = vrcp.pop %v6753
    %v6755 = vmul.f32 %v6753, %v6754
    %v6756 = vsub.f32 1.0, %v6755
    %v6757 = vmul.f32 %v6754, %v6756
    %v6758 = vadd.f32 %v6754, %v6757
    %vm6759 = vweird.f32 %v6753
    %vm6760 = vweird.f32 %v6754
    %vm6761 = vmor %vm6759, %vm6760
    %v6762 = vsel %vm6761, %v6754, %v6758
    %v6763 = vand.u32 2147483647, %v6753
    %vm6764 = vcmp.eq.f32.partialorder %v6763, 8.507059e+37
    %v6765 = vand.u32 %v6753, 2147483648
    %v6766 = vor.u32 1.1754944e-38, %v6765
    %v6767 = vsel %vm6764, %v6766, %v6762
    %v6768 = vmul.f32 1.0, %v6767
    %v6769 = vxor.u32 %v6747, 2147483648
    %v6770 = vmul.f32 %v6769, 1.442695
    %v6771 = vpow.pop %v6770
    %v6772 = vadd.f32 %v6771, 1.0
    %v6773 = vrcp.pop %v6772
    %v6774 = vmul.f32 %v6772, %v6773
    %v6775 = vsub.f32 1.0, %v6774
    %v6776 = vmul.f32 %v6773, %v6775
    %v6777 = vadd.f32 %v6773, %v6776
    %vm6778 = vweird.f32 %v6772
    %vm6779 = vweird.f32 %v6773
    %vm6780 = vmor %vm6778, %vm6779
    %v6781 = vsel %vm6780, %v6773, %v6777
    %v6782 = vand.u32 2147483647, %v6772
    %vm6783 = vcmp.eq.f32.partialorder %v6782, 8.507059e+37
    %v6784 = vand.u32 %v6772, 2147483648
    %v6785 = vor.u32 1.1754944e-38, %v6784
    %v6786 = vsel %vm6783, %v6785, %v6781
    %v6787 = vmul.f32 1.0, %v6786
    %v6788 = vtanh.pop %v6748
    %v6789 = vxor.u32 %v6749, 2147483648
    %v6790 = vmul.f32 %v6789, 1.442695
    %v6791 = vpow.pop %v6790
    %v6792 = vadd.f32 %v6791, 1.0
    %v6793 = vrcp.pop %v6792
    %v6794 = vmul.f32 %v6792, %v6793
    %v6795 = vsub.f32 1.0, %v6794
    %v6796 = vmul.f32 %v6793, %v6795
    %v6797 = vadd.f32 %v6793, %v6796
    %vm6798 = vweird.f32 %v6792
    %vm6799 = vweird.f32 %v6793
    %vm6800 = vmor %vm6798, %vm6799
    %v6801 = vsel %vm6800, %v6793, %v6797
    %v6802 = vand.u32 2147483647, %v6792
    %vm6803 = vcmp.eq.f32.partialorder %v6802, 8.507059e+37
    %v6804 = vand.u32 %v6792, 2147483648
    %v6805 = vor.u32 1.1754944e-38, %v6804
    %v6806 = vsel %vm6803, %v6805, %v6801
    %v6807 = vmul.f32 1.0, %v6806
    %v6808 = vmul.f32 %v6787, %v5859
    %v6809 = vmul.f32 %v6768, %v6788
    %v6810 = vadd.f32 %v6808, %v6809
    %v6811 = vtanh.pop %v6810
    %v6812 = vmul.f32 %v6807, %v6811
    %s6813 = scalar_lea.vmem [#allocation11], 48
    %6814 = vst [vmem:[%s6813] sm:$0xff] %v6812
    %s6815 = scalar_lea.vmem [#allocation13], 28
    %v6816 = vld [vmem:[%s6815] sm:$0xf]
    %v6817 = vld [vmem:[#allocation2] sm:$0xff]
    %v6818 = vld [vmem:[#allocation2 + $0x8] sm:$0xff]
    %v6819 = vld [vmem:[#allocation3] sm:$0xff]
    %v6820 = vld [vmem:[#allocation3 + $0x8] sm:$0xff]
    %v6821 = vld [vmem:[#allocation3 + $0x10] sm:$0xff]
    %v6822 = vld [vmem:[#allocation3 + $0x18] sm:$0xff]
    %v6823 = vld [vmem:[#allocation3 + $0x20] sm:$0xff]
    %v6824 = vld [vmem:[#allocation3 + $0x28] sm:$0xff]
    %v6825 = vld [vmem:[#allocation3 + $0x30] sm:$0xff]
    %v6826 = vld [vmem:[#allocation3 + $0x38] sm:$0xff]
    %v6827 = vld [vmem:[#allocation3 + $0x40] sm:$0xff]
    %v6828 = vld [vmem:[#allocation3 + $0x48] sm:$0xff]
    %v6829 = vld [vmem:[#allocation3 + $0x50] sm:$0xff]
    %v6830 = vld [vmem:[#allocation3 + $0x58] sm:$0xff]
    %v6831 = vld [vmem:[#allocation3 + $0x60] sm:$0xff]
    %v6832 = vld [vmem:[#allocation3 + $0x68] sm:$0xff]
    %v6833 = vld [vmem:[#allocation3 + $0x70] sm:$0xff]
    %v6834 = vld [vmem:[#allocation3 + $0x78] sm:$0xff]
    %v6835 = vld [vmem:[#allocation3 + $0x80] sm:$0xff]
    %v6836 = vld [vmem:[#allocation3 + $0x88] sm:$0xff]
    %v6837 = vld [vmem:[#allocation3 + $0x90] sm:$0xff]
    %v6838 = vld [vmem:[#allocation3 + $0x98] sm:$0xff]
    %v6839 = vld [vmem:[#allocation3 + $0xa0] sm:$0xff]
    %v6840 = vld [vmem:[#allocation3 + $0xa8] sm:$0xff]
    %v6841 = vld [vmem:[#allocation3 + $0xb0] sm:$0xff]
    %v6842 = vld [vmem:[#allocation3 + $0xb8] sm:$0xff]
    %v6843 = vld [vmem:[#allocation3 + $0xc0] sm:$0xff]
    %v6844 = vld [vmem:[#allocation3 + $0xc8] sm:$0xff]
    %v6845 = vld [vmem:[#allocation3 + $0xd0] sm:$0xff]
    %v6846 = vld [vmem:[#allocation3 + $0xd8] sm:$0xff]
    %v6847 = vld [vmem:[#allocation3 + $0xe0] sm:$0xff]
    %v6848 = vld [vmem:[#allocation3 + $0xe8] sm:$0xff]
    %v6849 = vld [vmem:[#allocation3 + $0xf0] sm:$0xff]
    %v6850 = vld [vmem:[#allocation3 + $0xf8] sm:$0xff]
    %v6883 = vunpack.c.l.b16 %v6819
    %v6884 = vunpack.c.h.b16 %v6819
    %v6885 = vunpack.c.l.b16 %v6820
    %v6886 = vunpack.c.h.b16 %v6820
    %v6887 = vunpack.c.l.b16 %v6821
    %v6888 = vunpack.c.h.b16 %v6821
    %v6889 = vunpack.c.l.b16 %v6822
    %v6890 = vunpack.c.h.b16 %v6822
    %v6891 = vunpack.c.l.b16 %v6823
    %v6892 = vunpack.c.h.b16 %v6823
    %v6893 = vunpack.c.l.b16 %v6824
    %v6894 = vunpack.c.h.b16 %v6824
    %v6895 = vunpack.c.l.b16 %v6825
    %v6896 = vunpack.c.h.b16 %v6825
    %v6897 = vunpack.c.l.b16 %v6826
    %v6898 = vunpack.c.h.b16 %v6826
    %v6899 = vunpack.c.l.b16 %v6827
    %v6900 = vunpack.c.h.b16 %v6827
    %v6901 = vunpack.c.l.b16 %v6828
    %v6902 = vunpack.c.h.b16 %v6828
    %v6903 = vunpack.c.l.b16 %v6829
    %v6904 = vunpack.c.h.b16 %v6829
    %v6905 = vunpack.c.l.b16 %v6830
    %v6906 = vunpack.c.h.b16 %v6830
    %v6907 = vunpack.c.l.b16 %v6831
    %v6908 = vunpack.c.h.b16 %v6831
    %v6909 = vunpack.c.l.b16 %v6832
    %v6910 = vunpack.c.h.b16 %v6832
    %v6911 = vunpack.c.l.b16 %v6833
    %v6912 = vunpack.c.h.b16 %v6833
    %v6913 = vunpack.c.l.b16 %v6834
    %v6914 = vunpack.c.h.b16 %v6834
    %v6915 = vunpack.c.l.b16 %v6835
    %v6916 = vunpack.c.h.b16 %v6835
    %v6917 = vunpack.c.l.b16 %v6836
    %v6918 = vunpack.c.h.b16 %v6836
    %v6919 = vunpack.c.l.b16 %v6837
    %v6920 = vunpack.c.h.b16 %v6837
    %v6921 = vunpack.c.l.b16 %v6838
    %v6922 = vunpack.c.h.b16 %v6838
    %v6923 = vunpack.c.l.b16 %v6839
    %v6924 = vunpack.c.h.b16 %v6839
    %v6925 = vunpack.c.l.b16 %v6840
    %v6926 = vunpack.c.h.b16 %v6840
    %v6927 = vunpack.c.l.b16 %v6841
    %v6928 = vunpack.c.h.b16 %v6841
    %v6929 = vunpack.c.l.b16 %v6842
    %v6930 = vunpack.c.h.b16 %v6842
    %v6931 = vunpack.c.l.b16 %v6843
    %v6932 = vunpack.c.h.b16 %v6843
    %v6933 = vunpack.c.l.b16 %v6844
    %v6934 = vunpack.c.h.b16 %v6844
    %v6935 = vunpack.c.l.b16 %v6845
    %v6936 = vunpack.c.h.b16 %v6845
    %v6937 = vunpack.c.l.b16 %v6846
    %v6938 = vunpack.c.h.b16 %v6846
    %v6939 = vunpack.c.l.b16 %v6847
    %v6940 = vunpack.c.h.b16 %v6847
    %v6941 = vunpack.c.l.b16 %v6848
    %v6942 = vunpack.c.h.b16 %v6848
    %v6943 = vunpack.c.l.b16 %v6849
    %v6944 = vunpack.c.h.b16 %v6849
    %v6945 = vunpack.c.l.b16 %v6850
    %v6946 = vunpack.c.h.b16 %v6850
    %v6947 = vpack.c.b16 %v6887, %v6883
    %v6948 = vpack.c.b16 %v6888, %v6884
    %v6949 = vpack.c.b16 %v6889, %v6885
    %v6950 = vpack.c.b16 %v6890, %v6886
    %v6951 = vpack.c.b16 %v6895, %v6891
    %v6952 = vpack.c.b16 %v6896, %v6892
    %v6953 = vpack.c.b16 %v6897, %v6893
    %v6954 = vpack.c.b16 %v6898, %v6894
    %v6955 = vpack.c.b16 %v6903, %v6899
    %v6956 = vpack.c.b16 %v6904, %v6900
    %v6957 = vpack.c.b16 %v6905, %v6901
    %v6958 = vpack.c.b16 %v6906, %v6902
    %v6959 = vpack.c.b16 %v6911, %v6907
    %v6960 = vpack.c.b16 %v6912, %v6908
    %v6961 = vpack.c.b16 %v6913, %v6909
    %v6962 = vpack.c.b16 %v6914, %v6910
    %v6963 = vpack.c.b16 %v6919, %v6915
    %v6964 = vpack.c.b16 %v6920, %v6916
    %v6965 = vpack.c.b16 %v6921, %v6917
    %v6966 = vpack.c.b16 %v6922, %v6918
    %v6967 = vpack.c.b16 %v6927, %v6923
    %v6968 = vpack.c.b16 %v6928, %v6924
    %v6969 = vpack.c.b16 %v6929, %v6925
    %v6970 = vpack.c.b16 %v6930, %v6926
    %v6971 = vpack.c.b16 %v6935, %v6931
    %v6972 = vpack.c.b16 %v6936, %v6932
    %v6973 = vpack.c.b16 %v6937, %v6933
    %v6974 = vpack.c.b16 %v6938, %v6934
    %v6975 = vpack.c.b16 %v6943, %v6939
    %v6976 = vpack.c.b16 %v6944, %v6940
    %v6977 = vpack.c.b16 %v6945, %v6941
    %v6978 = vpack.c.b16 %v6946, %v6942
    %7011 = vmatpush.bf16.msra.mxu0 %v6975
    %7012 = vmatpush.bf16.msra.mxu0 %v6971
    %7013 = vmatpush.bf16.msra.mxu0 %v6967
    %7014 = vmatpush.bf16.msra.mxu0 %v6963
    %7015 = vmatpush.bf16.msra.mxu0 %v6959
    %7016 = vmatpush.bf16.msra.mxu0 %v6955
    %7017 = vmatpush.bf16.msra.mxu0 %v6951
    %7018 = vmatpush.bf16.msra.mxu0 %v6947
    %7019 = vmatmul.bf16.gmra.mxu0 %v6256
    %v7020 = vpop.f32.mrf.mxu0
    %v7021 = vadd.f32 0.0, %v7020
    %v7022 = vpop.f32.mrf.mxu0
    %7023 = vdwg.mxu0
    %7024 = vmatpush.bf16.msra.mxu0 %v6976
    %7025 = vmatpush.bf16.msra.mxu0 %v6972
    %7026 = vmatpush.bf16.msra.mxu0 %v6968
    %7027 = vmatpush.bf16.msra.mxu0 %v6964
    %7028 = vmatpush.bf16.msra.mxu0 %v6960
    %7029 = vmatpush.bf16.msra.mxu0 %v6956
    %7030 = vmatpush.bf16.msra.mxu0 %v6952
    %7031 = vmatpush.bf16.msra.mxu0 %v6948
    %7032 = vmatmul.bf16.gmra.mxu0 %v6256
    %v7033 = vpop.f32.mrf.mxu0
    %v7034 = vadd.f32 0.0, %v7033
    %v7035 = vpop.f32.mrf.mxu0
    %7036 = vdwg.mxu0
    %7037 = vmatpush.bf16.msra.mxu0 %v6977
    %7038 = vmatpush.bf16.msra.mxu0 %v6973
    %7039 = vmatpush.bf16.msra.mxu0 %v6969
    %7040 = vmatpush.bf16.msra.mxu0 %v6965
    %7041 = vmatpush.bf16.msra.mxu0 %v6961
    %7042 = vmatpush.bf16.msra.mxu0 %v6957
    %7043 = vmatpush.bf16.msra.mxu0 %v6953
    %7044 = vmatpush.bf16.msra.mxu0 %v6949
    %7045 = vmatmul.bf16.gmra.mxu0 %v6256
    %v7046 = vpop.f32.mrf.mxu0
    %v7047 = vadd.f32 0.0, %v7046
    %v7048 = vpop.f32.mrf.mxu0
    %7049 = vdwg.mxu0
    %7050 = vmatpush.bf16.msra.mxu0 %v6978
    %7051 = vmatpush.bf16.msra.mxu0 %v6974
    %7052 = vmatpush.bf16.msra.mxu0 %v6970
    %7053 = vmatpush.bf16.msra.mxu0 %v6966
    %7054 = vmatpush.bf16.msra.mxu0 %v6962
    %7055 = vmatpush.bf16.msra.mxu0 %v6958
    %7056 = vmatpush.bf16.msra.mxu0 %v6954
    %7057 = vmatpush.bf16.msra.mxu0 %v6950
    %7058 = vmatmul.bf16.gmra.mxu0 %v6256
    %v7059 = vpop.f32.mrf.mxu0
    %v7060 = vadd.f32 0.0, %v7059
    %v7061 = vpop.f32.mrf.mxu0
    %7062 = vdwg.mxu0
    %v7065 = vunpack.c.l.b16 %v6817
    %v7066 = vunpack.c.h.b16 %v6817
    %v7067 = vunpack.c.l.b16 %v6818
    %v7068 = vunpack.c.h.b16 %v6818
    %v7069 = vpack.c.b16 %v7065, %v7065
    %v7070 = vpack.c.b16 %v7066, %v7066
    %v7071 = vpack.c.b16 %v7067, %v7067
    %v7072 = vpack.c.b16 %v7068, %v7068
    %v7074 = vsel %vm415, %v6816, 0
    %v7077 = vsel %vm419, %v7069, 0
    %v7080 = vsel %vm419, %v7070, 0
    %v7083 = vsel %vm419, %v7071, 0
    %v7086 = vsel %vm419, %v7072, 0
    %7088 = vmatpush.bf16.msra.mxu0 0
    %7089 = vmatpush.bf16.msra.mxu0 0
    %7090 = vmatpush.bf16.msra.mxu0 0
    %7091 = vmatpush.bf16.msra.mxu0 0
    %7092 = vmatpush.bf16.msra.mxu0 0
    %7093 = vmatpush.bf16.msra.mxu0 0
    %7094 = vmatpush.bf16.msra.mxu0 0
    %7095 = vmatpush.bf16.msra.mxu0 %v7077
    %7096 = vmatmul.bf16.gmra.mxu0 %v7074
    %v7097 = vpop.f32.mrf.mxu0
    %v7098 = vadd.f32 %v7021, %v7097
    %v7099 = vpop.f32.mrf.mxu0
    %7100 = vdwg.mxu0
    %7101 = vmatpush.bf16.msra.mxu0 0
    %7102 = vmatpush.bf16.msra.mxu0 0
    %7103 = vmatpush.bf16.msra.mxu0 0
    %7104 = vmatpush.bf16.msra.mxu0 0
    %7105 = vmatpush.bf16.msra.mxu0 0
    %7106 = vmatpush.bf16.msra.mxu0 0
    %7107 = vmatpush.bf16.msra.mxu0 0
    %7108 = vmatpush.bf16.msra.mxu0 %v7080
    %7109 = vmatmul.bf16.gmra.mxu0 %v7074
    %v7110 = vpop.f32.mrf.mxu0
    %v7111 = vadd.f32 %v7034, %v7110
    %v7112 = vpop.f32.mrf.mxu0
    %7113 = vdwg.mxu0
    %7114 = vmatpush.bf16.msra.mxu0 0
    %7115 = vmatpush.bf16.msra.mxu0 0
    %7116 = vmatpush.bf16.msra.mxu0 0
    %7117 = vmatpush.bf16.msra.mxu0 0
    %7118 = vmatpush.bf16.msra.mxu0 0
    %7119 = vmatpush.bf16.msra.mxu0 0
    %7120 = vmatpush.bf16.msra.mxu0 0
    %7121 = vmatpush.bf16.msra.mxu0 %v7083
    %7122 = vmatmul.bf16.gmra.mxu0 %v7074
    %v7123 = vpop.f32.mrf.mxu0
    %v7124 = vadd.f32 %v7047, %v7123
    %v7125 = vpop.f32.mrf.mxu0
    %7126 = vdwg.mxu0
    %7127 = vmatpush.bf16.msra.mxu0 0
    %7128 = vmatpush.bf16.msra.mxu0 0
    %7129 = vmatpush.bf16.msra.mxu0 0
    %7130 = vmatpush.bf16.msra.mxu0 0
    %7131 = vmatpush.bf16.msra.mxu0 0
    %7132 = vmatpush.bf16.msra.mxu0 0
    %7133 = vmatpush.bf16.msra.mxu0 0
    %7134 = vmatpush.bf16.msra.mxu0 %v7086
    %7135 = vmatmul.bf16.gmra.mxu0 %v7074
    %v7136 = vpop.f32.mrf.mxu0
    %v7137 = vadd.f32 %v7060, %v7136
    %v7138 = vpop.f32.mrf.mxu0
    %7139 = vdwg.mxu0
    %v7140 = vadd.f32 %v7098, %v135
    %v7141 = vadd.f32 %v7111, %v136
    %v7142 = vadd.f32 %v7124, %v137
    %v7143 = vadd.f32 %v7137, %v138
    %v7144 = vxor.u32 %v7140, 2147483648
    %v7145 = vmul.f32 %v7144, 1.442695
    %v7146 = vpow.pop %v7145
    %v7147 = vadd.f32 %v7146, 1.0
    %v7148 = vrcp.pop %v7147
    %v7149 = vmul.f32 %v7147, %v7148
    %v7150 = vsub.f32 1.0, %v7149
    %v7151 = vmul.f32 %v7148, %v7150
    %v7152 = vadd.f32 %v7148, %v7151
    %vm7153 = vweird.f32 %v7147
    %vm7154 = vweird.f32 %v7148
    %vm7155 = vmor %vm7153, %vm7154
    %v7156 = vsel %vm7155, %v7148, %v7152
    %v7157 = vand.u32 2147483647, %v7147
    %vm7158 = vcmp.eq.f32.partialorder %v7157, 8.507059e+37
    %v7159 = vand.u32 %v7147, 2147483648
    %v7160 = vor.u32 1.1754944e-38, %v7159
    %v7161 = vsel %vm7158, %v7160, %v7156
    %v7162 = vmul.f32 1.0, %v7161
    %v7163 = vxor.u32 %v7141, 2147483648
    %v7164 = vmul.f32 %v7163, 1.442695
    %v7165 = vpow.pop %v7164
    %v7166 = vadd.f32 %v7165, 1.0
    %v7167 = vrcp.pop %v7166
    %v7168 = vmul.f32 %v7166, %v7167
    %v7169 = vsub.f32 1.0, %v7168
    %v7170 = vmul.f32 %v7167, %v7169
    %v7171 = vadd.f32 %v7167, %v7170
    %vm7172 = vweird.f32 %v7166
    %vm7173 = vweird.f32 %v7167
    %vm7174 = vmor %vm7172, %vm7173
    %v7175 = vsel %vm7174, %v7167, %v7171
    %v7176 = vand.u32 2147483647, %v7166
    %vm7177 = vcmp.eq.f32.partialorder %v7176, 8.507059e+37
    %v7178 = vand.u32 %v7166, 2147483648
    %v7179 = vor.u32 1.1754944e-38, %v7178
    %v7180 = vsel %vm7177, %v7179, %v7175
    %v7181 = vmul.f32 1.0, %v7180
    %v7182 = vtanh.pop %v7142
    %v7183 = vxor.u32 %v7143, 2147483648
    %v7184 = vmul.f32 %v7183, 1.442695
    %v7185 = vpow.pop %v7184
    %v7186 = vadd.f32 %v7185, 1.0
    %v7187 = vrcp.pop %v7186
    %v7188 = vmul.f32 %v7186, %v7187
    %v7189 = vsub.f32 1.0, %v7188
    %v7190 = vmul.f32 %v7187, %v7189
    %v7191 = vadd.f32 %v7187, %v7190
    %vm7192 = vweird.f32 %v7186
    %vm7193 = vweird.f32 %v7187
    %vm7194 = vmor %vm7192, %vm7193
    %v7195 = vsel %vm7194, %v7187, %v7191
    %v7196 = vand.u32 2147483647, %v7186
    %vm7197 = vcmp.eq.f32.partialorder %v7196, 8.507059e+37
    %v7198 = vand.u32 %v7186, 2147483648
    %v7199 = vor.u32 1.1754944e-38, %v7198
    %v7200 = vsel %vm7197, %v7199, %v7195
    %v7201 = vmul.f32 1.0, %v7200
    %v7202 = vmul.f32 %v7181, %v6253
    %v7203 = vmul.f32 %v7162, %v7182
    %v7204 = vadd.f32 %v7202, %v7203
    %v7205 = vtanh.pop %v7204
    %v7206 = vmul.f32 %v7201, %v7205
    %v7207 = vpack.c.bf16 %v7206, %v7206
    %v7208 = vld [vmem:[#allocation4] sm:$0xff]
    %v7209 = vld [vmem:[#allocation4 + $0x8] sm:$0xff]
    %v7210 = vld [vmem:[#allocation4 + $0x10] sm:$0xff]
    %v7211 = vld [vmem:[#allocation4 + $0x18] sm:$0xff]
    %v7212 = vld [vmem:[#allocation4 + $0x20] sm:$0xff]
    %v7213 = vld [vmem:[#allocation4 + $0x28] sm:$0xff]
    %v7214 = vld [vmem:[#allocation4 + $0x30] sm:$0xff]
    %v7215 = vld [vmem:[#allocation4 + $0x38] sm:$0xff]
    %v7216 = vld [vmem:[#allocation4 + $0x40] sm:$0xff]
    %v7217 = vld [vmem:[#allocation4 + $0x48] sm:$0xff]
    %v7218 = vld [vmem:[#allocation4 + $0x50] sm:$0xff]
    %v7219 = vld [vmem:[#allocation4 + $0x58] sm:$0xff]
    %v7220 = vld [vmem:[#allocation4 + $0x60] sm:$0xff]
    %v7221 = vld [vmem:[#allocation4 + $0x68] sm:$0xff]
    %v7222 = vld [vmem:[#allocation4 + $0x70] sm:$0xff]
    %v7223 = vld [vmem:[#allocation4 + $0x78] sm:$0xff]
    %v7224 = vld [vmem:[#allocation4 + $0x80] sm:$0xff]
    %v7225 = vld [vmem:[#allocation4 + $0x88] sm:$0xff]
    %v7226 = vld [vmem:[#allocation4 + $0x90] sm:$0xff]
    %v7227 = vld [vmem:[#allocation4 + $0x98] sm:$0xff]
    %v7228 = vld [vmem:[#allocation4 + $0xa0] sm:$0xff]
    %v7229 = vld [vmem:[#allocation4 + $0xa8] sm:$0xff]
    %v7230 = vld [vmem:[#allocation4 + $0xb0] sm:$0xff]
    %v7231 = vld [vmem:[#allocation4 + $0xb8] sm:$0xff]
    %v7232 = vld [vmem:[#allocation4 + $0xc0] sm:$0xff]
    %v7233 = vld [vmem:[#allocation4 + $0xc8] sm:$0xff]
    %v7234 = vld [vmem:[#allocation4 + $0xd0] sm:$0xff]
    %v7235 = vld [vmem:[#allocation4 + $0xd8] sm:$0xff]
    %v7236 = vld [vmem:[#allocation4 + $0xe0] sm:$0xff]
    %v7237 = vld [vmem:[#allocation4 + $0xe8] sm:$0xff]
    %v7238 = vld [vmem:[#allocation4 + $0xf0] sm:$0xff]
    %v7239 = vld [vmem:[#allocation4 + $0xf8] sm:$0xff]
    %v7240 = vpack.c.bf16 %v6812, %v6812
    %v7241 = vld [vmem:[#allocation5] sm:$0xff]
    %v7242 = vld [vmem:[#allocation5 + $0x8] sm:$0xff]
    %v7243 = vld [vmem:[#allocation5 + $0x10] sm:$0xff]
    %v7244 = vld [vmem:[#allocation5 + $0x18] sm:$0xff]
    %v7245 = vld [vmem:[#allocation5 + $0x20] sm:$0xff]
    %v7246 = vld [vmem:[#allocation5 + $0x28] sm:$0xff]
    %v7247 = vld [vmem:[#allocation5 + $0x30] sm:$0xff]
    %v7248 = vld [vmem:[#allocation5 + $0x38] sm:$0xff]
    %v7249 = vld [vmem:[#allocation5 + $0x40] sm:$0xff]
    %v7250 = vld [vmem:[#allocation5 + $0x48] sm:$0xff]
    %v7251 = vld [vmem:[#allocation5 + $0x50] sm:$0xff]
    %v7252 = vld [vmem:[#allocation5 + $0x58] sm:$0xff]
    %v7253 = vld [vmem:[#allocation5 + $0x60] sm:$0xff]
    %v7254 = vld [vmem:[#allocation5 + $0x68] sm:$0xff]
    %v7255 = vld [vmem:[#allocation5 + $0x70] sm:$0xff]
    %v7256 = vld [vmem:[#allocation5 + $0x78] sm:$0xff]
    %v7257 = vld [vmem:[#allocation5 + $0x80] sm:$0xff]
    %v7258 = vld [vmem:[#allocation5 + $0x88] sm:$0xff]
    %v7259 = vld [vmem:[#allocation5 + $0x90] sm:$0xff]
    %v7260 = vld [vmem:[#allocation5 + $0x98] sm:$0xff]
    %v7261 = vld [vmem:[#allocation5 + $0xa0] sm:$0xff]
    %v7262 = vld [vmem:[#allocation5 + $0xa8] sm:$0xff]
    %v7263 = vld [vmem:[#allocation5 + $0xb0] sm:$0xff]
    %v7264 = vld [vmem:[#allocation5 + $0xb8] sm:$0xff]
    %v7265 = vld [vmem:[#allocation5 + $0xc0] sm:$0xff]
    %v7266 = vld [vmem:[#allocation5 + $0xc8] sm:$0xff]
    %v7267 = vld [vmem:[#allocation5 + $0xd0] sm:$0xff]
    %v7268 = vld [vmem:[#allocation5 + $0xd8] sm:$0xff]
    %v7269 = vld [vmem:[#allocation5 + $0xe0] sm:$0xff]
    %v7270 = vld [vmem:[#allocation5 + $0xe8] sm:$0xff]
    %v7271 = vld [vmem:[#allocation5 + $0xf0] sm:$0xff]
    %v7272 = vld [vmem:[#allocation5 + $0xf8] sm:$0xff]
    %v7305 = vunpack.c.l.b16 %v7241
    %v7306 = vunpack.c.h.b16 %v7241
    %v7307 = vunpack.c.l.b16 %v7242
    %v7308 = vunpack.c.h.b16 %v7242
    %v7309 = vunpack.c.l.b16 %v7243
    %v7310 = vunpack.c.h.b16 %v7243
    %v7311 = vunpack.c.l.b16 %v7244
    %v7312 = vunpack.c.h.b16 %v7244
    %v7313 = vunpack.c.l.b16 %v7245
    %v7314 = vunpack.c.h.b16 %v7245
    %v7315 = vunpack.c.l.b16 %v7246
    %v7316 = vunpack.c.h.b16 %v7246
    %v7317 = vunpack.c.l.b16 %v7247
    %v7318 = vunpack.c.h.b16 %v7247
    %v7319 = vunpack.c.l.b16 %v7248
    %v7320 = vunpack.c.h.b16 %v7248
    %v7321 = vunpack.c.l.b16 %v7249
    %v7322 = vunpack.c.h.b16 %v7249
    %v7323 = vunpack.c.l.b16 %v7250
    %v7324 = vunpack.c.h.b16 %v7250
    %v7325 = vunpack.c.l.b16 %v7251
    %v7326 = vunpack.c.h.b16 %v7251
    %v7327 = vunpack.c.l.b16 %v7252
    %v7328 = vunpack.c.h.b16 %v7252
    %v7329 = vunpack.c.l.b16 %v7253
    %v7330 = vunpack.c.h.b16 %v7253
    %v7331 = vunpack.c.l.b16 %v7254
    %v7332 = vunpack.c.h.b16 %v7254
    %v7333 = vunpack.c.l.b16 %v7255
    %v7334 = vunpack.c.h.b16 %v7255
    %v7335 = vunpack.c.l.b16 %v7256
    %v7336 = vunpack.c.h.b16 %v7256
    %v7337 = vunpack.c.l.b16 %v7257
    %v7338 = vunpack.c.h.b16 %v7257
    %v7339 = vunpack.c.l.b16 %v7258
    %v7340 = vunpack.c.h.b16 %v7258
    %v7341 = vunpack.c.l.b16 %v7259
    %v7342 = vunpack.c.h.b16 %v7259
    %v7343 = vunpack.c.l.b16 %v7260
    %v7344 = vunpack.c.h.b16 %v7260
    %v7345 = vunpack.c.l.b16 %v7261
    %v7346 = vunpack.c.h.b16 %v7261
    %v7347 = vunpack.c.l.b16 %v7262
    %v7348 = vunpack.c.h.b16 %v7262
    %v7349 = vunpack.c.l.b16 %v7263
    %v7350 = vunpack.c.h.b16 %v7263
    %v7351 = vunpack.c.l.b16 %v7264
    %v7352 = vunpack.c.h.b16 %v7264
    %v7353 = vunpack.c.l.b16 %v7265
    %v7354 = vunpack.c.h.b16 %v7265
    %v7355 = vunpack.c.l.b16 %v7266
    %v7356 = vunpack.c.h.b16 %v7266
    %v7357 = vunpack.c.l.b16 %v7267
    %v7358 = vunpack.c.h.b16 %v7267
    %v7359 = vunpack.c.l.b16 %v7268
    %v7360 = vunpack.c.h.b16 %v7268
    %v7361 = vunpack.c.l.b16 %v7269
    %v7362 = vunpack.c.h.b16 %v7269
    %v7363 = vunpack.c.l.b16 %v7270
    %v7364 = vunpack.c.h.b16 %v7270
    %v7365 = vunpack.c.l.b16 %v7271
    %v7366 = vunpack.c.h.b16 %v7271
    %v7367 = vunpack.c.l.b16 %v7272
    %v7368 = vunpack.c.h.b16 %v7272
    %v7369 = vpack.c.b16 %v7309, %v7305
    %v7370 = vpack.c.b16 %v7310, %v7306
    %v7371 = vpack.c.b16 %v7311, %v7307
    %v7372 = vpack.c.b16 %v7312, %v7308
    %v7373 = vpack.c.b16 %v7317, %v7313
    %v7374 = vpack.c.b16 %v7318, %v7314
    %v7375 = vpack.c.b16 %v7319, %v7315
    %v7376 = vpack.c.b16 %v7320, %v7316
    %v7377 = vpack.c.b16 %v7325, %v7321
    %v7378 = vpack.c.b16 %v7326, %v7322
    %v7379 = vpack.c.b16 %v7327, %v7323
    %v7380 = vpack.c.b16 %v7328, %v7324
    %v7381 = vpack.c.b16 %v7333, %v7329
    %v7382 = vpack.c.b16 %v7334, %v7330
    %v7383 = vpack.c.b16 %v7335, %v7331
    %v7384 = vpack.c.b16 %v7336, %v7332
    %v7385 = vpack.c.b16 %v7341, %v7337
    %v7386 = vpack.c.b16 %v7342, %v7338
    %v7387 = vpack.c.b16 %v7343, %v7339
    %v7388 = vpack.c.b16 %v7344, %v7340
    %v7389 = vpack.c.b16 %v7349, %v7345
    %v7390 = vpack.c.b16 %v7350, %v7346
    %v7391 = vpack.c.b16 %v7351, %v7347
    %v7392 = vpack.c.b16 %v7352, %v7348
    %v7393 = vpack.c.b16 %v7357, %v7353
    %v7394 = vpack.c.b16 %v7358, %v7354
    %v7395 = vpack.c.b16 %v7359, %v7355
    %v7396 = vpack.c.b16 %v7360, %v7356
    %v7397 = vpack.c.b16 %v7365, %v7361
    %v7398 = vpack.c.b16 %v7366, %v7362
    %v7399 = vpack.c.b16 %v7367, %v7363
    %v7400 = vpack.c.b16 %v7368, %v7364
    %7433 = vmatpush.bf16.msra.mxu0 %v7397
    %7434 = vmatpush.bf16.msra.mxu0 %v7393
    %7435 = vmatpush.bf16.msra.mxu0 %v7389
    %7436 = vmatpush.bf16.msra.mxu0 %v7385
    %7437 = vmatpush.bf16.msra.mxu0 %v7381
    %7438 = vmatpush.bf16.msra.mxu0 %v7377
    %7439 = vmatpush.bf16.msra.mxu0 %v7373
    %7440 = vmatpush.bf16.msra.mxu0 %v7369
    %7441 = vmatmul.bf16.gmra.mxu0 %v7240
    %v7442 = vpop.f32.mrf.mxu0
    %v7443 = vadd.f32 0.0, %v7442
    %v7444 = vpop.f32.mrf.mxu0
    %7445 = vdwg.mxu0
    %7446 = vmatpush.bf16.msra.mxu0 %v7398
    %7447 = vmatpush.bf16.msra.mxu0 %v7394
    %7448 = vmatpush.bf16.msra.mxu0 %v7390
    %7449 = vmatpush.bf16.msra.mxu0 %v7386
    %7450 = vmatpush.bf16.msra.mxu0 %v7382
    %7451 = vmatpush.bf16.msra.mxu0 %v7378
    %7452 = vmatpush.bf16.msra.mxu0 %v7374
    %7453 = vmatpush.bf16.msra.mxu0 %v7370
    %7454 = vmatmul.bf16.gmra.mxu0 %v7240
    %v7455 = vpop.f32.mrf.mxu0
    %v7456 = vadd.f32 0.0, %v7455
    %v7457 = vpop.f32.mrf.mxu0
    %7458 = vdwg.mxu0
    %7459 = vmatpush.bf16.msra.mxu0 %v7399
    %7460 = vmatpush.bf16.msra.mxu0 %v7395
    %7461 = vmatpush.bf16.msra.mxu0 %v7391
    %7462 = vmatpush.bf16.msra.mxu0 %v7387
    %7463 = vmatpush.bf16.msra.mxu0 %v7383
    %7464 = vmatpush.bf16.msra.mxu0 %v7379
    %7465 = vmatpush.bf16.msra.mxu0 %v7375
    %7466 = vmatpush.bf16.msra.mxu0 %v7371
    %7467 = vmatmul.bf16.gmra.mxu0 %v7240
    %v7468 = vpop.f32.mrf.mxu0
    %v7469 = vadd.f32 0.0, %v7468
    %v7470 = vpop.f32.mrf.mxu0
    %7471 = vdwg.mxu0
    %7472 = vmatpush.bf16.msra.mxu0 %v7400
    %7473 = vmatpush.bf16.msra.mxu0 %v7396
    %7474 = vmatpush.bf16.msra.mxu0 %v7392
    %7475 = vmatpush.bf16.msra.mxu0 %v7388
    %7476 = vmatpush.bf16.msra.mxu0 %v7384
    %7477 = vmatpush.bf16.msra.mxu0 %v7380
    %7478 = vmatpush.bf16.msra.mxu0 %v7376
    %7479 = vmatpush.bf16.msra.mxu0 %v7372
    %7480 = vmatmul.bf16.gmra.mxu0 %v7240
    %v7481 = vpop.f32.mrf.mxu0
    %v7482 = vadd.f32 0.0, %v7481
    %v7483 = vpop.f32.mrf.mxu0
    %7484 = vdwg.mxu0
    %v7517 = vunpack.c.l.b16 %v7208
    %v7518 = vunpack.c.h.b16 %v7208
    %v7519 = vunpack.c.l.b16 %v7209
    %v7520 = vunpack.c.h.b16 %v7209
    %v7521 = vunpack.c.l.b16 %v7210
    %v7522 = vunpack.c.h.b16 %v7210
    %v7523 = vunpack.c.l.b16 %v7211
    %v7524 = vunpack.c.h.b16 %v7211
    %v7525 = vunpack.c.l.b16 %v7212
    %v7526 = vunpack.c.h.b16 %v7212
    %v7527 = vunpack.c.l.b16 %v7213
    %v7528 = vunpack.c.h.b16 %v7213
    %v7529 = vunpack.c.l.b16 %v7214
    %v7530 = vunpack.c.h.b16 %v7214
    %v7531 = vunpack.c.l.b16 %v7215
    %v7532 = vunpack.c.h.b16 %v7215
    %v7533 = vunpack.c.l.b16 %v7216
    %v7534 = vunpack.c.h.b16 %v7216
    %v7535 = vunpack.c.l.b16 %v7217
    %v7536 = vunpack.c.h.b16 %v7217
    %v7537 = vunpack.c.l.b16 %v7218
    %v7538 = vunpack.c.h.b16 %v7218
    %v7539 = vunpack.c.l.b16 %v7219
    %v7540 = vunpack.c.h.b16 %v7219
    %v7541 = vunpack.c.l.b16 %v7220
    %v7542 = vunpack.c.h.b16 %v7220
    %v7543 = vunpack.c.l.b16 %v7221
    %v7544 = vunpack.c.h.b16 %v7221
    %v7545 = vunpack.c.l.b16 %v7222
    %v7546 = vunpack.c.h.b16 %v7222
    %v7547 = vunpack.c.l.b16 %v7223
    %v7548 = vunpack.c.h.b16 %v7223
    %v7549 = vunpack.c.l.b16 %v7224
    %v7550 = vunpack.c.h.b16 %v7224
    %v7551 = vunpack.c.l.b16 %v7225
    %v7552 = vunpack.c.h.b16 %v7225
    %v7553 = vunpack.c.l.b16 %v7226
    %v7554 = vunpack.c.h.b16 %v7226
    %v7555 = vunpack.c.l.b16 %v7227
    %v7556 = vunpack.c.h.b16 %v7227
    %v7557 = vunpack.c.l.b16 %v7228
    %v7558 = vunpack.c.h.b16 %v7228
    %v7559 = vunpack.c.l.b16 %v7229
    %v7560 = vunpack.c.h.b16 %v7229
    %v7561 = vunpack.c.l.b16 %v7230
    %v7562 = vunpack.c.h.b16 %v7230
    %v7563 = vunpack.c.l.b16 %v7231
    %v7564 = vunpack.c.h.b16 %v7231
    %v7565 = vunpack.c.l.b16 %v7232
    %v7566 = vunpack.c.h.b16 %v7232
    %v7567 = vunpack.c.l.b16 %v7233
    %v7568 = vunpack.c.h.b16 %v7233
    %v7569 = vunpack.c.l.b16 %v7234
    %v7570 = vunpack.c.h.b16 %v7234
    %v7571 = vunpack.c.l.b16 %v7235
    %v7572 = vunpack.c.h.b16 %v7235
    %v7573 = vunpack.c.l.b16 %v7236
    %v7574 = vunpack.c.h.b16 %v7236
    %v7575 = vunpack.c.l.b16 %v7237
    %v7576 = vunpack.c.h.b16 %v7237
    %v7577 = vunpack.c.l.b16 %v7238
    %v7578 = vunpack.c.h.b16 %v7238
    %v7579 = vunpack.c.l.b16 %v7239
    %v7580 = vunpack.c.h.b16 %v7239
    %v7581 = vpack.c.b16 %v7521, %v7517
    %v7582 = vpack.c.b16 %v7522, %v7518
    %v7583 = vpack.c.b16 %v7523, %v7519
    %v7584 = vpack.c.b16 %v7524, %v7520
    %v7585 = vpack.c.b16 %v7529, %v7525
    %v7586 = vpack.c.b16 %v7530, %v7526
    %v7587 = vpack.c.b16 %v7531, %v7527
    %v7588 = vpack.c.b16 %v7532, %v7528
    %v7589 = vpack.c.b16 %v7537, %v7533
    %v7590 = vpack.c.b16 %v7538, %v7534
    %v7591 = vpack.c.b16 %v7539, %v7535
    %v7592 = vpack.c.b16 %v7540, %v7536
    %v7593 = vpack.c.b16 %v7545, %v7541
    %v7594 = vpack.c.b16 %v7546, %v7542
    %v7595 = vpack.c.b16 %v7547, %v7543
    %v7596 = vpack.c.b16 %v7548, %v7544
    %v7597 = vpack.c.b16 %v7553, %v7549
    %v7598 = vpack.c.b16 %v7554, %v7550
    %v7599 = vpack.c.b16 %v7555, %v7551
    %v7600 = vpack.c.b16 %v7556, %v7552
    %v7601 = vpack.c.b16 %v7561, %v7557
    %v7602 = vpack.c.b16 %v7562, %v7558
    %v7603 = vpack.c.b16 %v7563, %v7559
    %v7604 = vpack.c.b16 %v7564, %v7560
    %v7605 = vpack.c.b16 %v7569, %v7565
    %v7606 = vpack.c.b16 %v7570, %v7566
    %v7607 = vpack.c.b16 %v7571, %v7567
    %v7608 = vpack.c.b16 %v7572, %v7568
    %v7609 = vpack.c.b16 %v7577, %v7573
    %v7610 = vpack.c.b16 %v7578, %v7574
    %v7611 = vpack.c.b16 %v7579, %v7575
    %v7612 = vpack.c.b16 %v7580, %v7576
    %7645 = vmatpush.bf16.msra.mxu0 %v7609
    %7646 = vmatpush.bf16.msra.mxu0 %v7605
    %7647 = vmatpush.bf16.msra.mxu0 %v7601
    %7648 = vmatpush.bf16.msra.mxu0 %v7597
    %7649 = vmatpush.bf16.msra.mxu0 %v7593
    %7650 = vmatpush.bf16.msra.mxu0 %v7589
    %7651 = vmatpush.bf16.msra.mxu0 %v7585
    %7652 = vmatpush.bf16.msra.mxu0 %v7581
    %7653 = vmatmul.bf16.gmra.mxu0 %v7207
    %v7654 = vpop.f32.mrf.mxu0
    %v7655 = vadd.f32 %v7443, %v7654
    %v7656 = vpop.f32.mrf.mxu0
    %7657 = vdwg.mxu0
    %7658 = vmatpush.bf16.msra.mxu0 %v7610
    %7659 = vmatpush.bf16.msra.mxu0 %v7606
    %7660 = vmatpush.bf16.msra.mxu0 %v7602
    %7661 = vmatpush.bf16.msra.mxu0 %v7598
    %7662 = vmatpush.bf16.msra.mxu0 %v7594
    %7663 = vmatpush.bf16.msra.mxu0 %v7590
    %7664 = vmatpush.bf16.msra.mxu0 %v7586
    %7665 = vmatpush.bf16.msra.mxu0 %v7582
    %7666 = vmatmul.bf16.gmra.mxu0 %v7207
    %v7667 = vpop.f32.mrf.mxu0
    %v7668 = vadd.f32 %v7456, %v7667
    %v7669 = vpop.f32.mrf.mxu0
    %7670 = vdwg.mxu0
    %7671 = vmatpush.bf16.msra.mxu0 %v7611
    %7672 = vmatpush.bf16.msra.mxu0 %v7607
    %7673 = vmatpush.bf16.msra.mxu0 %v7603
    %7674 = vmatpush.bf16.msra.mxu0 %v7599
    %7675 = vmatpush.bf16.msra.mxu0 %v7595
    %7676 = vmatpush.bf16.msra.mxu0 %v7591
    %7677 = vmatpush.bf16.msra.mxu0 %v7587
    %7678 = vmatpush.bf16.msra.mxu0 %v7583
    %7679 = vmatmul.bf16.gmra.mxu0 %v7207
    %v7680 = vpop.f32.mrf.mxu0
    %v7681 = vadd.f32 %v7469, %v7680
    %v7682 = vpop.f32.mrf.mxu0
    %7683 = vdwg.mxu0
    %7684 = vmatpush.bf16.msra.mxu0 %v7612
    %7685 = vmatpush.bf16.msra.mxu0 %v7608
    %7686 = vmatpush.bf16.msra.mxu0 %v7604
    %7687 = vmatpush.bf16.msra.mxu0 %v7600
    %7688 = vmatpush.bf16.msra.mxu0 %v7596
    %7689 = vmatpush.bf16.msra.mxu0 %v7592
    %7690 = vmatpush.bf16.msra.mxu0 %v7588
    %7691 = vmatpush.bf16.msra.mxu0 %v7584
    %7692 = vmatmul.bf16.gmra.mxu0 %v7207
    %v7693 = vpop.f32.mrf.mxu0
    %v7694 = vadd.f32 %v7482, %v7693
    %v7695 = vpop.f32.mrf.mxu0
    %7696 = vdwg.mxu0
    %v7697 = vadd.f32 %v7655, %v145
    %v7698 = vadd.f32 %v7668, %v146
    %v7699 = vadd.f32 %v7681, %v147
    %v7700 = vadd.f32 %v7694, %v148
    %v7701 = vxor.u32 %v7697, 2147483648
    %v7702 = vmul.f32 %v7701, 1.442695
    %v7703 = vpow.pop %v7702
    %v7704 = vadd.f32 %v7703, 1.0
    %v7705 = vrcp.pop %v7704
    %v7706 = vmul.f32 %v7704, %v7705
    %v7707 = vsub.f32 1.0, %v7706
    %v7708 = vmul.f32 %v7705, %v7707
    %v7709 = vadd.f32 %v7705, %v7708
    %vm7710 = vweird.f32 %v7704
    %vm7711 = vweird.f32 %v7705
    %vm7712 = vmor %vm7710, %vm7711
    %v7713 = vsel %vm7712, %v7705, %v7709
    %v7714 = vand.u32 2147483647, %v7704
    %vm7715 = vcmp.eq.f32.partialorder %v7714, 8.507059e+37
    %v7716 = vand.u32 %v7704, 2147483648
    %v7717 = vor.u32 1.1754944e-38, %v7716
    %v7718 = vsel %vm7715, %v7717, %v7713
    %v7719 = vmul.f32 1.0, %v7718
    %v7720 = vxor.u32 %v7698, 2147483648
    %v7721 = vmul.f32 %v7720, 1.442695
    %v7722 = vpow.pop %v7721
    %v7723 = vadd.f32 %v7722, 1.0
    %v7724 = vrcp.pop %v7723
    %v7725 = vmul.f32 %v7723, %v7724
    %v7726 = vsub.f32 1.0, %v7725
    %v7727 = vmul.f32 %v7724, %v7726
    %v7728 = vadd.f32 %v7724, %v7727
    %vm7729 = vweird.f32 %v7723
    %vm7730 = vweird.f32 %v7724
    %vm7731 = vmor %vm7729, %vm7730
    %v7732 = vsel %vm7731, %v7724, %v7728
    %v7733 = vand.u32 2147483647, %v7723
    %vm7734 = vcmp.eq.f32.partialorder %v7733, 8.507059e+37
    %v7735 = vand.u32 %v7723, 2147483648
    %v7736 = vor.u32 1.1754944e-38, %v7735
    %v7737 = vsel %vm7734, %v7736, %v7732
    %v7738 = vmul.f32 1.0, %v7737
    %v7739 = vtanh.pop %v7699
    %v7740 = vxor.u32 %v7700, 2147483648
    %v7741 = vmul.f32 %v7740, 1.442695
    %v7742 = vpow.pop %v7741
    %v7743 = vadd.f32 %v7742, 1.0
    %v7744 = vrcp.pop %v7743
    %v7745 = vmul.f32 %v7743, %v7744
    %v7746 = vsub.f32 1.0, %v7745
    %v7747 = vmul.f32 %v7744, %v7746
    %v7748 = vadd.f32 %v7744, %v7747
    %vm7749 = vweird.f32 %v7743
    %vm7750 = vweird.f32 %v7744
    %vm7751 = vmor %vm7749, %vm7750
    %v7752 = vsel %vm7751, %v7744, %v7748
    %v7753 = vand.u32 2147483647, %v7743
    %vm7754 = vcmp.eq.f32.partialorder %v7753, 8.507059e+37
    %v7755 = vand.u32 %v7743, 2147483648
    %v7756 = vor.u32 1.1754944e-38, %v7755
    %v7757 = vsel %vm7754, %v7756, %v7752
    %v7758 = vmul.f32 1.0, %v7757
    %v7759 = vmul.f32 %v7738, %v6810
    %v7760 = vmul.f32 %v7719, %v7739
    %v7761 = vadd.f32 %v7759, %v7760
    %v7762 = vtanh.pop %v7761
    %v7763 = vmul.f32 %v7758, %v7762
    %s7764 = scalar_lea.vmem [#allocation11], 56
    %7765 = vst [vmem:[%s7764] sm:$0xff] %v7763
    %7766 = vst [vmem:[#allocation7] sm:$0xff] %v7206
    %7767 = vst [vmem:[#allocation8] sm:$0xff] %v7204
    %7768 = vst [vmem:[#allocation9] sm:$0xff] %v7763
    %7769 = vst [vmem:[#allocation10] sm:$0xff] %v7761
    %v7770 = vld [vmem:[#allocation11] sm:$0xff]
    %v7771 = vld [vmem:[#allocation11 + $0x8] sm:$0xff]
    %v7772 = vld [vmem:[#allocation11 + $0x10] sm:$0xff]
    %v7773 = vld [vmem:[#allocation11 + $0x18] sm:$0xff]
    %v7774 = vld [vmem:[#allocation11 + $0x20] sm:$0xff]
    %v7775 = vld [vmem:[#allocation11 + $0x28] sm:$0xff]
    %v7776 = vld [vmem:[#allocation11 + $0x30] sm:$0xff]
    %v7777 = vld [vmem:[#allocation11 + $0x38] sm:$0xff]
    %v7778 = vld [vmem:[%s7] sm:$0x1]
    %v7780 = vperm.slane %v7778, 0
    %v7782 = vmul.f32 %v7770, %v7780
    %v7783 = vmul.f32 %v7771, %v7780
    %v7784 = vmul.f32 %v7772, %v7780
    %v7785 = vmul.f32 %v7773, %v7780
    %v7786 = vmul.f32 %v7774, %v7780
    %v7787 = vmul.f32 %v7775, %v7780
    %v7788 = vmul.f32 %v7776, %v7780
    %v7789 = vmul.f32 %v7777, %v7780
    %7790 = vadd.xlane.f32.xlu0 %v7782
    %v7791 = vpop.xlane.xlu0 %7790
    %7792 = vadd.xlane.f32.xlu0 %v7783
    %v7793 = vpop.xlane.xlu0 %7792
    %7794 = vadd.xlane.f32.xlu0 %v7784
    %v7795 = vpop.xlane.xlu0 %7794
    %7796 = vadd.xlane.f32.xlu0 %v7785
    %v7797 = vpop.xlane.xlu0 %7796
    %7798 = vadd.xlane.f32.xlu0 %v7786
    %v7799 = vpop.xlane.xlu0 %7798
    %7800 = vadd.xlane.f32.xlu0 %v7787
    %v7801 = vpop.xlane.xlu0 %7800
    %7802 = vadd.xlane.f32.xlu0 %v7788
    %v7803 = vpop.xlane.xlu0 %7802
    %7804 = vadd.xlane.f32.xlu0 %v7789
    %v7805 = vpop.xlane.xlu0 %7804
    %v7806 = vld [vmem:[#allocation12] sm:$0x1]
    %v7808 = vperm.slane %v7806, 0
    %7809 = vset.pattern.permute.xlu0 0
    %7810 = vperm.xlu0 %7809, %v7808
    %v7811 = vpop.permute.xlu0 %7810
    %v7813 = vadd.f32 %v7791, %v7811
    %v7814 = vadd.f32 %v7793, %v7811
    %v7815 = vadd.f32 %v7795, %v7811
    %v7816 = vadd.f32 %v7797, %v7811
    %v7817 = vadd.f32 %v7799, %v7811
    %v7818 = vadd.f32 %v7801, %v7811
    %v7819 = vadd.f32 %v7803, %v7811
    %v7820 = vadd.f32 %v7805, %v7811
    %v7829 = vlaneseq
    %v7830 = vand.u32 %v7829, 127
    %v7831 = vperm.slane %v7813, %v7830
    %v7832 = vperm.slane %v7814, %v7830
    %v7833 = vperm.slane %v7815, %v7830
    %v7834 = vperm.slane %v7816, %v7830
    %v7835 = vperm.slane %v7817, %v7830
    %v7836 = vperm.slane %v7818, %v7830
    %v7837 = vperm.slane %v7819, %v7830
    %v7838 = vperm.slane %v7820, %v7830
    %vm7839 = vcmask 1041409
    %v7840 = vsel %vm7839, %v7832, %v7831
    %vm7841 = vcmask 1042434
    %v7842 = vsel %vm7841, %v7833, %v7840
    %vm7843 = vcmask 1043459
    %v7844 = vsel %vm7843, %v7834, %v7842
    %vm7845 = vcmask 1044484
    %v7846 = vsel %vm7845, %v7835, %v7844
    %vm7847 = vcmask 1045509
    %v7848 = vsel %vm7847, %v7836, %v7846
    %vm7849 = vcmask 1046534
    %v7850 = vsel %vm7849, %v7837, %v7848
    %vm7851 = vcmask 1047559
    %v7852 = vsel %vm7851, %v7838, %v7850
    %7854 = vst.msk [vmem:[#allocation18] sm:$0xff] %vm415, %v7852
    // Predicated region
    $region50: #{tpu_custom_call.1} parent=1 // pred_check
      _
    $region51: #{tpu_custom_call.1} parent=1 // pred_check_branch
      %7856 = sbr.rel (0) target = $region53
    $region52: #{tpu_custom_call.1} parent=1 // pred_region
      %7858 = vsyncadd [#allocation15], 0
      %s7860 = sshll.u32 [#allocation18], 4
      %s7861 = int_to_ptr.vmem [resolvable:$true] %s7860
      %s7862 = sshll.u32 %s9, 4
      %s7863 = int_to_ptr.hbm [resolvable:$true] %s7862
      %7865 = dma.vmem_to_hbm [thread:$0]  %s7861, 128, %s7863, [#allocation15]
    $region53: #{tpu_custom_call.1} parent=1 // pred_fallthru
      _
    // Predicated region
    $region54: #{tpu_custom_call.1} parent=1 // pred_check
      _
    $region55: #{tpu_custom_call.1} parent=1 // pred_check_branch
      %7867 = sbr.rel (0) target = $region57
    $region56: #{tpu_custom_call.1} parent=1 // pred_region
      %7869 = dma.done [#allocation15], 128
    $region57: #{tpu_custom_call.1} parent=1 // pred_fallthru
      _
    %7870 = vsyncpa [#allocation14], 1
    %7871 = vsyncpa [#allocation17], 1
    %7872 = vsyncpa [#allocation15], 1
  %7873 = vsyncmov [#allocation6]
  %s7874 = vpop.sfrf %7873
  %p7875 = scmp.eq.s32.totalorder %s7874, 0
  %p7876 = pneg %p7875
  %7878 = shalt.err (%p7876)
  %s7879 = scalar_lea.sflag [#allocation6], 1
  %7880 = vsyncmov %s7879
  %s7881 = vpop.sfrf %7880
  %p7882 = scmp.eq.s32.totalorder %s7881, 0
  %p7883 = pneg %p7882
  %7885 = shalt.err (%p7883)
  %s7886 = scalar_lea.sflag [#allocation6], 2
  %7887 = vsyncmov %s7886
  %s7888 = vpop.sfrf %7887
  %p7889 = scmp.eq.s32.totalorder %s7888, 0
  %p7890 = pneg %p7889
  %7892 = shalt.err (%p7890)
  %s7893 = scalar_lea.sflag [#allocation6], 3
  %7894 = vsyncmov %s7893
  %s7895 = vpop.sfrf %7894
  %p7896 = scmp.eq.s32.totalorder %s7895, 0
  %p7897 = pneg %p7896
  %7899 = shalt.err (%p7897)

</llo_original>
